<compile_context>
chip_gen: v7x
topology: tpu7x:2x2x1
jax: 0.10.0
libtpu: 0.0.40
codegen_flags: <defaults>
</compile_context>

<pallas_src>
import functools

import jax
import jax.numpy as jnp
from jax.experimental import pallas as pl
from jax.experimental.pallas import tpu as pltpu

_BN_EPS = 1e-5
_VMEM = pl.BlockSpec(memory_space=pltpu.MemorySpace.VMEM)


# ------------------------------------------------------------------ Pallas kernels
def _conv_bn_relu_kernel(a_ref, w_ref, g_ref, b_ref, o_ref, *, m_true):
    """Fused conv-as-matmul + BatchNorm(training batch stats) + ReLU.

    a: (Mp, K) bf16 im2col patches (rows >= m_true are exact zeros),
    w: (K, C) bf16, g/b: (1, C) f32 gamma/beta.  Output: (Mp, C) f32.
    """
    y = jnp.dot(a_ref[...], w_ref[...], preferred_element_type=jnp.float32)
    inv_m = 1.0 / m_true
    mean = jnp.sum(y, axis=0, keepdims=True) * inv_m          # zero pad rows contribute 0
    sumsq = jnp.sum(y * y, axis=0, keepdims=True) * inv_m
    var = jnp.maximum(sumsq - mean * mean, 0.0)                # biased variance (train BN)
    scale = g_ref[...] * jax.lax.rsqrt(var + _BN_EPS)
    shift = b_ref[...] - mean * scale
    o_ref[...] = jnp.maximum(y * scale + shift, 0.0)


def _matmul_bias_kernel(a_ref, w_ref, b_ref, o_ref):
    o_ref[...] = (jnp.dot(a_ref[...], w_ref[...], preferred_element_type=jnp.float32)
                  + b_ref[...])


def _maxpool4_kernel(x_ref, o_ref):
    # x: (4, M, C) -- the 4 taps of each 2x2 window stacked on the leading axis.
    a = jnp.maximum(x_ref[0], x_ref[1])
    b = jnp.maximum(x_ref[2], x_ref[3])
    o_ref[...] = jnp.maximum(a, b)


# ------------------------------------------------------------------ kernel wrappers
def fused_conv_bn_relu(a, w, gamma, beta):
    """relu(BN_train(a @ w)).  a: (M, K), w: (K, C).  Returns (M, C) f32."""
    M, K = a.shape
    C = w.shape[1]
    Mp = (M + 7) // 8 * 8                      # sublane-align so the stats sums are exact
    if Mp != M:
        a = jnp.pad(a, ((0, Mp - M), (0, 0)))
    out = pl.pallas_call(
        functools.partial(_conv_bn_relu_kernel, m_true=float(M)),
        out_shape=jax.ShapeDtypeStruct((Mp, C), jnp.float32),
        in_specs=[_VMEM, _VMEM, _VMEM, _VMEM],
        out_specs=_VMEM,
    )(a.astype(jnp.bfloat16), w.astype(jnp.bfloat16),
      gamma.reshape(1, C).astype(jnp.float32),
      beta.reshape(1, C).astype(jnp.float32))
    return out[:M] if Mp != M else out


def fused_matmul_bias(a, w, b):
    """a @ w + b.  a: (M, K), w: (K, N), b: (N,).  Returns (M, N) f32."""
    M, _ = a.shape
    N = w.shape[1]
    return pl.pallas_call(
        _matmul_bias_kernel,
        out_shape=jax.ShapeDtypeStruct((M, N), jnp.float32),
        in_specs=[_VMEM, _VMEM, _VMEM],
        out_specs=_VMEM,
    )(a.astype(jnp.bfloat16), w.astype(jnp.bfloat16),
      b.reshape(1, N).astype(jnp.float32))


def pallas_maxpool2x2(x):
    """2x2 stride-2 max-pool, x: (N, H, W, C) with H, W even."""
    N, H, W, C = x.shape
    Hp, Wp = H // 2, W // 2
    # XLA glue: stack the 4 window taps on a leading axis of size 4.
    xr = (x.reshape(N, Hp, 2, Wp, 2, C)
            .transpose(2, 4, 0, 1, 3, 5)
            .reshape(4, N * Hp * Wp, C))
    out = pl.pallas_call(
        _maxpool4_kernel,
        out_shape=jax.ShapeDtypeStruct((N * Hp * Wp, C), jnp.float32),
        in_specs=[_VMEM],
        out_specs=_VMEM,
    )(xr)
    return out.reshape(N, Hp, Wp, C)


# ------------------------------------------------------------------ model pieces
def conv3x3_bn_relu(x, w, gamma, beta):
    """Conv2d(k=3,s=1,p=1,bias=False) + BatchNorm2d (training mode) + ReLU.
    x: (N,H,W,Cin) NHWC; w: (Cout,Cin,3,3) PyTorch layout."""
    N, H, W, Cin = x.shape
    Cout = w.shape[0]
    xp = jnp.pad(x, ((0, 0), (1, 1), (1, 1), (0, 0)))
    patches = [xp[:, di:di + H, dj:dj + W, :] for di in range(3) for dj in range(3)]
    a = jnp.concatenate(patches, axis=-1).reshape(N * H * W, 9 * Cin)
    wm = jnp.transpose(w, (2, 3, 1, 0)).reshape(9 * Cin, Cout)   # (kh,kw,cin) x cout
    y = fused_conv_bn_relu(a, wm, gamma, beta)
    return y.reshape(N, H, W, Cout)


def double_conv(x, p):
    x = conv3x3_bn_relu(x, p["w1"], p["g1"], p["b1"])
    x = conv3x3_bn_relu(x, p["w2"], p["g2"], p["b2"])
    return x


def conv_transpose2x2(x, w, b):
    """ConvTranspose2d(k=2, s=2). x: (N,H,W,Cin); w: (Cin,Cout,2,2); b: (Cout,)."""
    N, H, W, Cin = x.shape
    Cout = w.shape[1]
    a = x.reshape(N * H * W, Cin)
    wm = jnp.transpose(w, (0, 2, 3, 1)).reshape(Cin, 4 * Cout)   # cin x (kh,kw,cout)
    bt = jnp.tile(b, 4)                                          # bias per (kh,kw,cout) col
    y = fused_matmul_bias(a, wm, bt).reshape(N, H, W, 2, 2, Cout)
    y = jnp.transpose(y, (0, 1, 3, 2, 4, 5)).reshape(N, 2 * H, 2 * W, Cout)
    return y


def conv1x1(x, w, b):
    """Conv2d(k=1) with bias. x: (N,H,W,Cin); w: (Cout,Cin,1,1); b: (Cout,)."""
    N, H, W, Cin = x.shape
    Cout = w.shape[0]
    a = x.reshape(N * H * W, Cin)
    wm = jnp.transpose(w, (2, 3, 1, 0)).reshape(Cin, Cout)
    return fused_matmul_bias(a, wm, b).reshape(N, H, W, Cout)


@jax.jit
def unet_forward(x_nchw, params):
    x = jnp.transpose(x_nchw, (0, 2, 3, 1))        # NCHW -> NHWC
    skips = []
    for p in params["downs"]:
        x = double_conv(x, p)
        skips.append(x)
        x = pallas_maxpool2x2(x)
    x = double_conv(x, params["bottleneck"])
    skips = skips[::-1]
    for i in range(len(params["ups_t"])):
        x = conv_transpose2x2(x, params["ups_t"][i]["w"], params["ups_t"][i]["b"])
        skip = skips[i]
        # TODO(synk): TF.resize branch of the reference is unreachable for power-of-two
        # spatial sizes (and `TF` is undefined in the source); shapes always match here.
        x = jnp.concatenate([skip, x], axis=-1)    # channels-last concat == torch.cat(dim=1)
        x = double_conv(x, params["ups_dc"][i])
    y = conv1x1(x, params["final_w"], params["final_b"])
    return jnp.transpose(y, (0, 3, 1, 2))          # back to NCHW


# ------------------------------------------------------------------ deterministic params
def init_params(key, in_channels=1, out_channels=1, features=(8, 16, 32, 64)):
    cnt = [0]

    def nxt():
        cnt[0] += 1
        return jax.random.fold_in(key, cnt[0])

    def conv_w(cout, cin, k):
        return 0.1 * jax.random.normal(nxt(), (cout, cin, k, k), jnp.float32)

    def dc(cin, cout):
        return dict(w1=conv_w(cout, cin, 3),
                    g1=jnp.ones((cout,), jnp.float32), b1=jnp.zeros((cout,), jnp.float32),
                    w2=conv_w(cout, cout, 3),
                    g2=jnp.ones((cout,), jnp.float32), b2=jnp.zeros((cout,), jnp.float32))

    params = {"downs": [], "ups_t": [], "ups_dc": []}
    ch = in_channels
    for f in features:
        params["downs"].append(dc(ch, f))
        ch = f
    for f in reversed(features):
        params["ups_t"].append(dict(
            w=0.1 * jax.random.normal(nxt(), (2 * f, f, 2, 2), jnp.float32),
            b=0.1 * jax.random.normal(nxt(), (f,), jnp.float32)))
        params["ups_dc"].append(dc(2 * f, f))
    params["bottleneck"] = dc(features[-1], 2 * features[-1])
    params["final_w"] = 0.1 * jax.random.normal(
        nxt(), (out_channels, features[0], 1, 1), jnp.float32)
    params["final_b"] = 0.1 * jax.random.normal(nxt(), (out_channels,), jnp.float32)
    return params


# ------------------------------------------------------------------ main
if __name__ == "__main__":
    key = jax.random.PRNGKey(0)
    params = init_params(jax.random.fold_in(key, 1),
                         in_channels=1, out_channels=1, features=(8, 16, 32, 64))
    # input in PyTorch NCHW convention: (batch=2, channels=1, 16, 16)
    x = jax.random.normal(jax.random.fold_in(key, 2), (2, 1, 16, 16), jnp.float32)
    out = unet_forward(x, params)
    out = jax.block_until_ready(out)
    assert out.shape == (2, 1, 16, 16) and out.dtype == jnp.float32
    print("KERNEL_OK")
</pallas_src>

<mosaic_0001>
module attributes {stable_mosaic.version = 11 : i64} {
  func.func @_conv_bn_relu_kernel(%arg0: memref<512x9xbf16, #tpu.memory_space<vmem>>, %arg1: memref<9x8xbf16, #tpu.memory_space<vmem>>, %arg2: memref<1x8xf32, #tpu.memory_space<vmem>>, %arg3: memref<1x8xf32, #tpu.memory_space<vmem>>, %arg4: memref<512x8xf32, #tpu.memory_space<vmem>>) attributes {dimension_semantics = [], scalar_prefetch = 0 : i64, scratch_operands = 0 : i64, tpu.core_type = #tpu.core_type<tc>} {
    %c0 = arith.constant 0 : index
    %c0_0 = arith.constant 0 : index
    %0 = vector.load %arg0[%c0, %c0_0] : memref<512x9xbf16, #tpu.memory_space<vmem>>, vector<512x9xbf16>
    %c0_1 = arith.constant 0 : index
    %c0_2 = arith.constant 0 : index
    %1 = vector.load %arg1[%c0_1, %c0_2] : memref<9x8xbf16, #tpu.memory_space<vmem>>, vector<9x8xbf16>
    %cst = arith.constant dense<0.000000e+00> : vector<512x8xf32>
    %2 = tpu.matmul %0, %1, %cst {dimension_numbers = #tpu.dot_dimension_numbers<[1], [0], [0], [1], [0, 0, 1, 1], [], []>} : vector<512x9xbf16>, vector<9x8xbf16>, vector<512x8xf32> -> vector<512x8xf32>
    %cst_3 = arith.constant dense<0.000000e+00> : vector<8xf32>
    %3 = vector.multi_reduction <add>, %2, %cst_3 [0] : vector<512x8xf32> to vector<8xf32>
    %4 = vector.shape_cast %3 : vector<8xf32> to vector<1x8xf32>
    %cst_4 = arith.constant 0.001953125 : f32
    %5 = vector.broadcast %cst_4 : f32 to vector<1x8xf32>
    %6 = arith.mulf %4, %5 : vector<1x8xf32>
    %7 = arith.mulf %2, %2 : vector<512x8xf32>
    %cst_5 = arith.constant dense<0.000000e+00> : vector<8xf32>
    %8 = vector.multi_reduction <add>, %7, %cst_5 [0] : vector<512x8xf32> to vector<8xf32>
    %9 = vector.shape_cast %8 : vector<8xf32> to vector<1x8xf32>
    %cst_6 = arith.constant 0.001953125 : f32
    %10 = vector.broadcast %cst_6 : f32 to vector<1x8xf32>
    %11 = arith.mulf %9, %10 : vector<1x8xf32>
    %12 = arith.mulf %6, %6 : vector<1x8xf32>
    %13 = arith.subf %11, %12 : vector<1x8xf32>
    %cst_7 = arith.constant 0.000000e+00 : f32
    %14 = vector.broadcast %cst_7 : f32 to vector<1x8xf32>
    %15 = arith.maximumf %13, %14 : vector<1x8xf32>
    %c0_8 = arith.constant 0 : index
    %c0_9 = arith.constant 0 : index
    %16 = vector.load %arg2[%c0_8, %c0_9] : memref<1x8xf32, #tpu.memory_space<vmem>>, vector<1x8xf32>
    %cst_10 = arith.constant 9.99999974E-6 : f32
    %17 = vector.broadcast %cst_10 : f32 to vector<1x8xf32>
    %18 = arith.addf %15, %17 : vector<1x8xf32>
    %19 = math.rsqrt %18 : vector<1x8xf32>
    %20 = arith.mulf %16, %19 : vector<1x8xf32>
    %c0_11 = arith.constant 0 : index
    %c0_12 = arith.constant 0 : index
    %21 = vector.load %arg3[%c0_11, %c0_12] : memref<1x8xf32, #tpu.memory_space<vmem>>, vector<1x8xf32>
    %22 = arith.mulf %6, %20 : vector<1x8xf32>
    %23 = arith.subf %21, %22 : vector<1x8xf32>
    %24 = vector.broadcast %20 : vector<1x8xf32> to vector<512x8xf32>
    %25 = arith.mulf %2, %24 : vector<512x8xf32>
    %26 = vector.broadcast %23 : vector<1x8xf32> to vector<512x8xf32>
    %27 = arith.addf %25, %26 : vector<512x8xf32>
    %cst_13 = arith.constant 0.000000e+00 : f32
    %28 = vector.broadcast %cst_13 : f32 to vector<512x8xf32>
    %29 = arith.maximumf %27, %28 : vector<512x8xf32>
    %c0_14 = arith.constant 0 : index
    %c0_15 = arith.constant 0 : index
    %30 = vector.load %arg4[%c0_14, %c0_15] : memref<512x8xf32, #tpu.memory_space<vmem>>, vector<512x8xf32>
    tpu.vector_store %arg4[%c0_14, %c0_15], %29 {strides = array<i32>} : memref<512x8xf32, #tpu.memory_space<vmem>>, vector<512x8xf32>,
    return
  }
}

module attributes {stable_mosaic.version = 11 : i64} {
  func.func @_conv_bn_relu_kernel(%arg0: memref<512x72xbf16, #tpu.memory_space<vmem>>, %arg1: memref<72x8xbf16, #tpu.memory_space<vmem>>, %arg2: memref<1x8xf32, #tpu.memory_space<vmem>>, %arg3: memref<1x8xf32, #tpu.memory_space<vmem>>, %arg4: memref<512x8xf32, #tpu.memory_space<vmem>>) attributes {dimension_semantics = [], scalar_prefetch = 0 : i64, scratch_operands = 0 : i64, tpu.core_type = #tpu.core_type<tc>} {
    %c0 = arith.constant 0 : index
    %c0_0 = arith.constant 0 : index
    %0 = vector.load %arg0[%c0, %c0_0] : memref<512x72xbf16, #tpu.memory_space<vmem>>, vector<512x72xbf16>
    %c0_1 = arith.constant 0 : index
    %c0_2 = arith.constant 0 : index
    %1 = vector.load %arg1[%c0_1, %c0_2] : memref<72x8xbf16, #tpu.memory_space<vmem>>, vector<72x8xbf16>
    %cst = arith.constant dense<0.000000e+00> : vector<512x8xf32>
    %2 = tpu.matmul %0, %1, %cst {dimension_numbers = #tpu.dot_dimension_numbers<[1], [0], [0], [1], [0, 0, 1, 1], [], []>} : vector<512x72xbf16>, vector<72x8xbf16>, vector<512x8xf32> -> vector<512x8xf32>
    %cst_3 = arith.constant dense<0.000000e+00> : vector<8xf32>
    %3 = vector.multi_reduction <add>, %2, %cst_3 [0] : vector<512x8xf32> to vector<8xf32>
    %4 = vector.shape_cast %3 : vector<8xf32> to vector<1x8xf32>
    %cst_4 = arith.constant 0.001953125 : f32
    %5 = vector.broadcast %cst_4 : f32 to vector<1x8xf32>
    %6 = arith.mulf %4, %5 : vector<1x8xf32>
    %7 = arith.mulf %2, %2 : vector<512x8xf32>
    %cst_5 = arith.constant dense<0.000000e+00> : vector<8xf32>
    %8 = vector.multi_reduction <add>, %7, %cst_5 [0] : vector<512x8xf32> to vector<8xf32>
    %9 = vector.shape_cast %8 : vector<8xf32> to vector<1x8xf32>
    %cst_6 = arith.constant 0.001953125 : f32
    %10 = vector.broadcast %cst_6 : f32 to vector<1x8xf32>
    %11 = arith.mulf %9, %10 : vector<1x8xf32>
    %12 = arith.mulf %6, %6 : vector<1x8xf32>
    %13 = arith.subf %11, %12 : vector<1x8xf32>
    %cst_7 = arith.constant 0.000000e+00 : f32
    %14 = vector.broadcast %cst_7 : f32 to vector<1x8xf32>
    %15 = arith.maximumf %13, %14 : vector<1x8xf32>
    %c0_8 = arith.constant 0 : index
    %c0_9 = arith.constant 0 : index
    %16 = vector.load %arg2[%c0_8, %c0_9] : memref<1x8xf32, #tpu.memory_space<vmem>>, vector<1x8xf32>
    %cst_10 = arith.constant 9.99999974E-6 : f32
    %17 = vector.broadcast %cst_10 : f32 to vector<1x8xf32>
    %18 = arith.addf %15, %17 : vector<1x8xf32>
    %19 = math.rsqrt %18 : vector<1x8xf32>
    %20 = arith.mulf %16, %19 : vector<1x8xf32>
    %c0_11 = arith.constant 0 : index
    %c0_12 = arith.constant 0 : index
    %21 = vector.load %arg3[%c0_11, %c0_12] : memref<1x8xf32, #tpu.memory_space<vmem>>, vector<1x8xf32>
    %22 = arith.mulf %6, %20 : vector<1x8xf32>
    %23 = arith.subf %21, %22 : vector<1x8xf32>
    %24 = vector.broadcast %20 : vector<1x8xf32> to vector<512x8xf32>
    %25 = arith.mulf %2, %24 : vector<512x8xf32>
    %26 = vector.broadcast %23 : vector<1x8xf32> to vector<512x8xf32>
    %27 = arith.addf %25, %26 : vector<512x8xf32>
    %cst_13 = arith.constant 0.000000e+00 : f32
    %28 = vector.broadcast %cst_13 : f32 to vector<512x8xf32>
    %29 = arith.maximumf %27, %28 : vector<512x8xf32>
    %c0_14 = arith.constant 0 : index
    %c0_15 = arith.constant 0 : index
    %30 = vector.load %arg4[%c0_14, %c0_15] : memref<512x8xf32, #tpu.memory_space<vmem>>, vector<512x8xf32>
    tpu.vector_store %arg4[%c0_14, %c0_15], %29 {strides = array<i32>} : memref<512x8xf32, #tpu.memory_space<vmem>>, vector<512x8xf32>,
    return
  }
}

module attributes {stable_mosaic.version = 11 : i64} {
  func.func @_maxpool4_kernel(%arg0: memref<4x128x8xf32, #tpu.memory_space<vmem>>, %arg1: memref<128x8xf32, #tpu.memory_space<vmem>>) attributes {dimension_semantics = [], scalar_prefetch = 0 : i64, scratch_operands = 0 : i64, tpu.core_type = #tpu.core_type<tc>} {
    %c0 = arith.constant 0 : index
    %c0_0 = arith.constant 0 : index
    %c0_1 = arith.constant 0 : index
    %0 = vector.load %arg0[%c0, %c0_0, %c0_1] : memref<4x128x8xf32, #tpu.memory_space<vmem>>, vector<1x128x8xf32>
    %1 = vector.shape_cast %0 : vector<1x128x8xf32> to vector<128x8xf32>
    %c1 = arith.constant 1 : index
    %c0_2 = arith.constant 0 : index
    %c0_3 = arith.constant 0 : index
    %2 = vector.load %arg0[%c1, %c0_2, %c0_3] : memref<4x128x8xf32, #tpu.memory_space<vmem>>, vector<1x128x8xf32>
    %3 = vector.shape_cast %2 : vector<1x128x8xf32> to vector<128x8xf32>
    %4 = arith.maximumf %1, %3 : vector<128x8xf32>
    %c2 = arith.constant 2 : index
    %c0_4 = arith.constant 0 : index
    %c0_5 = arith.constant 0 : index
    %5 = vector.load %arg0[%c2, %c0_4, %c0_5] : memref<4x128x8xf32, #tpu.memory_space<vmem>>, vector<1x128x8xf32>
    %6 = vector.shape_cast %5 : vector<1x128x8xf32> to vector<128x8xf32>
    %c3 = arith.constant 3 : index
    %c0_6 = arith.constant 0 : index
    %c0_7 = arith.constant 0 : index
    %7 = vector.load %arg0[%c3, %c0_6, %c0_7] : memref<4x128x8xf32, #tpu.memory_space<vmem>>, vector<1x128x8xf32>
    %8 = vector.shape_cast %7 : vector<1x128x8xf32> to vector<128x8xf32>
    %9 = arith.maximumf %6, %8 : vector<128x8xf32>
    %10 = arith.maximumf %4, %9 : vector<128x8xf32>
    %c0_8 = arith.constant 0 : index
    %c0_9 = arith.constant 0 : index
    %11 = vector.load %arg1[%c0_8, %c0_9] : memref<128x8xf32, #tpu.memory_space<vmem>>, vector<128x8xf32>
    tpu.vector_store %arg1[%c0_8, %c0_9], %10 {strides = array<i32>} : memref<128x8xf32, #tpu.memory_space<vmem>>, vector<128x8xf32>,
    return
  }
}

module attributes {stable_mosaic.version = 11 : i64} {
  func.func @_conv_bn_relu_kernel(%arg0: memref<128x72xbf16, #tpu.memory_space<vmem>>, %arg1: memref<72x16xbf16, #tpu.memory_space<vmem>>, %arg2: memref<1x16xf32, #tpu.memory_space<vmem>>, %arg3: memref<1x16xf32, #tpu.memory_space<vmem>>, %arg4: memref<128x16xf32, #tpu.memory_space<vmem>>) attributes {dimension_semantics = [], scalar_prefetch = 0 : i64, scratch_operands = 0 : i64, tpu.core_type = #tpu.core_type<tc>} {
    %c0 = arith.constant 0 : index
    %c0_0 = arith.constant 0 : index
    %0 = vector.load %arg0[%c0, %c0_0] : memref<128x72xbf16, #tpu.memory_space<vmem>>, vector<128x72xbf16>
    %c0_1 = arith.constant 0 : index
    %c0_2 = arith.constant 0 : index
    %1 = vector.load %arg1[%c0_1, %c0_2] : memref<72x16xbf16, #tpu.memory_space<vmem>>, vector<72x16xbf16>
    %cst = arith.constant dense<0.000000e+00> : vector<128x16xf32>
    %2 = tpu.matmul %0, %1, %cst {dimension_numbers = #tpu.dot_dimension_numbers<[1], [0], [0], [1], [0, 0, 1, 1], [], []>} : vector<128x72xbf16>, vector<72x16xbf16>, vector<128x16xf32> -> vector<128x16xf32>
    %cst_3 = arith.constant dense<0.000000e+00> : vector<16xf32>
    %3 = vector.multi_reduction <add>, %2, %cst_3 [0] : vector<128x16xf32> to vector<16xf32>
    %4 = vector.shape_cast %3 : vector<16xf32> to vector<1x16xf32>
    %cst_4 = arith.constant 7.812500e-03 : f32
    %5 = vector.broadcast %cst_4 : f32 to vector<1x16xf32>
    %6 = arith.mulf %4, %5 : vector<1x16xf32>
    %7 = arith.mulf %2, %2 : vector<128x16xf32>
    %cst_5 = arith.constant dense<0.000000e+00> : vector<16xf32>
    %8 = vector.multi_reduction <add>, %7, %cst_5 [0] : vector<128x16xf32> to vector<16xf32>
    %9 = vector.shape_cast %8 : vector<16xf32> to vector<1x16xf32>
    %cst_6 = arith.constant 7.812500e-03 : f32
    %10 = vector.broadcast %cst_6 : f32 to vector<1x16xf32>
    %11 = arith.mulf %9, %10 : vector<1x16xf32>
    %12 = arith.mulf %6, %6 : vector<1x16xf32>
    %13 = arith.subf %11, %12 : vector<1x16xf32>
    %cst_7 = arith.constant 0.000000e+00 : f32
    %14 = vector.broadcast %cst_7 : f32 to vector<1x16xf32>
    %15 = arith.maximumf %13, %14 : vector<1x16xf32>
    %c0_8 = arith.constant 0 : index
    %c0_9 = arith.constant 0 : index
    %16 = vector.load %arg2[%c0_8, %c0_9] : memref<1x16xf32, #tpu.memory_space<vmem>>, vector<1x16xf32>
    %cst_10 = arith.constant 9.99999974E-6 : f32
    %17 = vector.broadcast %cst_10 : f32 to vector<1x16xf32>
    %18 = arith.addf %15, %17 : vector<1x16xf32>
    %19 = math.rsqrt %18 : vector<1x16xf32>
    %20 = arith.mulf %16, %19 : vector<1x16xf32>
    %c0_11 = arith.constant 0 : index
    %c0_12 = arith.constant 0 : index
    %21 = vector.load %arg3[%c0_11, %c0_12] : memref<1x16xf32, #tpu.memory_space<vmem>>, vector<1x16xf32>
    %22 = arith.mulf %6, %20 : vector<1x16xf32>
    %23 = arith.subf %21, %22 : vector<1x16xf32>
    %24 = vector.broadcast %20 : vector<1x16xf32> to vector<128x16xf32>
    %25 = arith.mulf %2, %24 : vector<128x16xf32>
    %26 = vector.broadcast %23 : vector<1x16xf32> to vector<128x16xf32>
    %27 = arith.addf %25, %26 : vector<128x16xf32>
    %cst_13 = arith.constant 0.000000e+00 : f32
    %28 = vector.broadcast %cst_13 : f32 to vector<128x16xf32>
    %29 = arith.maximumf %27, %28 : vector<128x16xf32>
    %c0_14 = arith.constant 0 : index
    %c0_15 = arith.constant 0 : index
    %30 = vector.load %arg4[%c0_14, %c0_15] : memref<128x16xf32, #tpu.memory_space<vmem>>, vector<128x16xf32>
    tpu.vector_store %arg4[%c0_14, %c0_15], %29 {strides = array<i32>} : memref<128x16xf32, #tpu.memory_space<vmem>>, vector<128x16xf32>,
    return
  }
}

module attributes {stable_mosaic.version = 11 : i64} {
  func.func @_conv_bn_relu_kernel(%arg0: memref<128x144xbf16, #tpu.memory_space<vmem>>, %arg1: memref<144x16xbf16, #tpu.memory_space<vmem>>, %arg2: memref<1x16xf32, #tpu.memory_space<vmem>>, %arg3: memref<1x16xf32, #tpu.memory_space<vmem>>, %arg4: memref<128x16xf32, #tpu.memory_space<vmem>>) attributes {dimension_semantics = [], scalar_prefetch = 0 : i64, scratch_operands = 0 : i64, tpu.core_type = #tpu.core_type<tc>} {
    %c0 = arith.constant 0 : index
    %c0_0 = arith.constant 0 : index
    %0 = vector.load %arg0[%c0, %c0_0] : memref<128x144xbf16, #tpu.memory_space<vmem>>, vector<128x144xbf16>
    %c0_1 = arith.constant 0 : index
    %c0_2 = arith.constant 0 : index
    %1 = vector.load %arg1[%c0_1, %c0_2] : memref<144x16xbf16, #tpu.memory_space<vmem>>, vector<144x16xbf16>
    %cst = arith.constant dense<0.000000e+00> : vector<128x16xf32>
    %2 = tpu.matmul %0, %1, %cst {dimension_numbers = #tpu.dot_dimension_numbers<[1], [0], [0], [1], [0, 0, 1, 1], [], []>} : vector<128x144xbf16>, vector<144x16xbf16>, vector<128x16xf32> -> vector<128x16xf32>
    %cst_3 = arith.constant dense<0.000000e+00> : vector<16xf32>
    %3 = vector.multi_reduction <add>, %2, %cst_3 [0] : vector<128x16xf32> to vector<16xf32>
    %4 = vector.shape_cast %3 : vector<16xf32> to vector<1x16xf32>
    %cst_4 = arith.constant 7.812500e-03 : f32
    %5 = vector.broadcast %cst_4 : f32 to vector<1x16xf32>
    %6 = arith.mulf %4, %5 : vector<1x16xf32>
    %7 = arith.mulf %2, %2 : vector<128x16xf32>
    %cst_5 = arith.constant dense<0.000000e+00> : vector<16xf32>
    %8 = vector.multi_reduction <add>, %7, %cst_5 [0] : vector<128x16xf32> to vector<16xf32>
    %9 = vector.shape_cast %8 : vector<16xf32> to vector<1x16xf32>
    %cst_6 = arith.constant 7.812500e-03 : f32
    %10 = vector.broadcast %cst_6 : f32 to vector<1x16xf32>
    %11 = arith.mulf %9, %10 : vector<1x16xf32>
    %12 = arith.mulf %6, %6 : vector<1x16xf32>
    %13 = arith.subf %11, %12 : vector<1x16xf32>
    %cst_7 = arith.constant 0.000000e+00 : f32
    %14 = vector.broadcast %cst_7 : f32 to vector<1x16xf32>
    %15 = arith.maximumf %13, %14 : vector<1x16xf32>
    %c0_8 = arith.constant 0 : index
    %c0_9 = arith.constant 0 : index
    %16 = vector.load %arg2[%c0_8, %c0_9] : memref<1x16xf32, #tpu.memory_space<vmem>>, vector<1x16xf32>
    %cst_10 = arith.constant 9.99999974E-6 : f32
    %17 = vector.broadcast %cst_10 : f32 to vector<1x16xf32>
    %18 = arith.addf %15, %17 : vector<1x16xf32>
    %19 = math.rsqrt %18 : vector<1x16xf32>
    %20 = arith.mulf %16, %19 : vector<1x16xf32>
    %c0_11 = arith.constant 0 : index
    %c0_12 = arith.constant 0 : index
    %21 = vector.load %arg3[%c0_11, %c0_12] : memref<1x16xf32, #tpu.memory_space<vmem>>, vector<1x16xf32>
    %22 = arith.mulf %6, %20 : vector<1x16xf32>
    %23 = arith.subf %21, %22 : vector<1x16xf32>
    %24 = vector.broadcast %20 : vector<1x16xf32> to vector<128x16xf32>
    %25 = arith.mulf %2, %24 : vector<128x16xf32>
    %26 = vector.broadcast %23 : vector<1x16xf32> to vector<128x16xf32>
    %27 = arith.addf %25, %26 : vector<128x16xf32>
    %cst_13 = arith.constant 0.000000e+00 : f32
    %28 = vector.broadcast %cst_13 : f32 to vector<128x16xf32>
    %29 = arith.maximumf %27, %28 : vector<128x16xf32>
    %c0_14 = arith.constant 0 : index
    %c0_15 = arith.constant 0 : index
    %30 = vector.load %arg4[%c0_14, %c0_15] : memref<128x16xf32, #tpu.memory_space<vmem>>, vector<128x16xf32>
    tpu.vector_store %arg4[%c0_14, %c0_15], %29 {strides = array<i32>} : memref<128x16xf32, #tpu.memory_space<vmem>>, vector<128x16xf32>,
    return
  }
}

module attributes {stable_mosaic.version = 11 : i64} {
  func.func @_maxpool4_kernel(%arg0: memref<4x32x16xf32, #tpu.memory_space<vmem>>, %arg1: memref<32x16xf32, #tpu.memory_space<vmem>>) attributes {dimension_semantics = [], scalar_prefetch = 0 : i64, scratch_operands = 0 : i64, tpu.core_type = #tpu.core_type<tc>} {
    %c0 = arith.constant 0 : index
    %c0_0 = arith.constant 0 : index
    %c0_1 = arith.constant 0 : index
    %0 = vector.load %arg0[%c0, %c0_0, %c0_1] : memref<4x32x16xf32, #tpu.memory_space<vmem>>, vector<1x32x16xf32>
    %1 = vector.shape_cast %0 : vector<1x32x16xf32> to vector<32x16xf32>
    %c1 = arith.constant 1 : index
    %c0_2 = arith.constant 0 : index
    %c0_3 = arith.constant 0 : index
    %2 = vector.load %arg0[%c1, %c0_2, %c0_3] : memref<4x32x16xf32, #tpu.memory_space<vmem>>, vector<1x32x16xf32>
    %3 = vector.shape_cast %2 : vector<1x32x16xf32> to vector<32x16xf32>
    %4 = arith.maximumf %1, %3 : vector<32x16xf32>
    %c2 = arith.constant 2 : index
    %c0_4 = arith.constant 0 : index
    %c0_5 = arith.constant 0 : index
    %5 = vector.load %arg0[%c2, %c0_4, %c0_5] : memref<4x32x16xf32, #tpu.memory_space<vmem>>, vector<1x32x16xf32>
    %6 = vector.shape_cast %5 : vector<1x32x16xf32> to vector<32x16xf32>
    %c3 = arith.constant 3 : index
    %c0_6 = arith.constant 0 : index
    %c0_7 = arith.constant 0 : index
    %7 = vector.load %arg0[%c3, %c0_6, %c0_7] : memref<4x32x16xf32, #tpu.memory_space<vmem>>, vector<1x32x16xf32>
    %8 = vector.shape_cast %7 : vector<1x32x16xf32> to vector<32x16xf32>
    %9 = arith.maximumf %6, %8 : vector<32x16xf32>
    %10 = arith.maximumf %4, %9 : vector<32x16xf32>
    %c0_8 = arith.constant 0 : index
    %c0_9 = arith.constant 0 : index
    %11 = vector.load %arg1[%c0_8, %c0_9] : memref<32x16xf32, #tpu.memory_space<vmem>>, vector<32x16xf32>
    tpu.vector_store %arg1[%c0_8, %c0_9], %10 {strides = array<i32>} : memref<32x16xf32, #tpu.memory_space<vmem>>, vector<32x16xf32>,
    return
  }
}

module attributes {stable_mosaic.version = 11 : i64} {
  func.func @_conv_bn_relu_kernel(%arg0: memref<32x144xbf16, #tpu.memory_space<vmem>>, %arg1: memref<144x32xbf16, #tpu.memory_space<vmem>>, %arg2: memref<1x32xf32, #tpu.memory_space<vmem>>, %arg3: memref<1x32xf32, #tpu.memory_space<vmem>>, %arg4: memref<32x32xf32, #tpu.memory_space<vmem>>) attributes {dimension_semantics = [], scalar_prefetch = 0 : i64, scratch_operands = 0 : i64, tpu.core_type = #tpu.core_type<tc>} {
    %c0 = arith.constant 0 : index
    %c0_0 = arith.constant 0 : index
    %0 = vector.load %arg0[%c0, %c0_0] : memref<32x144xbf16, #tpu.memory_space<vmem>>, vector<32x144xbf16>
    %c0_1 = arith.constant 0 : index
    %c0_2 = arith.constant 0 : index
    %1 = vector.load %arg1[%c0_1, %c0_2] : memref<144x32xbf16, #tpu.memory_space<vmem>>, vector<144x32xbf16>
    %cst = arith.constant dense<0.000000e+00> : vector<32x32xf32>
    %2 = tpu.matmul %0, %1, %cst {dimension_numbers = #tpu.dot_dimension_numbers<[1], [0], [0], [1], [0, 0, 1, 1], [], []>} : vector<32x144xbf16>, vector<144x32xbf16>, vector<32x32xf32> -> vector<32x32xf32>
    %cst_3 = arith.constant dense<0.000000e+00> : vector<32xf32>
    %3 = vector.multi_reduction <add>, %2, %cst_3 [0] : vector<32x32xf32> to vector<32xf32>
    %4 = vector.shape_cast %3 : vector<32xf32> to vector<1x32xf32>
    %cst_4 = arith.constant 3.125000e-02 : f32
    %5 = vector.broadcast %cst_4 : f32 to vector<1x32xf32>
    %6 = arith.mulf %4, %5 : vector<1x32xf32>
    %7 = arith.mulf %2, %2 : vector<32x32xf32>
    %cst_5 = arith.constant dense<0.000000e+00> : vector<32xf32>
    %8 = vector.multi_reduction <add>, %7, %cst_5 [0] : vector<32x32xf32> to vector<32xf32>
    %9 = vector.shape_cast %8 : vector<32xf32> to vector<1x32xf32>
    %cst_6 = arith.constant 3.125000e-02 : f32
    %10 = vector.broadcast %cst_6 : f32 to vector<1x32xf32>
    %11 = arith.mulf %9, %10 : vector<1x32xf32>
    %12 = arith.mulf %6, %6 : vector<1x32xf32>
    %13 = arith.subf %11, %12 : vector<1x32xf32>
    %cst_7 = arith.constant 0.000000e+00 : f32
    %14 = vector.broadcast %cst_7 : f32 to vector<1x32xf32>
    %15 = arith.maximumf %13, %14 : vector<1x32xf32>
    %c0_8 = arith.constant 0 : index
    %c0_9 = arith.constant 0 : index
    %16 = vector.load %arg2[%c0_8, %c0_9] : memref<1x32xf32, #tpu.memory_space<vmem>>, vector<1x32xf32>
    %cst_10 = arith.constant 9.99999974E-6 : f32
    %17 = vector.broadcast %cst_10 : f32 to vector<1x32xf32>
    %18 = arith.addf %15, %17 : vector<1x32xf32>
    %19 = math.rsqrt %18 : vector<1x32xf32>
    %20 = arith.mulf %16, %19 : vector<1x32xf32>
    %c0_11 = arith.constant 0 : index
    %c0_12 = arith.constant 0 : index
    %21 = vector.load %arg3[%c0_11, %c0_12] : memref<1x32xf32, #tpu.memory_space<vmem>>, vector<1x32xf32>
    %22 = arith.mulf %6, %20 : vector<1x32xf32>
    %23 = arith.subf %21, %22 : vector<1x32xf32>
    %24 = vector.broadcast %20 : vector<1x32xf32> to vector<32x32xf32>
    %25 = arith.mulf %2, %24 : vector<32x32xf32>
    %26 = vector.broadcast %23 : vector<1x32xf32> to vector<32x32xf32>
    %27 = arith.addf %25, %26 : vector<32x32xf32>
    %cst_13 = arith.constant 0.000000e+00 : f32
    %28 = vector.broadcast %cst_13 : f32 to vector<32x32xf32>
    %29 = arith.maximumf %27, %28 : vector<32x32xf32>
    %c0_14 = arith.constant 0 : index
    %c0_15 = arith.constant 0 : index
    %30 = vector.load %arg4[%c0_14, %c0_15] : memref<32x32xf32, #tpu.memory_space<vmem>>, vector<32x32xf32>
    tpu.vector_store %arg4[%c0_14, %c0_15], %29 {strides = array<i32>} : memref<32x32xf32, #tpu.memory_space<vmem>>, vector<32x32xf32>,
    return
  }
}

module attributes {stable_mosaic.version = 11 : i64} {
  func.func @_conv_bn_relu_kernel(%arg0: memref<32x288xbf16, #tpu.memory_space<vmem>>, %arg1: memref<288x32xbf16, #tpu.memory_space<vmem>>, %arg2: memref<1x32xf32, #tpu.memory_space<vmem>>, %arg3: memref<1x32xf32, #tpu.memory_space<vmem>>, %arg4: memref<32x32xf32, #tpu.memory_space<vmem>>) attributes {dimension_semantics = [], scalar_prefetch = 0 : i64, scratch_operands = 0 : i64, tpu.core_type = #tpu.core_type<tc>} {
    %c0 = arith.constant 0 : index
    %c0_0 = arith.constant 0 : index
    %0 = vector.load %arg0[%c0, %c0_0] : memref<32x288xbf16, #tpu.memory_space<vmem>>, vector<32x288xbf16>
    %c0_1 = arith.constant 0 : index
    %c0_2 = arith.constant 0 : index
    %1 = vector.load %arg1[%c0_1, %c0_2] : memref<288x32xbf16, #tpu.memory_space<vmem>>, vector<288x32xbf16>
    %cst = arith.constant dense<0.000000e+00> : vector<32x32xf32>
    %2 = tpu.matmul %0, %1, %cst {dimension_numbers = #tpu.dot_dimension_numbers<[1], [0], [0], [1], [0, 0, 1, 1], [], []>} : vector<32x288xbf16>, vector<288x32xbf16>, vector<32x32xf32> -> vector<32x32xf32>
    %cst_3 = arith.constant dense<0.000000e+00> : vector<32xf32>
    %3 = vector.multi_reduction <add>, %2, %cst_3 [0] : vector<32x32xf32> to vector<32xf32>
    %4 = vector.shape_cast %3 : vector<32xf32> to vector<1x32xf32>
    %cst_4 = arith.constant 3.125000e-02 : f32
    %5 = vector.broadcast %cst_4 : f32 to vector<1x32xf32>
    %6 = arith.mulf %4, %5 : vector<1x32xf32>
    %7 = arith.mulf %2, %2 : vector<32x32xf32>
    %cst_5 = arith.constant dense<0.000000e+00> : vector<32xf32>
    %8 = vector.multi_reduction <add>, %7, %cst_5 [0] : vector<32x32xf32> to vector<32xf32>
    %9 = vector.shape_cast %8 : vector<32xf32> to vector<1x32xf32>
    %cst_6 = arith.constant 3.125000e-02 : f32
    %10 = vector.broadcast %cst_6 : f32 to vector<1x32xf32>
    %11 = arith.mulf %9, %10 : vector<1x32xf32>
    %12 = arith.mulf %6, %6 : vector<1x32xf32>
    %13 = arith.subf %11, %12 : vector<1x32xf32>
    %cst_7 = arith.constant 0.000000e+00 : f32
    %14 = vector.broadcast %cst_7 : f32 to vector<1x32xf32>
    %15 = arith.maximumf %13, %14 : vector<1x32xf32>
    %c0_8 = arith.constant 0 : index
    %c0_9 = arith.constant 0 : index
    %16 = vector.load %arg2[%c0_8, %c0_9] : memref<1x32xf32, #tpu.memory_space<vmem>>, vector<1x32xf32>
    %cst_10 = arith.constant 9.99999974E-6 : f32
    %17 = vector.broadcast %cst_10 : f32 to vector<1x32xf32>
    %18 = arith.addf %15, %17 : vector<1x32xf32>
    %19 = math.rsqrt %18 : vector<1x32xf32>
    %20 = arith.mulf %16, %19 : vector<1x32xf32>
    %c0_11 = arith.constant 0 : index
    %c0_12 = arith.constant 0 : index
    %21 = vector.load %arg3[%c0_11, %c0_12] : memref<1x32xf32, #tpu.memory_space<vmem>>, vector<1x32xf32>
    %22 = arith.mulf %6, %20 : vector<1x32xf32>
    %23 = arith.subf %21, %22 : vector<1x32xf32>
    %24 = vector.broadcast %20 : vector<1x32xf32> to vector<32x32xf32>
    %25 = arith.mulf %2, %24 : vector<32x32xf32>
    %26 = vector.broadcast %23 : vector<1x32xf32> to vector<32x32xf32>
    %27 = arith.addf %25, %26 : vector<32x32xf32>
    %cst_13 = arith.constant 0.000000e+00 : f32
    %28 = vector.broadcast %cst_13 : f32 to vector<32x32xf32>
    %29 = arith.maximumf %27, %28 : vector<32x32xf32>
    %c0_14 = arith.constant 0 : index
    %c0_15 = arith.constant 0 : index
    %30 = vector.load %arg4[%c0_14, %c0_15] : memref<32x32xf32, #tpu.memory_space<vmem>>, vector<32x32xf32>
    tpu.vector_store %arg4[%c0_14, %c0_15], %29 {strides = array<i32>} : memref<32x32xf32, #tpu.memory_space<vmem>>, vector<32x32xf32>,
    return
  }
}

module attributes {stable_mosaic.version = 11 : i64} {
  func.func @_maxpool4_kernel(%arg0: memref<4x8x32xf32, #tpu.memory_space<vmem>>, %arg1: memref<8x32xf32, #tpu.memory_space<vmem>>) attributes {dimension_semantics = [], scalar_prefetch = 0 : i64, scratch_operands = 0 : i64, tpu.core_type = #tpu.core_type<tc>} {
    %c0 = arith.constant 0 : index
    %c0_0 = arith.constant 0 : index
    %c0_1 = arith.constant 0 : index
    %0 = vector.load %arg0[%c0, %c0_0, %c0_1] : memref<4x8x32xf32, #tpu.memory_space<vmem>>, vector<1x8x32xf32>
    %1 = vector.shape_cast %0 : vector<1x8x32xf32> to vector<8x32xf32>
    %c1 = arith.constant 1 : index
    %c0_2 = arith.constant 0 : index
    %c0_3 = arith.constant 0 : index
    %2 = vector.load %arg0[%c1, %c0_2, %c0_3] : memref<4x8x32xf32, #tpu.memory_space<vmem>>, vector<1x8x32xf32>
    %3 = vector.shape_cast %2 : vector<1x8x32xf32> to vector<8x32xf32>
    %4 = arith.maximumf %1, %3 : vector<8x32xf32>
    %c2 = arith.constant 2 : index
    %c0_4 = arith.constant 0 : index
    %c0_5 = arith.constant 0 : index
    %5 = vector.load %arg0[%c2, %c0_4, %c0_5] : memref<4x8x32xf32, #tpu.memory_space<vmem>>, vector<1x8x32xf32>
    %6 = vector.shape_cast %5 : vector<1x8x32xf32> to vector<8x32xf32>
    %c3 = arith.constant 3 : index
    %c0_6 = arith.constant 0 : index
    %c0_7 = arith.constant 0 : index
    %7 = vector.load %arg0[%c3, %c0_6, %c0_7] : memref<4x8x32xf32, #tpu.memory_space<vmem>>, vector<1x8x32xf32>
    %8 = vector.shape_cast %7 : vector<1x8x32xf32> to vector<8x32xf32>
    %9 = arith.maximumf %6, %8 : vector<8x32xf32>
    %10 = arith.maximumf %4, %9 : vector<8x32xf32>
    %c0_8 = arith.constant 0 : index
    %c0_9 = arith.constant 0 : index
    %11 = vector.load %arg1[%c0_8, %c0_9] : memref<8x32xf32, #tpu.memory_space<vmem>>, vector<8x32xf32>
    tpu.vector_store %arg1[%c0_8, %c0_9], %10 {strides = array<i32>} : memref<8x32xf32, #tpu.memory_space<vmem>>, vector<8x32xf32>,
    return
  }
}

module attributes {stable_mosaic.version = 11 : i64} {
  func.func @_conv_bn_relu_kernel(%arg0: memref<8x288xbf16, #tpu.memory_space<vmem>>, %arg1: memref<288x64xbf16, #tpu.memory_space<vmem>>, %arg2: memref<1x64xf32, #tpu.memory_space<vmem>>, %arg3: memref<1x64xf32, #tpu.memory_space<vmem>>, %arg4: memref<8x64xf32, #tpu.memory_space<vmem>>) attributes {dimension_semantics = [], scalar_prefetch = 0 : i64, scratch_operands = 0 : i64, tpu.core_type = #tpu.core_type<tc>} {
    %c0 = arith.constant 0 : index
    %c0_0 = arith.constant 0 : index
    %0 = vector.load %arg0[%c0, %c0_0] : memref<8x288xbf16, #tpu.memory_space<vmem>>, vector<8x288xbf16>
    %c0_1 = arith.constant 0 : index
    %c0_2 = arith.constant 0 : index
    %1 = vector.load %arg1[%c0_1, %c0_2] : memref<288x64xbf16, #tpu.memory_space<vmem>>, vector<288x64xbf16>
    %cst = arith.constant dense<0.000000e+00> : vector<8x64xf32>
    %2 = tpu.matmul %0, %1, %cst {dimension_numbers = #tpu.dot_dimension_numbers<[1], [0], [0], [1], [0, 0, 1, 1], [], []>} : vector<8x288xbf16>, vector<288x64xbf16>, vector<8x64xf32> -> vector<8x64xf32>
    %cst_3 = arith.constant dense<0.000000e+00> : vector<64xf32>
    %3 = vector.multi_reduction <add>, %2, %cst_3 [0] : vector<8x64xf32> to vector<64xf32>
    %4 = vector.shape_cast %3 : vector<64xf32> to vector<1x64xf32>
    %cst_4 = arith.constant 1.250000e-01 : f32
    %5 = vector.broadcast %cst_4 : f32 to vector<1x64xf32>
    %6 = arith.mulf %4, %5 : vector<1x64xf32>
    %7 = arith.mulf %2, %2 : vector<8x64xf32>
    %cst_5 = arith.constant dense<0.000000e+00> : vector<64xf32>
    %8 = vector.multi_reduction <add>, %7, %cst_5 [0] : vector<8x64xf32> to vector<64xf32>
    %9 = vector.shape_cast %8 : vector<64xf32> to vector<1x64xf32>
    %cst_6 = arith.constant 1.250000e-01 : f32
    %10 = vector.broadcast %cst_6 : f32 to vector<1x64xf32>
    %11 = arith.mulf %9, %10 : vector<1x64xf32>
    %12 = arith.mulf %6, %6 : vector<1x64xf32>
    %13 = arith.subf %11, %12 : vector<1x64xf32>
    %cst_7 = arith.constant 0.000000e+00 : f32
    %14 = vector.broadcast %cst_7 : f32 to vector<1x64xf32>
    %15 = arith.maximumf %13, %14 : vector<1x64xf32>
    %c0_8 = arith.constant 0 : index
    %c0_9 = arith.constant 0 : index
    %16 = vector.load %arg2[%c0_8, %c0_9] : memref<1x64xf32, #tpu.memory_space<vmem>>, vector<1x64xf32>
    %cst_10 = arith.constant 9.99999974E-6 : f32
    %17 = vector.broadcast %cst_10 : f32 to vector<1x64xf32>
    %18 = arith.addf %15, %17 : vector<1x64xf32>
    %19 = math.rsqrt %18 : vector<1x64xf32>
    %20 = arith.mulf %16, %19 : vector<1x64xf32>
    %c0_11 = arith.constant 0 : index
    %c0_12 = arith.constant 0 : index
    %21 = vector.load %arg3[%c0_11, %c0_12] : memref<1x64xf32, #tpu.memory_space<vmem>>, vector<1x64xf32>
    %22 = arith.mulf %6, %20 : vector<1x64xf32>
    %23 = arith.subf %21, %22 : vector<1x64xf32>
    %24 = vector.broadcast %20 : vector<1x64xf32> to vector<8x64xf32>
    %25 = arith.mulf %2, %24 : vector<8x64xf32>
    %26 = vector.broadcast %23 : vector<1x64xf32> to vector<8x64xf32>
    %27 = arith.addf %25, %26 : vector<8x64xf32>
    %cst_13 = arith.constant 0.000000e+00 : f32
    %28 = vector.broadcast %cst_13 : f32 to vector<8x64xf32>
    %29 = arith.maximumf %27, %28 : vector<8x64xf32>
    %c0_14 = arith.constant 0 : index
    %c0_15 = arith.constant 0 : index
    %30 = vector.load %arg4[%c0_14, %c0_15] : memref<8x64xf32, #tpu.memory_space<vmem>>, vector<8x64xf32>
    tpu.vector_store %arg4[%c0_14, %c0_15], %29 {strides = array<i32>} : memref<8x64xf32, #tpu.memory_space<vmem>>, vector<8x64xf32>,
    return
  }
}

module attributes {stable_mosaic.version = 11 : i64} {
  func.func @_conv_bn_relu_kernel(%arg0: memref<8x576xbf16, #tpu.memory_space<vmem>>, %arg1: memref<576x64xbf16, #tpu.memory_space<vmem>>, %arg2: memref<1x64xf32, #tpu.memory_space<vmem>>, %arg3: memref<1x64xf32, #tpu.memory_space<vmem>>, %arg4: memref<8x64xf32, #tpu.memory_space<vmem>>) attributes {dimension_semantics = [], scalar_prefetch = 0 : i64, scratch_operands = 0 : i64, tpu.core_type = #tpu.core_type<tc>} {
    %c0 = arith.constant 0 : index
    %c0_0 = arith.constant 0 : index
    %0 = vector.load %arg0[%c0, %c0_0] : memref<8x576xbf16, #tpu.memory_space<vmem>>, vector<8x576xbf16>
    %c0_1 = arith.constant 0 : index
    %c0_2 = arith.constant 0 : index
    %1 = vector.load %arg1[%c0_1, %c0_2] : memref<576x64xbf16, #tpu.memory_space<vmem>>, vector<576x64xbf16>
    %cst = arith.constant dense<0.000000e+00> : vector<8x64xf32>
    %2 = tpu.matmul %0, %1, %cst {dimension_numbers = #tpu.dot_dimension_numbers<[1], [0], [0], [1], [0, 0, 1, 1], [], []>} : vector<8x576xbf16>, vector<576x64xbf16>, vector<8x64xf32> -> vector<8x64xf32>
    %cst_3 = arith.constant dense<0.000000e+00> : vector<64xf32>
    %3 = vector.multi_reduction <add>, %2, %cst_3 [0] : vector<8x64xf32> to vector<64xf32>
    %4 = vector.shape_cast %3 : vector<64xf32> to vector<1x64xf32>
    %cst_4 = arith.constant 1.250000e-01 : f32
    %5 = vector.broadcast %cst_4 : f32 to vector<1x64xf32>
    %6 = arith.mulf %4, %5 : vector<1x64xf32>
    %7 = arith.mulf %2, %2 : vector<8x64xf32>
    %cst_5 = arith.constant dense<0.000000e+00> : vector<64xf32>
    %8 = vector.multi_reduction <add>, %7, %cst_5 [0] : vector<8x64xf32> to vector<64xf32>
    %9 = vector.shape_cast %8 : vector<64xf32> to vector<1x64xf32>
    %cst_6 = arith.constant 1.250000e-01 : f32
    %10 = vector.broadcast %cst_6 : f32 to vector<1x64xf32>
    %11 = arith.mulf %9, %10 : vector<1x64xf32>
    %12 = arith.mulf %6, %6 : vector<1x64xf32>
    %13 = arith.subf %11, %12 : vector<1x64xf32>
    %cst_7 = arith.constant 0.000000e+00 : f32
    %14 = vector.broadcast %cst_7 : f32 to vector<1x64xf32>
    %15 = arith.maximumf %13, %14 : vector<1x64xf32>
    %c0_8 = arith.constant 0 : index
    %c0_9 = arith.constant 0 : index
    %16 = vector.load %arg2[%c0_8, %c0_9] : memref<1x64xf32, #tpu.memory_space<vmem>>, vector<1x64xf32>
    %cst_10 = arith.constant 9.99999974E-6 : f32
    %17 = vector.broadcast %cst_10 : f32 to vector<1x64xf32>
    %18 = arith.addf %15, %17 : vector<1x64xf32>
    %19 = math.rsqrt %18 : vector<1x64xf32>
    %20 = arith.mulf %16, %19 : vector<1x64xf32>
    %c0_11 = arith.constant 0 : index
    %c0_12 = arith.constant 0 : index
    %21 = vector.load %arg3[%c0_11, %c0_12] : memref<1x64xf32, #tpu.memory_space<vmem>>, vector<1x64xf32>
    %22 = arith.mulf %6, %20 : vector<1x64xf32>
    %23 = arith.subf %21, %22 : vector<1x64xf32>
    %24 = vector.broadcast %20 : vector<1x64xf32> to vector<8x64xf32>
    %25 = arith.mulf %2, %24 : vector<8x64xf32>
    %26 = vector.broadcast %23 : vector<1x64xf32> to vector<8x64xf32>
    %27 = arith.addf %25, %26 : vector<8x64xf32>
    %cst_13 = arith.constant 0.000000e+00 : f32
    %28 = vector.broadcast %cst_13 : f32 to vector<8x64xf32>
    %29 = arith.maximumf %27, %28 : vector<8x64xf32>
    %c0_14 = arith.constant 0 : index
    %c0_15 = arith.constant 0 : index
    %30 = vector.load %arg4[%c0_14, %c0_15] : memref<8x64xf32, #tpu.memory_space<vmem>>, vector<8x64xf32>
    tpu.vector_store %arg4[%c0_14, %c0_15], %29 {strides = array<i32>} : memref<8x64xf32, #tpu.memory_space<vmem>>, vector<8x64xf32>,
    return
  }
}

module attributes {stable_mosaic.version = 11 : i64} {
  func.func @_maxpool4_kernel(%arg0: memref<4x2x64xf32, #tpu.memory_space<vmem>>, %arg1: memref<2x64xf32, #tpu.memory_space<vmem>>) attributes {dimension_semantics = [], scalar_prefetch = 0 : i64, scratch_operands = 0 : i64, tpu.core_type = #tpu.core_type<tc>} {
    %c0 = arith.constant 0 : index
    %c0_0 = arith.constant 0 : index
    %c0_1 = arith.constant 0 : index
    %0 = vector.load %arg0[%c0, %c0_0, %c0_1] : memref<4x2x64xf32, #tpu.memory_space<vmem>>, vector<1x2x64xf32>
    %1 = vector.shape_cast %0 : vector<1x2x64xf32> to vector<2x64xf32>
    %c1 = arith.constant 1 : index
    %c0_2 = arith.constant 0 : index
    %c0_3 = arith.constant 0 : index
    %2 = vector.load %arg0[%c1, %c0_2, %c0_3] : memref<4x2x64xf32, #tpu.memory_space<vmem>>, vector<1x2x64xf32>
    %3 = vector.shape_cast %2 : vector<1x2x64xf32> to vector<2x64xf32>
    %4 = arith.maximumf %1, %3 : vector<2x64xf32>
    %c2 = arith.constant 2 : index
    %c0_4 = arith.constant 0 : index
    %c0_5 = arith.constant 0 : index
    %5 = vector.load %arg0[%c2, %c0_4, %c0_5] : memref<4x2x64xf32, #tpu.memory_space<vmem>>, vector<1x2x64xf32>
    %6 = vector.shape_cast %5 : vector<1x2x64xf32> to vector<2x64xf32>
    %c3 = arith.constant 3 : index
    %c0_6 = arith.constant 0 : index
    %c0_7 = arith.constant 0 : index
    %7 = vector.load %arg0[%c3, %c0_6, %c0_7] : memref<4x2x64xf32, #tpu.memory_space<vmem>>, vector<1x2x64xf32>
    %8 = vector.shape_cast %7 : vector<1x2x64xf32> to vector<2x64xf32>
    %9 = arith.maximumf %6, %8 : vector<2x64xf32>
    %10 = arith.maximumf %4, %9 : vector<2x64xf32>
    %c0_8 = arith.constant 0 : index
    %c0_9 = arith.constant 0 : index
    %11 = vector.load %arg1[%c0_8, %c0_9] : memref<2x64xf32, #tpu.memory_space<vmem>>, vector<2x64xf32>
    tpu.vector_store %arg1[%c0_8, %c0_9], %10 {strides = array<i32>} : memref<2x64xf32, #tpu.memory_space<vmem>>, vector<2x64xf32>,
    return
  }
}

module attributes {stable_mosaic.version = 11 : i64} {
  func.func @_conv_bn_relu_kernel(%arg0: memref<8x576xbf16, #tpu.memory_space<vmem>>, %arg1: memref<576x128xbf16, #tpu.memory_space<vmem>>, %arg2: memref<1x128xf32, #tpu.memory_space<vmem>>, %arg3: memref<1x128xf32, #tpu.memory_space<vmem>>, %arg4: memref<8x128xf32, #tpu.memory_space<vmem>>) attributes {dimension_semantics = [], scalar_prefetch = 0 : i64, scratch_operands = 0 : i64, tpu.core_type = #tpu.core_type<tc>} {
    %c0 = arith.constant 0 : index
    %c0_0 = arith.constant 0 : index
    %0 = vector.load %arg0[%c0, %c0_0] : memref<8x576xbf16, #tpu.memory_space<vmem>>, vector<8x576xbf16>
    %c0_1 = arith.constant 0 : index
    %c0_2 = arith.constant 0 : index
    %1 = vector.load %arg1[%c0_1, %c0_2] : memref<576x128xbf16, #tpu.memory_space<vmem>>, vector<576x128xbf16>
    %cst = arith.constant dense<0.000000e+00> : vector<8x128xf32>
    %2 = tpu.matmul %0, %1, %cst {dimension_numbers = #tpu.dot_dimension_numbers<[1], [0], [0], [1], [0, 0, 1, 1], [], []>} : vector<8x576xbf16>, vector<576x128xbf16>, vector<8x128xf32> -> vector<8x128xf32>
    %cst_3 = arith.constant dense<0.000000e+00> : vector<128xf32>
    %3 = vector.multi_reduction <add>, %2, %cst_3 [0] : vector<8x128xf32> to vector<128xf32>
    %4 = vector.shape_cast %3 : vector<128xf32> to vector<1x128xf32>
    %cst_4 = arith.constant 5.000000e-01 : f32
    %5 = vector.broadcast %cst_4 : f32 to vector<1x128xf32>
    %6 = arith.mulf %4, %5 : vector<1x128xf32>
    %7 = arith.mulf %2, %2 : vector<8x128xf32>
    %cst_5 = arith.constant dense<0.000000e+00> : vector<128xf32>
    %8 = vector.multi_reduction <add>, %7, %cst_5 [0] : vector<8x128xf32> to vector<128xf32>
    %9 = vector.shape_cast %8 : vector<128xf32> to vector<1x128xf32>
    %cst_6 = arith.constant 5.000000e-01 : f32
    %10 = vector.broadcast %cst_6 : f32 to vector<1x128xf32>
    %11 = arith.mulf %9, %10 : vector<1x128xf32>
    %12 = arith.mulf %6, %6 : vector<1x128xf32>
    %13 = arith.subf %11, %12 : vector<1x128xf32>
    %cst_7 = arith.constant 0.000000e+00 : f32
    %14 = vector.broadcast %cst_7 : f32 to vector<1x128xf32>
    %15 = arith.maximumf %13, %14 : vector<1x128xf32>
    %c0_8 = arith.constant 0 : index
    %c0_9 = arith.constant 0 : index
    %16 = vector.load %arg2[%c0_8, %c0_9] : memref<1x128xf32, #tpu.memory_space<vmem>>, vector<1x128xf32>
    %cst_10 = arith.constant 9.99999974E-6 : f32
    %17 = vector.broadcast %cst_10 : f32 to vector<1x128xf32>
    %18 = arith.addf %15, %17 : vector<1x128xf32>
    %19 = math.rsqrt %18 : vector<1x128xf32>
    %20 = arith.mulf %16, %19 : vector<1x128xf32>
    %c0_11 = arith.constant 0 : index
    %c0_12 = arith.constant 0 : index
    %21 = vector.load %arg3[%c0_11, %c0_12] : memref<1x128xf32, #tpu.memory_space<vmem>>, vector<1x128xf32>
    %22 = arith.mulf %6, %20 : vector<1x128xf32>
    %23 = arith.subf %21, %22 : vector<1x128xf32>
    %24 = vector.broadcast %20 : vector<1x128xf32> to vector<8x128xf32>
    %25 = arith.mulf %2, %24 : vector<8x128xf32>
    %26 = vector.broadcast %23 : vector<1x128xf32> to vector<8x128xf32>
    %27 = arith.addf %25, %26 : vector<8x128xf32>
    %cst_13 = arith.constant 0.000000e+00 : f32
    %28 = vector.broadcast %cst_13 : f32 to vector<8x128xf32>
    %29 = arith.maximumf %27, %28 : vector<8x128xf32>
    %c0_14 = arith.constant 0 : index
    %c0_15 = arith.constant 0 : index
    %30 = vector.load %arg4[%c0_14, %c0_15] : memref<8x128xf32, #tpu.memory_space<vmem>>, vector<8x128xf32>
    tpu.vector_store %arg4[%c0_14, %c0_15], %29 {strides = array<i32>} : memref<8x128xf32, #tpu.memory_space<vmem>>, vector<8x128xf32>,
    return
  }
}

module attributes {stable_mosaic.version = 11 : i64} {
  func.func @_conv_bn_relu_kernel(%arg0: memref<8x1152xbf16, #tpu.memory_space<vmem>>, %arg1: memref<1152x128xbf16, #tpu.memory_space<vmem>>, %arg2: memref<1x128xf32, #tpu.memory_space<vmem>>, %arg3: memref<1x128xf32, #tpu.memory_space<vmem>>, %arg4: memref<8x128xf32, #tpu.memory_space<vmem>>) attributes {dimension_semantics = [], scalar_prefetch = 0 : i64, scratch_operands = 0 : i64, tpu.core_type = #tpu.core_type<tc>} {
    %c0 = arith.constant 0 : index
    %c0_0 = arith.constant 0 : index
    %0 = vector.load %arg0[%c0, %c0_0] : memref<8x1152xbf16, #tpu.memory_space<vmem>>, vector<8x1152xbf16>
    %c0_1 = arith.constant 0 : index
    %c0_2 = arith.constant 0 : index
    %1 = vector.load %arg1[%c0_1, %c0_2] : memref<1152x128xbf16, #tpu.memory_space<vmem>>, vector<1152x128xbf16>
    %cst = arith.constant dense<0.000000e+00> : vector<8x128xf32>
    %2 = tpu.matmul %0, %1, %cst {dimension_numbers = #tpu.dot_dimension_numbers<[1], [0], [0], [1], [0, 0, 1, 1], [], []>} : vector<8x1152xbf16>, vector<1152x128xbf16>, vector<8x128xf32> -> vector<8x128xf32>
    %cst_3 = arith.constant dense<0.000000e+00> : vector<128xf32>
    %3 = vector.multi_reduction <add>, %2, %cst_3 [0] : vector<8x128xf32> to vector<128xf32>
    %4 = vector.shape_cast %3 : vector<128xf32> to vector<1x128xf32>
    %cst_4 = arith.constant 5.000000e-01 : f32
    %5 = vector.broadcast %cst_4 : f32 to vector<1x128xf32>
    %6 = arith.mulf %4, %5 : vector<1x128xf32>
    %7 = arith.mulf %2, %2 : vector<8x128xf32>
    %cst_5 = arith.constant dense<0.000000e+00> : vector<128xf32>
    %8 = vector.multi_reduction <add>, %7, %cst_5 [0] : vector<8x128xf32> to vector<128xf32>
    %9 = vector.shape_cast %8 : vector<128xf32> to vector<1x128xf32>
    %cst_6 = arith.constant 5.000000e-01 : f32
    %10 = vector.broadcast %cst_6 : f32 to vector<1x128xf32>
    %11 = arith.mulf %9, %10 : vector<1x128xf32>
    %12 = arith.mulf %6, %6 : vector<1x128xf32>
    %13 = arith.subf %11, %12 : vector<1x128xf32>
    %cst_7 = arith.constant 0.000000e+00 : f32
    %14 = vector.broadcast %cst_7 : f32 to vector<1x128xf32>
    %15 = arith.maximumf %13, %14 : vector<1x128xf32>
    %c0_8 = arith.constant 0 : index
    %c0_9 = arith.constant 0 : index
    %16 = vector.load %arg2[%c0_8, %c0_9] : memref<1x128xf32, #tpu.memory_space<vmem>>, vector<1x128xf32>
    %cst_10 = arith.constant 9.99999974E-6 : f32
    %17 = vector.broadcast %cst_10 : f32 to vector<1x128xf32>
    %18 = arith.addf %15, %17 : vector<1x128xf32>
    %19 = math.rsqrt %18 : vector<1x128xf32>
    %20 = arith.mulf %16, %19 : vector<1x128xf32>
    %c0_11 = arith.constant 0 : index
    %c0_12 = arith.constant 0 : index
    %21 = vector.load %arg3[%c0_11, %c0_12] : memref<1x128xf32, #tpu.memory_space<vmem>>, vector<1x128xf32>
    %22 = arith.mulf %6, %20 : vector<1x128xf32>
    %23 = arith.subf %21, %22 : vector<1x128xf32>
    %24 = vector.broadcast %20 : vector<1x128xf32> to vector<8x128xf32>
    %25 = arith.mulf %2, %24 : vector<8x128xf32>
    %26 = vector.broadcast %23 : vector<1x128xf32> to vector<8x128xf32>
    %27 = arith.addf %25, %26 : vector<8x128xf32>
    %cst_13 = arith.constant 0.000000e+00 : f32
    %28 = vector.broadcast %cst_13 : f32 to vector<8x128xf32>
    %29 = arith.maximumf %27, %28 : vector<8x128xf32>
    %c0_14 = arith.constant 0 : index
    %c0_15 = arith.constant 0 : index
    %30 = vector.load %arg4[%c0_14, %c0_15] : memref<8x128xf32, #tpu.memory_space<vmem>>, vector<8x128xf32>
    tpu.vector_store %arg4[%c0_14, %c0_15], %29 {strides = array<i32>} : memref<8x128xf32, #tpu.memory_space<vmem>>, vector<8x128xf32>,
    return
  }
}

module attributes {stable_mosaic.version = 11 : i64} {
  func.func @_matmul_bias_kernel(%arg0: memref<2x128xbf16, #tpu.memory_space<vmem>>, %arg1: memref<128x256xbf16, #tpu.memory_space<vmem>>, %arg2: memref<1x256xf32, #tpu.memory_space<vmem>>, %arg3: memref<2x256xf32, #tpu.memory_space<vmem>>) attributes {dimension_semantics = [], scalar_prefetch = 0 : i64, scratch_operands = 0 : i64, tpu.core_type = #tpu.core_type<tc>} {
    %c0 = arith.constant 0 : index
    %c0_0 = arith.constant 0 : index
    %0 = vector.load %arg0[%c0, %c0_0] : memref<2x128xbf16, #tpu.memory_space<vmem>>, vector<2x128xbf16>
    %c0_1 = arith.constant 0 : index
    %c0_2 = arith.constant 0 : index
    %1 = vector.load %arg1[%c0_1, %c0_2] : memref<128x256xbf16, #tpu.memory_space<vmem>>, vector<128x256xbf16>
    %cst = arith.constant dense<0.000000e+00> : vector<2x256xf32>
    %2 = tpu.matmul %0, %1, %cst {dimension_numbers = #tpu.dot_dimension_numbers<[1], [0], [0], [1], [0, 0, 1, 1], [], []>} : vector<2x128xbf16>, vector<128x256xbf16>, vector<2x256xf32> -> vector<2x256xf32>
    %c0_3 = arith.constant 0 : index
    %c0_4 = arith.constant 0 : index
    %3 = vector.load %arg2[%c0_3, %c0_4] : memref<1x256xf32, #tpu.memory_space<vmem>>, vector<1x256xf32>
    %4 = vector.broadcast %3 : vector<1x256xf32> to vector<2x256xf32>
    %5 = arith.addf %2, %4 : vector<2x256xf32>
    %c0_5 = arith.constant 0 : index
    %c0_6 = arith.constant 0 : index
    %6 = vector.load %arg3[%c0_5, %c0_6] : memref<2x256xf32, #tpu.memory_space<vmem>>, vector<2x256xf32>
    tpu.vector_store %arg3[%c0_5, %c0_6], %5 {strides = array<i32>} : memref<2x256xf32, #tpu.memory_space<vmem>>, vector<2x256xf32>,
    return
  }
}

module attributes {stable_mosaic.version = 11 : i64} {
  func.func @_conv_bn_relu_kernel(%arg0: memref<8x1152xbf16, #tpu.memory_space<vmem>>, %arg1: memref<1152x64xbf16, #tpu.memory_space<vmem>>, %arg2: memref<1x64xf32, #tpu.memory_space<vmem>>, %arg3: memref<1x64xf32, #tpu.memory_space<vmem>>, %arg4: memref<8x64xf32, #tpu.memory_space<vmem>>) attributes {dimension_semantics = [], scalar_prefetch = 0 : i64, scratch_operands = 0 : i64, tpu.core_type = #tpu.core_type<tc>} {
    %c0 = arith.constant 0 : index
    %c0_0 = arith.constant 0 : index
    %0 = vector.load %arg0[%c0, %c0_0] : memref<8x1152xbf16, #tpu.memory_space<vmem>>, vector<8x1152xbf16>
    %c0_1 = arith.constant 0 : index
    %c0_2 = arith.constant 0 : index
    %1 = vector.load %arg1[%c0_1, %c0_2] : memref<1152x64xbf16, #tpu.memory_space<vmem>>, vector<1152x64xbf16>
    %cst = arith.constant dense<0.000000e+00> : vector<8x64xf32>
    %2 = tpu.matmul %0, %1, %cst {dimension_numbers = #tpu.dot_dimension_numbers<[1], [0], [0], [1], [0, 0, 1, 1], [], []>} : vector<8x1152xbf16>, vector<1152x64xbf16>, vector<8x64xf32> -> vector<8x64xf32>
    %cst_3 = arith.constant dense<0.000000e+00> : vector<64xf32>
    %3 = vector.multi_reduction <add>, %2, %cst_3 [0] : vector<8x64xf32> to vector<64xf32>
    %4 = vector.shape_cast %3 : vector<64xf32> to vector<1x64xf32>
    %cst_4 = arith.constant 1.250000e-01 : f32
    %5 = vector.broadcast %cst_4 : f32 to vector<1x64xf32>
    %6 = arith.mulf %4, %5 : vector<1x64xf32>
    %7 = arith.mulf %2, %2 : vector<8x64xf32>
    %cst_5 = arith.constant dense<0.000000e+00> : vector<64xf32>
    %8 = vector.multi_reduction <add>, %7, %cst_5 [0] : vector<8x64xf32> to vector<64xf32>
    %9 = vector.shape_cast %8 : vector<64xf32> to vector<1x64xf32>
    %cst_6 = arith.constant 1.250000e-01 : f32
    %10 = vector.broadcast %cst_6 : f32 to vector<1x64xf32>
    %11 = arith.mulf %9, %10 : vector<1x64xf32>
    %12 = arith.mulf %6, %6 : vector<1x64xf32>
    %13 = arith.subf %11, %12 : vector<1x64xf32>
    %cst_7 = arith.constant 0.000000e+00 : f32
    %14 = vector.broadcast %cst_7 : f32 to vector<1x64xf32>
    %15 = arith.maximumf %13, %14 : vector<1x64xf32>
    %c0_8 = arith.constant 0 : index
    %c0_9 = arith.constant 0 : index
    %16 = vector.load %arg2[%c0_8, %c0_9] : memref<1x64xf32, #tpu.memory_space<vmem>>, vector<1x64xf32>
    %cst_10 = arith.constant 9.99999974E-6 : f32
    %17 = vector.broadcast %cst_10 : f32 to vector<1x64xf32>
    %18 = arith.addf %15, %17 : vector<1x64xf32>
    %19 = math.rsqrt %18 : vector<1x64xf32>
    %20 = arith.mulf %16, %19 : vector<1x64xf32>
    %c0_11 = arith.constant 0 : index
    %c0_12 = arith.constant 0 : index
    %21 = vector.load %arg3[%c0_11, %c0_12] : memref<1x64xf32, #tpu.memory_space<vmem>>, vector<1x64xf32>
    %22 = arith.mulf %6, %20 : vector<1x64xf32>
    %23 = arith.subf %21, %22 : vector<1x64xf32>
    %24 = vector.broadcast %20 : vector<1x64xf32> to vector<8x64xf32>
    %25 = arith.mulf %2, %24 : vector<8x64xf32>
    %26 = vector.broadcast %23 : vector<1x64xf32> to vector<8x64xf32>
    %27 = arith.addf %25, %26 : vector<8x64xf32>
    %cst_13 = arith.constant 0.000000e+00 : f32
    %28 = vector.broadcast %cst_13 : f32 to vector<8x64xf32>
    %29 = arith.maximumf %27, %28 : vector<8x64xf32>
    %c0_14 = arith.constant 0 : index
    %c0_15 = arith.constant 0 : index
    %30 = vector.load %arg4[%c0_14, %c0_15] : memref<8x64xf32, #tpu.memory_space<vmem>>, vector<8x64xf32>
    tpu.vector_store %arg4[%c0_14, %c0_15], %29 {strides = array<i32>} : memref<8x64xf32, #tpu.memory_space<vmem>>, vector<8x64xf32>,
    return
  }
}

module attributes {stable_mosaic.version = 11 : i64} {
  func.func @_matmul_bias_kernel(%arg0: memref<8x64xbf16, #tpu.memory_space<vmem>>, %arg1: memref<64x128xbf16, #tpu.memory_space<vmem>>, %arg2: memref<1x128xf32, #tpu.memory_space<vmem>>, %arg3: memref<8x128xf32, #tpu.memory_space<vmem>>) attributes {dimension_semantics = [], scalar_prefetch = 0 : i64, scratch_operands = 0 : i64, tpu.core_type = #tpu.core_type<tc>} {
    %c0 = arith.constant 0 : index
    %c0_0 = arith.constant 0 : index
    %0 = vector.load %arg0[%c0, %c0_0] : memref<8x64xbf16, #tpu.memory_space<vmem>>, vector<8x64xbf16>
    %c0_1 = arith.constant 0 : index
    %c0_2 = arith.constant 0 : index
    %1 = vector.load %arg1[%c0_1, %c0_2] : memref<64x128xbf16, #tpu.memory_space<vmem>>, vector<64x128xbf16>
    %cst = arith.constant dense<0.000000e+00> : vector<8x128xf32>
    %2 = tpu.matmul %0, %1, %cst {dimension_numbers = #tpu.dot_dimension_numbers<[1], [0], [0], [1], [0, 0, 1, 1], [], []>} : vector<8x64xbf16>, vector<64x128xbf16>, vector<8x128xf32> -> vector<8x128xf32>
    %c0_3 = arith.constant 0 : index
    %c0_4 = arith.constant 0 : index
    %3 = vector.load %arg2[%c0_3, %c0_4] : memref<1x128xf32, #tpu.memory_space<vmem>>, vector<1x128xf32>
    %4 = vector.broadcast %3 : vector<1x128xf32> to vector<8x128xf32>
    %5 = arith.addf %2, %4 : vector<8x128xf32>
    %c0_5 = arith.constant 0 : index
    %c0_6 = arith.constant 0 : index
    %6 = vector.load %arg3[%c0_5, %c0_6] : memref<8x128xf32, #tpu.memory_space<vmem>>, vector<8x128xf32>
    tpu.vector_store %arg3[%c0_5, %c0_6], %5 {strides = array<i32>} : memref<8x128xf32, #tpu.memory_space<vmem>>, vector<8x128xf32>,
    return
  }
}

module attributes {stable_mosaic.version = 11 : i64} {
  func.func @_conv_bn_relu_kernel(%arg0: memref<32x576xbf16, #tpu.memory_space<vmem>>, %arg1: memref<576x32xbf16, #tpu.memory_space<vmem>>, %arg2: memref<1x32xf32, #tpu.memory_space<vmem>>, %arg3: memref<1x32xf32, #tpu.memory_space<vmem>>, %arg4: memref<32x32xf32, #tpu.memory_space<vmem>>) attributes {dimension_semantics = [], scalar_prefetch = 0 : i64, scratch_operands = 0 : i64, tpu.core_type = #tpu.core_type<tc>} {
    %c0 = arith.constant 0 : index
    %c0_0 = arith.constant 0 : index
    %0 = vector.load %arg0[%c0, %c0_0] : memref<32x576xbf16, #tpu.memory_space<vmem>>, vector<32x576xbf16>
    %c0_1 = arith.constant 0 : index
    %c0_2 = arith.constant 0 : index
    %1 = vector.load %arg1[%c0_1, %c0_2] : memref<576x32xbf16, #tpu.memory_space<vmem>>, vector<576x32xbf16>
    %cst = arith.constant dense<0.000000e+00> : vector<32x32xf32>
    %2 = tpu.matmul %0, %1, %cst {dimension_numbers = #tpu.dot_dimension_numbers<[1], [0], [0], [1], [0, 0, 1, 1], [], []>} : vector<32x576xbf16>, vector<576x32xbf16>, vector<32x32xf32> -> vector<32x32xf32>
    %cst_3 = arith.constant dense<0.000000e+00> : vector<32xf32>
    %3 = vector.multi_reduction <add>, %2, %cst_3 [0] : vector<32x32xf32> to vector<32xf32>
    %4 = vector.shape_cast %3 : vector<32xf32> to vector<1x32xf32>
    %cst_4 = arith.constant 3.125000e-02 : f32
    %5 = vector.broadcast %cst_4 : f32 to vector<1x32xf32>
    %6 = arith.mulf %4, %5 : vector<1x32xf32>
    %7 = arith.mulf %2, %2 : vector<32x32xf32>
    %cst_5 = arith.constant dense<0.000000e+00> : vector<32xf32>
    %8 = vector.multi_reduction <add>, %7, %cst_5 [0] : vector<32x32xf32> to vector<32xf32>
    %9 = vector.shape_cast %8 : vector<32xf32> to vector<1x32xf32>
    %cst_6 = arith.constant 3.125000e-02 : f32
    %10 = vector.broadcast %cst_6 : f32 to vector<1x32xf32>
    %11 = arith.mulf %9, %10 : vector<1x32xf32>
    %12 = arith.mulf %6, %6 : vector<1x32xf32>
    %13 = arith.subf %11, %12 : vector<1x32xf32>
    %cst_7 = arith.constant 0.000000e+00 : f32
    %14 = vector.broadcast %cst_7 : f32 to vector<1x32xf32>
    %15 = arith.maximumf %13, %14 : vector<1x32xf32>
    %c0_8 = arith.constant 0 : index
    %c0_9 = arith.constant 0 : index
    %16 = vector.load %arg2[%c0_8, %c0_9] : memref<1x32xf32, #tpu.memory_space<vmem>>, vector<1x32xf32>
    %cst_10 = arith.constant 9.99999974E-6 : f32
    %17 = vector.broadcast %cst_10 : f32 to vector<1x32xf32>
    %18 = arith.addf %15, %17 : vector<1x32xf32>
    %19 = math.rsqrt %18 : vector<1x32xf32>
    %20 = arith.mulf %16, %19 : vector<1x32xf32>
    %c0_11 = arith.constant 0 : index
    %c0_12 = arith.constant 0 : index
    %21 = vector.load %arg3[%c0_11, %c0_12] : memref<1x32xf32, #tpu.memory_space<vmem>>, vector<1x32xf32>
    %22 = arith.mulf %6, %20 : vector<1x32xf32>
    %23 = arith.subf %21, %22 : vector<1x32xf32>
    %24 = vector.broadcast %20 : vector<1x32xf32> to vector<32x32xf32>
    %25 = arith.mulf %2, %24 : vector<32x32xf32>
    %26 = vector.broadcast %23 : vector<1x32xf32> to vector<32x32xf32>
    %27 = arith.addf %25, %26 : vector<32x32xf32>
    %cst_13 = arith.constant 0.000000e+00 : f32
    %28 = vector.broadcast %cst_13 : f32 to vector<32x32xf32>
    %29 = arith.maximumf %27, %28 : vector<32x32xf32>
    %c0_14 = arith.constant 0 : index
    %c0_15 = arith.constant 0 : index
    %30 = vector.load %arg4[%c0_14, %c0_15] : memref<32x32xf32, #tpu.memory_space<vmem>>, vector<32x32xf32>
    tpu.vector_store %arg4[%c0_14, %c0_15], %29 {strides = array<i32>} : memref<32x32xf32, #tpu.memory_space<vmem>>, vector<32x32xf32>,
    return
  }
}

module attributes {stable_mosaic.version = 11 : i64} {
  func.func @_matmul_bias_kernel(%arg0: memref<32x32xbf16, #tpu.memory_space<vmem>>, %arg1: memref<32x64xbf16, #tpu.memory_space<vmem>>, %arg2: memref<1x64xf32, #tpu.memory_space<vmem>>, %arg3: memref<32x64xf32, #tpu.memory_space<vmem>>) attributes {dimension_semantics = [], scalar_prefetch = 0 : i64, scratch_operands = 0 : i64, tpu.core_type = #tpu.core_type<tc>} {
    %c0 = arith.constant 0 : index
    %c0_0 = arith.constant 0 : index
    %0 = vector.load %arg0[%c0, %c0_0] : memref<32x32xbf16, #tpu.memory_space<vmem>>, vector<32x32xbf16>
    %c0_1 = arith.constant 0 : index
    %c0_2 = arith.constant 0 : index
    %1 = vector.load %arg1[%c0_1, %c0_2] : memref<32x64xbf16, #tpu.memory_space<vmem>>, vector<32x64xbf16>
    %cst = arith.constant dense<0.000000e+00> : vector<32x64xf32>
    %2 = tpu.matmul %0, %1, %cst {dimension_numbers = #tpu.dot_dimension_numbers<[1], [0], [0], [1], [0, 0, 1, 1], [], []>} : vector<32x32xbf16>, vector<32x64xbf16>, vector<32x64xf32> -> vector<32x64xf32>
    %c0_3 = arith.constant 0 : index
    %c0_4 = arith.constant 0 : index
    %3 = vector.load %arg2[%c0_3, %c0_4] : memref<1x64xf32, #tpu.memory_space<vmem>>, vector<1x64xf32>
    %4 = vector.broadcast %3 : vector<1x64xf32> to vector<32x64xf32>
    %5 = arith.addf %2, %4 : vector<32x64xf32>
    %c0_5 = arith.constant 0 : index
    %c0_6 = arith.constant 0 : index
    %6 = vector.load %arg3[%c0_5, %c0_6] : memref<32x64xf32, #tpu.memory_space<vmem>>, vector<32x64xf32>
    tpu.vector_store %arg3[%c0_5, %c0_6], %5 {strides = array<i32>} : memref<32x64xf32, #tpu.memory_space<vmem>>, vector<32x64xf32>,
    return
  }
}

module attributes {stable_mosaic.version = 11 : i64} {
  func.func @_conv_bn_relu_kernel(%arg0: memref<128x288xbf16, #tpu.memory_space<vmem>>, %arg1: memref<288x16xbf16, #tpu.memory_space<vmem>>, %arg2: memref<1x16xf32, #tpu.memory_space<vmem>>, %arg3: memref<1x16xf32, #tpu.memory_space<vmem>>, %arg4: memref<128x16xf32, #tpu.memory_space<vmem>>) attributes {dimension_semantics = [], scalar_prefetch = 0 : i64, scratch_operands = 0 : i64, tpu.core_type = #tpu.core_type<tc>} {
    %c0 = arith.constant 0 : index
    %c0_0 = arith.constant 0 : index
    %0 = vector.load %arg0[%c0, %c0_0] : memref<128x288xbf16, #tpu.memory_space<vmem>>, vector<128x288xbf16>
    %c0_1 = arith.constant 0 : index
    %c0_2 = arith.constant 0 : index
    %1 = vector.load %arg1[%c0_1, %c0_2] : memref<288x16xbf16, #tpu.memory_space<vmem>>, vector<288x16xbf16>
    %cst = arith.constant dense<0.000000e+00> : vector<128x16xf32>
    %2 = tpu.matmul %0, %1, %cst {dimension_numbers = #tpu.dot_dimension_numbers<[1], [0], [0], [1], [0, 0, 1, 1], [], []>} : vector<128x288xbf16>, vector<288x16xbf16>, vector<128x16xf32> -> vector<128x16xf32>
    %cst_3 = arith.constant dense<0.000000e+00> : vector<16xf32>
    %3 = vector.multi_reduction <add>, %2, %cst_3 [0] : vector<128x16xf32> to vector<16xf32>
    %4 = vector.shape_cast %3 : vector<16xf32> to vector<1x16xf32>
    %cst_4 = arith.constant 7.812500e-03 : f32
    %5 = vector.broadcast %cst_4 : f32 to vector<1x16xf32>
    %6 = arith.mulf %4, %5 : vector<1x16xf32>
    %7 = arith.mulf %2, %2 : vector<128x16xf32>
    %cst_5 = arith.constant dense<0.000000e+00> : vector<16xf32>
    %8 = vector.multi_reduction <add>, %7, %cst_5 [0] : vector<128x16xf32> to vector<16xf32>
    %9 = vector.shape_cast %8 : vector<16xf32> to vector<1x16xf32>
    %cst_6 = arith.constant 7.812500e-03 : f32
    %10 = vector.broadcast %cst_6 : f32 to vector<1x16xf32>
    %11 = arith.mulf %9, %10 : vector<1x16xf32>
    %12 = arith.mulf %6, %6 : vector<1x16xf32>
    %13 = arith.subf %11, %12 : vector<1x16xf32>
    %cst_7 = arith.constant 0.000000e+00 : f32
    %14 = vector.broadcast %cst_7 : f32 to vector<1x16xf32>
    %15 = arith.maximumf %13, %14 : vector<1x16xf32>
    %c0_8 = arith.constant 0 : index
    %c0_9 = arith.constant 0 : index
    %16 = vector.load %arg2[%c0_8, %c0_9] : memref<1x16xf32, #tpu.memory_space<vmem>>, vector<1x16xf32>
    %cst_10 = arith.constant 9.99999974E-6 : f32
    %17 = vector.broadcast %cst_10 : f32 to vector<1x16xf32>
    %18 = arith.addf %15, %17 : vector<1x16xf32>
    %19 = math.rsqrt %18 : vector<1x16xf32>
    %20 = arith.mulf %16, %19 : vector<1x16xf32>
    %c0_11 = arith.constant 0 : index
    %c0_12 = arith.constant 0 : index
    %21 = vector.load %arg3[%c0_11, %c0_12] : memref<1x16xf32, #tpu.memory_space<vmem>>, vector<1x16xf32>
    %22 = arith.mulf %6, %20 : vector<1x16xf32>
    %23 = arith.subf %21, %22 : vector<1x16xf32>
    %24 = vector.broadcast %20 : vector<1x16xf32> to vector<128x16xf32>
    %25 = arith.mulf %2, %24 : vector<128x16xf32>
    %26 = vector.broadcast %23 : vector<1x16xf32> to vector<128x16xf32>
    %27 = arith.addf %25, %26 : vector<128x16xf32>
    %cst_13 = arith.constant 0.000000e+00 : f32
    %28 = vector.broadcast %cst_13 : f32 to vector<128x16xf32>
    %29 = arith.maximumf %27, %28 : vector<128x16xf32>
    %c0_14 = arith.constant 0 : index
    %c0_15 = arith.constant 0 : index
    %30 = vector.load %arg4[%c0_14, %c0_15] : memref<128x16xf32, #tpu.memory_space<vmem>>, vector<128x16xf32>
    tpu.vector_store %arg4[%c0_14, %c0_15], %29 {strides = array<i32>} : memref<128x16xf32, #tpu.memory_space<vmem>>, vector<128x16xf32>,
    return
  }
}

module attributes {stable_mosaic.version = 11 : i64} {
  func.func @_matmul_bias_kernel(%arg0: memref<128x16xbf16, #tpu.memory_space<vmem>>, %arg1: memref<16x32xbf16, #tpu.memory_space<vmem>>, %arg2: memref<1x32xf32, #tpu.memory_space<vmem>>, %arg3: memref<128x32xf32, #tpu.memory_space<vmem>>) attributes {dimension_semantics = [], scalar_prefetch = 0 : i64, scratch_operands = 0 : i64, tpu.core_type = #tpu.core_type<tc>} {
    %c0 = arith.constant 0 : index
    %c0_0 = arith.constant 0 : index
    %0 = vector.load %arg0[%c0, %c0_0] : memref<128x16xbf16, #tpu.memory_space<vmem>>, vector<128x16xbf16>
    %c0_1 = arith.constant 0 : index
    %c0_2 = arith.constant 0 : index
    %1 = vector.load %arg1[%c0_1, %c0_2] : memref<16x32xbf16, #tpu.memory_space<vmem>>, vector<16x32xbf16>
    %cst = arith.constant dense<0.000000e+00> : vector<128x32xf32>
    %2 = tpu.matmul %0, %1, %cst {dimension_numbers = #tpu.dot_dimension_numbers<[1], [0], [0], [1], [0, 0, 1, 1], [], []>} : vector<128x16xbf16>, vector<16x32xbf16>, vector<128x32xf32> -> vector<128x32xf32>
    %c0_3 = arith.constant 0 : index
    %c0_4 = arith.constant 0 : index
    %3 = vector.load %arg2[%c0_3, %c0_4] : memref<1x32xf32, #tpu.memory_space<vmem>>, vector<1x32xf32>
    %4 = vector.broadcast %3 : vector<1x32xf32> to vector<128x32xf32>
    %5 = arith.addf %2, %4 : vector<128x32xf32>
    %c0_5 = arith.constant 0 : index
    %c0_6 = arith.constant 0 : index
    %6 = vector.load %arg3[%c0_5, %c0_6] : memref<128x32xf32, #tpu.memory_space<vmem>>, vector<128x32xf32>
    tpu.vector_store %arg3[%c0_5, %c0_6], %5 {strides = array<i32>} : memref<128x32xf32, #tpu.memory_space<vmem>>, vector<128x32xf32>,
    return
  }
}

module attributes {stable_mosaic.version = 11 : i64} {
  func.func @_conv_bn_relu_kernel(%arg0: memref<512x144xbf16, #tpu.memory_space<vmem>>, %arg1: memref<144x8xbf16, #tpu.memory_space<vmem>>, %arg2: memref<1x8xf32, #tpu.memory_space<vmem>>, %arg3: memref<1x8xf32, #tpu.memory_space<vmem>>, %arg4: memref<512x8xf32, #tpu.memory_space<vmem>>) attributes {dimension_semantics = [], scalar_prefetch = 0 : i64, scratch_operands = 0 : i64, tpu.core_type = #tpu.core_type<tc>} {
    %c0 = arith.constant 0 : index
    %c0_0 = arith.constant 0 : index
    %0 = vector.load %arg0[%c0, %c0_0] : memref<512x144xbf16, #tpu.memory_space<vmem>>, vector<512x144xbf16>
    %c0_1 = arith.constant 0 : index
    %c0_2 = arith.constant 0 : index
    %1 = vector.load %arg1[%c0_1, %c0_2] : memref<144x8xbf16, #tpu.memory_space<vmem>>, vector<144x8xbf16>
    %cst = arith.constant dense<0.000000e+00> : vector<512x8xf32>
    %2 = tpu.matmul %0, %1, %cst {dimension_numbers = #tpu.dot_dimension_numbers<[1], [0], [0], [1], [0, 0, 1, 1], [], []>} : vector<512x144xbf16>, vector<144x8xbf16>, vector<512x8xf32> -> vector<512x8xf32>
    %cst_3 = arith.constant dense<0.000000e+00> : vector<8xf32>
    %3 = vector.multi_reduction <add>, %2, %cst_3 [0] : vector<512x8xf32> to vector<8xf32>
    %4 = vector.shape_cast %3 : vector<8xf32> to vector<1x8xf32>
    %cst_4 = arith.constant 0.001953125 : f32
    %5 = vector.broadcast %cst_4 : f32 to vector<1x8xf32>
    %6 = arith.mulf %4, %5 : vector<1x8xf32>
    %7 = arith.mulf %2, %2 : vector<512x8xf32>
    %cst_5 = arith.constant dense<0.000000e+00> : vector<8xf32>
    %8 = vector.multi_reduction <add>, %7, %cst_5 [0] : vector<512x8xf32> to vector<8xf32>
    %9 = vector.shape_cast %8 : vector<8xf32> to vector<1x8xf32>
    %cst_6 = arith.constant 0.001953125 : f32
    %10 = vector.broadcast %cst_6 : f32 to vector<1x8xf32>
    %11 = arith.mulf %9, %10 : vector<1x8xf32>
    %12 = arith.mulf %6, %6 : vector<1x8xf32>
    %13 = arith.subf %11, %12 : vector<1x8xf32>
    %cst_7 = arith.constant 0.000000e+00 : f32
    %14 = vector.broadcast %cst_7 : f32 to vector<1x8xf32>
    %15 = arith.maximumf %13, %14 : vector<1x8xf32>
    %c0_8 = arith.constant 0 : index
    %c0_9 = arith.constant 0 : index
    %16 = vector.load %arg2[%c0_8, %c0_9] : memref<1x8xf32, #tpu.memory_space<vmem>>, vector<1x8xf32>
    %cst_10 = arith.constant 9.99999974E-6 : f32
    %17 = vector.broadcast %cst_10 : f32 to vector<1x8xf32>
    %18 = arith.addf %15, %17 : vector<1x8xf32>
    %19 = math.rsqrt %18 : vector<1x8xf32>
    %20 = arith.mulf %16, %19 : vector<1x8xf32>
    %c0_11 = arith.constant 0 : index
    %c0_12 = arith.constant 0 : index
    %21 = vector.load %arg3[%c0_11, %c0_12] : memref<1x8xf32, #tpu.memory_space<vmem>>, vector<1x8xf32>
    %22 = arith.mulf %6, %20 : vector<1x8xf32>
    %23 = arith.subf %21, %22 : vector<1x8xf32>
    %24 = vector.broadcast %20 : vector<1x8xf32> to vector<512x8xf32>
    %25 = arith.mulf %2, %24 : vector<512x8xf32>
    %26 = vector.broadcast %23 : vector<1x8xf32> to vector<512x8xf32>
    %27 = arith.addf %25, %26 : vector<512x8xf32>
    %cst_13 = arith.constant 0.000000e+00 : f32
    %28 = vector.broadcast %cst_13 : f32 to vector<512x8xf32>
    %29 = arith.maximumf %27, %28 : vector<512x8xf32>
    %c0_14 = arith.constant 0 : index
    %c0_15 = arith.constant 0 : index
    %30 = vector.load %arg4[%c0_14, %c0_15] : memref<512x8xf32, #tpu.memory_space<vmem>>, vector<512x8xf32>
    tpu.vector_store %arg4[%c0_14, %c0_15], %29 {strides = array<i32>} : memref<512x8xf32, #tpu.memory_space<vmem>>, vector<512x8xf32>,
    return
  }
}

module attributes {stable_mosaic.version = 11 : i64} {
  func.func @_matmul_bias_kernel(%arg0: memref<512x8xbf16, #tpu.memory_space<vmem>>, %arg1: memref<8x1xbf16, #tpu.memory_space<vmem>>, %arg2: memref<1x1xf32, #tpu.memory_space<vmem>>, %arg3: memref<512x1xf32, #tpu.memory_space<vmem>>) attributes {dimension_semantics = [], scalar_prefetch = 0 : i64, scratch_operands = 0 : i64, tpu.core_type = #tpu.core_type<tc>} {
    %c0 = arith.constant 0 : index
    %c0_0 = arith.constant 0 : index
    %0 = vector.load %arg0[%c0, %c0_0] : memref<512x8xbf16, #tpu.memory_space<vmem>>, vector<512x8xbf16>
    %c0_1 = arith.constant 0 : index
    %c0_2 = arith.constant 0 : index
    %1 = vector.load %arg1[%c0_1, %c0_2] : memref<8x1xbf16, #tpu.memory_space<vmem>>, vector<8x1xbf16>
    %cst = arith.constant dense<0.000000e+00> : vector<512x1xf32>
    %2 = tpu.matmul %0, %1, %cst {dimension_numbers = #tpu.dot_dimension_numbers<[1], [0], [0], [1], [0, 0, 1, 1], [], []>} : vector<512x8xbf16>, vector<8x1xbf16>, vector<512x1xf32> -> vector<512x1xf32>
    %c0_3 = arith.constant 0 : index
    %c0_4 = arith.constant 0 : index
    %3 = vector.load %arg2[%c0_3, %c0_4] : memref<1x1xf32, #tpu.memory_space<vmem>>, vector<1x1xf32>
    %4 = vector.broadcast %3 : vector<1x1xf32> to vector<512x1xf32>
    %5 = arith.addf %2, %4 : vector<512x1xf32>
    %c0_5 = arith.constant 0 : index
    %c0_6 = arith.constant 0 : index
    %6 = vector.load %arg3[%c0_5, %c0_6] : memref<512x1xf32, #tpu.memory_space<vmem>>, vector<512x1xf32>
    tpu.vector_store %arg3[%c0_5, %c0_6], %5 {strides = array<i32>} : memref<512x1xf32, #tpu.memory_space<vmem>>, vector<512x1xf32>,
    return
  }
}

</mosaic_0001>

<llo_original>
// kernel: unet_forward.27
$region0: #{unet_forward.27}
  #allocation0 [shape = 'u32[]', space=smem, size = 0x4, offset = 0x4, fixed_abs, tag = 'smem constant byte address 0x4 - core index']
  #allocation1 [shape = 'u32[144,128]{1,0:T(1,128)}', space=vmem, size = 0x12000, scoped, tag = 'internal scratch']
  %s0 = inlined_call_operand.vmem [shape: bf16[512,9], index: 0, kind: input, shape index: {}]
  %s1 = inlined_call_operand.vmem [shape: bf16[9,8], index: 1, kind: input, shape index: {}]
  %s2 = inlined_call_operand.vmem [shape: f32[1,8], index: 2, kind: input, shape index: {}]
  %s3 = inlined_call_operand.vmem [shape: f32[1,8], index: 3, kind: input, shape index: {}]
  %s4 = inlined_call_operand.vmem [shape: f32[512,8], index: 4, kind: output, shape index: {}]
  %s5 = sld [smem:[#allocation0]]
  $region26: #{unet_forward.27} parent=0
    _
  %s7 = ssub.s32 1, %s5
  %s8 = scalar_select 0, %s7, %s5
  // Predicated region
  $region2: #{unet_forward.27} parent=0 // pred_check
    _
  $region3: #{unet_forward.27} parent=0 // pred_check_branch
    %10 = sbr.rel (0) target = $region5
  $region4: #{unet_forward.27} parent=0 // pred_region
    _
  $region5: #{unet_forward.27} parent=0 // pred_fallthru
    _
  // Predicated region
  $region6: #{unet_forward.27} parent=0 // pred_check
    _
  $region7: #{unet_forward.27} parent=0 // pred_check_branch
    %12 = sbr.rel (0) target = $region9
  $region8: #{unet_forward.27} parent=0 // pred_region
    _
  $region9: #{unet_forward.27} parent=0 // pred_fallthru
    _
  // Predicated region
  $region10: #{unet_forward.27} parent=0 // pred_check
    _
  $region11: #{unet_forward.27} parent=0 // pred_check_branch
    %14 = sbr.rel (0) target = $region13
  $region12: #{unet_forward.27} parent=0 // pred_region
    _
  $region13: #{unet_forward.27} parent=0 // pred_fallthru
    _
  // Predicated region
  $region14: #{unet_forward.27} parent=0 // pred_check
    _
  $region15: #{unet_forward.27} parent=0 // pred_check_branch
    %16 = sbr.rel (0) target = $region17
  $region16: #{unet_forward.27} parent=0 // pred_region
    _
  $region17: #{unet_forward.27} parent=0 // pred_fallthru
    _
  %v18 = vld [vmem:[%s0] sm:$0xf]
  %v19 = vld [vmem:[%s0 + $0x4] sm:$0xf]
  %v20 = vld [vmem:[%s0 + $0x8] sm:$0xf]
  %v21 = vld [vmem:[%s0 + $0xc] sm:$0xf]
  %v22 = vld [vmem:[%s0 + $0x10] sm:$0xf]
  %v23 = vld [vmem:[%s0 + $0x14] sm:$0xf]
  %v24 = vld [vmem:[%s0 + $0x18] sm:$0xf]
  %v25 = vld [vmem:[%s0 + $0x1c] sm:$0xf]
  %v26 = vld [vmem:[%s0 + $0x20] sm:$0xf]
  %v27 = vld [vmem:[%s0 + $0x24] sm:$0xf]
  %v28 = vld [vmem:[%s0 + $0x28] sm:$0xf]
  %v29 = vld [vmem:[%s0 + $0x2c] sm:$0xf]
  %v30 = vld [vmem:[%s0 + $0x30] sm:$0xf]
  %v31 = vld [vmem:[%s0 + $0x34] sm:$0xf]
  %v32 = vld [vmem:[%s0 + $0x38] sm:$0xf]
  %v33 = vld [vmem:[%s0 + $0x3c] sm:$0xf]
  %v34 = vld [vmem:[%s0 + $0x40] sm:$0xf]
  %v35 = vld [vmem:[%s0 + $0x44] sm:$0xf]
  %v36 = vld [vmem:[%s0 + $0x48] sm:$0xf]
  %v37 = vld [vmem:[%s0 + $0x4c] sm:$0xf]
  %v38 = vld [vmem:[%s0 + $0x50] sm:$0xf]
  %v39 = vld [vmem:[%s0 + $0x54] sm:$0xf]
  %v40 = vld [vmem:[%s0 + $0x58] sm:$0xf]
  %v41 = vld [vmem:[%s0 + $0x5c] sm:$0xf]
  %v42 = vld [vmem:[%s0 + $0x60] sm:$0xf]
  %v43 = vld [vmem:[%s0 + $0x64] sm:$0xf]
  %v44 = vld [vmem:[%s0 + $0x68] sm:$0xf]
  %v45 = vld [vmem:[%s0 + $0x6c] sm:$0xf]
  %v46 = vld [vmem:[%s0 + $0x70] sm:$0xf]
  %v47 = vld [vmem:[%s0 + $0x74] sm:$0xf]
  %v48 = vld [vmem:[%s0 + $0x78] sm:$0xf]
  %v49 = vld [vmem:[%s0 + $0x7c] sm:$0xf]
  %v50 = vld [vmem:[%s0 + $0x80] sm:$0xf]
  %v51 = vld [vmem:[%s0 + $0x84] sm:$0xf]
  %v52 = vld [vmem:[%s0 + $0x88] sm:$0xf]
  %v53 = vld [vmem:[%s0 + $0x8c] sm:$0xf]
  %v54 = vld [vmem:[%s0 + $0x90] sm:$0xf]
  %v55 = vld [vmem:[%s0 + $0x94] sm:$0xf]
  %v56 = vld [vmem:[%s0 + $0x98] sm:$0xf]
  %v57 = vld [vmem:[%s0 + $0x9c] sm:$0xf]
  %v58 = vld [vmem:[%s0 + $0xa0] sm:$0xf]
  %v59 = vld [vmem:[%s0 + $0xa4] sm:$0xf]
  %v60 = vld [vmem:[%s0 + $0xa8] sm:$0xf]
  %v61 = vld [vmem:[%s0 + $0xac] sm:$0xf]
  %v62 = vld [vmem:[%s0 + $0xb0] sm:$0xf]
  %v63 = vld [vmem:[%s0 + $0xb4] sm:$0xf]
  %v64 = vld [vmem:[%s0 + $0xb8] sm:$0xf]
  %v65 = vld [vmem:[%s0 + $0xbc] sm:$0xf]
  %v66 = vld [vmem:[%s0 + $0xc0] sm:$0xf]
  %v67 = vld [vmem:[%s0 + $0xc4] sm:$0xf]
  %v68 = vld [vmem:[%s0 + $0xc8] sm:$0xf]
  %v69 = vld [vmem:[%s0 + $0xcc] sm:$0xf]
  %v70 = vld [vmem:[%s0 + $0xd0] sm:$0xf]
  %v71 = vld [vmem:[%s0 + $0xd4] sm:$0xf]
  %v72 = vld [vmem:[%s0 + $0xd8] sm:$0xf]
  %v73 = vld [vmem:[%s0 + $0xdc] sm:$0xf]
  %v74 = vld [vmem:[%s0 + $0xe0] sm:$0xf]
  %v75 = vld [vmem:[%s0 + $0xe4] sm:$0xf]
  %v76 = vld [vmem:[%s0 + $0xe8] sm:$0xf]
  %v77 = vld [vmem:[%s0 + $0xec] sm:$0xf]
  %v78 = vld [vmem:[%s0 + $0xf0] sm:$0xf]
  %v79 = vld [vmem:[%s0 + $0xf4] sm:$0xf]
  %v80 = vld [vmem:[%s0 + $0xf8] sm:$0xf]
  %v81 = vld [vmem:[%s0 + $0xfc] sm:$0xf]
  %v82 = vld [vmem:[%s1] sm:$0xf]
  %v83 = vld [vmem:[%s1 + $0x4] sm:$0x1]
  %v148 = vunpack.c.l.b16 %v18
  %v149 = vunpack.c.l.b16 %v19
  %v150 = vunpack.c.l.b16 %v20
  %v151 = vunpack.c.l.b16 %v21
  %v152 = vunpack.c.l.b16 %v22
  %v153 = vunpack.c.l.b16 %v23
  %v154 = vunpack.c.l.b16 %v24
  %v155 = vunpack.c.l.b16 %v25
  %v156 = vunpack.c.l.b16 %v26
  %v157 = vunpack.c.l.b16 %v27
  %v158 = vunpack.c.l.b16 %v28
  %v159 = vunpack.c.l.b16 %v29
  %v160 = vunpack.c.l.b16 %v30
  %v161 = vunpack.c.l.b16 %v31
  %v162 = vunpack.c.l.b16 %v32
  %v163 = vunpack.c.l.b16 %v33
  %v164 = vunpack.c.l.b16 %v34
  %v165 = vunpack.c.l.b16 %v35
  %v166 = vunpack.c.l.b16 %v36
  %v167 = vunpack.c.l.b16 %v37
  %v168 = vunpack.c.l.b16 %v38
  %v169 = vunpack.c.l.b16 %v39
  %v170 = vunpack.c.l.b16 %v40
  %v171 = vunpack.c.l.b16 %v41
  %v172 = vunpack.c.l.b16 %v42
  %v173 = vunpack.c.l.b16 %v43
  %v174 = vunpack.c.l.b16 %v44
  %v175 = vunpack.c.l.b16 %v45
  %v176 = vunpack.c.l.b16 %v46
  %v177 = vunpack.c.l.b16 %v47
  %v178 = vunpack.c.l.b16 %v48
  %v179 = vunpack.c.l.b16 %v49
  %v180 = vunpack.c.l.b16 %v50
  %v181 = vunpack.c.l.b16 %v51
  %v182 = vunpack.c.l.b16 %v52
  %v183 = vunpack.c.l.b16 %v53
  %v184 = vunpack.c.l.b16 %v54
  %v185 = vunpack.c.l.b16 %v55
  %v186 = vunpack.c.l.b16 %v56
  %v187 = vunpack.c.l.b16 %v57
  %v188 = vunpack.c.l.b16 %v58
  %v189 = vunpack.c.l.b16 %v59
  %v190 = vunpack.c.l.b16 %v60
  %v191 = vunpack.c.l.b16 %v61
  %v192 = vunpack.c.l.b16 %v62
  %v193 = vunpack.c.l.b16 %v63
  %v194 = vunpack.c.l.b16 %v64
  %v195 = vunpack.c.l.b16 %v65
  %v196 = vunpack.c.l.b16 %v66
  %v197 = vunpack.c.l.b16 %v67
  %v198 = vunpack.c.l.b16 %v68
  %v199 = vunpack.c.l.b16 %v69
  %v200 = vunpack.c.l.b16 %v70
  %v201 = vunpack.c.l.b16 %v71
  %v202 = vunpack.c.l.b16 %v72
  %v203 = vunpack.c.l.b16 %v73
  %v204 = vunpack.c.l.b16 %v74
  %v205 = vunpack.c.l.b16 %v75
  %v206 = vunpack.c.l.b16 %v76
  %v207 = vunpack.c.l.b16 %v77
  %v208 = vunpack.c.l.b16 %v78
  %v209 = vunpack.c.l.b16 %v79
  %v210 = vunpack.c.l.b16 %v80
  %v211 = vunpack.c.l.b16 %v81
  %v212 = vpack.c.b16 %v149, %v148
  %v213 = vpack.c.b16 %v151, %v150
  %v214 = vpack.c.b16 %v153, %v152
  %v215 = vpack.c.b16 %v155, %v154
  %v216 = vpack.c.b16 %v157, %v156
  %v217 = vpack.c.b16 %v159, %v158
  %v218 = vpack.c.b16 %v161, %v160
  %v219 = vpack.c.b16 %v163, %v162
  %v220 = vpack.c.b16 %v165, %v164
  %v221 = vpack.c.b16 %v167, %v166
  %v222 = vpack.c.b16 %v169, %v168
  %v223 = vpack.c.b16 %v171, %v170
  %v224 = vpack.c.b16 %v173, %v172
  %v225 = vpack.c.b16 %v175, %v174
  %v226 = vpack.c.b16 %v177, %v176
  %v227 = vpack.c.b16 %v179, %v178
  %v228 = vpack.c.b16 %v181, %v180
  %v229 = vpack.c.b16 %v183, %v182
  %v230 = vpack.c.b16 %v185, %v184
  %v231 = vpack.c.b16 %v187, %v186
  %v232 = vpack.c.b16 %v189, %v188
  %v233 = vpack.c.b16 %v191, %v190
  %v234 = vpack.c.b16 %v193, %v192
  %v235 = vpack.c.b16 %v195, %v194
  %v236 = vpack.c.b16 %v197, %v196
  %v237 = vpack.c.b16 %v199, %v198
  %v238 = vpack.c.b16 %v201, %v200
  %v239 = vpack.c.b16 %v203, %v202
  %v240 = vpack.c.b16 %v205, %v204
  %v241 = vpack.c.b16 %v207, %v206
  %v242 = vpack.c.b16 %v209, %v208
  %v243 = vpack.c.b16 %v211, %v210
  %v246 = vunpack.c.l.b16 %v82
  %v247 = vunpack.c.l.b16 %v83
  %v248 = vpack.c.b16 %v247, %v246
  %vm249 = vcmask 72704
  %v251 = vsel %vm249, %v212, 0
  %v254 = vsel %vm249, %v213, 0
  %v257 = vsel %vm249, %v214, 0
  %v260 = vsel %vm249, %v215, 0
  %v263 = vsel %vm249, %v216, 0
  %v266 = vsel %vm249, %v217, 0
  %v269 = vsel %vm249, %v218, 0
  %v272 = vsel %vm249, %v219, 0
  %v275 = vsel %vm249, %v220, 0
  %v278 = vsel %vm249, %v221, 0
  %v281 = vsel %vm249, %v222, 0
  %v284 = vsel %vm249, %v223, 0
  %v287 = vsel %vm249, %v224, 0
  %v290 = vsel %vm249, %v225, 0
  %v293 = vsel %vm249, %v226, 0
  %v296 = vsel %vm249, %v227, 0
  %v299 = vsel %vm249, %v228, 0
  %v302 = vsel %vm249, %v229, 0
  %v305 = vsel %vm249, %v230, 0
  %v308 = vsel %vm249, %v231, 0
  %v311 = vsel %vm249, %v232, 0
  %v314 = vsel %vm249, %v233, 0
  %v317 = vsel %vm249, %v234, 0
  %v320 = vsel %vm249, %v235, 0
  %v323 = vsel %vm249, %v236, 0
  %v326 = vsel %vm249, %v237, 0
  %v329 = vsel %vm249, %v238, 0
  %v332 = vsel %vm249, %v239, 0
  %v335 = vsel %vm249, %v240, 0
  %v338 = vsel %vm249, %v241, 0
  %v341 = vsel %vm249, %v242, 0
  %v344 = vsel %vm249, %v243, 0
  %vm346 = vcmask 1043456
  %vm347 = vcmask 1044480
  %v348 = vsel %vm346, 4294967295, 65535
  %v349 = vsel %vm347, %v348, 0
  %v351 = vand.u32 %v248, %v349
  %353 = vmatprep.subr.bf16.mxu0 0
  %354 = vmatpush1.bf16.msra.mxu0 %v351
  %355 = vmatprep.subr.bf16.mxu0 0
  %356 = vmatpush1.bf16.msra.mxu0 0
  %357 = vmatprep.subr.bf16.mxu0 0
  %358 = vmatpush1.bf16.msra.mxu0 0
  %359 = vmatprep.subr.bf16.mxu0 0
  %360 = vmatpush1.bf16.msra.mxu0 0
  %361 = vmatprep.subr.bf16.mxu0 0
  %362 = vmatpush1.bf16.msra.mxu0 0
  %363 = vmatprep.subr.bf16.mxu0 0
  %364 = vmatpush1.bf16.msra.mxu0 0
  %365 = vmatprep.subr.bf16.mxu0 0
  %366 = vmatpush1.bf16.msra.mxu0 0
  %367 = vmatprep.subr.bf16.mxu0 0
  %368 = vmatpush1.bf16.msra.mxu0 0
  %369 = vmatprep.subr.bf16.mxu0 0
  %370 = vmatpush1.bf16.msra.mxu0 0
  %371 = vmatprep.subr.bf16.mxu0 0
  %372 = vmatpush1.bf16.msra.mxu0 0
  %373 = vmatprep.subr.bf16.mxu0 0
  %374 = vmatpush1.bf16.msra.mxu0 0
  %375 = vmatprep.subr.bf16.mxu0 0
  %376 = vmatpush1.bf16.msra.mxu0 0
  %377 = vmatprep.subr.bf16.mxu0 0
  %378 = vmatpush1.bf16.msra.mxu0 0
  %379 = vmatprep.subr.bf16.mxu0 0
  %380 = vmatpush1.bf16.msra.mxu0 0
  %381 = vmatprep.subr.bf16.mxu0 0
  %382 = vmatpush1.bf16.msra.mxu0 0
  %383 = vmatprep.subr.bf16.mxu0 0
  %384 = vmatpush1.bf16.msra.mxu0 0
  %385 = vmatprep.mubr.bf16.mxu0 0
  %386 = vmatmul.mubr.bf16.gmra.mrb[0].mxu0 %v251
  %v387 = vpop.f32.mrb[0].mxu0
  %v388 = vadd.f32 0.0, %v387
  %v389 = vpop.f32.mrb[0].mxu0
  %v390 = vpop.f32.mrb[0].mxu0
  %v391 = vadd.f32 0.0, %v390
  %v392 = vpop.f32.mrb[0].mxu0
  %393 = vmatprep.mubr.bf16.mxu0 0
  %394 = vmatmul.mubr.bf16.gmra.mrb[0].mxu0 %v254
  %v395 = vpop.f32.mrb[0].mxu0
  %v396 = vadd.f32 0.0, %v395
  %v397 = vpop.f32.mrb[0].mxu0
  %v398 = vpop.f32.mrb[0].mxu0
  %v399 = vadd.f32 0.0, %v398
  %v400 = vpop.f32.mrb[0].mxu0
  %401 = vmatprep.mubr.bf16.mxu0 0
  %402 = vmatmul.mubr.bf16.gmra.mrb[0].mxu0 %v257
  %v403 = vpop.f32.mrb[0].mxu0
  %v404 = vadd.f32 0.0, %v403
  %v405 = vpop.f32.mrb[0].mxu0
  %v406 = vpop.f32.mrb[0].mxu0
  %v407 = vadd.f32 0.0, %v406
  %v408 = vpop.f32.mrb[0].mxu0
  %409 = vmatprep.mubr.bf16.mxu0 0
  %410 = vmatmul.mubr.bf16.gmra.mrb[0].mxu0 %v260
  %v411 = vpop.f32.mrb[0].mxu0
  %v412 = vadd.f32 0.0, %v411
  %v413 = vpop.f32.mrb[0].mxu0
  %v414 = vpop.f32.mrb[0].mxu0
  %v415 = vadd.f32 0.0, %v414
  %v416 = vpop.f32.mrb[0].mxu0
  %417 = vmatprep.mubr.bf16.mxu0 0
  %418 = vmatmul.mubr.bf16.gmra.mrb[0].mxu0 %v263
  %v419 = vpop.f32.mrb[0].mxu0
  %v420 = vadd.f32 0.0, %v419
  %v421 = vpop.f32.mrb[0].mxu0
  %v422 = vpop.f32.mrb[0].mxu0
  %v423 = vadd.f32 0.0, %v422
  %v424 = vpop.f32.mrb[0].mxu0
  %425 = vmatprep.mubr.bf16.mxu0 0
  %426 = vmatmul.mubr.bf16.gmra.mrb[0].mxu0 %v266
  %v427 = vpop.f32.mrb[0].mxu0
  %v428 = vadd.f32 0.0, %v427
  %v429 = vpop.f32.mrb[0].mxu0
  %v430 = vpop.f32.mrb[0].mxu0
  %v431 = vadd.f32 0.0, %v430
  %v432 = vpop.f32.mrb[0].mxu0
  %433 = vmatprep.mubr.bf16.mxu0 0
  %434 = vmatmul.mubr.bf16.gmra.mrb[0].mxu0 %v269
  %v435 = vpop.f32.mrb[0].mxu0
  %v436 = vadd.f32 0.0, %v435
  %v437 = vpop.f32.mrb[0].mxu0
  %v438 = vpop.f32.mrb[0].mxu0
  %v439 = vadd.f32 0.0, %v438
  %v440 = vpop.f32.mrb[0].mxu0
  %441 = vmatprep.mubr.bf16.mxu0 0
  %442 = vmatmul.mubr.bf16.gmra.mrb[0].mxu0 %v272
  %v443 = vpop.f32.mrb[0].mxu0
  %v444 = vadd.f32 0.0, %v443
  %v445 = vpop.f32.mrb[0].mxu0
  %v446 = vpop.f32.mrb[0].mxu0
  %v447 = vadd.f32 0.0, %v446
  %v448 = vpop.f32.mrb[0].mxu0
  %449 = vmatprep.mubr.bf16.mxu0 0
  %450 = vmatmul.mubr.bf16.gmra.mrb[0].mxu0 %v275
  %v451 = vpop.f32.mrb[0].mxu0
  %v452 = vadd.f32 0.0, %v451
  %v453 = vpop.f32.mrb[0].mxu0
  %v454 = vpop.f32.mrb[0].mxu0
  %v455 = vadd.f32 0.0, %v454
  %v456 = vpop.f32.mrb[0].mxu0
  %457 = vmatprep.mubr.bf16.mxu0 0
  %458 = vmatmul.mubr.bf16.gmra.mrb[0].mxu0 %v278
  %v459 = vpop.f32.mrb[0].mxu0
  %v460 = vadd.f32 0.0, %v459
  %v461 = vpop.f32.mrb[0].mxu0
  %v462 = vpop.f32.mrb[0].mxu0
  %v463 = vadd.f32 0.0, %v462
  %v464 = vpop.f32.mrb[0].mxu0
  %465 = vmatprep.mubr.bf16.mxu0 0
  %466 = vmatmul.mubr.bf16.gmra.mrb[0].mxu0 %v281
  %v467 = vpop.f32.mrb[0].mxu0
  %v468 = vadd.f32 0.0, %v467
  %v469 = vpop.f32.mrb[0].mxu0
  %v470 = vpop.f32.mrb[0].mxu0
  %v471 = vadd.f32 0.0, %v470
  %v472 = vpop.f32.mrb[0].mxu0
  %473 = vmatprep.mubr.bf16.mxu0 0
  %474 = vmatmul.mubr.bf16.gmra.mrb[0].mxu0 %v284
  %v475 = vpop.f32.mrb[0].mxu0
  %v476 = vadd.f32 0.0, %v475
  %v477 = vpop.f32.mrb[0].mxu0
  %v478 = vpop.f32.mrb[0].mxu0
  %v479 = vadd.f32 0.0, %v478
  %v480 = vpop.f32.mrb[0].mxu0
  %481 = vmatprep.mubr.bf16.mxu0 0
  %482 = vmatmul.mubr.bf16.gmra.mrb[0].mxu0 %v287
  %v483 = vpop.f32.mrb[0].mxu0
  %v484 = vadd.f32 0.0, %v483
  %v485 = vpop.f32.mrb[0].mxu0
  %v486 = vpop.f32.mrb[0].mxu0
  %v487 = vadd.f32 0.0, %v486
  %v488 = vpop.f32.mrb[0].mxu0
  %489 = vmatprep.mubr.bf16.mxu0 0
  %490 = vmatmul.mubr.bf16.gmra.mrb[0].mxu0 %v290
  %v491 = vpop.f32.mrb[0].mxu0
  %v492 = vadd.f32 0.0, %v491
  %v493 = vpop.f32.mrb[0].mxu0
  %v494 = vpop.f32.mrb[0].mxu0
  %v495 = vadd.f32 0.0, %v494
  %v496 = vpop.f32.mrb[0].mxu0
  %497 = vmatprep.mubr.bf16.mxu0 0
  %498 = vmatmul.mubr.bf16.gmra.mrb[0].mxu0 %v293
  %v499 = vpop.f32.mrb[0].mxu0
  %v500 = vadd.f32 0.0, %v499
  %v501 = vpop.f32.mrb[0].mxu0
  %v502 = vpop.f32.mrb[0].mxu0
  %v503 = vadd.f32 0.0, %v502
  %v504 = vpop.f32.mrb[0].mxu0
  %505 = vmatprep.mubr.bf16.mxu0 0
  %506 = vmatmul.mubr.bf16.gmra.mrb[0].mxu0 %v296
  %v507 = vpop.f32.mrb[0].mxu0
  %v508 = vadd.f32 0.0, %v507
  %v509 = vpop.f32.mrb[0].mxu0
  %v510 = vpop.f32.mrb[0].mxu0
  %v511 = vadd.f32 0.0, %v510
  %v512 = vpop.f32.mrb[0].mxu0
  %513 = vmatprep.mubr.bf16.mxu0 0
  %514 = vmatmul.mubr.bf16.gmra.mrb[0].mxu0 %v299
  %v515 = vpop.f32.mrb[0].mxu0
  %v516 = vadd.f32 0.0, %v515
  %v517 = vpop.f32.mrb[0].mxu0
  %v518 = vpop.f32.mrb[0].mxu0
  %v519 = vadd.f32 0.0, %v518
  %v520 = vpop.f32.mrb[0].mxu0
  %521 = vmatprep.mubr.bf16.mxu0 0
  %522 = vmatmul.mubr.bf16.gmra.mrb[0].mxu0 %v302
  %v523 = vpop.f32.mrb[0].mxu0
  %v524 = vadd.f32 0.0, %v523
  %v525 = vpop.f32.mrb[0].mxu0
  %v526 = vpop.f32.mrb[0].mxu0
  %v527 = vadd.f32 0.0, %v526
  %v528 = vpop.f32.mrb[0].mxu0
  %529 = vmatprep.mubr.bf16.mxu0 0
  %530 = vmatmul.mubr.bf16.gmra.mrb[0].mxu0 %v305
  %v531 = vpop.f32.mrb[0].mxu0
  %v532 = vadd.f32 0.0, %v531
  %v533 = vpop.f32.mrb[0].mxu0
  %v534 = vpop.f32.mrb[0].mxu0
  %v535 = vadd.f32 0.0, %v534
  %v536 = vpop.f32.mrb[0].mxu0
  %537 = vmatprep.mubr.bf16.mxu0 0
  %538 = vmatmul.mubr.bf16.gmra.mrb[0].mxu0 %v308
  %v539 = vpop.f32.mrb[0].mxu0
  %v540 = vadd.f32 0.0, %v539
  %v541 = vpop.f32.mrb[0].mxu0
  %v542 = vpop.f32.mrb[0].mxu0
  %v543 = vadd.f32 0.0, %v542
  %v544 = vpop.f32.mrb[0].mxu0
  %545 = vmatprep.mubr.bf16.mxu0 0
  %546 = vmatmul.mubr.bf16.gmra.mrb[0].mxu0 %v311
  %v547 = vpop.f32.mrb[0].mxu0
  %v548 = vadd.f32 0.0, %v547
  %v549 = vpop.f32.mrb[0].mxu0
  %v550 = vpop.f32.mrb[0].mxu0
  %v551 = vadd.f32 0.0, %v550
  %v552 = vpop.f32.mrb[0].mxu0
  %553 = vmatprep.mubr.bf16.mxu0 0
  %554 = vmatmul.mubr.bf16.gmra.mrb[0].mxu0 %v314
  %v555 = vpop.f32.mrb[0].mxu0
  %v556 = vadd.f32 0.0, %v555
  %v557 = vpop.f32.mrb[0].mxu0
  %v558 = vpop.f32.mrb[0].mxu0
  %v559 = vadd.f32 0.0, %v558
  %v560 = vpop.f32.mrb[0].mxu0
  %561 = vmatprep.mubr.bf16.mxu0 0
  %562 = vmatmul.mubr.bf16.gmra.mrb[0].mxu0 %v317
  %v563 = vpop.f32.mrb[0].mxu0
  %v564 = vadd.f32 0.0, %v563
  %v565 = vpop.f32.mrb[0].mxu0
  %v566 = vpop.f32.mrb[0].mxu0
  %v567 = vadd.f32 0.0, %v566
  %v568 = vpop.f32.mrb[0].mxu0
  %569 = vmatprep.mubr.bf16.mxu0 0
  %570 = vmatmul.mubr.bf16.gmra.mrb[0].mxu0 %v320
  %v571 = vpop.f32.mrb[0].mxu0
  %v572 = vadd.f32 0.0, %v571
  %v573 = vpop.f32.mrb[0].mxu0
  %v574 = vpop.f32.mrb[0].mxu0
  %v575 = vadd.f32 0.0, %v574
  %v576 = vpop.f32.mrb[0].mxu0
  %577 = vmatprep.mubr.bf16.mxu0 0
  %578 = vmatmul.mubr.bf16.gmra.mrb[0].mxu0 %v323
  %v579 = vpop.f32.mrb[0].mxu0
  %v580 = vadd.f32 0.0, %v579
  %v581 = vpop.f32.mrb[0].mxu0
  %v582 = vpop.f32.mrb[0].mxu0
  %v583 = vadd.f32 0.0, %v582
  %v584 = vpop.f32.mrb[0].mxu0
  %585 = vmatprep.mubr.bf16.mxu0 0
  %586 = vmatmul.mubr.bf16.gmra.mrb[0].mxu0 %v326
  %v587 = vpop.f32.mrb[0].mxu0
  %v588 = vadd.f32 0.0, %v587
  %v589 = vpop.f32.mrb[0].mxu0
  %v590 = vpop.f32.mrb[0].mxu0
  %v591 = vadd.f32 0.0, %v590
  %v592 = vpop.f32.mrb[0].mxu0
  %593 = vmatprep.mubr.bf16.mxu0 0
  %594 = vmatmul.mubr.bf16.gmra.mrb[0].mxu0 %v329
  %v595 = vpop.f32.mrb[0].mxu0
  %v596 = vadd.f32 0.0, %v595
  %v597 = vpop.f32.mrb[0].mxu0
  %v598 = vpop.f32.mrb[0].mxu0
  %v599 = vadd.f32 0.0, %v598
  %v600 = vpop.f32.mrb[0].mxu0
  %601 = vmatprep.mubr.bf16.mxu0 0
  %602 = vmatmul.mubr.bf16.gmra.mrb[0].mxu0 %v332
  %v603 = vpop.f32.mrb[0].mxu0
  %v604 = vadd.f32 0.0, %v603
  %v605 = vpop.f32.mrb[0].mxu0
  %v606 = vpop.f32.mrb[0].mxu0
  %v607 = vadd.f32 0.0, %v606
  %v608 = vpop.f32.mrb[0].mxu0
  %609 = vmatprep.mubr.bf16.mxu0 0
  %610 = vmatmul.mubr.bf16.gmra.mrb[0].mxu0 %v335
  %v611 = vpop.f32.mrb[0].mxu0
  %v612 = vadd.f32 0.0, %v611
  %v613 = vpop.f32.mrb[0].mxu0
  %v614 = vpop.f32.mrb[0].mxu0
  %v615 = vadd.f32 0.0, %v614
  %v616 = vpop.f32.mrb[0].mxu0
  %617 = vmatprep.mubr.bf16.mxu0 0
  %618 = vmatmul.mubr.bf16.gmra.mrb[0].mxu0 %v338
  %v619 = vpop.f32.mrb[0].mxu0
  %v620 = vadd.f32 0.0, %v619
  %v621 = vpop.f32.mrb[0].mxu0
  %v622 = vpop.f32.mrb[0].mxu0
  %v623 = vadd.f32 0.0, %v622
  %v624 = vpop.f32.mrb[0].mxu0
  %625 = vmatprep.mubr.bf16.mxu0 0
  %626 = vmatmul.mubr.bf16.gmra.mrb[0].mxu0 %v341
  %v627 = vpop.f32.mrb[0].mxu0
  %v628 = vadd.f32 0.0, %v627
  %v629 = vpop.f32.mrb[0].mxu0
  %v630 = vpop.f32.mrb[0].mxu0
  %v631 = vadd.f32 0.0, %v630
  %v632 = vpop.f32.mrb[0].mxu0
  %633 = vmatprep.mubr.bf16.mxu0 0
  %634 = vmatmul.mubr.bf16.gmra.mrb[0].mxu0 %v344
  %v635 = vpop.f32.mrb[0].mxu0
  %v636 = vadd.f32 0.0, %v635
  %v637 = vpop.f32.mrb[0].mxu0
  %v638 = vpop.f32.mrb[0].mxu0
  %v639 = vadd.f32 0.0, %v638
  %v640 = vpop.f32.mrb[0].mxu0
  %641 = vdwg.mxu0
  %vm642 = vcmask 64512
  %v643 = vsel %vm642, %v388, 0.0
  %v644 = vsel %vm642, %v391, 0.0
  %v645 = vadd.f32 %v643, %v644
  %v646 = vsel %vm642, %v396, 0.0
  %v647 = vadd.f32 %v645, %v646
  %v648 = vsel %vm642, %v399, 0.0
  %v649 = vadd.f32 %v647, %v648
  %v650 = vsel %vm642, %v404, 0.0
  %v651 = vadd.f32 %v649, %v650
  %v652 = vsel %vm642, %v407, 0.0
  %v653 = vadd.f32 %v651, %v652
  %v654 = vsel %vm642, %v412, 0.0
  %v655 = vadd.f32 %v653, %v654
  %v656 = vsel %vm642, %v415, 0.0
  %v657 = vadd.f32 %v655, %v656
  %v658 = vsel %vm642, %v420, 0.0
  %v659 = vadd.f32 %v657, %v658
  %v660 = vsel %vm642, %v423, 0.0
  %v661 = vadd.f32 %v659, %v660
  %v662 = vsel %vm642, %v428, 0.0
  %v663 = vadd.f32 %v661, %v662
  %v664 = vsel %vm642, %v431, 0.0
  %v665 = vadd.f32 %v663, %v664
  %v666 = vsel %vm642, %v436, 0.0
  %v667 = vadd.f32 %v665, %v666
  %v668 = vsel %vm642, %v439, 0.0
  %v669 = vadd.f32 %v667, %v668
  %v670 = vsel %vm642, %v444, 0.0
  %v671 = vadd.f32 %v669, %v670
  %v672 = vsel %vm642, %v447, 0.0
  %v673 = vadd.f32 %v671, %v672
  %v674 = vsel %vm642, %v452, 0.0
  %v675 = vadd.f32 %v673, %v674
  %v676 = vsel %vm642, %v455, 0.0
  %v677 = vadd.f32 %v675, %v676
  %v678 = vsel %vm642, %v460, 0.0
  %v679 = vadd.f32 %v677, %v678
  %v680 = vsel %vm642, %v463, 0.0
  %v681 = vadd.f32 %v679, %v680
  %v682 = vsel %vm642, %v468, 0.0
  %v683 = vadd.f32 %v681, %v682
  %v684 = vsel %vm642, %v471, 0.0
  %v685 = vadd.f32 %v683, %v684
  %v686 = vsel %vm642, %v476, 0.0
  %v687 = vadd.f32 %v685, %v686
  %v688 = vsel %vm642, %v479, 0.0
  %v689 = vadd.f32 %v687, %v688
  %v690 = vsel %vm642, %v484, 0.0
  %v691 = vadd.f32 %v689, %v690
  %v692 = vsel %vm642, %v487, 0.0
  %v693 = vadd.f32 %v691, %v692
  %v694 = vsel %vm642, %v492, 0.0
  %v695 = vadd.f32 %v693, %v694
  %v696 = vsel %vm642, %v495, 0.0
  %v697 = vadd.f32 %v695, %v696
  %v698 = vsel %vm642, %v500, 0.0
  %v699 = vadd.f32 %v697, %v698
  %v700 = vsel %vm642, %v503, 0.0
  %v701 = vadd.f32 %v699, %v700
  %v702 = vsel %vm642, %v508, 0.0
  %v703 = vadd.f32 %v701, %v702
  %v704 = vsel %vm642, %v511, 0.0
  %v705 = vadd.f32 %v703, %v704
  %v706 = vsel %vm642, %v516, 0.0
  %v707 = vadd.f32 %v705, %v706
  %v708 = vsel %vm642, %v519, 0.0
  %v709 = vadd.f32 %v707, %v708
  %v710 = vsel %vm642, %v524, 0.0
  %v711 = vadd.f32 %v709, %v710
  %v712 = vsel %vm642, %v527, 0.0
  %v713 = vadd.f32 %v711, %v712
  %v714 = vsel %vm642, %v532, 0.0
  %v715 = vadd.f32 %v713, %v714
  %v716 = vsel %vm642, %v535, 0.0
  %v717 = vadd.f32 %v715, %v716
  %v718 = vsel %vm642, %v540, 0.0
  %v719 = vadd.f32 %v717, %v718
  %v720 = vsel %vm642, %v543, 0.0
  %v721 = vadd.f32 %v719, %v720
  %v722 = vsel %vm642, %v548, 0.0
  %v723 = vadd.f32 %v721, %v722
  %v724 = vsel %vm642, %v551, 0.0
  %v725 = vadd.f32 %v723, %v724
  %v726 = vsel %vm642, %v556, 0.0
  %v727 = vadd.f32 %v725, %v726
  %v728 = vsel %vm642, %v559, 0.0
  %v729 = vadd.f32 %v727, %v728
  %v730 = vsel %vm642, %v564, 0.0
  %v731 = vadd.f32 %v729, %v730
  %v732 = vsel %vm642, %v567, 0.0
  %v733 = vadd.f32 %v731, %v732
  %v734 = vsel %vm642, %v572, 0.0
  %v735 = vadd.f32 %v733, %v734
  %v736 = vsel %vm642, %v575, 0.0
  %v737 = vadd.f32 %v735, %v736
  %v738 = vsel %vm642, %v580, 0.0
  %v739 = vadd.f32 %v737, %v738
  %v740 = vsel %vm642, %v583, 0.0
  %v741 = vadd.f32 %v739, %v740
  %v742 = vsel %vm642, %v588, 0.0
  %v743 = vadd.f32 %v741, %v742
  %v744 = vsel %vm642, %v591, 0.0
  %v745 = vadd.f32 %v743, %v744
  %v746 = vsel %vm642, %v596, 0.0
  %v747 = vadd.f32 %v745, %v746
  %v748 = vsel %vm642, %v599, 0.0
  %v749 = vadd.f32 %v747, %v748
  %v750 = vsel %vm642, %v604, 0.0
  %v751 = vadd.f32 %v749, %v750
  %v752 = vsel %vm642, %v607, 0.0
  %v753 = vadd.f32 %v751, %v752
  %v754 = vsel %vm642, %v612, 0.0
  %v755 = vadd.f32 %v753, %v754
  %v756 = vsel %vm642, %v615, 0.0
  %v757 = vadd.f32 %v755, %v756
  %v758 = vsel %vm642, %v620, 0.0
  %v759 = vadd.f32 %v757, %v758
  %v760 = vsel %vm642, %v623, 0.0
  %v761 = vadd.f32 %v759, %v760
  %v762 = vsel %vm642, %v628, 0.0
  %v763 = vadd.f32 %v761, %v762
  %v764 = vsel %vm642, %v631, 0.0
  %v765 = vadd.f32 %v763, %v764
  %v766 = vsel %vm642, %v636, 0.0
  %v767 = vadd.f32 %v765, %v766
  %v768 = vsel %vm642, %v639, 0.0
  %v769 = vadd.f32 %v767, %v768
  %v770 = vrot.slane %v769, 4
  %v771 = vadd.f32 %v769, %v770
  %v772 = vrot.slane %v771, 2
  %v773 = vadd.f32 %v771, %v772
  %v774 = vrot.slane %v773, 1
  %v775 = vadd.f32 %v773, %v774
  %v776 = vmul.f32 %v775, 0.001953125
  %v777 = vmul.f32 %v388, %v388
  %v778 = vmul.f32 %v391, %v391
  %v779 = vmul.f32 %v396, %v396
  %v780 = vmul.f32 %v399, %v399
  %v781 = vmul.f32 %v404, %v404
  %v782 = vmul.f32 %v407, %v407
  %v783 = vmul.f32 %v412, %v412
  %v784 = vmul.f32 %v415, %v415
  %v785 = vmul.f32 %v420, %v420
  %v786 = vmul.f32 %v423, %v423
  %v787 = vmul.f32 %v428, %v428
  %v788 = vmul.f32 %v431, %v431
  %v789 = vmul.f32 %v436, %v436
  %v790 = vmul.f32 %v439, %v439
  %v791 = vmul.f32 %v444, %v444
  %v792 = vmul.f32 %v447, %v447
  %v793 = vmul.f32 %v452, %v452
  %v794 = vmul.f32 %v455, %v455
  %v795 = vmul.f32 %v460, %v460
  %v796 = vmul.f32 %v463, %v463
  %v797 = vmul.f32 %v468, %v468
  %v798 = vmul.f32 %v471, %v471
  %v799 = vmul.f32 %v476, %v476
  %v800 = vmul.f32 %v479, %v479
  %v801 = vmul.f32 %v484, %v484
  %v802 = vmul.f32 %v487, %v487
  %v803 = vmul.f32 %v492, %v492
  %v804 = vmul.f32 %v495, %v495
  %v805 = vmul.f32 %v500, %v500
  %v806 = vmul.f32 %v503, %v503
  %v807 = vmul.f32 %v508, %v508
  %v808 = vmul.f32 %v511, %v511
  %v809 = vmul.f32 %v516, %v516
  %v810 = vmul.f32 %v519, %v519
  %v811 = vmul.f32 %v524, %v524
  %v812 = vmul.f32 %v527, %v527
  %v813 = vmul.f32 %v532, %v532
  %v814 = vmul.f32 %v535, %v535
  %v815 = vmul.f32 %v540, %v540
  %v816 = vmul.f32 %v543, %v543
  %v817 = vmul.f32 %v548, %v548
  %v818 = vmul.f32 %v551, %v551
  %v819 = vmul.f32 %v556, %v556
  %v820 = vmul.f32 %v559, %v559
  %v821 = vmul.f32 %v564, %v564
  %v822 = vmul.f32 %v567, %v567
  %v823 = vmul.f32 %v572, %v572
  %v824 = vmul.f32 %v575, %v575
  %v825 = vmul.f32 %v580, %v580
  %v826 = vmul.f32 %v583, %v583
  %v827 = vmul.f32 %v588, %v588
  %v828 = vmul.f32 %v591, %v591
  %v829 = vmul.f32 %v596, %v596
  %v830 = vmul.f32 %v599, %v599
  %v831 = vmul.f32 %v604, %v604
  %v832 = vmul.f32 %v607, %v607
  %v833 = vmul.f32 %v612, %v612
  %v834 = vmul.f32 %v615, %v615
  %v835 = vmul.f32 %v620, %v620
  %v836 = vmul.f32 %v623, %v623
  %v837 = vmul.f32 %v628, %v628
  %v838 = vmul.f32 %v631, %v631
  %v839 = vmul.f32 %v636, %v636
  %v840 = vmul.f32 %v639, %v639
  %v841 = vsel %vm642, %v777, 0.0
  %v842 = vsel %vm642, %v778, 0.0
  %v843 = vadd.f32 %v841, %v842
  %v844 = vsel %vm642, %v779, 0.0
  %v845 = vadd.f32 %v843, %v844
  %v846 = vsel %vm642, %v780, 0.0
  %v847 = vadd.f32 %v845, %v846
  %v848 = vsel %vm642, %v781, 0.0
  %v849 = vadd.f32 %v847, %v848
  %v850 = vsel %vm642, %v782, 0.0
  %v851 = vadd.f32 %v849, %v850
  %v852 = vsel %vm642, %v783, 0.0
  %v853 = vadd.f32 %v851, %v852
  %v854 = vsel %vm642, %v784, 0.0
  %v855 = vadd.f32 %v853, %v854
  %v856 = vsel %vm642, %v785, 0.0
  %v857 = vadd.f32 %v855, %v856
  %v858 = vsel %vm642, %v786, 0.0
  %v859 = vadd.f32 %v857, %v858
  %v860 = vsel %vm642, %v787, 0.0
  %v861 = vadd.f32 %v859, %v860
  %v862 = vsel %vm642, %v788, 0.0
  %v863 = vadd.f32 %v861, %v862
  %v864 = vsel %vm642, %v789, 0.0
  %v865 = vadd.f32 %v863, %v864
  %v866 = vsel %vm642, %v790, 0.0
  %v867 = vadd.f32 %v865, %v866
  %v868 = vsel %vm642, %v791, 0.0
  %v869 = vadd.f32 %v867, %v868
  %v870 = vsel %vm642, %v792, 0.0
  %v871 = vadd.f32 %v869, %v870
  %v872 = vsel %vm642, %v793, 0.0
  %v873 = vadd.f32 %v871, %v872
  %v874 = vsel %vm642, %v794, 0.0
  %v875 = vadd.f32 %v873, %v874
  %v876 = vsel %vm642, %v795, 0.0
  %v877 = vadd.f32 %v875, %v876
  %v878 = vsel %vm642, %v796, 0.0
  %v879 = vadd.f32 %v877, %v878
  %v880 = vsel %vm642, %v797, 0.0
  %v881 = vadd.f32 %v879, %v880
  %v882 = vsel %vm642, %v798, 0.0
  %v883 = vadd.f32 %v881, %v882
  %v884 = vsel %vm642, %v799, 0.0
  %v885 = vadd.f32 %v883, %v884
  %v886 = vsel %vm642, %v800, 0.0
  %v887 = vadd.f32 %v885, %v886
  %v888 = vsel %vm642, %v801, 0.0
  %v889 = vadd.f32 %v887, %v888
  %v890 = vsel %vm642, %v802, 0.0
  %v891 = vadd.f32 %v889, %v890
  %v892 = vsel %vm642, %v803, 0.0
  %v893 = vadd.f32 %v891, %v892
  %v894 = vsel %vm642, %v804, 0.0
  %v895 = vadd.f32 %v893, %v894
  %v896 = vsel %vm642, %v805, 0.0
  %v897 = vadd.f32 %v895, %v896
  %v898 = vsel %vm642, %v806, 0.0
  %v899 = vadd.f32 %v897, %v898
  %v900 = vsel %vm642, %v807, 0.0
  %v901 = vadd.f32 %v899, %v900
  %v902 = vsel %vm642, %v808, 0.0
  %v903 = vadd.f32 %v901, %v902
  %v904 = vsel %vm642, %v809, 0.0
  %v905 = vadd.f32 %v903, %v904
  %v906 = vsel %vm642, %v810, 0.0
  %v907 = vadd.f32 %v905, %v906
  %v908 = vsel %vm642, %v811, 0.0
  %v909 = vadd.f32 %v907, %v908
  %v910 = vsel %vm642, %v812, 0.0
  %v911 = vadd.f32 %v909, %v910
  %v912 = vsel %vm642, %v813, 0.0
  %v913 = vadd.f32 %v911, %v912
  %v914 = vsel %vm642, %v814, 0.0
  %v915 = vadd.f32 %v913, %v914
  %v916 = vsel %vm642, %v815, 0.0
  %v917 = vadd.f32 %v915, %v916
  %v918 = vsel %vm642, %v816, 0.0
  %v919 = vadd.f32 %v917, %v918
  %v920 = vsel %vm642, %v817, 0.0
  %v921 = vadd.f32 %v919, %v920
  %v922 = vsel %vm642, %v818, 0.0
  %v923 = vadd.f32 %v921, %v922
  %v924 = vsel %vm642, %v819, 0.0
  %v925 = vadd.f32 %v923, %v924
  %v926 = vsel %vm642, %v820, 0.0
  %v927 = vadd.f32 %v925, %v926
  %v928 = vsel %vm642, %v821, 0.0
  %v929 = vadd.f32 %v927, %v928
  %v930 = vsel %vm642, %v822, 0.0
  %v931 = vadd.f32 %v929, %v930
  %v932 = vsel %vm642, %v823, 0.0
  %v933 = vadd.f32 %v931, %v932
  %v934 = vsel %vm642, %v824, 0.0
  %v935 = vadd.f32 %v933, %v934
  %v936 = vsel %vm642, %v825, 0.0
  %v937 = vadd.f32 %v935, %v936
  %v938 = vsel %vm642, %v826, 0.0
  %v939 = vadd.f32 %v937, %v938
  %v940 = vsel %vm642, %v827, 0.0
  %v941 = vadd.f32 %v939, %v940
  %v942 = vsel %vm642, %v828, 0.0
  %v943 = vadd.f32 %v941, %v942
  %v944 = vsel %vm642, %v829, 0.0
  %v945 = vadd.f32 %v943, %v944
  %v946 = vsel %vm642, %v830, 0.0
  %v947 = vadd.f32 %v945, %v946
  %v948 = vsel %vm642, %v831, 0.0
  %v949 = vadd.f32 %v947, %v948
  %v950 = vsel %vm642, %v832, 0.0
  %v951 = vadd.f32 %v949, %v950
  %v952 = vsel %vm642, %v833, 0.0
  %v953 = vadd.f32 %v951, %v952
  %v954 = vsel %vm642, %v834, 0.0
  %v955 = vadd.f32 %v953, %v954
  %v956 = vsel %vm642, %v835, 0.0
  %v957 = vadd.f32 %v955, %v956
  %v958 = vsel %vm642, %v836, 0.0
  %v959 = vadd.f32 %v957, %v958
  %v960 = vsel %vm642, %v837, 0.0
  %v961 = vadd.f32 %v959, %v960
  %v962 = vsel %vm642, %v838, 0.0
  %v963 = vadd.f32 %v961, %v962
  %v964 = vsel %vm642, %v839, 0.0
  %v965 = vadd.f32 %v963, %v964
  %v966 = vsel %vm642, %v840, 0.0
  %v967 = vadd.f32 %v965, %v966
  %v968 = vrot.slane %v967, 4
  %v969 = vadd.f32 %v967, %v968
  %v970 = vrot.slane %v969, 2
  %v971 = vadd.f32 %v969, %v970
  %v972 = vrot.slane %v971, 1
  %v973 = vadd.f32 %v971, %v972
  %v974 = vmul.f32 %v973, 0.001953125
  %v975 = vmul.f32 %v776, %v776
  %v976 = vsub.f32 %v974, %v975
  %v977 = vmax.f32 %v976, 0.0
  %v978 = vld [vmem:[%s2] sm:$0x1]
  %v979 = vadd.f32 %v977, 1e-05
  %v980 = vrsqrt.pop %v979
  %v981 = vmul.f32 %v978, %v980
  %v982 = vld [vmem:[%s3] sm:$0x1]
  %v983 = vmul.f32 %v776, %v981
  %v984 = vsub.f32 %v982, %v983
  %v986 = vlaneseq
  %v987 = vshrl.u32 %v986, 7
  %v988 = vsub.s32 0, %v987
  %v989 = vrot.slane %v981, %v988
  %v991 = vmul.f32 %v388, %v989
  %v992 = vmul.f32 %v391, %v989
  %v993 = vmul.f32 %v396, %v989
  %v994 = vmul.f32 %v399, %v989
  %v995 = vmul.f32 %v404, %v989
  %v996 = vmul.f32 %v407, %v989
  %v997 = vmul.f32 %v412, %v989
  %v998 = vmul.f32 %v415, %v989
  %v999 = vmul.f32 %v420, %v989
  %v1000 = vmul.f32 %v423, %v989
  %v1001 = vmul.f32 %v428, %v989
  %v1002 = vmul.f32 %v431, %v989
  %v1003 = vmul.f32 %v436, %v989
  %v1004 = vmul.f32 %v439, %v989
  %v1005 = vmul.f32 %v444, %v989
  %v1006 = vmul.f32 %v447, %v989
  %v1007 = vmul.f32 %v452, %v989
  %v1008 = vmul.f32 %v455, %v989
  %v1009 = vmul.f32 %v460, %v989
  %v1010 = vmul.f32 %v463, %v989
  %v1011 = vmul.f32 %v468, %v989
  %v1012 = vmul.f32 %v471, %v989
  %v1013 = vmul.f32 %v476, %v989
  %v1014 = vmul.f32 %v479, %v989
  %v1015 = vmul.f32 %v484, %v989
  %v1016 = vmul.f32 %v487, %v989
  %v1017 = vmul.f32 %v492, %v989
  %v1018 = vmul.f32 %v495, %v989
  %v1019 = vmul.f32 %v500, %v989
  %v1020 = vmul.f32 %v503, %v989
  %v1021 = vmul.f32 %v508, %v989
  %v1022 = vmul.f32 %v511, %v989
  %v1023 = vmul.f32 %v516, %v989
  %v1024 = vmul.f32 %v519, %v989
  %v1025 = vmul.f32 %v524, %v989
  %v1026 = vmul.f32 %v527, %v989
  %v1027 = vmul.f32 %v532, %v989
  %v1028 = vmul.f32 %v535, %v989
  %v1029 = vmul.f32 %v540, %v989
  %v1030 = vmul.f32 %v543, %v989
  %v1031 = vmul.f32 %v548, %v989
  %v1032 = vmul.f32 %v551, %v989
  %v1033 = vmul.f32 %v556, %v989
  %v1034 = vmul.f32 %v559, %v989
  %v1035 = vmul.f32 %v564, %v989
  %v1036 = vmul.f32 %v567, %v989
  %v1037 = vmul.f32 %v572, %v989
  %v1038 = vmul.f32 %v575, %v989
  %v1039 = vmul.f32 %v580, %v989
  %v1040 = vmul.f32 %v583, %v989
  %v1041 = vmul.f32 %v588, %v989
  %v1042 = vmul.f32 %v591, %v989
  %v1043 = vmul.f32 %v596, %v989
  %v1044 = vmul.f32 %v599, %v989
  %v1045 = vmul.f32 %v604, %v989
  %v1046 = vmul.f32 %v607, %v989
  %v1047 = vmul.f32 %v612, %v989
  %v1048 = vmul.f32 %v615, %v989
  %v1049 = vmul.f32 %v620, %v989
  %v1050 = vmul.f32 %v623, %v989
  %v1051 = vmul.f32 %v628, %v989
  %v1052 = vmul.f32 %v631, %v989
  %v1053 = vmul.f32 %v636, %v989
  %v1054 = vmul.f32 %v639, %v989
  %v1056 = vlaneseq
  %v1057 = vshrl.u32 %v1056, 7
  %v1058 = vsub.s32 0, %v1057
  %v1059 = vrot.slane %v984, %v1058
  %v1061 = vadd.f32 %v991, %v1059
  %v1062 = vadd.f32 %v992, %v1059
  %v1063 = vadd.f32 %v993, %v1059
  %v1064 = vadd.f32 %v994, %v1059
  %v1065 = vadd.f32 %v995, %v1059
  %v1066 = vadd.f32 %v996, %v1059
  %v1067 = vadd.f32 %v997, %v1059
  %v1068 = vadd.f32 %v998, %v1059
  %v1069 = vadd.f32 %v999, %v1059
  %v1070 = vadd.f32 %v1000, %v1059
  %v1071 = vadd.f32 %v1001, %v1059
  %v1072 = vadd.f32 %v1002, %v1059
  %v1073 = vadd.f32 %v1003, %v1059
  %v1074 = vadd.f32 %v1004, %v1059
  %v1075 = vadd.f32 %v1005, %v1059
  %v1076 = vadd.f32 %v1006, %v1059
  %v1077 = vadd.f32 %v1007, %v1059
  %v1078 = vadd.f32 %v1008, %v1059
  %v1079 = vadd.f32 %v1009, %v1059
  %v1080 = vadd.f32 %v1010, %v1059
  %v1081 = vadd.f32 %v1011, %v1059
  %v1082 = vadd.f32 %v1012, %v1059
  %v1083 = vadd.f32 %v1013, %v1059
  %v1084 = vadd.f32 %v1014, %v1059
  %v1085 = vadd.f32 %v1015, %v1059
  %v1086 = vadd.f32 %v1016, %v1059
  %v1087 = vadd.f32 %v1017, %v1059
  %v1088 = vadd.f32 %v1018, %v1059
  %v1089 = vadd.f32 %v1019, %v1059
  %v1090 = vadd.f32 %v1020, %v1059
  %v1091 = vadd.f32 %v1021, %v1059
  %v1092 = vadd.f32 %v1022, %v1059
  %v1093 = vadd.f32 %v1023, %v1059
  %v1094 = vadd.f32 %v1024, %v1059
  %v1095 = vadd.f32 %v1025, %v1059
  %v1096 = vadd.f32 %v1026, %v1059
  %v1097 = vadd.f32 %v1027, %v1059
  %v1098 = vadd.f32 %v1028, %v1059
  %v1099 = vadd.f32 %v1029, %v1059
  %v1100 = vadd.f32 %v1030, %v1059
  %v1101 = vadd.f32 %v1031, %v1059
  %v1102 = vadd.f32 %v1032, %v1059
  %v1103 = vadd.f32 %v1033, %v1059
  %v1104 = vadd.f32 %v1034, %v1059
  %v1105 = vadd.f32 %v1035, %v1059
  %v1106 = vadd.f32 %v1036, %v1059
  %v1107 = vadd.f32 %v1037, %v1059
  %v1108 = vadd.f32 %v1038, %v1059
  %v1109 = vadd.f32 %v1039, %v1059
  %v1110 = vadd.f32 %v1040, %v1059
  %v1111 = vadd.f32 %v1041, %v1059
  %v1112 = vadd.f32 %v1042, %v1059
  %v1113 = vadd.f32 %v1043, %v1059
  %v1114 = vadd.f32 %v1044, %v1059
  %v1115 = vadd.f32 %v1045, %v1059
  %v1116 = vadd.f32 %v1046, %v1059
  %v1117 = vadd.f32 %v1047, %v1059
  %v1118 = vadd.f32 %v1048, %v1059
  %v1119 = vadd.f32 %v1049, %v1059
  %v1120 = vadd.f32 %v1050, %v1059
  %v1121 = vadd.f32 %v1051, %v1059
  %v1122 = vadd.f32 %v1052, %v1059
  %v1123 = vadd.f32 %v1053, %v1059
  %v1124 = vadd.f32 %v1054, %v1059
  %v1125 = vmax.f32 %v1061, 0.0
  %v1126 = vmax.f32 %v1062, 0.0
  %v1127 = vmax.f32 %v1063, 0.0
  %v1128 = vmax.f32 %v1064, 0.0
  %v1129 = vmax.f32 %v1065, 0.0
  %v1130 = vmax.f32 %v1066, 0.0
  %v1131 = vmax.f32 %v1067, 0.0
  %v1132 = vmax.f32 %v1068, 0.0
  %v1133 = vmax.f32 %v1069, 0.0
  %v1134 = vmax.f32 %v1070, 0.0
  %v1135 = vmax.f32 %v1071, 0.0
  %v1136 = vmax.f32 %v1072, 0.0
  %v1137 = vmax.f32 %v1073, 0.0
  %v1138 = vmax.f32 %v1074, 0.0
  %v1139 = vmax.f32 %v1075, 0.0
  %v1140 = vmax.f32 %v1076, 0.0
  %v1141 = vmax.f32 %v1077, 0.0
  %v1142 = vmax.f32 %v1078, 0.0
  %v1143 = vmax.f32 %v1079, 0.0
  %v1144 = vmax.f32 %v1080, 0.0
  %v1145 = vmax.f32 %v1081, 0.0
  %v1146 = vmax.f32 %v1082, 0.0
  %v1147 = vmax.f32 %v1083, 0.0
  %v1148 = vmax.f32 %v1084, 0.0
  %v1149 = vmax.f32 %v1085, 0.0
  %v1150 = vmax.f32 %v1086, 0.0
  %v1151 = vmax.f32 %v1087, 0.0
  %v1152 = vmax.f32 %v1088, 0.0
  %v1153 = vmax.f32 %v1089, 0.0
  %v1154 = vmax.f32 %v1090, 0.0
  %v1155 = vmax.f32 %v1091, 0.0
  %v1156 = vmax.f32 %v1092, 0.0
  %v1157 = vmax.f32 %v1093, 0.0
  %v1158 = vmax.f32 %v1094, 0.0
  %v1159 = vmax.f32 %v1095, 0.0
  %v1160 = vmax.f32 %v1096, 0.0
  %v1161 = vmax.f32 %v1097, 0.0
  %v1162 = vmax.f32 %v1098, 0.0
  %v1163 = vmax.f32 %v1099, 0.0
  %v1164 = vmax.f32 %v1100, 0.0
  %v1165 = vmax.f32 %v1101, 0.0
  %v1166 = vmax.f32 %v1102, 0.0
  %v1167 = vmax.f32 %v1103, 0.0
  %v1168 = vmax.f32 %v1104, 0.0
  %v1169 = vmax.f32 %v1105, 0.0
  %v1170 = vmax.f32 %v1106, 0.0
  %v1171 = vmax.f32 %v1107, 0.0
  %v1172 = vmax.f32 %v1108, 0.0
  %v1173 = vmax.f32 %v1109, 0.0
  %v1174 = vmax.f32 %v1110, 0.0
  %v1175 = vmax.f32 %v1111, 0.0
  %v1176 = vmax.f32 %v1112, 0.0
  %v1177 = vmax.f32 %v1113, 0.0
  %v1178 = vmax.f32 %v1114, 0.0
  %v1179 = vmax.f32 %v1115, 0.0
  %v1180 = vmax.f32 %v1116, 0.0
  %v1181 = vmax.f32 %v1117, 0.0
  %v1182 = vmax.f32 %v1118, 0.0
  %v1183 = vmax.f32 %v1119, 0.0
  %v1184 = vmax.f32 %v1120, 0.0
  %v1185 = vmax.f32 %v1121, 0.0
  %v1186 = vmax.f32 %v1122, 0.0
  %v1187 = vmax.f32 %v1123, 0.0
  %v1188 = vmax.f32 %v1124, 0.0
  %1189 = vst.msk [vmem:[%s4] sm:$0xff] %vm642, %v1125
  %1190 = vst.msk [vmem:[%s4 + $0x8] sm:$0xff] %vm642, %v1126
  %1191 = vst.msk [vmem:[%s4 + $0x10] sm:$0xff] %vm642, %v1127
  %1192 = vst.msk [vmem:[%s4 + $0x18] sm:$0xff] %vm642, %v1128
  %1193 = vst.msk [vmem:[%s4 + $0x20] sm:$0xff] %vm642, %v1129
  %1194 = vst.msk [vmem:[%s4 + $0x28] sm:$0xff] %vm642, %v1130
  %1195 = vst.msk [vmem:[%s4 + $0x30] sm:$0xff] %vm642, %v1131
  %1196 = vst.msk [vmem:[%s4 + $0x38] sm:$0xff] %vm642, %v1132
  %1197 = vst.msk [vmem:[%s4 + $0x40] sm:$0xff] %vm642, %v1133
  %1198 = vst.msk [vmem:[%s4 + $0x48] sm:$0xff] %vm642, %v1134
  %1199 = vst.msk [vmem:[%s4 + $0x50] sm:$0xff] %vm642, %v1135
  %1200 = vst.msk [vmem:[%s4 + $0x58] sm:$0xff] %vm642, %v1136
  %1201 = vst.msk [vmem:[%s4 + $0x60] sm:$0xff] %vm642, %v1137
  %1202 = vst.msk [vmem:[%s4 + $0x68] sm:$0xff] %vm642, %v1138
  %1203 = vst.msk [vmem:[%s4 + $0x70] sm:$0xff] %vm642, %v1139
  %1204 = vst.msk [vmem:[%s4 + $0x78] sm:$0xff] %vm642, %v1140
  %1205 = vst.msk [vmem:[%s4 + $0x80] sm:$0xff] %vm642, %v1141
  %1206 = vst.msk [vmem:[%s4 + $0x88] sm:$0xff] %vm642, %v1142
  %1207 = vst.msk [vmem:[%s4 + $0x90] sm:$0xff] %vm642, %v1143
  %1208 = vst.msk [vmem:[%s4 + $0x98] sm:$0xff] %vm642, %v1144
  %1209 = vst.msk [vmem:[%s4 + $0xa0] sm:$0xff] %vm642, %v1145
  %1210 = vst.msk [vmem:[%s4 + $0xa8] sm:$0xff] %vm642, %v1146
  %1211 = vst.msk [vmem:[%s4 + $0xb0] sm:$0xff] %vm642, %v1147
  %1212 = vst.msk [vmem:[%s4 + $0xb8] sm:$0xff] %vm642, %v1148
  %1213 = vst.msk [vmem:[%s4 + $0xc0] sm:$0xff] %vm642, %v1149
  %1214 = vst.msk [vmem:[%s4 + $0xc8] sm:$0xff] %vm642, %v1150
  %1215 = vst.msk [vmem:[%s4 + $0xd0] sm:$0xff] %vm642, %v1151
  %1216 = vst.msk [vmem:[%s4 + $0xd8] sm:$0xff] %vm642, %v1152
  %1217 = vst.msk [vmem:[%s4 + $0xe0] sm:$0xff] %vm642, %v1153
  %1218 = vst.msk [vmem:[%s4 + $0xe8] sm:$0xff] %vm642, %v1154
  %1219 = vst.msk [vmem:[%s4 + $0xf0] sm:$0xff] %vm642, %v1155
  %1220 = vst.msk [vmem:[%s4 + $0xf8] sm:$0xff] %vm642, %v1156
  %1221 = vst.msk [vmem:[%s4 + $0x100] sm:$0xff] %vm642, %v1157
  %1222 = vst.msk [vmem:[%s4 + $0x108] sm:$0xff] %vm642, %v1158
  %1223 = vst.msk [vmem:[%s4 + $0x110] sm:$0xff] %vm642, %v1159
  %1224 = vst.msk [vmem:[%s4 + $0x118] sm:$0xff] %vm642, %v1160
  %1225 = vst.msk [vmem:[%s4 + $0x120] sm:$0xff] %vm642, %v1161
  %1226 = vst.msk [vmem:[%s4 + $0x128] sm:$0xff] %vm642, %v1162
  %1227 = vst.msk [vmem:[%s4 + $0x130] sm:$0xff] %vm642, %v1163
  %1228 = vst.msk [vmem:[%s4 + $0x138] sm:$0xff] %vm642, %v1164
  %1229 = vst.msk [vmem:[%s4 + $0x140] sm:$0xff] %vm642, %v1165
  %1230 = vst.msk [vmem:[%s4 + $0x148] sm:$0xff] %vm642, %v1166
  %1231 = vst.msk [vmem:[%s4 + $0x150] sm:$0xff] %vm642, %v1167
  %1232 = vst.msk [vmem:[%s4 + $0x158] sm:$0xff] %vm642, %v1168
  %1233 = vst.msk [vmem:[%s4 + $0x160] sm:$0xff] %vm642, %v1169
  %1234 = vst.msk [vmem:[%s4 + $0x168] sm:$0xff] %vm642, %v1170
  %1235 = vst.msk [vmem:[%s4 + $0x170] sm:$0xff] %vm642, %v1171
  %1236 = vst.msk [vmem:[%s4 + $0x178] sm:$0xff] %vm642, %v1172
  %1237 = vst.msk [vmem:[%s4 + $0x180] sm:$0xff] %vm642, %v1173
  %1238 = vst.msk [vmem:[%s4 + $0x188] sm:$0xff] %vm642, %v1174
  %1239 = vst.msk [vmem:[%s4 + $0x190] sm:$0xff] %vm642, %v1175
  %1240 = vst.msk [vmem:[%s4 + $0x198] sm:$0xff] %vm642, %v1176
  %1241 = vst.msk [vmem:[%s4 + $0x1a0] sm:$0xff] %vm642, %v1177
  %1242 = vst.msk [vmem:[%s4 + $0x1a8] sm:$0xff] %vm642, %v1178
  %1243 = vst.msk [vmem:[%s4 + $0x1b0] sm:$0xff] %vm642, %v1179
  %1244 = vst.msk [vmem:[%s4 + $0x1b8] sm:$0xff] %vm642, %v1180
  %1245 = vst.msk [vmem:[%s4 + $0x1c0] sm:$0xff] %vm642, %v1181
  %1246 = vst.msk [vmem:[%s4 + $0x1c8] sm:$0xff] %vm642, %v1182
  %1247 = vst.msk [vmem:[%s4 + $0x1d0] sm:$0xff] %vm642, %v1183
  %1248 = vst.msk [vmem:[%s4 + $0x1d8] sm:$0xff] %vm642, %v1184
  %1249 = vst.msk [vmem:[%s4 + $0x1e0] sm:$0xff] %vm642, %v1185
  %1250 = vst.msk [vmem:[%s4 + $0x1e8] sm:$0xff] %vm642, %v1186
  %1251 = vst.msk [vmem:[%s4 + $0x1f0] sm:$0xff] %vm642, %v1187
  %1252 = vst.msk [vmem:[%s4 + $0x1f8] sm:$0xff] %vm642, %v1188
  // Predicated region
  $region18: #{unet_forward.27} parent=0 // pred_check
    _
  $region19: #{unet_forward.27} parent=0 // pred_check_branch
    %1254 = sbr.rel (0) target = $region21
  $region20: #{unet_forward.27} parent=0 // pred_region
    _
  $region21: #{unet_forward.27} parent=0 // pred_fallthru
    _
  // Predicated region
  $region22: #{unet_forward.27} parent=0 // pred_check
    _
  $region23: #{unet_forward.27} parent=0 // pred_check_branch
    %1256 = sbr.rel (0) target = $region25
  $region24: #{unet_forward.27} parent=0 // pred_region
    _
  $region25: #{unet_forward.27} parent=0 // pred_fallthru
    _

// kernel: unet_forward.28
$region0: #{unet_forward.28}
  #allocation0 [shape = 'u32[]', space=smem, size = 0x4, offset = 0x4, fixed_abs, tag = 'smem constant byte address 0x4 - core index']
  #allocation1 [shape = 'u32[144,128]{1,0:T(1,128)}', space=vmem, size = 0x12000, scoped, tag = 'internal scratch']
  %s0 = inlined_call_operand.vmem [shape: bf16[512,72], index: 0, kind: input, shape index: {}]
  %s1 = inlined_call_operand.vmem [shape: bf16[72,8], index: 1, kind: input, shape index: {}]
  %s2 = inlined_call_operand.vmem [shape: f32[1,8], index: 2, kind: input, shape index: {}]
  %s3 = inlined_call_operand.vmem [shape: f32[1,8], index: 3, kind: input, shape index: {}]
  %s4 = inlined_call_operand.vmem [shape: f32[512,8], index: 4, kind: output, shape index: {}]
  %s5 = sld [smem:[#allocation0]]
  $region26: #{unet_forward.28} parent=0
    _
  %s7 = ssub.s32 1, %s5
  %s8 = scalar_select 0, %s7, %s5
  // Predicated region
  $region2: #{unet_forward.28} parent=0 // pred_check
    _
  $region3: #{unet_forward.28} parent=0 // pred_check_branch
    %10 = sbr.rel (0) target = $region5
  $region4: #{unet_forward.28} parent=0 // pred_region
    _
  $region5: #{unet_forward.28} parent=0 // pred_fallthru
    _
  // Predicated region
  $region6: #{unet_forward.28} parent=0 // pred_check
    _
  $region7: #{unet_forward.28} parent=0 // pred_check_branch
    %12 = sbr.rel (0) target = $region9
  $region8: #{unet_forward.28} parent=0 // pred_region
    _
  $region9: #{unet_forward.28} parent=0 // pred_fallthru
    _
  // Predicated region
  $region10: #{unet_forward.28} parent=0 // pred_check
    _
  $region11: #{unet_forward.28} parent=0 // pred_check_branch
    %14 = sbr.rel (0) target = $region13
  $region12: #{unet_forward.28} parent=0 // pred_region
    _
  $region13: #{unet_forward.28} parent=0 // pred_fallthru
    _
  // Predicated region
  $region14: #{unet_forward.28} parent=0 // pred_check
    _
  $region15: #{unet_forward.28} parent=0 // pred_check_branch
    %16 = sbr.rel (0) target = $region17
  $region16: #{unet_forward.28} parent=0 // pred_region
    _
  $region17: #{unet_forward.28} parent=0 // pred_fallthru
    _
  %v18 = vld [vmem:[%s0] sm:$0xf]
  %v19 = vld [vmem:[%s0 + $0x4] sm:$0xf]
  %v20 = vld [vmem:[%s0 + $0x8] sm:$0xf]
  %v21 = vld [vmem:[%s0 + $0xc] sm:$0xf]
  %v22 = vld [vmem:[%s0 + $0x10] sm:$0xf]
  %v23 = vld [vmem:[%s0 + $0x14] sm:$0xf]
  %v24 = vld [vmem:[%s0 + $0x18] sm:$0xf]
  %v25 = vld [vmem:[%s0 + $0x1c] sm:$0xf]
  %v26 = vld [vmem:[%s0 + $0x20] sm:$0xf]
  %v27 = vld [vmem:[%s0 + $0x24] sm:$0xf]
  %v28 = vld [vmem:[%s0 + $0x28] sm:$0xf]
  %v29 = vld [vmem:[%s0 + $0x2c] sm:$0xf]
  %v30 = vld [vmem:[%s0 + $0x30] sm:$0xf]
  %v31 = vld [vmem:[%s0 + $0x34] sm:$0xf]
  %v32 = vld [vmem:[%s0 + $0x38] sm:$0xf]
  %v33 = vld [vmem:[%s0 + $0x3c] sm:$0xf]
  %v34 = vld [vmem:[%s0 + $0x40] sm:$0xf]
  %v35 = vld [vmem:[%s0 + $0x44] sm:$0xf]
  %v36 = vld [vmem:[%s0 + $0x48] sm:$0xf]
  %v37 = vld [vmem:[%s0 + $0x4c] sm:$0xf]
  %v38 = vld [vmem:[%s0 + $0x50] sm:$0xf]
  %v39 = vld [vmem:[%s0 + $0x54] sm:$0xf]
  %v40 = vld [vmem:[%s0 + $0x58] sm:$0xf]
  %v41 = vld [vmem:[%s0 + $0x5c] sm:$0xf]
  %v42 = vld [vmem:[%s0 + $0x60] sm:$0xf]
  %v43 = vld [vmem:[%s0 + $0x64] sm:$0xf]
  %v44 = vld [vmem:[%s0 + $0x68] sm:$0xf]
  %v45 = vld [vmem:[%s0 + $0x6c] sm:$0xf]
  %v46 = vld [vmem:[%s0 + $0x70] sm:$0xf]
  %v47 = vld [vmem:[%s0 + $0x74] sm:$0xf]
  %v48 = vld [vmem:[%s0 + $0x78] sm:$0xf]
  %v49 = vld [vmem:[%s0 + $0x7c] sm:$0xf]
  %v50 = vld [vmem:[%s0 + $0x80] sm:$0xf]
  %v51 = vld [vmem:[%s0 + $0x84] sm:$0xf]
  %v52 = vld [vmem:[%s0 + $0x88] sm:$0xf]
  %v53 = vld [vmem:[%s0 + $0x8c] sm:$0xf]
  %v54 = vld [vmem:[%s0 + $0x90] sm:$0xf]
  %v55 = vld [vmem:[%s0 + $0x94] sm:$0xf]
  %v56 = vld [vmem:[%s0 + $0x98] sm:$0xf]
  %v57 = vld [vmem:[%s0 + $0x9c] sm:$0xf]
  %v58 = vld [vmem:[%s0 + $0xa0] sm:$0xf]
  %v59 = vld [vmem:[%s0 + $0xa4] sm:$0xf]
  %v60 = vld [vmem:[%s0 + $0xa8] sm:$0xf]
  %v61 = vld [vmem:[%s0 + $0xac] sm:$0xf]
  %v62 = vld [vmem:[%s0 + $0xb0] sm:$0xf]
  %v63 = vld [vmem:[%s0 + $0xb4] sm:$0xf]
  %v64 = vld [vmem:[%s0 + $0xb8] sm:$0xf]
  %v65 = vld [vmem:[%s0 + $0xbc] sm:$0xf]
  %v66 = vld [vmem:[%s0 + $0xc0] sm:$0xf]
  %v67 = vld [vmem:[%s0 + $0xc4] sm:$0xf]
  %v68 = vld [vmem:[%s0 + $0xc8] sm:$0xf]
  %v69 = vld [vmem:[%s0 + $0xcc] sm:$0xf]
  %v70 = vld [vmem:[%s0 + $0xd0] sm:$0xf]
  %v71 = vld [vmem:[%s0 + $0xd4] sm:$0xf]
  %v72 = vld [vmem:[%s0 + $0xd8] sm:$0xf]
  %v73 = vld [vmem:[%s0 + $0xdc] sm:$0xf]
  %v74 = vld [vmem:[%s0 + $0xe0] sm:$0xf]
  %v75 = vld [vmem:[%s0 + $0xe4] sm:$0xf]
  %v76 = vld [vmem:[%s0 + $0xe8] sm:$0xf]
  %v77 = vld [vmem:[%s0 + $0xec] sm:$0xf]
  %v78 = vld [vmem:[%s0 + $0xf0] sm:$0xf]
  %v79 = vld [vmem:[%s0 + $0xf4] sm:$0xf]
  %v80 = vld [vmem:[%s0 + $0xf8] sm:$0xf]
  %v81 = vld [vmem:[%s0 + $0xfc] sm:$0xf]
  %v82 = vld [vmem:[%s1] sm:$0xf]
  %v83 = vld [vmem:[%s1 + $0x4] sm:$0xf]
  %v84 = vld [vmem:[%s1 + $0x8] sm:$0xf]
  %v85 = vld [vmem:[%s1 + $0xc] sm:$0xf]
  %v86 = vld [vmem:[%s1 + $0x10] sm:$0xf]
  %v87 = vld [vmem:[%s1 + $0x14] sm:$0xf]
  %v88 = vld [vmem:[%s1 + $0x18] sm:$0xf]
  %v89 = vld [vmem:[%s1 + $0x1c] sm:$0xf]
  %v90 = vld [vmem:[%s1 + $0x20] sm:$0xf]
  %v155 = vunpack.c.l.b16 %v18
  %v156 = vunpack.c.l.b16 %v19
  %v157 = vunpack.c.l.b16 %v20
  %v158 = vunpack.c.l.b16 %v21
  %v159 = vunpack.c.l.b16 %v22
  %v160 = vunpack.c.l.b16 %v23
  %v161 = vunpack.c.l.b16 %v24
  %v162 = vunpack.c.l.b16 %v25
  %v163 = vunpack.c.l.b16 %v26
  %v164 = vunpack.c.l.b16 %v27
  %v165 = vunpack.c.l.b16 %v28
  %v166 = vunpack.c.l.b16 %v29
  %v167 = vunpack.c.l.b16 %v30
  %v168 = vunpack.c.l.b16 %v31
  %v169 = vunpack.c.l.b16 %v32
  %v170 = vunpack.c.l.b16 %v33
  %v171 = vunpack.c.l.b16 %v34
  %v172 = vunpack.c.l.b16 %v35
  %v173 = vunpack.c.l.b16 %v36
  %v174 = vunpack.c.l.b16 %v37
  %v175 = vunpack.c.l.b16 %v38
  %v176 = vunpack.c.l.b16 %v39
  %v177 = vunpack.c.l.b16 %v40
  %v178 = vunpack.c.l.b16 %v41
  %v179 = vunpack.c.l.b16 %v42
  %v180 = vunpack.c.l.b16 %v43
  %v181 = vunpack.c.l.b16 %v44
  %v182 = vunpack.c.l.b16 %v45
  %v183 = vunpack.c.l.b16 %v46
  %v184 = vunpack.c.l.b16 %v47
  %v185 = vunpack.c.l.b16 %v48
  %v186 = vunpack.c.l.b16 %v49
  %v187 = vunpack.c.l.b16 %v50
  %v188 = vunpack.c.l.b16 %v51
  %v189 = vunpack.c.l.b16 %v52
  %v190 = vunpack.c.l.b16 %v53
  %v191 = vunpack.c.l.b16 %v54
  %v192 = vunpack.c.l.b16 %v55
  %v193 = vunpack.c.l.b16 %v56
  %v194 = vunpack.c.l.b16 %v57
  %v195 = vunpack.c.l.b16 %v58
  %v196 = vunpack.c.l.b16 %v59
  %v197 = vunpack.c.l.b16 %v60
  %v198 = vunpack.c.l.b16 %v61
  %v199 = vunpack.c.l.b16 %v62
  %v200 = vunpack.c.l.b16 %v63
  %v201 = vunpack.c.l.b16 %v64
  %v202 = vunpack.c.l.b16 %v65
  %v203 = vunpack.c.l.b16 %v66
  %v204 = vunpack.c.l.b16 %v67
  %v205 = vunpack.c.l.b16 %v68
  %v206 = vunpack.c.l.b16 %v69
  %v207 = vunpack.c.l.b16 %v70
  %v208 = vunpack.c.l.b16 %v71
  %v209 = vunpack.c.l.b16 %v72
  %v210 = vunpack.c.l.b16 %v73
  %v211 = vunpack.c.l.b16 %v74
  %v212 = vunpack.c.l.b16 %v75
  %v213 = vunpack.c.l.b16 %v76
  %v214 = vunpack.c.l.b16 %v77
  %v215 = vunpack.c.l.b16 %v78
  %v216 = vunpack.c.l.b16 %v79
  %v217 = vunpack.c.l.b16 %v80
  %v218 = vunpack.c.l.b16 %v81
  %v219 = vpack.c.b16 %v156, %v155
  %v220 = vpack.c.b16 %v158, %v157
  %v221 = vpack.c.b16 %v160, %v159
  %v222 = vpack.c.b16 %v162, %v161
  %v223 = vpack.c.b16 %v164, %v163
  %v224 = vpack.c.b16 %v166, %v165
  %v225 = vpack.c.b16 %v168, %v167
  %v226 = vpack.c.b16 %v170, %v169
  %v227 = vpack.c.b16 %v172, %v171
  %v228 = vpack.c.b16 %v174, %v173
  %v229 = vpack.c.b16 %v176, %v175
  %v230 = vpack.c.b16 %v178, %v177
  %v231 = vpack.c.b16 %v180, %v179
  %v232 = vpack.c.b16 %v182, %v181
  %v233 = vpack.c.b16 %v184, %v183
  %v234 = vpack.c.b16 %v186, %v185
  %v235 = vpack.c.b16 %v188, %v187
  %v236 = vpack.c.b16 %v190, %v189
  %v237 = vpack.c.b16 %v192, %v191
  %v238 = vpack.c.b16 %v194, %v193
  %v239 = vpack.c.b16 %v196, %v195
  %v240 = vpack.c.b16 %v198, %v197
  %v241 = vpack.c.b16 %v200, %v199
  %v242 = vpack.c.b16 %v202, %v201
  %v243 = vpack.c.b16 %v204, %v203
  %v244 = vpack.c.b16 %v206, %v205
  %v245 = vpack.c.b16 %v208, %v207
  %v246 = vpack.c.b16 %v210, %v209
  %v247 = vpack.c.b16 %v212, %v211
  %v248 = vpack.c.b16 %v214, %v213
  %v249 = vpack.c.b16 %v216, %v215
  %v250 = vpack.c.b16 %v218, %v217
  %v260 = vunpack.c.l.b16 %v82
  %v261 = vunpack.c.l.b16 %v83
  %v262 = vunpack.c.l.b16 %v84
  %v263 = vunpack.c.l.b16 %v85
  %v264 = vunpack.c.l.b16 %v86
  %v265 = vunpack.c.l.b16 %v87
  %v266 = vunpack.c.l.b16 %v88
  %v267 = vunpack.c.l.b16 %v89
  %v268 = vunpack.c.l.b16 %v90
  %v269 = vpack.c.b16 %v261, %v260
  %v270 = vpack.c.b16 %v263, %v262
  %v271 = vpack.c.b16 %v265, %v264
  %v272 = vpack.c.b16 %v267, %v266
  %v273 = vpack.c.b16 %v268, %v268
  %vm278 = vcmask 588800
  %v280 = vsel %vm278, %v219, 0
  %v283 = vsel %vm278, %v220, 0
  %v286 = vsel %vm278, %v221, 0
  %v289 = vsel %vm278, %v222, 0
  %v292 = vsel %vm278, %v223, 0
  %v295 = vsel %vm278, %v224, 0
  %v298 = vsel %vm278, %v225, 0
  %v301 = vsel %vm278, %v226, 0
  %v304 = vsel %vm278, %v227, 0
  %v307 = vsel %vm278, %v228, 0
  %v310 = vsel %vm278, %v229, 0
  %v313 = vsel %vm278, %v230, 0
  %v316 = vsel %vm278, %v231, 0
  %v319 = vsel %vm278, %v232, 0
  %v322 = vsel %vm278, %v233, 0
  %v325 = vsel %vm278, %v234, 0
  %v328 = vsel %vm278, %v235, 0
  %v331 = vsel %vm278, %v236, 0
  %v334 = vsel %vm278, %v237, 0
  %v337 = vsel %vm278, %v238, 0
  %v340 = vsel %vm278, %v239, 0
  %v343 = vsel %vm278, %v240, 0
  %v346 = vsel %vm278, %v241, 0
  %v349 = vsel %vm278, %v242, 0
  %v352 = vsel %vm278, %v243, 0
  %v355 = vsel %vm278, %v244, 0
  %v358 = vsel %vm278, %v245, 0
  %v361 = vsel %vm278, %v246, 0
  %v364 = vsel %vm278, %v247, 0
  %v367 = vsel %vm278, %v248, 0
  %v370 = vsel %vm278, %v249, 0
  %v373 = vsel %vm278, %v250, 0
  %vm375 = vcmask 1043456
  %v377 = vsel %vm375, %v273, 0
  %379 = vmatprep.subr.bf16.mxu0 0
  %380 = vmatpush1.bf16.msra.mxu0 %v269
  %381 = vmatprep.subr.bf16.mxu0 0
  %382 = vmatpush1.bf16.msra.mxu0 %v270
  %383 = vmatprep.subr.bf16.mxu0 0
  %384 = vmatpush1.bf16.msra.mxu0 %v271
  %385 = vmatprep.subr.bf16.mxu0 0
  %386 = vmatpush1.bf16.msra.mxu0 %v272
  %387 = vmatprep.subr.bf16.mxu0 0
  %388 = vmatpush1.bf16.msra.mxu0 %v377
  %389 = vmatprep.subr.bf16.mxu0 0
  %390 = vmatpush1.bf16.msra.mxu0 0
  %391 = vmatprep.subr.bf16.mxu0 0
  %392 = vmatpush1.bf16.msra.mxu0 0
  %393 = vmatprep.subr.bf16.mxu0 0
  %394 = vmatpush1.bf16.msra.mxu0 0
  %395 = vmatprep.subr.bf16.mxu0 0
  %396 = vmatpush1.bf16.msra.mxu0 0
  %397 = vmatprep.subr.bf16.mxu0 0
  %398 = vmatpush1.bf16.msra.mxu0 0
  %399 = vmatprep.subr.bf16.mxu0 0
  %400 = vmatpush1.bf16.msra.mxu0 0
  %401 = vmatprep.subr.bf16.mxu0 0
  %402 = vmatpush1.bf16.msra.mxu0 0
  %403 = vmatprep.subr.bf16.mxu0 0
  %404 = vmatpush1.bf16.msra.mxu0 0
  %405 = vmatprep.subr.bf16.mxu0 0
  %406 = vmatpush1.bf16.msra.mxu0 0
  %407 = vmatprep.subr.bf16.mxu0 0
  %408 = vmatpush1.bf16.msra.mxu0 0
  %409 = vmatprep.subr.bf16.mxu0 0
  %410 = vmatpush1.bf16.msra.mxu0 0
  %411 = vmatprep.mubr.bf16.mxu0 0
  %412 = vmatmul.mubr.bf16.gmra.mrb[0].mxu0 %v280
  %v413 = vpop.f32.mrb[0].mxu0
  %v414 = vadd.f32 0.0, %v413
  %v415 = vpop.f32.mrb[0].mxu0
  %v416 = vpop.f32.mrb[0].mxu0
  %v417 = vadd.f32 0.0, %v416
  %v418 = vpop.f32.mrb[0].mxu0
  %419 = vmatprep.mubr.bf16.mxu0 0
  %420 = vmatmul.mubr.bf16.gmra.mrb[0].mxu0 %v283
  %v421 = vpop.f32.mrb[0].mxu0
  %v422 = vadd.f32 0.0, %v421
  %v423 = vpop.f32.mrb[0].mxu0
  %v424 = vpop.f32.mrb[0].mxu0
  %v425 = vadd.f32 0.0, %v424
  %v426 = vpop.f32.mrb[0].mxu0
  %427 = vmatprep.mubr.bf16.mxu0 0
  %428 = vmatmul.mubr.bf16.gmra.mrb[0].mxu0 %v286
  %v429 = vpop.f32.mrb[0].mxu0
  %v430 = vadd.f32 0.0, %v429
  %v431 = vpop.f32.mrb[0].mxu0
  %v432 = vpop.f32.mrb[0].mxu0
  %v433 = vadd.f32 0.0, %v432
  %v434 = vpop.f32.mrb[0].mxu0
  %435 = vmatprep.mubr.bf16.mxu0 0
  %436 = vmatmul.mubr.bf16.gmra.mrb[0].mxu0 %v289
  %v437 = vpop.f32.mrb[0].mxu0
  %v438 = vadd.f32 0.0, %v437
  %v439 = vpop.f32.mrb[0].mxu0
  %v440 = vpop.f32.mrb[0].mxu0
  %v441 = vadd.f32 0.0, %v440
  %v442 = vpop.f32.mrb[0].mxu0
  %443 = vmatprep.mubr.bf16.mxu0 0
  %444 = vmatmul.mubr.bf16.gmra.mrb[0].mxu0 %v292
  %v445 = vpop.f32.mrb[0].mxu0
  %v446 = vadd.f32 0.0, %v445
  %v447 = vpop.f32.mrb[0].mxu0
  %v448 = vpop.f32.mrb[0].mxu0
  %v449 = vadd.f32 0.0, %v448
  %v450 = vpop.f32.mrb[0].mxu0
  %451 = vmatprep.mubr.bf16.mxu0 0
  %452 = vmatmul.mubr.bf16.gmra.mrb[0].mxu0 %v295
  %v453 = vpop.f32.mrb[0].mxu0
  %v454 = vadd.f32 0.0, %v453
  %v455 = vpop.f32.mrb[0].mxu0
  %v456 = vpop.f32.mrb[0].mxu0
  %v457 = vadd.f32 0.0, %v456
  %v458 = vpop.f32.mrb[0].mxu0
  %459 = vmatprep.mubr.bf16.mxu0 0
  %460 = vmatmul.mubr.bf16.gmra.mrb[0].mxu0 %v298
  %v461 = vpop.f32.mrb[0].mxu0
  %v462 = vadd.f32 0.0, %v461
  %v463 = vpop.f32.mrb[0].mxu0
  %v464 = vpop.f32.mrb[0].mxu0
  %v465 = vadd.f32 0.0, %v464
  %v466 = vpop.f32.mrb[0].mxu0
  %467 = vmatprep.mubr.bf16.mxu0 0
  %468 = vmatmul.mubr.bf16.gmra.mrb[0].mxu0 %v301
  %v469 = vpop.f32.mrb[0].mxu0
  %v470 = vadd.f32 0.0, %v469
  %v471 = vpop.f32.mrb[0].mxu0
  %v472 = vpop.f32.mrb[0].mxu0
  %v473 = vadd.f32 0.0, %v472
  %v474 = vpop.f32.mrb[0].mxu0
  %475 = vmatprep.mubr.bf16.mxu0 0
  %476 = vmatmul.mubr.bf16.gmra.mrb[0].mxu0 %v304
  %v477 = vpop.f32.mrb[0].mxu0
  %v478 = vadd.f32 0.0, %v477
  %v479 = vpop.f32.mrb[0].mxu0
  %v480 = vpop.f32.mrb[0].mxu0
  %v481 = vadd.f32 0.0, %v480
  %v482 = vpop.f32.mrb[0].mxu0
  %483 = vmatprep.mubr.bf16.mxu0 0
  %484 = vmatmul.mubr.bf16.gmra.mrb[0].mxu0 %v307
  %v485 = vpop.f32.mrb[0].mxu0
  %v486 = vadd.f32 0.0, %v485
  %v487 = vpop.f32.mrb[0].mxu0
  %v488 = vpop.f32.mrb[0].mxu0
  %v489 = vadd.f32 0.0, %v488
  %v490 = vpop.f32.mrb[0].mxu0
  %491 = vmatprep.mubr.bf16.mxu0 0
  %492 = vmatmul.mubr.bf16.gmra.mrb[0].mxu0 %v310
  %v493 = vpop.f32.mrb[0].mxu0
  %v494 = vadd.f32 0.0, %v493
  %v495 = vpop.f32.mrb[0].mxu0
  %v496 = vpop.f32.mrb[0].mxu0
  %v497 = vadd.f32 0.0, %v496
  %v498 = vpop.f32.mrb[0].mxu0
  %499 = vmatprep.mubr.bf16.mxu0 0
  %500 = vmatmul.mubr.bf16.gmra.mrb[0].mxu0 %v313
  %v501 = vpop.f32.mrb[0].mxu0
  %v502 = vadd.f32 0.0, %v501
  %v503 = vpop.f32.mrb[0].mxu0
  %v504 = vpop.f32.mrb[0].mxu0
  %v505 = vadd.f32 0.0, %v504
  %v506 = vpop.f32.mrb[0].mxu0
  %507 = vmatprep.mubr.bf16.mxu0 0
  %508 = vmatmul.mubr.bf16.gmra.mrb[0].mxu0 %v316
  %v509 = vpop.f32.mrb[0].mxu0
  %v510 = vadd.f32 0.0, %v509
  %v511 = vpop.f32.mrb[0].mxu0
  %v512 = vpop.f32.mrb[0].mxu0
  %v513 = vadd.f32 0.0, %v512
  %v514 = vpop.f32.mrb[0].mxu0
  %515 = vmatprep.mubr.bf16.mxu0 0
  %516 = vmatmul.mubr.bf16.gmra.mrb[0].mxu0 %v319
  %v517 = vpop.f32.mrb[0].mxu0
  %v518 = vadd.f32 0.0, %v517
  %v519 = vpop.f32.mrb[0].mxu0
  %v520 = vpop.f32.mrb[0].mxu0
  %v521 = vadd.f32 0.0, %v520
  %v522 = vpop.f32.mrb[0].mxu0
  %523 = vmatprep.mubr.bf16.mxu0 0
  %524 = vmatmul.mubr.bf16.gmra.mrb[0].mxu0 %v322
  %v525 = vpop.f32.mrb[0].mxu0
  %v526 = vadd.f32 0.0, %v525
  %v527 = vpop.f32.mrb[0].mxu0
  %v528 = vpop.f32.mrb[0].mxu0
  %v529 = vadd.f32 0.0, %v528
  %v530 = vpop.f32.mrb[0].mxu0
  %531 = vmatprep.mubr.bf16.mxu0 0
  %532 = vmatmul.mubr.bf16.gmra.mrb[0].mxu0 %v325
  %v533 = vpop.f32.mrb[0].mxu0
  %v534 = vadd.f32 0.0, %v533
  %v535 = vpop.f32.mrb[0].mxu0
  %v536 = vpop.f32.mrb[0].mxu0
  %v537 = vadd.f32 0.0, %v536
  %v538 = vpop.f32.mrb[0].mxu0
  %539 = vmatprep.mubr.bf16.mxu0 0
  %540 = vmatmul.mubr.bf16.gmra.mrb[0].mxu0 %v328
  %v541 = vpop.f32.mrb[0].mxu0
  %v542 = vadd.f32 0.0, %v541
  %v543 = vpop.f32.mrb[0].mxu0
  %v544 = vpop.f32.mrb[0].mxu0
  %v545 = vadd.f32 0.0, %v544
  %v546 = vpop.f32.mrb[0].mxu0
  %547 = vmatprep.mubr.bf16.mxu0 0
  %548 = vmatmul.mubr.bf16.gmra.mrb[0].mxu0 %v331
  %v549 = vpop.f32.mrb[0].mxu0
  %v550 = vadd.f32 0.0, %v549
  %v551 = vpop.f32.mrb[0].mxu0
  %v552 = vpop.f32.mrb[0].mxu0
  %v553 = vadd.f32 0.0, %v552
  %v554 = vpop.f32.mrb[0].mxu0
  %555 = vmatprep.mubr.bf16.mxu0 0
  %556 = vmatmul.mubr.bf16.gmra.mrb[0].mxu0 %v334
  %v557 = vpop.f32.mrb[0].mxu0
  %v558 = vadd.f32 0.0, %v557
  %v559 = vpop.f32.mrb[0].mxu0
  %v560 = vpop.f32.mrb[0].mxu0
  %v561 = vadd.f32 0.0, %v560
  %v562 = vpop.f32.mrb[0].mxu0
  %563 = vmatprep.mubr.bf16.mxu0 0
  %564 = vmatmul.mubr.bf16.gmra.mrb[0].mxu0 %v337
  %v565 = vpop.f32.mrb[0].mxu0
  %v566 = vadd.f32 0.0, %v565
  %v567 = vpop.f32.mrb[0].mxu0
  %v568 = vpop.f32.mrb[0].mxu0
  %v569 = vadd.f32 0.0, %v568
  %v570 = vpop.f32.mrb[0].mxu0
  %571 = vmatprep.mubr.bf16.mxu0 0
  %572 = vmatmul.mubr.bf16.gmra.mrb[0].mxu0 %v340
  %v573 = vpop.f32.mrb[0].mxu0
  %v574 = vadd.f32 0.0, %v573
  %v575 = vpop.f32.mrb[0].mxu0
  %v576 = vpop.f32.mrb[0].mxu0
  %v577 = vadd.f32 0.0, %v576
  %v578 = vpop.f32.mrb[0].mxu0
  %579 = vmatprep.mubr.bf16.mxu0 0
  %580 = vmatmul.mubr.bf16.gmra.mrb[0].mxu0 %v343
  %v581 = vpop.f32.mrb[0].mxu0
  %v582 = vadd.f32 0.0, %v581
  %v583 = vpop.f32.mrb[0].mxu0
  %v584 = vpop.f32.mrb[0].mxu0
  %v585 = vadd.f32 0.0, %v584
  %v586 = vpop.f32.mrb[0].mxu0
  %587 = vmatprep.mubr.bf16.mxu0 0
  %588 = vmatmul.mubr.bf16.gmra.mrb[0].mxu0 %v346
  %v589 = vpop.f32.mrb[0].mxu0
  %v590 = vadd.f32 0.0, %v589
  %v591 = vpop.f32.mrb[0].mxu0
  %v592 = vpop.f32.mrb[0].mxu0
  %v593 = vadd.f32 0.0, %v592
  %v594 = vpop.f32.mrb[0].mxu0
  %595 = vmatprep.mubr.bf16.mxu0 0
  %596 = vmatmul.mubr.bf16.gmra.mrb[0].mxu0 %v349
  %v597 = vpop.f32.mrb[0].mxu0
  %v598 = vadd.f32 0.0, %v597
  %v599 = vpop.f32.mrb[0].mxu0
  %v600 = vpop.f32.mrb[0].mxu0
  %v601 = vadd.f32 0.0, %v600
  %v602 = vpop.f32.mrb[0].mxu0
  %603 = vmatprep.mubr.bf16.mxu0 0
  %604 = vmatmul.mubr.bf16.gmra.mrb[0].mxu0 %v352
  %v605 = vpop.f32.mrb[0].mxu0
  %v606 = vadd.f32 0.0, %v605
  %v607 = vpop.f32.mrb[0].mxu0
  %v608 = vpop.f32.mrb[0].mxu0
  %v609 = vadd.f32 0.0, %v608
  %v610 = vpop.f32.mrb[0].mxu0
  %611 = vmatprep.mubr.bf16.mxu0 0
  %612 = vmatmul.mubr.bf16.gmra.mrb[0].mxu0 %v355
  %v613 = vpop.f32.mrb[0].mxu0
  %v614 = vadd.f32 0.0, %v613
  %v615 = vpop.f32.mrb[0].mxu0
  %v616 = vpop.f32.mrb[0].mxu0
  %v617 = vadd.f32 0.0, %v616
  %v618 = vpop.f32.mrb[0].mxu0
  %619 = vmatprep.mubr.bf16.mxu0 0
  %620 = vmatmul.mubr.bf16.gmra.mrb[0].mxu0 %v358
  %v621 = vpop.f32.mrb[0].mxu0
  %v622 = vadd.f32 0.0, %v621
  %v623 = vpop.f32.mrb[0].mxu0
  %v624 = vpop.f32.mrb[0].mxu0
  %v625 = vadd.f32 0.0, %v624
  %v626 = vpop.f32.mrb[0].mxu0
  %627 = vmatprep.mubr.bf16.mxu0 0
  %628 = vmatmul.mubr.bf16.gmra.mrb[0].mxu0 %v361
  %v629 = vpop.f32.mrb[0].mxu0
  %v630 = vadd.f32 0.0, %v629
  %v631 = vpop.f32.mrb[0].mxu0
  %v632 = vpop.f32.mrb[0].mxu0
  %v633 = vadd.f32 0.0, %v632
  %v634 = vpop.f32.mrb[0].mxu0
  %635 = vmatprep.mubr.bf16.mxu0 0
  %636 = vmatmul.mubr.bf16.gmra.mrb[0].mxu0 %v364
  %v637 = vpop.f32.mrb[0].mxu0
  %v638 = vadd.f32 0.0, %v637
  %v639 = vpop.f32.mrb[0].mxu0
  %v640 = vpop.f32.mrb[0].mxu0
  %v641 = vadd.f32 0.0, %v640
  %v642 = vpop.f32.mrb[0].mxu0
  %643 = vmatprep.mubr.bf16.mxu0 0
  %644 = vmatmul.mubr.bf16.gmra.mrb[0].mxu0 %v367
  %v645 = vpop.f32.mrb[0].mxu0
  %v646 = vadd.f32 0.0, %v645
  %v647 = vpop.f32.mrb[0].mxu0
  %v648 = vpop.f32.mrb[0].mxu0
  %v649 = vadd.f32 0.0, %v648
  %v650 = vpop.f32.mrb[0].mxu0
  %651 = vmatprep.mubr.bf16.mxu0 0
  %652 = vmatmul.mubr.bf16.gmra.mrb[0].mxu0 %v370
  %v653 = vpop.f32.mrb[0].mxu0
  %v654 = vadd.f32 0.0, %v653
  %v655 = vpop.f32.mrb[0].mxu0
  %v656 = vpop.f32.mrb[0].mxu0
  %v657 = vadd.f32 0.0, %v656
  %v658 = vpop.f32.mrb[0].mxu0
  %659 = vmatprep.mubr.bf16.mxu0 0
  %660 = vmatmul.mubr.bf16.gmra.mrb[0].mxu0 %v373
  %v661 = vpop.f32.mrb[0].mxu0
  %v662 = vadd.f32 0.0, %v661
  %v663 = vpop.f32.mrb[0].mxu0
  %v664 = vpop.f32.mrb[0].mxu0
  %v665 = vadd.f32 0.0, %v664
  %v666 = vpop.f32.mrb[0].mxu0
  %667 = vdwg.mxu0
  %vm668 = vcmask 64512
  %v669 = vsel %vm668, %v414, 0.0
  %v670 = vsel %vm668, %v417, 0.0
  %v671 = vadd.f32 %v669, %v670
  %v672 = vsel %vm668, %v422, 0.0
  %v673 = vadd.f32 %v671, %v672
  %v674 = vsel %vm668, %v425, 0.0
  %v675 = vadd.f32 %v673, %v674
  %v676 = vsel %vm668, %v430, 0.0
  %v677 = vadd.f32 %v675, %v676
  %v678 = vsel %vm668, %v433, 0.0
  %v679 = vadd.f32 %v677, %v678
  %v680 = vsel %vm668, %v438, 0.0
  %v681 = vadd.f32 %v679, %v680
  %v682 = vsel %vm668, %v441, 0.0
  %v683 = vadd.f32 %v681, %v682
  %v684 = vsel %vm668, %v446, 0.0
  %v685 = vadd.f32 %v683, %v684
  %v686 = vsel %vm668, %v449, 0.0
  %v687 = vadd.f32 %v685, %v686
  %v688 = vsel %vm668, %v454, 0.0
  %v689 = vadd.f32 %v687, %v688
  %v690 = vsel %vm668, %v457, 0.0
  %v691 = vadd.f32 %v689, %v690
  %v692 = vsel %vm668, %v462, 0.0
  %v693 = vadd.f32 %v691, %v692
  %v694 = vsel %vm668, %v465, 0.0
  %v695 = vadd.f32 %v693, %v694
  %v696 = vsel %vm668, %v470, 0.0
  %v697 = vadd.f32 %v695, %v696
  %v698 = vsel %vm668, %v473, 0.0
  %v699 = vadd.f32 %v697, %v698
  %v700 = vsel %vm668, %v478, 0.0
  %v701 = vadd.f32 %v699, %v700
  %v702 = vsel %vm668, %v481, 0.0
  %v703 = vadd.f32 %v701, %v702
  %v704 = vsel %vm668, %v486, 0.0
  %v705 = vadd.f32 %v703, %v704
  %v706 = vsel %vm668, %v489, 0.0
  %v707 = vadd.f32 %v705, %v706
  %v708 = vsel %vm668, %v494, 0.0
  %v709 = vadd.f32 %v707, %v708
  %v710 = vsel %vm668, %v497, 0.0
  %v711 = vadd.f32 %v709, %v710
  %v712 = vsel %vm668, %v502, 0.0
  %v713 = vadd.f32 %v711, %v712
  %v714 = vsel %vm668, %v505, 0.0
  %v715 = vadd.f32 %v713, %v714
  %v716 = vsel %vm668, %v510, 0.0
  %v717 = vadd.f32 %v715, %v716
  %v718 = vsel %vm668, %v513, 0.0
  %v719 = vadd.f32 %v717, %v718
  %v720 = vsel %vm668, %v518, 0.0
  %v721 = vadd.f32 %v719, %v720
  %v722 = vsel %vm668, %v521, 0.0
  %v723 = vadd.f32 %v721, %v722
  %v724 = vsel %vm668, %v526, 0.0
  %v725 = vadd.f32 %v723, %v724
  %v726 = vsel %vm668, %v529, 0.0
  %v727 = vadd.f32 %v725, %v726
  %v728 = vsel %vm668, %v534, 0.0
  %v729 = vadd.f32 %v727, %v728
  %v730 = vsel %vm668, %v537, 0.0
  %v731 = vadd.f32 %v729, %v730
  %v732 = vsel %vm668, %v542, 0.0
  %v733 = vadd.f32 %v731, %v732
  %v734 = vsel %vm668, %v545, 0.0
  %v735 = vadd.f32 %v733, %v734
  %v736 = vsel %vm668, %v550, 0.0
  %v737 = vadd.f32 %v735, %v736
  %v738 = vsel %vm668, %v553, 0.0
  %v739 = vadd.f32 %v737, %v738
  %v740 = vsel %vm668, %v558, 0.0
  %v741 = vadd.f32 %v739, %v740
  %v742 = vsel %vm668, %v561, 0.0
  %v743 = vadd.f32 %v741, %v742
  %v744 = vsel %vm668, %v566, 0.0
  %v745 = vadd.f32 %v743, %v744
  %v746 = vsel %vm668, %v569, 0.0
  %v747 = vadd.f32 %v745, %v746
  %v748 = vsel %vm668, %v574, 0.0
  %v749 = vadd.f32 %v747, %v748
  %v750 = vsel %vm668, %v577, 0.0
  %v751 = vadd.f32 %v749, %v750
  %v752 = vsel %vm668, %v582, 0.0
  %v753 = vadd.f32 %v751, %v752
  %v754 = vsel %vm668, %v585, 0.0
  %v755 = vadd.f32 %v753, %v754
  %v756 = vsel %vm668, %v590, 0.0
  %v757 = vadd.f32 %v755, %v756
  %v758 = vsel %vm668, %v593, 0.0
  %v759 = vadd.f32 %v757, %v758
  %v760 = vsel %vm668, %v598, 0.0
  %v761 = vadd.f32 %v759, %v760
  %v762 = vsel %vm668, %v601, 0.0
  %v763 = vadd.f32 %v761, %v762
  %v764 = vsel %vm668, %v606, 0.0
  %v765 = vadd.f32 %v763, %v764
  %v766 = vsel %vm668, %v609, 0.0
  %v767 = vadd.f32 %v765, %v766
  %v768 = vsel %vm668, %v614, 0.0
  %v769 = vadd.f32 %v767, %v768
  %v770 = vsel %vm668, %v617, 0.0
  %v771 = vadd.f32 %v769, %v770
  %v772 = vsel %vm668, %v622, 0.0
  %v773 = vadd.f32 %v771, %v772
  %v774 = vsel %vm668, %v625, 0.0
  %v775 = vadd.f32 %v773, %v774
  %v776 = vsel %vm668, %v630, 0.0
  %v777 = vadd.f32 %v775, %v776
  %v778 = vsel %vm668, %v633, 0.0
  %v779 = vadd.f32 %v777, %v778
  %v780 = vsel %vm668, %v638, 0.0
  %v781 = vadd.f32 %v779, %v780
  %v782 = vsel %vm668, %v641, 0.0
  %v783 = vadd.f32 %v781, %v782
  %v784 = vsel %vm668, %v646, 0.0
  %v785 = vadd.f32 %v783, %v784
  %v786 = vsel %vm668, %v649, 0.0
  %v787 = vadd.f32 %v785, %v786
  %v788 = vsel %vm668, %v654, 0.0
  %v789 = vadd.f32 %v787, %v788
  %v790 = vsel %vm668, %v657, 0.0
  %v791 = vadd.f32 %v789, %v790
  %v792 = vsel %vm668, %v662, 0.0
  %v793 = vadd.f32 %v791, %v792
  %v794 = vsel %vm668, %v665, 0.0
  %v795 = vadd.f32 %v793, %v794
  %v796 = vrot.slane %v795, 4
  %v797 = vadd.f32 %v795, %v796
  %v798 = vrot.slane %v797, 2
  %v799 = vadd.f32 %v797, %v798
  %v800 = vrot.slane %v799, 1
  %v801 = vadd.f32 %v799, %v800
  %v802 = vmul.f32 %v801, 0.001953125
  %v803 = vmul.f32 %v414, %v414
  %v804 = vmul.f32 %v417, %v417
  %v805 = vmul.f32 %v422, %v422
  %v806 = vmul.f32 %v425, %v425
  %v807 = vmul.f32 %v430, %v430
  %v808 = vmul.f32 %v433, %v433
  %v809 = vmul.f32 %v438, %v438
  %v810 = vmul.f32 %v441, %v441
  %v811 = vmul.f32 %v446, %v446
  %v812 = vmul.f32 %v449, %v449
  %v813 = vmul.f32 %v454, %v454
  %v814 = vmul.f32 %v457, %v457
  %v815 = vmul.f32 %v462, %v462
  %v816 = vmul.f32 %v465, %v465
  %v817 = vmul.f32 %v470, %v470
  %v818 = vmul.f32 %v473, %v473
  %v819 = vmul.f32 %v478, %v478
  %v820 = vmul.f32 %v481, %v481
  %v821 = vmul.f32 %v486, %v486
  %v822 = vmul.f32 %v489, %v489
  %v823 = vmul.f32 %v494, %v494
  %v824 = vmul.f32 %v497, %v497
  %v825 = vmul.f32 %v502, %v502
  %v826 = vmul.f32 %v505, %v505
  %v827 = vmul.f32 %v510, %v510
  %v828 = vmul.f32 %v513, %v513
  %v829 = vmul.f32 %v518, %v518
  %v830 = vmul.f32 %v521, %v521
  %v831 = vmul.f32 %v526, %v526
  %v832 = vmul.f32 %v529, %v529
  %v833 = vmul.f32 %v534, %v534
  %v834 = vmul.f32 %v537, %v537
  %v835 = vmul.f32 %v542, %v542
  %v836 = vmul.f32 %v545, %v545
  %v837 = vmul.f32 %v550, %v550
  %v838 = vmul.f32 %v553, %v553
  %v839 = vmul.f32 %v558, %v558
  %v840 = vmul.f32 %v561, %v561
  %v841 = vmul.f32 %v566, %v566
  %v842 = vmul.f32 %v569, %v569
  %v843 = vmul.f32 %v574, %v574
  %v844 = vmul.f32 %v577, %v577
  %v845 = vmul.f32 %v582, %v582
  %v846 = vmul.f32 %v585, %v585
  %v847 = vmul.f32 %v590, %v590
  %v848 = vmul.f32 %v593, %v593
  %v849 = vmul.f32 %v598, %v598
  %v850 = vmul.f32 %v601, %v601
  %v851 = vmul.f32 %v606, %v606
  %v852 = vmul.f32 %v609, %v609
  %v853 = vmul.f32 %v614, %v614
  %v854 = vmul.f32 %v617, %v617
  %v855 = vmul.f32 %v622, %v622
  %v856 = vmul.f32 %v625, %v625
  %v857 = vmul.f32 %v630, %v630
  %v858 = vmul.f32 %v633, %v633
  %v859 = vmul.f32 %v638, %v638
  %v860 = vmul.f32 %v641, %v641
  %v861 = vmul.f32 %v646, %v646
  %v862 = vmul.f32 %v649, %v649
  %v863 = vmul.f32 %v654, %v654
  %v864 = vmul.f32 %v657, %v657
  %v865 = vmul.f32 %v662, %v662
  %v866 = vmul.f32 %v665, %v665
  %v867 = vsel %vm668, %v803, 0.0
  %v868 = vsel %vm668, %v804, 0.0
  %v869 = vadd.f32 %v867, %v868
  %v870 = vsel %vm668, %v805, 0.0
  %v871 = vadd.f32 %v869, %v870
  %v872 = vsel %vm668, %v806, 0.0
  %v873 = vadd.f32 %v871, %v872
  %v874 = vsel %vm668, %v807, 0.0
  %v875 = vadd.f32 %v873, %v874
  %v876 = vsel %vm668, %v808, 0.0
  %v877 = vadd.f32 %v875, %v876
  %v878 = vsel %vm668, %v809, 0.0
  %v879 = vadd.f32 %v877, %v878
  %v880 = vsel %vm668, %v810, 0.0
  %v881 = vadd.f32 %v879, %v880
  %v882 = vsel %vm668, %v811, 0.0
  %v883 = vadd.f32 %v881, %v882
  %v884 = vsel %vm668, %v812, 0.0
  %v885 = vadd.f32 %v883, %v884
  %v886 = vsel %vm668, %v813, 0.0
  %v887 = vadd.f32 %v885, %v886
  %v888 = vsel %vm668, %v814, 0.0
  %v889 = vadd.f32 %v887, %v888
  %v890 = vsel %vm668, %v815, 0.0
  %v891 = vadd.f32 %v889, %v890
  %v892 = vsel %vm668, %v816, 0.0
  %v893 = vadd.f32 %v891, %v892
  %v894 = vsel %vm668, %v817, 0.0
  %v895 = vadd.f32 %v893, %v894
  %v896 = vsel %vm668, %v818, 0.0
  %v897 = vadd.f32 %v895, %v896
  %v898 = vsel %vm668, %v819, 0.0
  %v899 = vadd.f32 %v897, %v898
  %v900 = vsel %vm668, %v820, 0.0
  %v901 = vadd.f32 %v899, %v900
  %v902 = vsel %vm668, %v821, 0.0
  %v903 = vadd.f32 %v901, %v902
  %v904 = vsel %vm668, %v822, 0.0
  %v905 = vadd.f32 %v903, %v904
  %v906 = vsel %vm668, %v823, 0.0
  %v907 = vadd.f32 %v905, %v906
  %v908 = vsel %vm668, %v824, 0.0
  %v909 = vadd.f32 %v907, %v908
  %v910 = vsel %vm668, %v825, 0.0
  %v911 = vadd.f32 %v909, %v910
  %v912 = vsel %vm668, %v826, 0.0
  %v913 = vadd.f32 %v911, %v912
  %v914 = vsel %vm668, %v827, 0.0
  %v915 = vadd.f32 %v913, %v914
  %v916 = vsel %vm668, %v828, 0.0
  %v917 = vadd.f32 %v915, %v916
  %v918 = vsel %vm668, %v829, 0.0
  %v919 = vadd.f32 %v917, %v918
  %v920 = vsel %vm668, %v830, 0.0
  %v921 = vadd.f32 %v919, %v920
  %v922 = vsel %vm668, %v831, 0.0
  %v923 = vadd.f32 %v921, %v922
  %v924 = vsel %vm668, %v832, 0.0
  %v925 = vadd.f32 %v923, %v924
  %v926 = vsel %vm668, %v833, 0.0
  %v927 = vadd.f32 %v925, %v926
  %v928 = vsel %vm668, %v834, 0.0
  %v929 = vadd.f32 %v927, %v928
  %v930 = vsel %vm668, %v835, 0.0
  %v931 = vadd.f32 %v929, %v930
  %v932 = vsel %vm668, %v836, 0.0
  %v933 = vadd.f32 %v931, %v932
  %v934 = vsel %vm668, %v837, 0.0
  %v935 = vadd.f32 %v933, %v934
  %v936 = vsel %vm668, %v838, 0.0
  %v937 = vadd.f32 %v935, %v936
  %v938 = vsel %vm668, %v839, 0.0
  %v939 = vadd.f32 %v937, %v938
  %v940 = vsel %vm668, %v840, 0.0
  %v941 = vadd.f32 %v939, %v940
  %v942 = vsel %vm668, %v841, 0.0
  %v943 = vadd.f32 %v941, %v942
  %v944 = vsel %vm668, %v842, 0.0
  %v945 = vadd.f32 %v943, %v944
  %v946 = vsel %vm668, %v843, 0.0
  %v947 = vadd.f32 %v945, %v946
  %v948 = vsel %vm668, %v844, 0.0
  %v949 = vadd.f32 %v947, %v948
  %v950 = vsel %vm668, %v845, 0.0
  %v951 = vadd.f32 %v949, %v950
  %v952 = vsel %vm668, %v846, 0.0
  %v953 = vadd.f32 %v951, %v952
  %v954 = vsel %vm668, %v847, 0.0
  %v955 = vadd.f32 %v953, %v954
  %v956 = vsel %vm668, %v848, 0.0
  %v957 = vadd.f32 %v955, %v956
  %v958 = vsel %vm668, %v849, 0.0
  %v959 = vadd.f32 %v957, %v958
  %v960 = vsel %vm668, %v850, 0.0
  %v961 = vadd.f32 %v959, %v960
  %v962 = vsel %vm668, %v851, 0.0
  %v963 = vadd.f32 %v961, %v962
  %v964 = vsel %vm668, %v852, 0.0
  %v965 = vadd.f32 %v963, %v964
  %v966 = vsel %vm668, %v853, 0.0
  %v967 = vadd.f32 %v965, %v966
  %v968 = vsel %vm668, %v854, 0.0
  %v969 = vadd.f32 %v967, %v968
  %v970 = vsel %vm668, %v855, 0.0
  %v971 = vadd.f32 %v969, %v970
  %v972 = vsel %vm668, %v856, 0.0
  %v973 = vadd.f32 %v971, %v972
  %v974 = vsel %vm668, %v857, 0.0
  %v975 = vadd.f32 %v973, %v974
  %v976 = vsel %vm668, %v858, 0.0
  %v977 = vadd.f32 %v975, %v976
  %v978 = vsel %vm668, %v859, 0.0
  %v979 = vadd.f32 %v977, %v978
  %v980 = vsel %vm668, %v860, 0.0
  %v981 = vadd.f32 %v979, %v980
  %v982 = vsel %vm668, %v861, 0.0
  %v983 = vadd.f32 %v981, %v982
  %v984 = vsel %vm668, %v862, 0.0
  %v985 = vadd.f32 %v983, %v984
  %v986 = vsel %vm668, %v863, 0.0
  %v987 = vadd.f32 %v985, %v986
  %v988 = vsel %vm668, %v864, 0.0
  %v989 = vadd.f32 %v987, %v988
  %v990 = vsel %vm668, %v865, 0.0
  %v991 = vadd.f32 %v989, %v990
  %v992 = vsel %vm668, %v866, 0.0
  %v993 = vadd.f32 %v991, %v992
  %v994 = vrot.slane %v993, 4
  %v995 = vadd.f32 %v993, %v994
  %v996 = vrot.slane %v995, 2
  %v997 = vadd.f32 %v995, %v996
  %v998 = vrot.slane %v997, 1
  %v999 = vadd.f32 %v997, %v998
  %v1000 = vmul.f32 %v999, 0.001953125
  %v1001 = vmul.f32 %v802, %v802
  %v1002 = vsub.f32 %v1000, %v1001
  %v1003 = vmax.f32 %v1002, 0.0
  %v1004 = vld [vmem:[%s2] sm:$0x1]
  %v1005 = vadd.f32 %v1003, 1e-05
  %v1006 = vrsqrt.pop %v1005
  %v1007 = vmul.f32 %v1004, %v1006
  %v1008 = vld [vmem:[%s3] sm:$0x1]
  %v1009 = vmul.f32 %v802, %v1007
  %v1010 = vsub.f32 %v1008, %v1009
  %v1012 = vlaneseq
  %v1013 = vshrl.u32 %v1012, 7
  %v1014 = vsub.s32 0, %v1013
  %v1015 = vrot.slane %v1007, %v1014
  %v1017 = vmul.f32 %v414, %v1015
  %v1018 = vmul.f32 %v417, %v1015
  %v1019 = vmul.f32 %v422, %v1015
  %v1020 = vmul.f32 %v425, %v1015
  %v1021 = vmul.f32 %v430, %v1015
  %v1022 = vmul.f32 %v433, %v1015
  %v1023 = vmul.f32 %v438, %v1015
  %v1024 = vmul.f32 %v441, %v1015
  %v1025 = vmul.f32 %v446, %v1015
  %v1026 = vmul.f32 %v449, %v1015
  %v1027 = vmul.f32 %v454, %v1015
  %v1028 = vmul.f32 %v457, %v1015
  %v1029 = vmul.f32 %v462, %v1015
  %v1030 = vmul.f32 %v465, %v1015
  %v1031 = vmul.f32 %v470, %v1015
  %v1032 = vmul.f32 %v473, %v1015
  %v1033 = vmul.f32 %v478, %v1015
  %v1034 = vmul.f32 %v481, %v1015
  %v1035 = vmul.f32 %v486, %v1015
  %v1036 = vmul.f32 %v489, %v1015
  %v1037 = vmul.f32 %v494, %v1015
  %v1038 = vmul.f32 %v497, %v1015
  %v1039 = vmul.f32 %v502, %v1015
  %v1040 = vmul.f32 %v505, %v1015
  %v1041 = vmul.f32 %v510, %v1015
  %v1042 = vmul.f32 %v513, %v1015
  %v1043 = vmul.f32 %v518, %v1015
  %v1044 = vmul.f32 %v521, %v1015
  %v1045 = vmul.f32 %v526, %v1015
  %v1046 = vmul.f32 %v529, %v1015
  %v1047 = vmul.f32 %v534, %v1015
  %v1048 = vmul.f32 %v537, %v1015
  %v1049 = vmul.f32 %v542, %v1015
  %v1050 = vmul.f32 %v545, %v1015
  %v1051 = vmul.f32 %v550, %v1015
  %v1052 = vmul.f32 %v553, %v1015
  %v1053 = vmul.f32 %v558, %v1015
  %v1054 = vmul.f32 %v561, %v1015
  %v1055 = vmul.f32 %v566, %v1015
  %v1056 = vmul.f32 %v569, %v1015
  %v1057 = vmul.f32 %v574, %v1015
  %v1058 = vmul.f32 %v577, %v1015
  %v1059 = vmul.f32 %v582, %v1015
  %v1060 = vmul.f32 %v585, %v1015
  %v1061 = vmul.f32 %v590, %v1015
  %v1062 = vmul.f32 %v593, %v1015
  %v1063 = vmul.f32 %v598, %v1015
  %v1064 = vmul.f32 %v601, %v1015
  %v1065 = vmul.f32 %v606, %v1015
  %v1066 = vmul.f32 %v609, %v1015
  %v1067 = vmul.f32 %v614, %v1015
  %v1068 = vmul.f32 %v617, %v1015
  %v1069 = vmul.f32 %v622, %v1015
  %v1070 = vmul.f32 %v625, %v1015
  %v1071 = vmul.f32 %v630, %v1015
  %v1072 = vmul.f32 %v633, %v1015
  %v1073 = vmul.f32 %v638, %v1015
  %v1074 = vmul.f32 %v641, %v1015
  %v1075 = vmul.f32 %v646, %v1015
  %v1076 = vmul.f32 %v649, %v1015
  %v1077 = vmul.f32 %v654, %v1015
  %v1078 = vmul.f32 %v657, %v1015
  %v1079 = vmul.f32 %v662, %v1015
  %v1080 = vmul.f32 %v665, %v1015
  %v1082 = vlaneseq
  %v1083 = vshrl.u32 %v1082, 7
  %v1084 = vsub.s32 0, %v1083
  %v1085 = vrot.slane %v1010, %v1084
  %v1087 = vadd.f32 %v1017, %v1085
  %v1088 = vadd.f32 %v1018, %v1085
  %v1089 = vadd.f32 %v1019, %v1085
  %v1090 = vadd.f32 %v1020, %v1085
  %v1091 = vadd.f32 %v1021, %v1085
  %v1092 = vadd.f32 %v1022, %v1085
  %v1093 = vadd.f32 %v1023, %v1085
  %v1094 = vadd.f32 %v1024, %v1085
  %v1095 = vadd.f32 %v1025, %v1085
  %v1096 = vadd.f32 %v1026, %v1085
  %v1097 = vadd.f32 %v1027, %v1085
  %v1098 = vadd.f32 %v1028, %v1085
  %v1099 = vadd.f32 %v1029, %v1085
  %v1100 = vadd.f32 %v1030, %v1085
  %v1101 = vadd.f32 %v1031, %v1085
  %v1102 = vadd.f32 %v1032, %v1085
  %v1103 = vadd.f32 %v1033, %v1085
  %v1104 = vadd.f32 %v1034, %v1085
  %v1105 = vadd.f32 %v1035, %v1085
  %v1106 = vadd.f32 %v1036, %v1085
  %v1107 = vadd.f32 %v1037, %v1085
  %v1108 = vadd.f32 %v1038, %v1085
  %v1109 = vadd.f32 %v1039, %v1085
  %v1110 = vadd.f32 %v1040, %v1085
  %v1111 = vadd.f32 %v1041, %v1085
  %v1112 = vadd.f32 %v1042, %v1085
  %v1113 = vadd.f32 %v1043, %v1085
  %v1114 = vadd.f32 %v1044, %v1085
  %v1115 = vadd.f32 %v1045, %v1085
  %v1116 = vadd.f32 %v1046, %v1085
  %v1117 = vadd.f32 %v1047, %v1085
  %v1118 = vadd.f32 %v1048, %v1085
  %v1119 = vadd.f32 %v1049, %v1085
  %v1120 = vadd.f32 %v1050, %v1085
  %v1121 = vadd.f32 %v1051, %v1085
  %v1122 = vadd.f32 %v1052, %v1085
  %v1123 = vadd.f32 %v1053, %v1085
  %v1124 = vadd.f32 %v1054, %v1085
  %v1125 = vadd.f32 %v1055, %v1085
  %v1126 = vadd.f32 %v1056, %v1085
  %v1127 = vadd.f32 %v1057, %v1085
  %v1128 = vadd.f32 %v1058, %v1085
  %v1129 = vadd.f32 %v1059, %v1085
  %v1130 = vadd.f32 %v1060, %v1085
  %v1131 = vadd.f32 %v1061, %v1085
  %v1132 = vadd.f32 %v1062, %v1085
  %v1133 = vadd.f32 %v1063, %v1085
  %v1134 = vadd.f32 %v1064, %v1085
  %v1135 = vadd.f32 %v1065, %v1085
  %v1136 = vadd.f32 %v1066, %v1085
  %v1137 = vadd.f32 %v1067, %v1085
  %v1138 = vadd.f32 %v1068, %v1085
  %v1139 = vadd.f32 %v1069, %v1085
  %v1140 = vadd.f32 %v1070, %v1085
  %v1141 = vadd.f32 %v1071, %v1085
  %v1142 = vadd.f32 %v1072, %v1085
  %v1143 = vadd.f32 %v1073, %v1085
  %v1144 = vadd.f32 %v1074, %v1085
  %v1145 = vadd.f32 %v1075, %v1085
  %v1146 = vadd.f32 %v1076, %v1085
  %v1147 = vadd.f32 %v1077, %v1085
  %v1148 = vadd.f32 %v1078, %v1085
  %v1149 = vadd.f32 %v1079, %v1085
  %v1150 = vadd.f32 %v1080, %v1085
  %v1151 = vmax.f32 %v1087, 0.0
  %v1152 = vmax.f32 %v1088, 0.0
  %v1153 = vmax.f32 %v1089, 0.0
  %v1154 = vmax.f32 %v1090, 0.0
  %v1155 = vmax.f32 %v1091, 0.0
  %v1156 = vmax.f32 %v1092, 0.0
  %v1157 = vmax.f32 %v1093, 0.0
  %v1158 = vmax.f32 %v1094, 0.0
  %v1159 = vmax.f32 %v1095, 0.0
  %v1160 = vmax.f32 %v1096, 0.0
  %v1161 = vmax.f32 %v1097, 0.0
  %v1162 = vmax.f32 %v1098, 0.0
  %v1163 = vmax.f32 %v1099, 0.0
  %v1164 = vmax.f32 %v1100, 0.0
  %v1165 = vmax.f32 %v1101, 0.0
  %v1166 = vmax.f32 %v1102, 0.0
  %v1167 = vmax.f32 %v1103, 0.0
  %v1168 = vmax.f32 %v1104, 0.0
  %v1169 = vmax.f32 %v1105, 0.0
  %v1170 = vmax.f32 %v1106, 0.0
  %v1171 = vmax.f32 %v1107, 0.0
  %v1172 = vmax.f32 %v1108, 0.0
  %v1173 = vmax.f32 %v1109, 0.0
  %v1174 = vmax.f32 %v1110, 0.0
  %v1175 = vmax.f32 %v1111, 0.0
  %v1176 = vmax.f32 %v1112, 0.0
  %v1177 = vmax.f32 %v1113, 0.0
  %v1178 = vmax.f32 %v1114, 0.0
  %v1179 = vmax.f32 %v1115, 0.0
  %v1180 = vmax.f32 %v1116, 0.0
  %v1181 = vmax.f32 %v1117, 0.0
  %v1182 = vmax.f32 %v1118, 0.0
  %v1183 = vmax.f32 %v1119, 0.0
  %v1184 = vmax.f32 %v1120, 0.0
  %v1185 = vmax.f32 %v1121, 0.0
  %v1186 = vmax.f32 %v1122, 0.0
  %v1187 = vmax.f32 %v1123, 0.0
  %v1188 = vmax.f32 %v1124, 0.0
  %v1189 = vmax.f32 %v1125, 0.0
  %v1190 = vmax.f32 %v1126, 0.0
  %v1191 = vmax.f32 %v1127, 0.0
  %v1192 = vmax.f32 %v1128, 0.0
  %v1193 = vmax.f32 %v1129, 0.0
  %v1194 = vmax.f32 %v1130, 0.0
  %v1195 = vmax.f32 %v1131, 0.0
  %v1196 = vmax.f32 %v1132, 0.0
  %v1197 = vmax.f32 %v1133, 0.0
  %v1198 = vmax.f32 %v1134, 0.0
  %v1199 = vmax.f32 %v1135, 0.0
  %v1200 = vmax.f32 %v1136, 0.0
  %v1201 = vmax.f32 %v1137, 0.0
  %v1202 = vmax.f32 %v1138, 0.0
  %v1203 = vmax.f32 %v1139, 0.0
  %v1204 = vmax.f32 %v1140, 0.0
  %v1205 = vmax.f32 %v1141, 0.0
  %v1206 = vmax.f32 %v1142, 0.0
  %v1207 = vmax.f32 %v1143, 0.0
  %v1208 = vmax.f32 %v1144, 0.0
  %v1209 = vmax.f32 %v1145, 0.0
  %v1210 = vmax.f32 %v1146, 0.0
  %v1211 = vmax.f32 %v1147, 0.0
  %v1212 = vmax.f32 %v1148, 0.0
  %v1213 = vmax.f32 %v1149, 0.0
  %v1214 = vmax.f32 %v1150, 0.0
  %1215 = vst.msk [vmem:[%s4] sm:$0xff] %vm668, %v1151
  %1216 = vst.msk [vmem:[%s4 + $0x8] sm:$0xff] %vm668, %v1152
  %1217 = vst.msk [vmem:[%s4 + $0x10] sm:$0xff] %vm668, %v1153
  %1218 = vst.msk [vmem:[%s4 + $0x18] sm:$0xff] %vm668, %v1154
  %1219 = vst.msk [vmem:[%s4 + $0x20] sm:$0xff] %vm668, %v1155
  %1220 = vst.msk [vmem:[%s4 + $0x28] sm:$0xff] %vm668, %v1156
  %1221 = vst.msk [vmem:[%s4 + $0x30] sm:$0xff] %vm668, %v1157
  %1222 = vst.msk [vmem:[%s4 + $0x38] sm:$0xff] %vm668, %v1158
  %1223 = vst.msk [vmem:[%s4 + $0x40] sm:$0xff] %vm668, %v1159
  %1224 = vst.msk [vmem:[%s4 + $0x48] sm:$0xff] %vm668, %v1160
  %1225 = vst.msk [vmem:[%s4 + $0x50] sm:$0xff] %vm668, %v1161
  %1226 = vst.msk [vmem:[%s4 + $0x58] sm:$0xff] %vm668, %v1162
  %1227 = vst.msk [vmem:[%s4 + $0x60] sm:$0xff] %vm668, %v1163
  %1228 = vst.msk [vmem:[%s4 + $0x68] sm:$0xff] %vm668, %v1164
  %1229 = vst.msk [vmem:[%s4 + $0x70] sm:$0xff] %vm668, %v1165
  %1230 = vst.msk [vmem:[%s4 + $0x78] sm:$0xff] %vm668, %v1166
  %1231 = vst.msk [vmem:[%s4 + $0x80] sm:$0xff] %vm668, %v1167
  %1232 = vst.msk [vmem:[%s4 + $0x88] sm:$0xff] %vm668, %v1168
  %1233 = vst.msk [vmem:[%s4 + $0x90] sm:$0xff] %vm668, %v1169
  %1234 = vst.msk [vmem:[%s4 + $0x98] sm:$0xff] %vm668, %v1170
  %1235 = vst.msk [vmem:[%s4 + $0xa0] sm:$0xff] %vm668, %v1171
  %1236 = vst.msk [vmem:[%s4 + $0xa8] sm:$0xff] %vm668, %v1172
  %1237 = vst.msk [vmem:[%s4 + $0xb0] sm:$0xff] %vm668, %v1173
  %1238 = vst.msk [vmem:[%s4 + $0xb8] sm:$0xff] %vm668, %v1174
  %1239 = vst.msk [vmem:[%s4 + $0xc0] sm:$0xff] %vm668, %v1175
  %1240 = vst.msk [vmem:[%s4 + $0xc8] sm:$0xff] %vm668, %v1176
  %1241 = vst.msk [vmem:[%s4 + $0xd0] sm:$0xff] %vm668, %v1177
  %1242 = vst.msk [vmem:[%s4 + $0xd8] sm:$0xff] %vm668, %v1178
  %1243 = vst.msk [vmem:[%s4 + $0xe0] sm:$0xff] %vm668, %v1179
  %1244 = vst.msk [vmem:[%s4 + $0xe8] sm:$0xff] %vm668, %v1180
  %1245 = vst.msk [vmem:[%s4 + $0xf0] sm:$0xff] %vm668, %v1181
  %1246 = vst.msk [vmem:[%s4 + $0xf8] sm:$0xff] %vm668, %v1182
  %1247 = vst.msk [vmem:[%s4 + $0x100] sm:$0xff] %vm668, %v1183
  %1248 = vst.msk [vmem:[%s4 + $0x108] sm:$0xff] %vm668, %v1184
  %1249 = vst.msk [vmem:[%s4 + $0x110] sm:$0xff] %vm668, %v1185
  %1250 = vst.msk [vmem:[%s4 + $0x118] sm:$0xff] %vm668, %v1186
  %1251 = vst.msk [vmem:[%s4 + $0x120] sm:$0xff] %vm668, %v1187
  %1252 = vst.msk [vmem:[%s4 + $0x128] sm:$0xff] %vm668, %v1188
  %1253 = vst.msk [vmem:[%s4 + $0x130] sm:$0xff] %vm668, %v1189
  %1254 = vst.msk [vmem:[%s4 + $0x138] sm:$0xff] %vm668, %v1190
  %1255 = vst.msk [vmem:[%s4 + $0x140] sm:$0xff] %vm668, %v1191
  %1256 = vst.msk [vmem:[%s4 + $0x148] sm:$0xff] %vm668, %v1192
  %1257 = vst.msk [vmem:[%s4 + $0x150] sm:$0xff] %vm668, %v1193
  %1258 = vst.msk [vmem:[%s4 + $0x158] sm:$0xff] %vm668, %v1194
  %1259 = vst.msk [vmem:[%s4 + $0x160] sm:$0xff] %vm668, %v1195
  %1260 = vst.msk [vmem:[%s4 + $0x168] sm:$0xff] %vm668, %v1196
  %1261 = vst.msk [vmem:[%s4 + $0x170] sm:$0xff] %vm668, %v1197
  %1262 = vst.msk [vmem:[%s4 + $0x178] sm:$0xff] %vm668, %v1198
  %1263 = vst.msk [vmem:[%s4 + $0x180] sm:$0xff] %vm668, %v1199
  %1264 = vst.msk [vmem:[%s4 + $0x188] sm:$0xff] %vm668, %v1200
  %1265 = vst.msk [vmem:[%s4 + $0x190] sm:$0xff] %vm668, %v1201
  %1266 = vst.msk [vmem:[%s4 + $0x198] sm:$0xff] %vm668, %v1202
  %1267 = vst.msk [vmem:[%s4 + $0x1a0] sm:$0xff] %vm668, %v1203
  %1268 = vst.msk [vmem:[%s4 + $0x1a8] sm:$0xff] %vm668, %v1204
  %1269 = vst.msk [vmem:[%s4 + $0x1b0] sm:$0xff] %vm668, %v1205
  %1270 = vst.msk [vmem:[%s4 + $0x1b8] sm:$0xff] %vm668, %v1206
  %1271 = vst.msk [vmem:[%s4 + $0x1c0] sm:$0xff] %vm668, %v1207
  %1272 = vst.msk [vmem:[%s4 + $0x1c8] sm:$0xff] %vm668, %v1208
  %1273 = vst.msk [vmem:[%s4 + $0x1d0] sm:$0xff] %vm668, %v1209
  %1274 = vst.msk [vmem:[%s4 + $0x1d8] sm:$0xff] %vm668, %v1210
  %1275 = vst.msk [vmem:[%s4 + $0x1e0] sm:$0xff] %vm668, %v1211
  %1276 = vst.msk [vmem:[%s4 + $0x1e8] sm:$0xff] %vm668, %v1212
  %1277 = vst.msk [vmem:[%s4 + $0x1f0] sm:$0xff] %vm668, %v1213
  %1278 = vst.msk [vmem:[%s4 + $0x1f8] sm:$0xff] %vm668, %v1214
  // Predicated region
  $region18: #{unet_forward.28} parent=0 // pred_check
    _
  $region19: #{unet_forward.28} parent=0 // pred_check_branch
    %1280 = sbr.rel (0) target = $region21
  $region20: #{unet_forward.28} parent=0 // pred_region
    _
  $region21: #{unet_forward.28} parent=0 // pred_fallthru
    _
  // Predicated region
  $region22: #{unet_forward.28} parent=0 // pred_check
    _
  $region23: #{unet_forward.28} parent=0 // pred_check_branch
    %1282 = sbr.rel (0) target = $region25
  $region24: #{unet_forward.28} parent=0 // pred_region
    _
  $region25: #{unet_forward.28} parent=0 // pred_fallthru
    _

// kernel: unet_forward.29
$region0: #{unet_forward.29}
  #allocation0 [shape = 'u32[]', space=smem, size = 0x4, offset = 0x4, fixed_abs, tag = 'smem constant byte address 0x4 - core index']
  #allocation1 [shape = 'u32[144,128]{1,0:T(1,128)}', space=vmem, size = 0x12000, scoped, tag = 'internal scratch']
  %s0 = inlined_call_operand.vmem [shape: f32[4,128,8], index: 0, kind: input, shape index: {}]
  %s1 = inlined_call_operand.vmem [shape: f32[128,8], index: 1, kind: output, shape index: {}]
  %s2 = sld [smem:[#allocation0]]
  $region14: #{unet_forward.29} parent=0
    _
  %s4 = ssub.s32 1, %s2
  %s5 = scalar_select 0, %s4, %s2
  // Predicated region
  $region2: #{unet_forward.29} parent=0 // pred_check
    _
  $region3: #{unet_forward.29} parent=0 // pred_check_branch
    %7 = sbr.rel (0) target = $region5
  $region4: #{unet_forward.29} parent=0 // pred_region
    _
  $region5: #{unet_forward.29} parent=0 // pred_fallthru
    _
  %v8 = vld [vmem:[%s0] sm:$0xff]
  %v9 = vld [vmem:[%s0 + $0x8] sm:$0xff]
  %v10 = vld [vmem:[%s0 + $0x10] sm:$0xff]
  %v11 = vld [vmem:[%s0 + $0x18] sm:$0xff]
  %v12 = vld [vmem:[%s0 + $0x20] sm:$0xff]
  %v13 = vld [vmem:[%s0 + $0x28] sm:$0xff]
  %v14 = vld [vmem:[%s0 + $0x30] sm:$0xff]
  %v15 = vld [vmem:[%s0 + $0x38] sm:$0xff]
  %v16 = vld [vmem:[%s0 + $0x40] sm:$0xff]
  %v17 = vld [vmem:[%s0 + $0x48] sm:$0xff]
  %v18 = vld [vmem:[%s0 + $0x50] sm:$0xff]
  %v19 = vld [vmem:[%s0 + $0x58] sm:$0xff]
  %v20 = vld [vmem:[%s0 + $0x60] sm:$0xff]
  %v21 = vld [vmem:[%s0 + $0x68] sm:$0xff]
  %v22 = vld [vmem:[%s0 + $0x70] sm:$0xff]
  %v23 = vld [vmem:[%s0 + $0x78] sm:$0xff]
  %s24 = scalar_lea.vmem %s0, 128
  %v25 = vld [vmem:[%s24] sm:$0xff]
  %v26 = vld [vmem:[%s24 + $0x8] sm:$0xff]
  %v27 = vld [vmem:[%s24 + $0x10] sm:$0xff]
  %v28 = vld [vmem:[%s24 + $0x18] sm:$0xff]
  %v29 = vld [vmem:[%s24 + $0x20] sm:$0xff]
  %v30 = vld [vmem:[%s24 + $0x28] sm:$0xff]
  %v31 = vld [vmem:[%s24 + $0x30] sm:$0xff]
  %v32 = vld [vmem:[%s24 + $0x38] sm:$0xff]
  %v33 = vld [vmem:[%s24 + $0x40] sm:$0xff]
  %v34 = vld [vmem:[%s24 + $0x48] sm:$0xff]
  %v35 = vld [vmem:[%s24 + $0x50] sm:$0xff]
  %v36 = vld [vmem:[%s24 + $0x58] sm:$0xff]
  %v37 = vld [vmem:[%s24 + $0x60] sm:$0xff]
  %v38 = vld [vmem:[%s24 + $0x68] sm:$0xff]
  %v39 = vld [vmem:[%s24 + $0x70] sm:$0xff]
  %v40 = vld [vmem:[%s24 + $0x78] sm:$0xff]
  %v41 = vmax.f32 %v8, %v25
  %v42 = vmax.f32 %v9, %v26
  %v43 = vmax.f32 %v10, %v27
  %v44 = vmax.f32 %v11, %v28
  %v45 = vmax.f32 %v12, %v29
  %v46 = vmax.f32 %v13, %v30
  %v47 = vmax.f32 %v14, %v31
  %v48 = vmax.f32 %v15, %v32
  %v49 = vmax.f32 %v16, %v33
  %v50 = vmax.f32 %v17, %v34
  %v51 = vmax.f32 %v18, %v35
  %v52 = vmax.f32 %v19, %v36
  %v53 = vmax.f32 %v20, %v37
  %v54 = vmax.f32 %v21, %v38
  %v55 = vmax.f32 %v22, %v39
  %v56 = vmax.f32 %v23, %v40
  %s57 = scalar_lea.vmem %s0, 256
  %v58 = vld [vmem:[%s57] sm:$0xff]
  %v59 = vld [vmem:[%s57 + $0x8] sm:$0xff]
  %v60 = vld [vmem:[%s57 + $0x10] sm:$0xff]
  %v61 = vld [vmem:[%s57 + $0x18] sm:$0xff]
  %v62 = vld [vmem:[%s57 + $0x20] sm:$0xff]
  %v63 = vld [vmem:[%s57 + $0x28] sm:$0xff]
  %v64 = vld [vmem:[%s57 + $0x30] sm:$0xff]
  %v65 = vld [vmem:[%s57 + $0x38] sm:$0xff]
  %v66 = vld [vmem:[%s57 + $0x40] sm:$0xff]
  %v67 = vld [vmem:[%s57 + $0x48] sm:$0xff]
  %v68 = vld [vmem:[%s57 + $0x50] sm:$0xff]
  %v69 = vld [vmem:[%s57 + $0x58] sm:$0xff]
  %v70 = vld [vmem:[%s57 + $0x60] sm:$0xff]
  %v71 = vld [vmem:[%s57 + $0x68] sm:$0xff]
  %v72 = vld [vmem:[%s57 + $0x70] sm:$0xff]
  %v73 = vld [vmem:[%s57 + $0x78] sm:$0xff]
  %s74 = scalar_lea.vmem %s0, 384
  %v75 = vld [vmem:[%s74] sm:$0xff]
  %v76 = vld [vmem:[%s74 + $0x8] sm:$0xff]
  %v77 = vld [vmem:[%s74 + $0x10] sm:$0xff]
  %v78 = vld [vmem:[%s74 + $0x18] sm:$0xff]
  %v79 = vld [vmem:[%s74 + $0x20] sm:$0xff]
  %v80 = vld [vmem:[%s74 + $0x28] sm:$0xff]
  %v81 = vld [vmem:[%s74 + $0x30] sm:$0xff]
  %v82 = vld [vmem:[%s74 + $0x38] sm:$0xff]
  %v83 = vld [vmem:[%s74 + $0x40] sm:$0xff]
  %v84 = vld [vmem:[%s74 + $0x48] sm:$0xff]
  %v85 = vld [vmem:[%s74 + $0x50] sm:$0xff]
  %v86 = vld [vmem:[%s74 + $0x58] sm:$0xff]
  %v87 = vld [vmem:[%s74 + $0x60] sm:$0xff]
  %v88 = vld [vmem:[%s74 + $0x68] sm:$0xff]
  %v89 = vld [vmem:[%s74 + $0x70] sm:$0xff]
  %v90 = vld [vmem:[%s74 + $0x78] sm:$0xff]
  %v91 = vmax.f32 %v58, %v75
  %v92 = vmax.f32 %v59, %v76
  %v93 = vmax.f32 %v60, %v77
  %v94 = vmax.f32 %v61, %v78
  %v95 = vmax.f32 %v62, %v79
  %v96 = vmax.f32 %v63, %v80
  %v97 = vmax.f32 %v64, %v81
  %v98 = vmax.f32 %v65, %v82
  %v99 = vmax.f32 %v66, %v83
  %v100 = vmax.f32 %v67, %v84
  %v101 = vmax.f32 %v68, %v85
  %v102 = vmax.f32 %v69, %v86
  %v103 = vmax.f32 %v70, %v87
  %v104 = vmax.f32 %v71, %v88
  %v105 = vmax.f32 %v72, %v89
  %v106 = vmax.f32 %v73, %v90
  %v107 = vmax.f32 %v41, %v91
  %v108 = vmax.f32 %v42, %v92
  %v109 = vmax.f32 %v43, %v93
  %v110 = vmax.f32 %v44, %v94
  %v111 = vmax.f32 %v45, %v95
  %v112 = vmax.f32 %v46, %v96
  %v113 = vmax.f32 %v47, %v97
  %v114 = vmax.f32 %v48, %v98
  %v115 = vmax.f32 %v49, %v99
  %v116 = vmax.f32 %v50, %v100
  %v117 = vmax.f32 %v51, %v101
  %v118 = vmax.f32 %v52, %v102
  %v119 = vmax.f32 %v53, %v103
  %v120 = vmax.f32 %v54, %v104
  %v121 = vmax.f32 %v55, %v105
  %v122 = vmax.f32 %v56, %v106
  %vm123 = vcmask 64512
  %124 = vst.msk [vmem:[%s1] sm:$0xff] %vm123, %v107
  %125 = vst.msk [vmem:[%s1 + $0x8] sm:$0xff] %vm123, %v108
  %126 = vst.msk [vmem:[%s1 + $0x10] sm:$0xff] %vm123, %v109
  %127 = vst.msk [vmem:[%s1 + $0x18] sm:$0xff] %vm123, %v110
  %128 = vst.msk [vmem:[%s1 + $0x20] sm:$0xff] %vm123, %v111
  %129 = vst.msk [vmem:[%s1 + $0x28] sm:$0xff] %vm123, %v112
  %130 = vst.msk [vmem:[%s1 + $0x30] sm:$0xff] %vm123, %v113
  %131 = vst.msk [vmem:[%s1 + $0x38] sm:$0xff] %vm123, %v114
  %132 = vst.msk [vmem:[%s1 + $0x40] sm:$0xff] %vm123, %v115
  %133 = vst.msk [vmem:[%s1 + $0x48] sm:$0xff] %vm123, %v116
  %134 = vst.msk [vmem:[%s1 + $0x50] sm:$0xff] %vm123, %v117
  %135 = vst.msk [vmem:[%s1 + $0x58] sm:$0xff] %vm123, %v118
  %136 = vst.msk [vmem:[%s1 + $0x60] sm:$0xff] %vm123, %v119
  %137 = vst.msk [vmem:[%s1 + $0x68] sm:$0xff] %vm123, %v120
  %138 = vst.msk [vmem:[%s1 + $0x70] sm:$0xff] %vm123, %v121
  %139 = vst.msk [vmem:[%s1 + $0x78] sm:$0xff] %vm123, %v122
  // Predicated region
  $region6: #{unet_forward.29} parent=0 // pred_check
    _
  $region7: #{unet_forward.29} parent=0 // pred_check_branch
    %141 = sbr.rel (0) target = $region9
  $region8: #{unet_forward.29} parent=0 // pred_region
    _
  $region9: #{unet_forward.29} parent=0 // pred_fallthru
    _
  // Predicated region
  $region10: #{unet_forward.29} parent=0 // pred_check
    _
  $region11: #{unet_forward.29} parent=0 // pred_check_branch
    %143 = sbr.rel (0) target = $region13
  $region12: #{unet_forward.29} parent=0 // pred_region
    _
  $region13: #{unet_forward.29} parent=0 // pred_fallthru
    _

// kernel: unet_forward.30
$region0: #{unet_forward.30}
  #allocation0 [shape = 'u32[]', space=smem, size = 0x4, offset = 0x4, fixed_abs, tag = 'smem constant byte address 0x4 - core index']
  #allocation1 [shape = 'u32[144,128]{1,0:T(1,128)}', space=vmem, size = 0x12000, scoped, tag = 'internal scratch']
  %s0 = inlined_call_operand.vmem [shape: bf16[128,72], index: 0, kind: input, shape index: {}]
  %s1 = inlined_call_operand.vmem [shape: bf16[72,16], index: 1, kind: input, shape index: {}]
  %s2 = inlined_call_operand.vmem [shape: f32[1,16], index: 2, kind: input, shape index: {}]
  %s3 = inlined_call_operand.vmem [shape: f32[1,16], index: 3, kind: input, shape index: {}]
  %s4 = inlined_call_operand.vmem [shape: f32[128,16], index: 4, kind: output, shape index: {}]
  %s5 = sld [smem:[#allocation0]]
  $region26: #{unet_forward.30} parent=0
    _
  %s7 = ssub.s32 1, %s5
  %s8 = scalar_select 0, %s7, %s5
  // Predicated region
  $region2: #{unet_forward.30} parent=0 // pred_check
    _
  $region3: #{unet_forward.30} parent=0 // pred_check_branch
    %10 = sbr.rel (0) target = $region5
  $region4: #{unet_forward.30} parent=0 // pred_region
    _
  $region5: #{unet_forward.30} parent=0 // pred_fallthru
    _
  // Predicated region
  $region6: #{unet_forward.30} parent=0 // pred_check
    _
  $region7: #{unet_forward.30} parent=0 // pred_check_branch
    %12 = sbr.rel (0) target = $region9
  $region8: #{unet_forward.30} parent=0 // pred_region
    _
  $region9: #{unet_forward.30} parent=0 // pred_fallthru
    _
  // Predicated region
  $region10: #{unet_forward.30} parent=0 // pred_check
    _
  $region11: #{unet_forward.30} parent=0 // pred_check_branch
    %14 = sbr.rel (0) target = $region13
  $region12: #{unet_forward.30} parent=0 // pred_region
    _
  $region13: #{unet_forward.30} parent=0 // pred_fallthru
    _
  // Predicated region
  $region14: #{unet_forward.30} parent=0 // pred_check
    _
  $region15: #{unet_forward.30} parent=0 // pred_check_branch
    %16 = sbr.rel (0) target = $region17
  $region16: #{unet_forward.30} parent=0 // pred_region
    _
  $region17: #{unet_forward.30} parent=0 // pred_fallthru
    _
  %v18 = vld [vmem:[%s0] sm:$0xf]
  %v19 = vld [vmem:[%s0 + $0x4] sm:$0xf]
  %v20 = vld [vmem:[%s0 + $0x8] sm:$0xf]
  %v21 = vld [vmem:[%s0 + $0xc] sm:$0xf]
  %v22 = vld [vmem:[%s0 + $0x10] sm:$0xf]
  %v23 = vld [vmem:[%s0 + $0x14] sm:$0xf]
  %v24 = vld [vmem:[%s0 + $0x18] sm:$0xf]
  %v25 = vld [vmem:[%s0 + $0x1c] sm:$0xf]
  %v26 = vld [vmem:[%s0 + $0x20] sm:$0xf]
  %v27 = vld [vmem:[%s0 + $0x24] sm:$0xf]
  %v28 = vld [vmem:[%s0 + $0x28] sm:$0xf]
  %v29 = vld [vmem:[%s0 + $0x2c] sm:$0xf]
  %v30 = vld [vmem:[%s0 + $0x30] sm:$0xf]
  %v31 = vld [vmem:[%s0 + $0x34] sm:$0xf]
  %v32 = vld [vmem:[%s0 + $0x38] sm:$0xf]
  %v33 = vld [vmem:[%s0 + $0x3c] sm:$0xf]
  %v34 = vld [vmem:[%s1] sm:$0xf]
  %v35 = vld [vmem:[%s1 + $0x4] sm:$0xf]
  %v36 = vld [vmem:[%s1 + $0x8] sm:$0xf]
  %v37 = vld [vmem:[%s1 + $0xc] sm:$0xf]
  %v38 = vld [vmem:[%s1 + $0x10] sm:$0xf]
  %v39 = vld [vmem:[%s1 + $0x14] sm:$0xf]
  %v40 = vld [vmem:[%s1 + $0x18] sm:$0xf]
  %v41 = vld [vmem:[%s1 + $0x1c] sm:$0xf]
  %v42 = vld [vmem:[%s1 + $0x20] sm:$0xf]
  %v59 = vunpack.c.l.b16 %v18
  %v60 = vunpack.c.l.b16 %v19
  %v61 = vunpack.c.l.b16 %v20
  %v62 = vunpack.c.l.b16 %v21
  %v63 = vunpack.c.l.b16 %v22
  %v64 = vunpack.c.l.b16 %v23
  %v65 = vunpack.c.l.b16 %v24
  %v66 = vunpack.c.l.b16 %v25
  %v67 = vunpack.c.l.b16 %v26
  %v68 = vunpack.c.l.b16 %v27
  %v69 = vunpack.c.l.b16 %v28
  %v70 = vunpack.c.l.b16 %v29
  %v71 = vunpack.c.l.b16 %v30
  %v72 = vunpack.c.l.b16 %v31
  %v73 = vunpack.c.l.b16 %v32
  %v74 = vunpack.c.l.b16 %v33
  %v75 = vpack.c.b16 %v60, %v59
  %v76 = vpack.c.b16 %v62, %v61
  %v77 = vpack.c.b16 %v64, %v63
  %v78 = vpack.c.b16 %v66, %v65
  %v79 = vpack.c.b16 %v68, %v67
  %v80 = vpack.c.b16 %v70, %v69
  %v81 = vpack.c.b16 %v72, %v71
  %v82 = vpack.c.b16 %v74, %v73
  %v92 = vunpack.c.l.b16 %v34
  %v93 = vunpack.c.l.b16 %v35
  %v94 = vunpack.c.l.b16 %v36
  %v95 = vunpack.c.l.b16 %v37
  %v96 = vunpack.c.l.b16 %v38
  %v97 = vunpack.c.l.b16 %v39
  %v98 = vunpack.c.l.b16 %v40
  %v99 = vunpack.c.l.b16 %v41
  %v100 = vunpack.c.l.b16 %v42
  %v101 = vpack.c.b16 %v93, %v92
  %v102 = vpack.c.b16 %v95, %v94
  %v103 = vpack.c.b16 %v97, %v96
  %v104 = vpack.c.b16 %v99, %v98
  %v105 = vpack.c.b16 %v100, %v100
  %vm110 = vcmask 588800
  %v112 = vsel %vm110, %v75, 0
  %v115 = vsel %vm110, %v76, 0
  %v118 = vsel %vm110, %v77, 0
  %v121 = vsel %vm110, %v78, 0
  %v124 = vsel %vm110, %v79, 0
  %v127 = vsel %vm110, %v80, 0
  %v130 = vsel %vm110, %v81, 0
  %v133 = vsel %vm110, %v82, 0
  %vm135 = vcmask 1043456
  %v137 = vsel %vm135, %v105, 0
  %139 = vmatprep.subr.bf16.mxu0 0
  %140 = vmatpush1.bf16.msra.mxu0 %v101
  %141 = vmatprep.subr.bf16.mxu0 0
  %142 = vmatpush1.bf16.msra.mxu0 %v102
  %143 = vmatprep.subr.bf16.mxu0 0
  %144 = vmatpush1.bf16.msra.mxu0 %v103
  %145 = vmatprep.subr.bf16.mxu0 0
  %146 = vmatpush1.bf16.msra.mxu0 %v104
  %147 = vmatprep.subr.bf16.mxu0 0
  %148 = vmatpush1.bf16.msra.mxu0 %v137
  %149 = vmatprep.subr.bf16.mxu0 0
  %150 = vmatpush1.bf16.msra.mxu0 0
  %151 = vmatprep.subr.bf16.mxu0 0
  %152 = vmatpush1.bf16.msra.mxu0 0
  %153 = vmatprep.subr.bf16.mxu0 0
  %154 = vmatpush1.bf16.msra.mxu0 0
  %155 = vmatprep.subr.bf16.mxu0 0
  %156 = vmatpush1.bf16.msra.mxu0 0
  %157 = vmatprep.subr.bf16.mxu0 0
  %158 = vmatpush1.bf16.msra.mxu0 0
  %159 = vmatprep.subr.bf16.mxu0 0
  %160 = vmatpush1.bf16.msra.mxu0 0
  %161 = vmatprep.subr.bf16.mxu0 0
  %162 = vmatpush1.bf16.msra.mxu0 0
  %163 = vmatprep.subr.bf16.mxu0 0
  %164 = vmatpush1.bf16.msra.mxu0 0
  %165 = vmatprep.subr.bf16.mxu0 0
  %166 = vmatpush1.bf16.msra.mxu0 0
  %167 = vmatprep.subr.bf16.mxu0 0
  %168 = vmatpush1.bf16.msra.mxu0 0
  %169 = vmatprep.subr.bf16.mxu0 0
  %170 = vmatpush1.bf16.msra.mxu0 0
  %171 = vmatprep.mubr.bf16.mxu0 0
  %172 = vmatmul.mubr.bf16.gmra.mrb[0].mxu0 %v112
  %v173 = vpop.f32.mrb[0].mxu0
  %v174 = vadd.f32 0.0, %v173
  %v175 = vpop.f32.mrb[0].mxu0
  %v176 = vpop.f32.mrb[0].mxu0
  %v177 = vadd.f32 0.0, %v176
  %v178 = vpop.f32.mrb[0].mxu0
  %179 = vmatprep.mubr.bf16.mxu0 0
  %180 = vmatmul.mubr.bf16.gmra.mrb[0].mxu0 %v115
  %v181 = vpop.f32.mrb[0].mxu0
  %v182 = vadd.f32 0.0, %v181
  %v183 = vpop.f32.mrb[0].mxu0
  %v184 = vpop.f32.mrb[0].mxu0
  %v185 = vadd.f32 0.0, %v184
  %v186 = vpop.f32.mrb[0].mxu0
  %187 = vmatprep.mubr.bf16.mxu0 0
  %188 = vmatmul.mubr.bf16.gmra.mrb[0].mxu0 %v118
  %v189 = vpop.f32.mrb[0].mxu0
  %v190 = vadd.f32 0.0, %v189
  %v191 = vpop.f32.mrb[0].mxu0
  %v192 = vpop.f32.mrb[0].mxu0
  %v193 = vadd.f32 0.0, %v192
  %v194 = vpop.f32.mrb[0].mxu0
  %195 = vmatprep.mubr.bf16.mxu0 0
  %196 = vmatmul.mubr.bf16.gmra.mrb[0].mxu0 %v121
  %v197 = vpop.f32.mrb[0].mxu0
  %v198 = vadd.f32 0.0, %v197
  %v199 = vpop.f32.mrb[0].mxu0
  %v200 = vpop.f32.mrb[0].mxu0
  %v201 = vadd.f32 0.0, %v200
  %v202 = vpop.f32.mrb[0].mxu0
  %203 = vmatprep.mubr.bf16.mxu0 0
  %204 = vmatmul.mubr.bf16.gmra.mrb[0].mxu0 %v124
  %v205 = vpop.f32.mrb[0].mxu0
  %v206 = vadd.f32 0.0, %v205
  %v207 = vpop.f32.mrb[0].mxu0
  %v208 = vpop.f32.mrb[0].mxu0
  %v209 = vadd.f32 0.0, %v208
  %v210 = vpop.f32.mrb[0].mxu0
  %211 = vmatprep.mubr.bf16.mxu0 0
  %212 = vmatmul.mubr.bf16.gmra.mrb[0].mxu0 %v127
  %v213 = vpop.f32.mrb[0].mxu0
  %v214 = vadd.f32 0.0, %v213
  %v215 = vpop.f32.mrb[0].mxu0
  %v216 = vpop.f32.mrb[0].mxu0
  %v217 = vadd.f32 0.0, %v216
  %v218 = vpop.f32.mrb[0].mxu0
  %219 = vmatprep.mubr.bf16.mxu0 0
  %220 = vmatmul.mubr.bf16.gmra.mrb[0].mxu0 %v130
  %v221 = vpop.f32.mrb[0].mxu0
  %v222 = vadd.f32 0.0, %v221
  %v223 = vpop.f32.mrb[0].mxu0
  %v224 = vpop.f32.mrb[0].mxu0
  %v225 = vadd.f32 0.0, %v224
  %v226 = vpop.f32.mrb[0].mxu0
  %227 = vmatprep.mubr.bf16.mxu0 0
  %228 = vmatmul.mubr.bf16.gmra.mrb[0].mxu0 %v133
  %v229 = vpop.f32.mrb[0].mxu0
  %v230 = vadd.f32 0.0, %v229
  %v231 = vpop.f32.mrb[0].mxu0
  %v232 = vpop.f32.mrb[0].mxu0
  %v233 = vadd.f32 0.0, %v232
  %v234 = vpop.f32.mrb[0].mxu0
  %235 = vdwg.mxu0
  %vm236 = vcmask 130048
  %v237 = vsel %vm236, %v174, 0.0
  %v238 = vsel %vm236, %v177, 0.0
  %v239 = vadd.f32 %v237, %v238
  %v240 = vsel %vm236, %v182, 0.0
  %v241 = vadd.f32 %v239, %v240
  %v242 = vsel %vm236, %v185, 0.0
  %v243 = vadd.f32 %v241, %v242
  %v244 = vsel %vm236, %v190, 0.0
  %v245 = vadd.f32 %v243, %v244
  %v246 = vsel %vm236, %v193, 0.0
  %v247 = vadd.f32 %v245, %v246
  %v248 = vsel %vm236, %v198, 0.0
  %v249 = vadd.f32 %v247, %v248
  %v250 = vsel %vm236, %v201, 0.0
  %v251 = vadd.f32 %v249, %v250
  %v252 = vsel %vm236, %v206, 0.0
  %v253 = vadd.f32 %v251, %v252
  %v254 = vsel %vm236, %v209, 0.0
  %v255 = vadd.f32 %v253, %v254
  %v256 = vsel %vm236, %v214, 0.0
  %v257 = vadd.f32 %v255, %v256
  %v258 = vsel %vm236, %v217, 0.0
  %v259 = vadd.f32 %v257, %v258
  %v260 = vsel %vm236, %v222, 0.0
  %v261 = vadd.f32 %v259, %v260
  %v262 = vsel %vm236, %v225, 0.0
  %v263 = vadd.f32 %v261, %v262
  %v264 = vsel %vm236, %v230, 0.0
  %v265 = vadd.f32 %v263, %v264
  %v266 = vsel %vm236, %v233, 0.0
  %v267 = vadd.f32 %v265, %v266
  %v268 = vrot.slane %v267, 4
  %v269 = vadd.f32 %v267, %v268
  %v270 = vrot.slane %v269, 2
  %v271 = vadd.f32 %v269, %v270
  %v272 = vrot.slane %v271, 1
  %v273 = vadd.f32 %v271, %v272
  %v274 = vmul.f32 %v273, 0.0078125
  %v275 = vmul.f32 %v174, %v174
  %v276 = vmul.f32 %v177, %v177
  %v277 = vmul.f32 %v182, %v182
  %v278 = vmul.f32 %v185, %v185
  %v279 = vmul.f32 %v190, %v190
  %v280 = vmul.f32 %v193, %v193
  %v281 = vmul.f32 %v198, %v198
  %v282 = vmul.f32 %v201, %v201
  %v283 = vmul.f32 %v206, %v206
  %v284 = vmul.f32 %v209, %v209
  %v285 = vmul.f32 %v214, %v214
  %v286 = vmul.f32 %v217, %v217
  %v287 = vmul.f32 %v222, %v222
  %v288 = vmul.f32 %v225, %v225
  %v289 = vmul.f32 %v230, %v230
  %v290 = vmul.f32 %v233, %v233
  %v291 = vsel %vm236, %v275, 0.0
  %v292 = vsel %vm236, %v276, 0.0
  %v293 = vadd.f32 %v291, %v292
  %v294 = vsel %vm236, %v277, 0.0
  %v295 = vadd.f32 %v293, %v294
  %v296 = vsel %vm236, %v278, 0.0
  %v297 = vadd.f32 %v295, %v296
  %v298 = vsel %vm236, %v279, 0.0
  %v299 = vadd.f32 %v297, %v298
  %v300 = vsel %vm236, %v280, 0.0
  %v301 = vadd.f32 %v299, %v300
  %v302 = vsel %vm236, %v281, 0.0
  %v303 = vadd.f32 %v301, %v302
  %v304 = vsel %vm236, %v282, 0.0
  %v305 = vadd.f32 %v303, %v304
  %v306 = vsel %vm236, %v283, 0.0
  %v307 = vadd.f32 %v305, %v306
  %v308 = vsel %vm236, %v284, 0.0
  %v309 = vadd.f32 %v307, %v308
  %v310 = vsel %vm236, %v285, 0.0
  %v311 = vadd.f32 %v309, %v310
  %v312 = vsel %vm236, %v286, 0.0
  %v313 = vadd.f32 %v311, %v312
  %v314 = vsel %vm236, %v287, 0.0
  %v315 = vadd.f32 %v313, %v314
  %v316 = vsel %vm236, %v288, 0.0
  %v317 = vadd.f32 %v315, %v316
  %v318 = vsel %vm236, %v289, 0.0
  %v319 = vadd.f32 %v317, %v318
  %v320 = vsel %vm236, %v290, 0.0
  %v321 = vadd.f32 %v319, %v320
  %v322 = vrot.slane %v321, 4
  %v323 = vadd.f32 %v321, %v322
  %v324 = vrot.slane %v323, 2
  %v325 = vadd.f32 %v323, %v324
  %v326 = vrot.slane %v325, 1
  %v327 = vadd.f32 %v325, %v326
  %v328 = vmul.f32 %v327, 0.0078125
  %v329 = vmul.f32 %v274, %v274
  %v330 = vsub.f32 %v328, %v329
  %v331 = vmax.f32 %v330, 0.0
  %v332 = vld [vmem:[%s2] sm:$0x1]
  %v333 = vadd.f32 %v331, 1e-05
  %v334 = vrsqrt.pop %v333
  %v335 = vmul.f32 %v332, %v334
  %v336 = vld [vmem:[%s3] sm:$0x1]
  %v337 = vmul.f32 %v274, %v335
  %v338 = vsub.f32 %v336, %v337
  %v340 = vlaneseq
  %v341 = vshrl.u32 %v340, 7
  %v342 = vsub.s32 0, %v341
  %v343 = vrot.slane %v335, %v342
  %v345 = vmul.f32 %v174, %v343
  %v346 = vmul.f32 %v177, %v343
  %v347 = vmul.f32 %v182, %v343
  %v348 = vmul.f32 %v185, %v343
  %v349 = vmul.f32 %v190, %v343
  %v350 = vmul.f32 %v193, %v343
  %v351 = vmul.f32 %v198, %v343
  %v352 = vmul.f32 %v201, %v343
  %v353 = vmul.f32 %v206, %v343
  %v354 = vmul.f32 %v209, %v343
  %v355 = vmul.f32 %v214, %v343
  %v356 = vmul.f32 %v217, %v343
  %v357 = vmul.f32 %v222, %v343
  %v358 = vmul.f32 %v225, %v343
  %v359 = vmul.f32 %v230, %v343
  %v360 = vmul.f32 %v233, %v343
  %v362 = vlaneseq
  %v363 = vshrl.u32 %v362, 7
  %v364 = vsub.s32 0, %v363
  %v365 = vrot.slane %v338, %v364
  %v367 = vadd.f32 %v345, %v365
  %v368 = vadd.f32 %v346, %v365
  %v369 = vadd.f32 %v347, %v365
  %v370 = vadd.f32 %v348, %v365
  %v371 = vadd.f32 %v349, %v365
  %v372 = vadd.f32 %v350, %v365
  %v373 = vadd.f32 %v351, %v365
  %v374 = vadd.f32 %v352, %v365
  %v375 = vadd.f32 %v353, %v365
  %v376 = vadd.f32 %v354, %v365
  %v377 = vadd.f32 %v355, %v365
  %v378 = vadd.f32 %v356, %v365
  %v379 = vadd.f32 %v357, %v365
  %v380 = vadd.f32 %v358, %v365
  %v381 = vadd.f32 %v359, %v365
  %v382 = vadd.f32 %v360, %v365
  %v383 = vmax.f32 %v367, 0.0
  %v384 = vmax.f32 %v368, 0.0
  %v385 = vmax.f32 %v369, 0.0
  %v386 = vmax.f32 %v370, 0.0
  %v387 = vmax.f32 %v371, 0.0
  %v388 = vmax.f32 %v372, 0.0
  %v389 = vmax.f32 %v373, 0.0
  %v390 = vmax.f32 %v374, 0.0
  %v391 = vmax.f32 %v375, 0.0
  %v392 = vmax.f32 %v376, 0.0
  %v393 = vmax.f32 %v377, 0.0
  %v394 = vmax.f32 %v378, 0.0
  %v395 = vmax.f32 %v379, 0.0
  %v396 = vmax.f32 %v380, 0.0
  %v397 = vmax.f32 %v381, 0.0
  %v398 = vmax.f32 %v382, 0.0
  %399 = vst.msk [vmem:[%s4] sm:$0xff] %vm236, %v383
  %400 = vst.msk [vmem:[%s4 + $0x8] sm:$0xff] %vm236, %v384
  %401 = vst.msk [vmem:[%s4 + $0x10] sm:$0xff] %vm236, %v385
  %402 = vst.msk [vmem:[%s4 + $0x18] sm:$0xff] %vm236, %v386
  %403 = vst.msk [vmem:[%s4 + $0x20] sm:$0xff] %vm236, %v387
  %404 = vst.msk [vmem:[%s4 + $0x28] sm:$0xff] %vm236, %v388
  %405 = vst.msk [vmem:[%s4 + $0x30] sm:$0xff] %vm236, %v389
  %406 = vst.msk [vmem:[%s4 + $0x38] sm:$0xff] %vm236, %v390
  %407 = vst.msk [vmem:[%s4 + $0x40] sm:$0xff] %vm236, %v391
  %408 = vst.msk [vmem:[%s4 + $0x48] sm:$0xff] %vm236, %v392
  %409 = vst.msk [vmem:[%s4 + $0x50] sm:$0xff] %vm236, %v393
  %410 = vst.msk [vmem:[%s4 + $0x58] sm:$0xff] %vm236, %v394
  %411 = vst.msk [vmem:[%s4 + $0x60] sm:$0xff] %vm236, %v395
  %412 = vst.msk [vmem:[%s4 + $0x68] sm:$0xff] %vm236, %v396
  %413 = vst.msk [vmem:[%s4 + $0x70] sm:$0xff] %vm236, %v397
  %414 = vst.msk [vmem:[%s4 + $0x78] sm:$0xff] %vm236, %v398
  // Predicated region
  $region18: #{unet_forward.30} parent=0 // pred_check
    _
  $region19: #{unet_forward.30} parent=0 // pred_check_branch
    %416 = sbr.rel (0) target = $region21
  $region20: #{unet_forward.30} parent=0 // pred_region
    _
  $region21: #{unet_forward.30} parent=0 // pred_fallthru
    _
  // Predicated region
  $region22: #{unet_forward.30} parent=0 // pred_check
    _
  $region23: #{unet_forward.30} parent=0 // pred_check_branch
    %418 = sbr.rel (0) target = $region25
  $region24: #{unet_forward.30} parent=0 // pred_region
    _
  $region25: #{unet_forward.30} parent=0 // pred_fallthru
    _

// kernel: unet_forward.32
$region0: #{unet_forward.32}
  #allocation0 [shape = 'u32[]', space=smem, size = 0x4, offset = 0x4, fixed_abs, tag = 'smem constant byte address 0x4 - core index']
  #allocation1 [shape = 'u32[144,128]{1,0:T(1,128)}', space=vmem, size = 0x12000, scoped, tag = 'internal scratch']
  %s0 = inlined_call_operand.vmem [shape: f32[4,32,16], index: 0, kind: input, shape index: {}]
  %s1 = inlined_call_operand.vmem [shape: f32[32,16], index: 1, kind: output, shape index: {}]
  %s2 = sld [smem:[#allocation0]]
  $region14: #{unet_forward.32} parent=0
    _
  %s4 = ssub.s32 1, %s2
  %s5 = scalar_select 0, %s4, %s2
  // Predicated region
  $region2: #{unet_forward.32} parent=0 // pred_check
    _
  $region3: #{unet_forward.32} parent=0 // pred_check_branch
    %7 = sbr.rel (0) target = $region5
  $region4: #{unet_forward.32} parent=0 // pred_region
    _
  $region5: #{unet_forward.32} parent=0 // pred_fallthru
    _
  %v8 = vld [vmem:[%s0] sm:$0xff]
  %v9 = vld [vmem:[%s0 + $0x8] sm:$0xff]
  %v10 = vld [vmem:[%s0 + $0x10] sm:$0xff]
  %v11 = vld [vmem:[%s0 + $0x18] sm:$0xff]
  %s12 = scalar_lea.vmem %s0, 32
  %v13 = vld [vmem:[%s12] sm:$0xff]
  %v14 = vld [vmem:[%s12 + $0x8] sm:$0xff]
  %v15 = vld [vmem:[%s12 + $0x10] sm:$0xff]
  %v16 = vld [vmem:[%s12 + $0x18] sm:$0xff]
  %v17 = vmax.f32 %v8, %v13
  %v18 = vmax.f32 %v9, %v14
  %v19 = vmax.f32 %v10, %v15
  %v20 = vmax.f32 %v11, %v16
  %s21 = scalar_lea.vmem %s0, 64
  %v22 = vld [vmem:[%s21] sm:$0xff]
  %v23 = vld [vmem:[%s21 + $0x8] sm:$0xff]
  %v24 = vld [vmem:[%s21 + $0x10] sm:$0xff]
  %v25 = vld [vmem:[%s21 + $0x18] sm:$0xff]
  %s26 = scalar_lea.vmem %s0, 96
  %v27 = vld [vmem:[%s26] sm:$0xff]
  %v28 = vld [vmem:[%s26 + $0x8] sm:$0xff]
  %v29 = vld [vmem:[%s26 + $0x10] sm:$0xff]
  %v30 = vld [vmem:[%s26 + $0x18] sm:$0xff]
  %v31 = vmax.f32 %v22, %v27
  %v32 = vmax.f32 %v23, %v28
  %v33 = vmax.f32 %v24, %v29
  %v34 = vmax.f32 %v25, %v30
  %v35 = vmax.f32 %v17, %v31
  %v36 = vmax.f32 %v18, %v32
  %v37 = vmax.f32 %v19, %v33
  %v38 = vmax.f32 %v20, %v34
  %vm39 = vcmask 130048
  %40 = vst.msk [vmem:[%s1] sm:$0xff] %vm39, %v35
  %41 = vst.msk [vmem:[%s1 + $0x8] sm:$0xff] %vm39, %v36
  %42 = vst.msk [vmem:[%s1 + $0x10] sm:$0xff] %vm39, %v37
  %43 = vst.msk [vmem:[%s1 + $0x18] sm:$0xff] %vm39, %v38
  // Predicated region
  $region6: #{unet_forward.32} parent=0 // pred_check
    _
  $region7: #{unet_forward.32} parent=0 // pred_check_branch
    %45 = sbr.rel (0) target = $region9
  $region8: #{unet_forward.32} parent=0 // pred_region
    _
  $region9: #{unet_forward.32} parent=0 // pred_fallthru
    _
  // Predicated region
  $region10: #{unet_forward.32} parent=0 // pred_check
    _
  $region11: #{unet_forward.32} parent=0 // pred_check_branch
    %47 = sbr.rel (0) target = $region13
  $region12: #{unet_forward.32} parent=0 // pred_region
    _
  $region13: #{unet_forward.32} parent=0 // pred_fallthru
    _

// kernel: unet_forward.31
$region0: #{unet_forward.31}
  #allocation0 [shape = 'u32[]', space=smem, size = 0x4, offset = 0x4, fixed_abs, tag = 'smem constant byte address 0x4 - core index']
  #allocation1 [shape = 'u32[144,128]{1,0:T(1,128)}', space=vmem, size = 0x12000, scoped, tag = 'internal scratch']
  %s0 = inlined_call_operand.vmem [shape: bf16[128,144], index: 0, kind: input, shape index: {}]
  %s1 = inlined_call_operand.vmem [shape: bf16[144,16], index: 1, kind: input, shape index: {}]
  %s2 = inlined_call_operand.vmem [shape: f32[1,16], index: 2, kind: input, shape index: {}]
  %s3 = inlined_call_operand.vmem [shape: f32[1,16], index: 3, kind: input, shape index: {}]
  %s4 = inlined_call_operand.vmem [shape: f32[128,16], index: 4, kind: output, shape index: {}]
  %s5 = sld [smem:[#allocation0]]
  $region26: #{unet_forward.31} parent=0
    _
  %s7 = ssub.s32 1, %s5
  %s8 = scalar_select 0, %s7, %s5
  // Predicated region
  $region2: #{unet_forward.31} parent=0 // pred_check
    _
  $region3: #{unet_forward.31} parent=0 // pred_check_branch
    %10 = sbr.rel (0) target = $region5
  $region4: #{unet_forward.31} parent=0 // pred_region
    _
  $region5: #{unet_forward.31} parent=0 // pred_fallthru
    _
  // Predicated region
  $region6: #{unet_forward.31} parent=0 // pred_check
    _
  $region7: #{unet_forward.31} parent=0 // pred_check_branch
    %12 = sbr.rel (0) target = $region9
  $region8: #{unet_forward.31} parent=0 // pred_region
    _
  $region9: #{unet_forward.31} parent=0 // pred_fallthru
    _
  // Predicated region
  $region10: #{unet_forward.31} parent=0 // pred_check
    _
  $region11: #{unet_forward.31} parent=0 // pred_check_branch
    %14 = sbr.rel (0) target = $region13
  $region12: #{unet_forward.31} parent=0 // pred_region
    _
  $region13: #{unet_forward.31} parent=0 // pred_fallthru
    _
  // Predicated region
  $region14: #{unet_forward.31} parent=0 // pred_check
    _
  $region15: #{unet_forward.31} parent=0 // pred_check_branch
    %16 = sbr.rel (0) target = $region17
  $region16: #{unet_forward.31} parent=0 // pred_region
    _
  $region17: #{unet_forward.31} parent=0 // pred_fallthru
    _
  %v18 = vld [vmem:[%s0] sm:$0xff]
  %v19 = vld [vmem:[%s0 + $0x8] sm:$0xff]
  %v20 = vld [vmem:[%s0 + $0x10] sm:$0xff]
  %v21 = vld [vmem:[%s0 + $0x18] sm:$0xff]
  %v22 = vld [vmem:[%s0 + $0x20] sm:$0xff]
  %v23 = vld [vmem:[%s0 + $0x28] sm:$0xff]
  %v24 = vld [vmem:[%s0 + $0x30] sm:$0xff]
  %v25 = vld [vmem:[%s0 + $0x38] sm:$0xff]
  %v26 = vld [vmem:[%s0 + $0x40] sm:$0xff]
  %v27 = vld [vmem:[%s0 + $0x48] sm:$0xff]
  %v28 = vld [vmem:[%s0 + $0x50] sm:$0xff]
  %v29 = vld [vmem:[%s0 + $0x58] sm:$0xff]
  %v30 = vld [vmem:[%s0 + $0x60] sm:$0xff]
  %v31 = vld [vmem:[%s0 + $0x68] sm:$0xff]
  %v32 = vld [vmem:[%s0 + $0x70] sm:$0xff]
  %v33 = vld [vmem:[%s0 + $0x78] sm:$0xff]
  %v34 = vld [vmem:[%s1] sm:$0xf]
  %v35 = vld [vmem:[%s1 + $0x4] sm:$0xf]
  %v36 = vld [vmem:[%s1 + $0x8] sm:$0xf]
  %v37 = vld [vmem:[%s1 + $0xc] sm:$0xf]
  %v38 = vld [vmem:[%s1 + $0x10] sm:$0xf]
  %v39 = vld [vmem:[%s1 + $0x14] sm:$0xf]
  %v40 = vld [vmem:[%s1 + $0x18] sm:$0xf]
  %v41 = vld [vmem:[%s1 + $0x1c] sm:$0xf]
  %v42 = vld [vmem:[%s1 + $0x20] sm:$0xf]
  %v43 = vld [vmem:[%s1 + $0x24] sm:$0xf]
  %v44 = vld [vmem:[%s1 + $0x28] sm:$0xf]
  %v45 = vld [vmem:[%s1 + $0x2c] sm:$0xf]
  %v46 = vld [vmem:[%s1 + $0x30] sm:$0xf]
  %v47 = vld [vmem:[%s1 + $0x34] sm:$0xf]
  %v48 = vld [vmem:[%s1 + $0x38] sm:$0xf]
  %v49 = vld [vmem:[%s1 + $0x3c] sm:$0xf]
  %v50 = vld [vmem:[%s1 + $0x40] sm:$0xf]
  %v51 = vld [vmem:[%s1 + $0x44] sm:$0xf]
  %v68 = vunpack.c.l.b16 %v18
  %v69 = vunpack.c.h.b16 %v18
  %v70 = vunpack.c.l.b16 %v19
  %v71 = vunpack.c.h.b16 %v19
  %v72 = vunpack.c.l.b16 %v20
  %v73 = vunpack.c.h.b16 %v20
  %v74 = vunpack.c.l.b16 %v21
  %v75 = vunpack.c.h.b16 %v21
  %v76 = vunpack.c.l.b16 %v22
  %v77 = vunpack.c.h.b16 %v22
  %v78 = vunpack.c.l.b16 %v23
  %v79 = vunpack.c.h.b16 %v23
  %v80 = vunpack.c.l.b16 %v24
  %v81 = vunpack.c.h.b16 %v24
  %v82 = vunpack.c.l.b16 %v25
  %v83 = vunpack.c.h.b16 %v25
  %v84 = vunpack.c.l.b16 %v26
  %v85 = vunpack.c.h.b16 %v26
  %v86 = vunpack.c.l.b16 %v27
  %v87 = vunpack.c.h.b16 %v27
  %v88 = vunpack.c.l.b16 %v28
  %v89 = vunpack.c.h.b16 %v28
  %v90 = vunpack.c.l.b16 %v29
  %v91 = vunpack.c.h.b16 %v29
  %v92 = vunpack.c.l.b16 %v30
  %v93 = vunpack.c.h.b16 %v30
  %v94 = vunpack.c.l.b16 %v31
  %v95 = vunpack.c.h.b16 %v31
  %v96 = vunpack.c.l.b16 %v32
  %v97 = vunpack.c.h.b16 %v32
  %v98 = vunpack.c.l.b16 %v33
  %v99 = vunpack.c.h.b16 %v33
  %v100 = vpack.c.b16 %v70, %v68
  %v101 = vpack.c.b16 %v71, %v69
  %v102 = vpack.c.b16 %v74, %v72
  %v103 = vpack.c.b16 %v75, %v73
  %v104 = vpack.c.b16 %v78, %v76
  %v105 = vpack.c.b16 %v79, %v77
  %v106 = vpack.c.b16 %v82, %v80
  %v107 = vpack.c.b16 %v83, %v81
  %v108 = vpack.c.b16 %v86, %v84
  %v109 = vpack.c.b16 %v87, %v85
  %v110 = vpack.c.b16 %v90, %v88
  %v111 = vpack.c.b16 %v91, %v89
  %v112 = vpack.c.b16 %v94, %v92
  %v113 = vpack.c.b16 %v95, %v93
  %v114 = vpack.c.b16 %v98, %v96
  %v115 = vpack.c.b16 %v99, %v97
  %v142 = vunpack.c.l.b16 %v34
  %v143 = vunpack.c.l.b16 %v35
  %v144 = vunpack.c.l.b16 %v36
  %v145 = vunpack.c.l.b16 %v37
  %v146 = vunpack.c.l.b16 %v38
  %v147 = vunpack.c.l.b16 %v39
  %v148 = vunpack.c.l.b16 %v40
  %v149 = vunpack.c.l.b16 %v41
  %v150 = vunpack.c.l.b16 %v42
  %v151 = vunpack.c.l.b16 %v43
  %v152 = vunpack.c.l.b16 %v44
  %v153 = vunpack.c.l.b16 %v45
  %v154 = vunpack.c.l.b16 %v46
  %v155 = vunpack.c.l.b16 %v47
  %v156 = vunpack.c.l.b16 %v48
  %v157 = vunpack.c.l.b16 %v49
  %v158 = vunpack.c.l.b16 %v50
  %v159 = vunpack.c.l.b16 %v51
  %v160 = vpack.c.b16 %v143, %v142
  %v161 = vpack.c.b16 %v145, %v144
  %v162 = vpack.c.b16 %v147, %v146
  %v163 = vpack.c.b16 %v149, %v148
  %v164 = vpack.c.b16 %v151, %v150
  %v165 = vpack.c.b16 %v153, %v152
  %v166 = vpack.c.b16 %v155, %v154
  %v167 = vpack.c.b16 %v157, %v156
  %v168 = vpack.c.b16 %v159, %v158
  %vm178 = vcmask 130048
  %v180 = vsel %vm178, %v101, 0
  %v183 = vsel %vm178, %v103, 0
  %v186 = vsel %vm178, %v105, 0
  %v189 = vsel %vm178, %v107, 0
  %v192 = vsel %vm178, %v109, 0
  %v195 = vsel %vm178, %v111, 0
  %v198 = vsel %vm178, %v113, 0
  %v201 = vsel %vm178, %v115, 0
  %203 = vmatprep.subr.bf16.mxu0 0
  %204 = vmatpush1.bf16.msra.mxu0 %v160
  %205 = vmatprep.subr.bf16.mxu0 0
  %206 = vmatpush1.bf16.msra.mxu0 %v161
  %207 = vmatprep.subr.bf16.mxu0 0
  %208 = vmatpush1.bf16.msra.mxu0 %v162
  %209 = vmatprep.subr.bf16.mxu0 0
  %210 = vmatpush1.bf16.msra.mxu0 %v163
  %211 = vmatprep.subr.bf16.mxu0 0
  %212 = vmatpush1.bf16.msra.mxu0 %v164
  %213 = vmatprep.subr.bf16.mxu0 0
  %214 = vmatpush1.bf16.msra.mxu0 %v165
  %215 = vmatprep.subr.bf16.mxu0 0
  %216 = vmatpush1.bf16.msra.mxu0 %v166
  %217 = vmatprep.subr.bf16.mxu0 0
  %218 = vmatpush1.bf16.msra.mxu0 %v167
  %219 = vmatprep.subr.bf16.mxu0 0
  %220 = vmatpush1.bf16.msra.mxu0 %v168
  %221 = vmatprep.subr.bf16.mxu0 0
  %222 = vmatpush1.bf16.msra.mxu0 0
  %223 = vmatprep.subr.bf16.mxu0 0
  %224 = vmatpush1.bf16.msra.mxu0 0
  %225 = vmatprep.subr.bf16.mxu0 0
  %226 = vmatpush1.bf16.msra.mxu0 0
  %227 = vmatprep.subr.bf16.mxu0 0
  %228 = vmatpush1.bf16.msra.mxu0 0
  %229 = vmatprep.subr.bf16.mxu0 0
  %230 = vmatpush1.bf16.msra.mxu0 0
  %231 = vmatprep.subr.bf16.mxu0 0
  %232 = vmatpush1.bf16.msra.mxu0 0
  %233 = vmatprep.subr.bf16.mxu0 0
  %234 = vmatpush1.bf16.msra.mxu0 0
  %235 = vmatprep.mubr.bf16.mxu0 %v180
  %236 = vmatmul.mubr.bf16.gmra.mrb[0].mxu0 %v100
  %v237 = vpop.f32.mrb[0].mxu0
  %v238 = vadd.f32 0.0, %v237
  %v239 = vpop.f32.mrb[0].mxu0
  %v240 = vpop.f32.mrb[0].mxu0
  %v241 = vadd.f32 0.0, %v240
  %v242 = vpop.f32.mrb[0].mxu0
  %243 = vmatprep.mubr.bf16.mxu0 %v183
  %244 = vmatmul.mubr.bf16.gmra.mrb[0].mxu0 %v102
  %v245 = vpop.f32.mrb[0].mxu0
  %v246 = vadd.f32 0.0, %v245
  %v247 = vpop.f32.mrb[0].mxu0
  %v248 = vpop.f32.mrb[0].mxu0
  %v249 = vadd.f32 0.0, %v248
  %v250 = vpop.f32.mrb[0].mxu0
  %251 = vmatprep.mubr.bf16.mxu0 %v186
  %252 = vmatmul.mubr.bf16.gmra.mrb[0].mxu0 %v104
  %v253 = vpop.f32.mrb[0].mxu0
  %v254 = vadd.f32 0.0, %v253
  %v255 = vpop.f32.mrb[0].mxu0
  %v256 = vpop.f32.mrb[0].mxu0
  %v257 = vadd.f32 0.0, %v256
  %v258 = vpop.f32.mrb[0].mxu0
  %259 = vmatprep.mubr.bf16.mxu0 %v189
  %260 = vmatmul.mubr.bf16.gmra.mrb[0].mxu0 %v106
  %v261 = vpop.f32.mrb[0].mxu0
  %v262 = vadd.f32 0.0, %v261
  %v263 = vpop.f32.mrb[0].mxu0
  %v264 = vpop.f32.mrb[0].mxu0
  %v265 = vadd.f32 0.0, %v264
  %v266 = vpop.f32.mrb[0].mxu0
  %267 = vmatprep.mubr.bf16.mxu0 %v192
  %268 = vmatmul.mubr.bf16.gmra.mrb[0].mxu0 %v108
  %v269 = vpop.f32.mrb[0].mxu0
  %v270 = vadd.f32 0.0, %v269
  %v271 = vpop.f32.mrb[0].mxu0
  %v272 = vpop.f32.mrb[0].mxu0
  %v273 = vadd.f32 0.0, %v272
  %v274 = vpop.f32.mrb[0].mxu0
  %275 = vmatprep.mubr.bf16.mxu0 %v195
  %276 = vmatmul.mubr.bf16.gmra.mrb[0].mxu0 %v110
  %v277 = vpop.f32.mrb[0].mxu0
  %v278 = vadd.f32 0.0, %v277
  %v279 = vpop.f32.mrb[0].mxu0
  %v280 = vpop.f32.mrb[0].mxu0
  %v281 = vadd.f32 0.0, %v280
  %v282 = vpop.f32.mrb[0].mxu0
  %283 = vmatprep.mubr.bf16.mxu0 %v198
  %284 = vmatmul.mubr.bf16.gmra.mrb[0].mxu0 %v112
  %v285 = vpop.f32.mrb[0].mxu0
  %v286 = vadd.f32 0.0, %v285
  %v287 = vpop.f32.mrb[0].mxu0
  %v288 = vpop.f32.mrb[0].mxu0
  %v289 = vadd.f32 0.0, %v288
  %v290 = vpop.f32.mrb[0].mxu0
  %291 = vmatprep.mubr.bf16.mxu0 %v201
  %292 = vmatmul.mubr.bf16.gmra.mrb[0].mxu0 %v114
  %v293 = vpop.f32.mrb[0].mxu0
  %v294 = vadd.f32 0.0, %v293
  %v295 = vpop.f32.mrb[0].mxu0
  %v296 = vpop.f32.mrb[0].mxu0
  %v297 = vadd.f32 0.0, %v296
  %v298 = vpop.f32.mrb[0].mxu0
  %299 = vdwg.mxu0
  %v300 = vsel %vm178, %v238, 0.0
  %v301 = vsel %vm178, %v241, 0.0
  %v302 = vadd.f32 %v300, %v301
  %v303 = vsel %vm178, %v246, 0.0
  %v304 = vadd.f32 %v302, %v303
  %v305 = vsel %vm178, %v249, 0.0
  %v306 = vadd.f32 %v304, %v305
  %v307 = vsel %vm178, %v254, 0.0
  %v308 = vadd.f32 %v306, %v307
  %v309 = vsel %vm178, %v257, 0.0
  %v310 = vadd.f32 %v308, %v309
  %v311 = vsel %vm178, %v262, 0.0
  %v312 = vadd.f32 %v310, %v311
  %v313 = vsel %vm178, %v265, 0.0
  %v314 = vadd.f32 %v312, %v313
  %v315 = vsel %vm178, %v270, 0.0
  %v316 = vadd.f32 %v314, %v315
  %v317 = vsel %vm178, %v273, 0.0
  %v318 = vadd.f32 %v316, %v317
  %v319 = vsel %vm178, %v278, 0.0
  %v320 = vadd.f32 %v318, %v319
  %v321 = vsel %vm178, %v281, 0.0
  %v322 = vadd.f32 %v320, %v321
  %v323 = vsel %vm178, %v286, 0.0
  %v324 = vadd.f32 %v322, %v323
  %v325 = vsel %vm178, %v289, 0.0
  %v326 = vadd.f32 %v324, %v325
  %v327 = vsel %vm178, %v294, 0.0
  %v328 = vadd.f32 %v326, %v327
  %v329 = vsel %vm178, %v297, 0.0
  %v330 = vadd.f32 %v328, %v329
  %v331 = vrot.slane %v330, 4
  %v332 = vadd.f32 %v330, %v331
  %v333 = vrot.slane %v332, 2
  %v334 = vadd.f32 %v332, %v333
  %v335 = vrot.slane %v334, 1
  %v336 = vadd.f32 %v334, %v335
  %v337 = vmul.f32 %v336, 0.0078125
  %v338 = vmul.f32 %v238, %v238
  %v339 = vmul.f32 %v241, %v241
  %v340 = vmul.f32 %v246, %v246
  %v341 = vmul.f32 %v249, %v249
  %v342 = vmul.f32 %v254, %v254
  %v343 = vmul.f32 %v257, %v257
  %v344 = vmul.f32 %v262, %v262
  %v345 = vmul.f32 %v265, %v265
  %v346 = vmul.f32 %v270, %v270
  %v347 = vmul.f32 %v273, %v273
  %v348 = vmul.f32 %v278, %v278
  %v349 = vmul.f32 %v281, %v281
  %v350 = vmul.f32 %v286, %v286
  %v351 = vmul.f32 %v289, %v289
  %v352 = vmul.f32 %v294, %v294
  %v353 = vmul.f32 %v297, %v297
  %v354 = vsel %vm178, %v338, 0.0
  %v355 = vsel %vm178, %v339, 0.0
  %v356 = vadd.f32 %v354, %v355
  %v357 = vsel %vm178, %v340, 0.0
  %v358 = vadd.f32 %v356, %v357
  %v359 = vsel %vm178, %v341, 0.0
  %v360 = vadd.f32 %v358, %v359
  %v361 = vsel %vm178, %v342, 0.0
  %v362 = vadd.f32 %v360, %v361
  %v363 = vsel %vm178, %v343, 0.0
  %v364 = vadd.f32 %v362, %v363
  %v365 = vsel %vm178, %v344, 0.0
  %v366 = vadd.f32 %v364, %v365
  %v367 = vsel %vm178, %v345, 0.0
  %v368 = vadd.f32 %v366, %v367
  %v369 = vsel %vm178, %v346, 0.0
  %v370 = vadd.f32 %v368, %v369
  %v371 = vsel %vm178, %v347, 0.0
  %v372 = vadd.f32 %v370, %v371
  %v373 = vsel %vm178, %v348, 0.0
  %v374 = vadd.f32 %v372, %v373
  %v375 = vsel %vm178, %v349, 0.0
  %v376 = vadd.f32 %v374, %v375
  %v377 = vsel %vm178, %v350, 0.0
  %v378 = vadd.f32 %v376, %v377
  %v379 = vsel %vm178, %v351, 0.0
  %v380 = vadd.f32 %v378, %v379
  %v381 = vsel %vm178, %v352, 0.0
  %v382 = vadd.f32 %v380, %v381
  %v383 = vsel %vm178, %v353, 0.0
  %v384 = vadd.f32 %v382, %v383
  %v385 = vrot.slane %v384, 4
  %v386 = vadd.f32 %v384, %v385
  %v387 = vrot.slane %v386, 2
  %v388 = vadd.f32 %v386, %v387
  %v389 = vrot.slane %v388, 1
  %v390 = vadd.f32 %v388, %v389
  %v391 = vmul.f32 %v390, 0.0078125
  %v392 = vmul.f32 %v337, %v337
  %v393 = vsub.f32 %v391, %v392
  %v394 = vmax.f32 %v393, 0.0
  %v395 = vld [vmem:[%s2] sm:$0x1]
  %v396 = vadd.f32 %v394, 1e-05
  %v397 = vrsqrt.pop %v396
  %v398 = vmul.f32 %v395, %v397
  %v399 = vld [vmem:[%s3] sm:$0x1]
  %v400 = vmul.f32 %v337, %v398
  %v401 = vsub.f32 %v399, %v400
  %v403 = vlaneseq
  %v404 = vshrl.u32 %v403, 7
  %v405 = vsub.s32 0, %v404
  %v406 = vrot.slane %v398, %v405
  %v408 = vmul.f32 %v238, %v406
  %v409 = vmul.f32 %v241, %v406
  %v410 = vmul.f32 %v246, %v406
  %v411 = vmul.f32 %v249, %v406
  %v412 = vmul.f32 %v254, %v406
  %v413 = vmul.f32 %v257, %v406
  %v414 = vmul.f32 %v262, %v406
  %v415 = vmul.f32 %v265, %v406
  %v416 = vmul.f32 %v270, %v406
  %v417 = vmul.f32 %v273, %v406
  %v418 = vmul.f32 %v278, %v406
  %v419 = vmul.f32 %v281, %v406
  %v420 = vmul.f32 %v286, %v406
  %v421 = vmul.f32 %v289, %v406
  %v422 = vmul.f32 %v294, %v406
  %v423 = vmul.f32 %v297, %v406
  %v425 = vlaneseq
  %v426 = vshrl.u32 %v425, 7
  %v427 = vsub.s32 0, %v426
  %v428 = vrot.slane %v401, %v427
  %v430 = vadd.f32 %v408, %v428
  %v431 = vadd.f32 %v409, %v428
  %v432 = vadd.f32 %v410, %v428
  %v433 = vadd.f32 %v411, %v428
  %v434 = vadd.f32 %v412, %v428
  %v435 = vadd.f32 %v413, %v428
  %v436 = vadd.f32 %v414, %v428
  %v437 = vadd.f32 %v415, %v428
  %v438 = vadd.f32 %v416, %v428
  %v439 = vadd.f32 %v417, %v428
  %v440 = vadd.f32 %v418, %v428
  %v441 = vadd.f32 %v419, %v428
  %v442 = vadd.f32 %v420, %v428
  %v443 = vadd.f32 %v421, %v428
  %v444 = vadd.f32 %v422, %v428
  %v445 = vadd.f32 %v423, %v428
  %v446 = vmax.f32 %v430, 0.0
  %v447 = vmax.f32 %v431, 0.0
  %v448 = vmax.f32 %v432, 0.0
  %v449 = vmax.f32 %v433, 0.0
  %v450 = vmax.f32 %v434, 0.0
  %v451 = vmax.f32 %v435, 0.0
  %v452 = vmax.f32 %v436, 0.0
  %v453 = vmax.f32 %v437, 0.0
  %v454 = vmax.f32 %v438, 0.0
  %v455 = vmax.f32 %v439, 0.0
  %v456 = vmax.f32 %v440, 0.0
  %v457 = vmax.f32 %v441, 0.0
  %v458 = vmax.f32 %v442, 0.0
  %v459 = vmax.f32 %v443, 0.0
  %v460 = vmax.f32 %v444, 0.0
  %v461 = vmax.f32 %v445, 0.0
  %462 = vst.msk [vmem:[%s4] sm:$0xff] %vm178, %v446
  %463 = vst.msk [vmem:[%s4 + $0x8] sm:$0xff] %vm178, %v447
  %464 = vst.msk [vmem:[%s4 + $0x10] sm:$0xff] %vm178, %v448
  %465 = vst.msk [vmem:[%s4 + $0x18] sm:$0xff] %vm178, %v449
  %466 = vst.msk [vmem:[%s4 + $0x20] sm:$0xff] %vm178, %v450
  %467 = vst.msk [vmem:[%s4 + $0x28] sm:$0xff] %vm178, %v451
  %468 = vst.msk [vmem:[%s4 + $0x30] sm:$0xff] %vm178, %v452
  %469 = vst.msk [vmem:[%s4 + $0x38] sm:$0xff] %vm178, %v453
  %470 = vst.msk [vmem:[%s4 + $0x40] sm:$0xff] %vm178, %v454
  %471 = vst.msk [vmem:[%s4 + $0x48] sm:$0xff] %vm178, %v455
  %472 = vst.msk [vmem:[%s4 + $0x50] sm:$0xff] %vm178, %v456
  %473 = vst.msk [vmem:[%s4 + $0x58] sm:$0xff] %vm178, %v457
  %474 = vst.msk [vmem:[%s4 + $0x60] sm:$0xff] %vm178, %v458
  %475 = vst.msk [vmem:[%s4 + $0x68] sm:$0xff] %vm178, %v459
  %476 = vst.msk [vmem:[%s4 + $0x70] sm:$0xff] %vm178, %v460
  %477 = vst.msk [vmem:[%s4 + $0x78] sm:$0xff] %vm178, %v461
  // Predicated region
  $region18: #{unet_forward.31} parent=0 // pred_check
    _
  $region19: #{unet_forward.31} parent=0 // pred_check_branch
    %479 = sbr.rel (0) target = $region21
  $region20: #{unet_forward.31} parent=0 // pred_region
    _
  $region21: #{unet_forward.31} parent=0 // pred_fallthru
    _
  // Predicated region
  $region22: #{unet_forward.31} parent=0 // pred_check
    _
  $region23: #{unet_forward.31} parent=0 // pred_check_branch
    %481 = sbr.rel (0) target = $region25
  $region24: #{unet_forward.31} parent=0 // pred_region
    _
  $region25: #{unet_forward.31} parent=0 // pred_fallthru
    _

// kernel: unet_forward.33
$region0: #{unet_forward.33}
  #allocation0 [shape = 'u32[]', space=smem, size = 0x4, offset = 0x4, fixed_abs, tag = 'smem constant byte address 0x4 - core index']
  #allocation1 [shape = 'u32[144,128]{1,0:T(1,128)}', space=vmem, size = 0x12000, scoped, tag = 'internal scratch']
  %s0 = inlined_call_operand.vmem [shape: bf16[32,144], index: 0, kind: input, shape index: {}]
  %s1 = inlined_call_operand.vmem [shape: bf16[144,32], index: 1, kind: input, shape index: {}]
  %s2 = inlined_call_operand.vmem [shape: f32[1,32], index: 2, kind: input, shape index: {}]
  %s3 = inlined_call_operand.vmem [shape: f32[1,32], index: 3, kind: input, shape index: {}]
  %s4 = inlined_call_operand.vmem [shape: f32[32,32], index: 4, kind: output, shape index: {}]
  %s5 = sld [smem:[#allocation0]]
  $region26: #{unet_forward.33} parent=0
    _
  %s7 = ssub.s32 1, %s5
  %s8 = scalar_select 0, %s7, %s5
  // Predicated region
  $region2: #{unet_forward.33} parent=0 // pred_check
    _
  $region3: #{unet_forward.33} parent=0 // pred_check_branch
    %10 = sbr.rel (0) target = $region5
  $region4: #{unet_forward.33} parent=0 // pred_region
    _
  $region5: #{unet_forward.33} parent=0 // pred_fallthru
    _
  // Predicated region
  $region6: #{unet_forward.33} parent=0 // pred_check
    _
  $region7: #{unet_forward.33} parent=0 // pred_check_branch
    %12 = sbr.rel (0) target = $region9
  $region8: #{unet_forward.33} parent=0 // pred_region
    _
  $region9: #{unet_forward.33} parent=0 // pred_fallthru
    _
  // Predicated region
  $region10: #{unet_forward.33} parent=0 // pred_check
    _
  $region11: #{unet_forward.33} parent=0 // pred_check_branch
    %14 = sbr.rel (0) target = $region13
  $region12: #{unet_forward.33} parent=0 // pred_region
    _
  $region13: #{unet_forward.33} parent=0 // pred_fallthru
    _
  // Predicated region
  $region14: #{unet_forward.33} parent=0 // pred_check
    _
  $region15: #{unet_forward.33} parent=0 // pred_check_branch
    %16 = sbr.rel (0) target = $region17
  $region16: #{unet_forward.33} parent=0 // pred_region
    _
  $region17: #{unet_forward.33} parent=0 // pred_fallthru
    _
  %v18 = vld [vmem:[%s0] sm:$0xff]
  %v19 = vld [vmem:[%s0 + $0x8] sm:$0xff]
  %v20 = vld [vmem:[%s0 + $0x10] sm:$0xff]
  %v21 = vld [vmem:[%s0 + $0x18] sm:$0xff]
  %v22 = vld [vmem:[%s1] sm:$0xf]
  %v23 = vld [vmem:[%s1 + $0x4] sm:$0xf]
  %v24 = vld [vmem:[%s1 + $0x8] sm:$0xf]
  %v25 = vld [vmem:[%s1 + $0xc] sm:$0xf]
  %v26 = vld [vmem:[%s1 + $0x10] sm:$0xf]
  %v27 = vld [vmem:[%s1 + $0x14] sm:$0xf]
  %v28 = vld [vmem:[%s1 + $0x18] sm:$0xf]
  %v29 = vld [vmem:[%s1 + $0x1c] sm:$0xf]
  %v30 = vld [vmem:[%s1 + $0x20] sm:$0xf]
  %v31 = vld [vmem:[%s1 + $0x24] sm:$0xf]
  %v32 = vld [vmem:[%s1 + $0x28] sm:$0xf]
  %v33 = vld [vmem:[%s1 + $0x2c] sm:$0xf]
  %v34 = vld [vmem:[%s1 + $0x30] sm:$0xf]
  %v35 = vld [vmem:[%s1 + $0x34] sm:$0xf]
  %v36 = vld [vmem:[%s1 + $0x38] sm:$0xf]
  %v37 = vld [vmem:[%s1 + $0x3c] sm:$0xf]
  %v38 = vld [vmem:[%s1 + $0x40] sm:$0xf]
  %v39 = vld [vmem:[%s1 + $0x44] sm:$0xf]
  %v44 = vunpack.c.l.b16 %v18
  %v45 = vunpack.c.h.b16 %v18
  %v46 = vunpack.c.l.b16 %v19
  %v47 = vunpack.c.h.b16 %v19
  %v48 = vunpack.c.l.b16 %v20
  %v49 = vunpack.c.h.b16 %v20
  %v50 = vunpack.c.l.b16 %v21
  %v51 = vunpack.c.h.b16 %v21
  %v52 = vpack.c.b16 %v46, %v44
  %v53 = vpack.c.b16 %v47, %v45
  %v54 = vpack.c.b16 %v50, %v48
  %v55 = vpack.c.b16 %v51, %v49
  %v76 = vunpack.c.l.b16 %v22
  %v77 = vunpack.c.l.b16 %v23
  %v78 = vunpack.c.l.b16 %v24
  %v79 = vunpack.c.l.b16 %v25
  %v80 = vunpack.c.l.b16 %v26
  %v81 = vunpack.c.l.b16 %v27
  %v82 = vunpack.c.l.b16 %v28
  %v83 = vunpack.c.l.b16 %v29
  %v84 = vunpack.c.l.b16 %v30
  %v85 = vunpack.c.l.b16 %v31
  %v86 = vunpack.c.l.b16 %v32
  %v87 = vunpack.c.l.b16 %v33
  %v88 = vunpack.c.l.b16 %v34
  %v89 = vunpack.c.l.b16 %v35
  %v90 = vunpack.c.l.b16 %v36
  %v91 = vunpack.c.l.b16 %v37
  %v92 = vunpack.c.l.b16 %v38
  %v93 = vunpack.c.l.b16 %v39
  %v94 = vpack.c.b16 %v77, %v76
  %v95 = vpack.c.b16 %v79, %v78
  %v96 = vpack.c.b16 %v81, %v80
  %v97 = vpack.c.b16 %v83, %v82
  %v98 = vpack.c.b16 %v85, %v84
  %v99 = vpack.c.b16 %v87, %v86
  %v100 = vpack.c.b16 %v89, %v88
  %v101 = vpack.c.b16 %v91, %v90
  %v102 = vpack.c.b16 %v93, %v92
  %vm112 = vcmask 130048
  %v114 = vsel %vm112, %v53, 0
  %v117 = vsel %vm112, %v55, 0
  %119 = vmatprep.subr.bf16.mxu0 0
  %120 = vmatpush1.bf16.msra.mxu0 %v94
  %121 = vmatprep.subr.bf16.mxu0 0
  %122 = vmatpush1.bf16.msra.mxu0 %v95
  %123 = vmatprep.subr.bf16.mxu0 0
  %124 = vmatpush1.bf16.msra.mxu0 %v96
  %125 = vmatprep.subr.bf16.mxu0 0
  %126 = vmatpush1.bf16.msra.mxu0 %v97
  %127 = vmatprep.subr.bf16.mxu0 0
  %128 = vmatpush1.bf16.msra.mxu0 %v98
  %129 = vmatprep.subr.bf16.mxu0 0
  %130 = vmatpush1.bf16.msra.mxu0 %v99
  %131 = vmatprep.subr.bf16.mxu0 0
  %132 = vmatpush1.bf16.msra.mxu0 %v100
  %133 = vmatprep.subr.bf16.mxu0 0
  %134 = vmatpush1.bf16.msra.mxu0 %v101
  %135 = vmatprep.subr.bf16.mxu0 0
  %136 = vmatpush1.bf16.msra.mxu0 %v102
  %137 = vmatprep.subr.bf16.mxu0 0
  %138 = vmatpush1.bf16.msra.mxu0 0
  %139 = vmatprep.subr.bf16.mxu0 0
  %140 = vmatpush1.bf16.msra.mxu0 0
  %141 = vmatprep.subr.bf16.mxu0 0
  %142 = vmatpush1.bf16.msra.mxu0 0
  %143 = vmatprep.subr.bf16.mxu0 0
  %144 = vmatpush1.bf16.msra.mxu0 0
  %145 = vmatprep.subr.bf16.mxu0 0
  %146 = vmatpush1.bf16.msra.mxu0 0
  %147 = vmatprep.subr.bf16.mxu0 0
  %148 = vmatpush1.bf16.msra.mxu0 0
  %149 = vmatprep.subr.bf16.mxu0 0
  %150 = vmatpush1.bf16.msra.mxu0 0
  %151 = vmatprep.mubr.bf16.mxu0 %v114
  %152 = vmatmul.mubr.bf16.gmra.mrb[0].mxu0 %v52
  %v153 = vpop.f32.mrb[0].mxu0
  %v154 = vadd.f32 0.0, %v153
  %v155 = vpop.f32.mrb[0].mxu0
  %v156 = vpop.f32.mrb[0].mxu0
  %v157 = vadd.f32 0.0, %v156
  %v158 = vpop.f32.mrb[0].mxu0
  %159 = vmatprep.mubr.bf16.mxu0 %v117
  %160 = vmatmul.mubr.bf16.gmra.mrb[0].mxu0 %v54
  %v161 = vpop.f32.mrb[0].mxu0
  %v162 = vadd.f32 0.0, %v161
  %v163 = vpop.f32.mrb[0].mxu0
  %v164 = vpop.f32.mrb[0].mxu0
  %v165 = vadd.f32 0.0, %v164
  %v166 = vpop.f32.mrb[0].mxu0
  %167 = vdwg.mxu0
  %vm168 = vcmask 261120
  %v169 = vsel %vm168, %v154, 0.0
  %v170 = vsel %vm168, %v157, 0.0
  %v171 = vadd.f32 %v169, %v170
  %v172 = vsel %vm168, %v162, 0.0
  %v173 = vadd.f32 %v171, %v172
  %v174 = vsel %vm168, %v165, 0.0
  %v175 = vadd.f32 %v173, %v174
  %v176 = vrot.slane %v175, 4
  %v177 = vadd.f32 %v175, %v176
  %v178 = vrot.slane %v177, 2
  %v179 = vadd.f32 %v177, %v178
  %v180 = vrot.slane %v179, 1
  %v181 = vadd.f32 %v179, %v180
  %v182 = vmul.f32 %v181, 0.03125
  %v183 = vmul.f32 %v154, %v154
  %v184 = vmul.f32 %v157, %v157
  %v185 = vmul.f32 %v162, %v162
  %v186 = vmul.f32 %v165, %v165
  %v187 = vsel %vm168, %v183, 0.0
  %v188 = vsel %vm168, %v184, 0.0
  %v189 = vadd.f32 %v187, %v188
  %v190 = vsel %vm168, %v185, 0.0
  %v191 = vadd.f32 %v189, %v190
  %v192 = vsel %vm168, %v186, 0.0
  %v193 = vadd.f32 %v191, %v192
  %v194 = vrot.slane %v193, 4
  %v195 = vadd.f32 %v193, %v194
  %v196 = vrot.slane %v195, 2
  %v197 = vadd.f32 %v195, %v196
  %v198 = vrot.slane %v197, 1
  %v199 = vadd.f32 %v197, %v198
  %v200 = vmul.f32 %v199, 0.03125
  %v201 = vmul.f32 %v182, %v182
  %v202 = vsub.f32 %v200, %v201
  %v203 = vmax.f32 %v202, 0.0
  %v204 = vld [vmem:[%s2] sm:$0x1]
  %v205 = vadd.f32 %v203, 1e-05
  %v206 = vrsqrt.pop %v205
  %v207 = vmul.f32 %v204, %v206
  %v208 = vld [vmem:[%s3] sm:$0x1]
  %v209 = vmul.f32 %v182, %v207
  %v210 = vsub.f32 %v208, %v209
  %v212 = vlaneseq
  %v213 = vshrl.u32 %v212, 7
  %v214 = vsub.s32 0, %v213
  %v215 = vrot.slane %v207, %v214
  %v217 = vmul.f32 %v154, %v215
  %v218 = vmul.f32 %v157, %v215
  %v219 = vmul.f32 %v162, %v215
  %v220 = vmul.f32 %v165, %v215
  %v222 = vlaneseq
  %v223 = vshrl.u32 %v222, 7
  %v224 = vsub.s32 0, %v223
  %v225 = vrot.slane %v210, %v224
  %v227 = vadd.f32 %v217, %v225
  %v228 = vadd.f32 %v218, %v225
  %v229 = vadd.f32 %v219, %v225
  %v230 = vadd.f32 %v220, %v225
  %v231 = vmax.f32 %v227, 0.0
  %v232 = vmax.f32 %v228, 0.0
  %v233 = vmax.f32 %v229, 0.0
  %v234 = vmax.f32 %v230, 0.0
  %235 = vst.msk [vmem:[%s4] sm:$0xff] %vm168, %v231
  %236 = vst.msk [vmem:[%s4 + $0x8] sm:$0xff] %vm168, %v232
  %237 = vst.msk [vmem:[%s4 + $0x10] sm:$0xff] %vm168, %v233
  %238 = vst.msk [vmem:[%s4 + $0x18] sm:$0xff] %vm168, %v234
  // Predicated region
  $region18: #{unet_forward.33} parent=0 // pred_check
    _
  $region19: #{unet_forward.33} parent=0 // pred_check_branch
    %240 = sbr.rel (0) target = $region21
  $region20: #{unet_forward.33} parent=0 // pred_region
    _
  $region21: #{unet_forward.33} parent=0 // pred_fallthru
    _
  // Predicated region
  $region22: #{unet_forward.33} parent=0 // pred_check
    _
  $region23: #{unet_forward.33} parent=0 // pred_check_branch
    %242 = sbr.rel (0) target = $region25
  $region24: #{unet_forward.33} parent=0 // pred_region
    _
  $region25: #{unet_forward.33} parent=0 // pred_fallthru
    _

// kernel: unet_forward.34
$region0: #{unet_forward.34}
  #allocation0 [shape = 'u32[]', space=smem, size = 0x4, offset = 0x4, fixed_abs, tag = 'smem constant byte address 0x4 - core index']
  #allocation1 [shape = 'u32[144,128]{1,0:T(1,128)}', space=vmem, size = 0x12000, scoped, tag = 'internal scratch']
  %s0 = inlined_call_operand.vmem [shape: bf16[32,288], index: 0, kind: input, shape index: {}]
  %s1 = inlined_call_operand.vmem [shape: bf16[288,32], index: 1, kind: input, shape index: {}]
  %s2 = inlined_call_operand.vmem [shape: f32[1,32], index: 2, kind: input, shape index: {}]
  %s3 = inlined_call_operand.vmem [shape: f32[1,32], index: 3, kind: input, shape index: {}]
  %s4 = inlined_call_operand.vmem [shape: f32[32,32], index: 4, kind: output, shape index: {}]
  %s5 = sld [smem:[#allocation0]]
  $region26: #{unet_forward.34} parent=0
    _
  %s7 = ssub.s32 1, %s5
  %s8 = scalar_select 0, %s7, %s5
  // Predicated region
  $region2: #{unet_forward.34} parent=0 // pred_check
    _
  $region3: #{unet_forward.34} parent=0 // pred_check_branch
    %10 = sbr.rel (0) target = $region5
  $region4: #{unet_forward.34} parent=0 // pred_region
    _
  $region5: #{unet_forward.34} parent=0 // pred_fallthru
    _
  // Predicated region
  $region6: #{unet_forward.34} parent=0 // pred_check
    _
  $region7: #{unet_forward.34} parent=0 // pred_check_branch
    %12 = sbr.rel (0) target = $region9
  $region8: #{unet_forward.34} parent=0 // pred_region
    _
  $region9: #{unet_forward.34} parent=0 // pred_fallthru
    _
  // Predicated region
  $region10: #{unet_forward.34} parent=0 // pred_check
    _
  $region11: #{unet_forward.34} parent=0 // pred_check_branch
    %14 = sbr.rel (0) target = $region13
  $region12: #{unet_forward.34} parent=0 // pred_region
    _
  $region13: #{unet_forward.34} parent=0 // pred_fallthru
    _
  // Predicated region
  $region14: #{unet_forward.34} parent=0 // pred_check
    _
  $region15: #{unet_forward.34} parent=0 // pred_check_branch
    %16 = sbr.rel (0) target = $region17
  $region16: #{unet_forward.34} parent=0 // pred_region
    _
  $region17: #{unet_forward.34} parent=0 // pred_fallthru
    _
  %v18 = vld [vmem:[%s0] sm:$0xff]
  %v19 = vld [vmem:[%s0 + $0x8] sm:$0xf]
  %v20 = vld [vmem:[%s0 + $0xc] sm:$0xff]
  %v21 = vld [vmem:[%s0 + $0x14] sm:$0xf]
  %v22 = vld [vmem:[%s0 + $0x18] sm:$0xff]
  %v23 = vld [vmem:[%s0 + $0x20] sm:$0xf]
  %v24 = vld [vmem:[%s0 + $0x24] sm:$0xff]
  %v25 = vld [vmem:[%s0 + $0x2c] sm:$0xf]
  %v26 = vld [vmem:[%s1] sm:$0xf]
  %v27 = vld [vmem:[%s1 + $0x4] sm:$0xf]
  %v28 = vld [vmem:[%s1 + $0x8] sm:$0xf]
  %v29 = vld [vmem:[%s1 + $0xc] sm:$0xf]
  %v30 = vld [vmem:[%s1 + $0x10] sm:$0xf]
  %v31 = vld [vmem:[%s1 + $0x14] sm:$0xf]
  %v32 = vld [vmem:[%s1 + $0x18] sm:$0xf]
  %v33 = vld [vmem:[%s1 + $0x1c] sm:$0xf]
  %v34 = vld [vmem:[%s1 + $0x20] sm:$0xf]
  %v35 = vld [vmem:[%s1 + $0x24] sm:$0xf]
  %v36 = vld [vmem:[%s1 + $0x28] sm:$0xf]
  %v37 = vld [vmem:[%s1 + $0x2c] sm:$0xf]
  %v38 = vld [vmem:[%s1 + $0x30] sm:$0xf]
  %v39 = vld [vmem:[%s1 + $0x34] sm:$0xf]
  %v40 = vld [vmem:[%s1 + $0x38] sm:$0xf]
  %v41 = vld [vmem:[%s1 + $0x3c] sm:$0xf]
  %v42 = vld [vmem:[%s1 + $0x40] sm:$0xf]
  %v43 = vld [vmem:[%s1 + $0x44] sm:$0xf]
  %v44 = vld [vmem:[%s1 + $0x48] sm:$0xf]
  %v45 = vld [vmem:[%s1 + $0x4c] sm:$0xf]
  %v46 = vld [vmem:[%s1 + $0x50] sm:$0xf]
  %v47 = vld [vmem:[%s1 + $0x54] sm:$0xf]
  %v48 = vld [vmem:[%s1 + $0x58] sm:$0xf]
  %v49 = vld [vmem:[%s1 + $0x5c] sm:$0xf]
  %v50 = vld [vmem:[%s1 + $0x60] sm:$0xf]
  %v51 = vld [vmem:[%s1 + $0x64] sm:$0xf]
  %v52 = vld [vmem:[%s1 + $0x68] sm:$0xf]
  %v53 = vld [vmem:[%s1 + $0x6c] sm:$0xf]
  %v54 = vld [vmem:[%s1 + $0x70] sm:$0xf]
  %v55 = vld [vmem:[%s1 + $0x74] sm:$0xf]
  %v56 = vld [vmem:[%s1 + $0x78] sm:$0xf]
  %v57 = vld [vmem:[%s1 + $0x7c] sm:$0xf]
  %v58 = vld [vmem:[%s1 + $0x80] sm:$0xf]
  %v59 = vld [vmem:[%s1 + $0x84] sm:$0xf]
  %v60 = vld [vmem:[%s1 + $0x88] sm:$0xf]
  %v61 = vld [vmem:[%s1 + $0x8c] sm:$0xf]
  %v70 = vunpack.c.l.b16 %v18
  %v71 = vunpack.c.h.b16 %v18
  %v72 = vunpack.c.l.b16 %v19
  %v73 = vunpack.c.l.b16 %v20
  %v74 = vunpack.c.h.b16 %v20
  %v75 = vunpack.c.l.b16 %v21
  %v76 = vunpack.c.l.b16 %v22
  %v77 = vunpack.c.h.b16 %v22
  %v78 = vunpack.c.l.b16 %v23
  %v79 = vunpack.c.l.b16 %v24
  %v80 = vunpack.c.h.b16 %v24
  %v81 = vunpack.c.l.b16 %v25
  %v82 = vpack.c.b16 %v73, %v70
  %v83 = vpack.c.b16 %v74, %v71
  %v84 = vpack.c.b16 %v75, %v72
  %v85 = vpack.c.b16 %v79, %v76
  %v86 = vpack.c.b16 %v80, %v77
  %v87 = vpack.c.b16 %v81, %v78
  %v128 = vunpack.c.l.b16 %v26
  %v129 = vunpack.c.l.b16 %v27
  %v130 = vunpack.c.l.b16 %v28
  %v131 = vunpack.c.l.b16 %v29
  %v132 = vunpack.c.l.b16 %v30
  %v133 = vunpack.c.l.b16 %v31
  %v134 = vunpack.c.l.b16 %v32
  %v135 = vunpack.c.l.b16 %v33
  %v136 = vunpack.c.l.b16 %v34
  %v137 = vunpack.c.l.b16 %v35
  %v138 = vunpack.c.l.b16 %v36
  %v139 = vunpack.c.l.b16 %v37
  %v140 = vunpack.c.l.b16 %v38
  %v141 = vunpack.c.l.b16 %v39
  %v142 = vunpack.c.l.b16 %v40
  %v143 = vunpack.c.l.b16 %v41
  %v144 = vunpack.c.l.b16 %v42
  %v145 = vunpack.c.l.b16 %v43
  %v146 = vunpack.c.l.b16 %v44
  %v147 = vunpack.c.l.b16 %v45
  %v148 = vunpack.c.l.b16 %v46
  %v149 = vunpack.c.l.b16 %v47
  %v150 = vunpack.c.l.b16 %v48
  %v151 = vunpack.c.l.b16 %v49
  %v152 = vunpack.c.l.b16 %v50
  %v153 = vunpack.c.l.b16 %v51
  %v154 = vunpack.c.l.b16 %v52
  %v155 = vunpack.c.l.b16 %v53
  %v156 = vunpack.c.l.b16 %v54
  %v157 = vunpack.c.l.b16 %v55
  %v158 = vunpack.c.l.b16 %v56
  %v159 = vunpack.c.l.b16 %v57
  %v160 = vunpack.c.l.b16 %v58
  %v161 = vunpack.c.l.b16 %v59
  %v162 = vunpack.c.l.b16 %v60
  %v163 = vunpack.c.l.b16 %v61
  %v164 = vpack.c.b16 %v129, %v128
  %v165 = vpack.c.b16 %v131, %v130
  %v166 = vpack.c.b16 %v133, %v132
  %v167 = vpack.c.b16 %v135, %v134
  %v168 = vpack.c.b16 %v137, %v136
  %v169 = vpack.c.b16 %v139, %v138
  %v170 = vpack.c.b16 %v141, %v140
  %v171 = vpack.c.b16 %v143, %v142
  %v172 = vpack.c.b16 %v145, %v144
  %v173 = vpack.c.b16 %v147, %v146
  %v174 = vpack.c.b16 %v149, %v148
  %v175 = vpack.c.b16 %v151, %v150
  %v176 = vpack.c.b16 %v153, %v152
  %v177 = vpack.c.b16 %v155, %v154
  %v178 = vpack.c.b16 %v157, %v156
  %v179 = vpack.c.b16 %v159, %v158
  %v180 = vpack.c.b16 %v161, %v160
  %v181 = vpack.c.b16 %v163, %v162
  %vm200 = vcmask 261120
  %v202 = vsel %vm200, %v84, 0
  %v205 = vsel %vm200, %v87, 0
  %207 = vmatprep.subr.bf16.mxu0 0
  %208 = vmatpush1.bf16.msra.mxu0 %v164
  %209 = vmatprep.subr.bf16.mxu0 0
  %210 = vmatpush1.bf16.msra.mxu0 %v165
  %211 = vmatprep.subr.bf16.mxu0 0
  %212 = vmatpush1.bf16.msra.mxu0 %v166
  %213 = vmatprep.subr.bf16.mxu0 0
  %214 = vmatpush1.bf16.msra.mxu0 %v167
  %215 = vmatprep.subr.bf16.mxu0 0
  %216 = vmatpush1.bf16.msra.mxu0 %v168
  %217 = vmatprep.subr.bf16.mxu0 0
  %218 = vmatpush1.bf16.msra.mxu0 %v169
  %219 = vmatprep.subr.bf16.mxu0 0
  %220 = vmatpush1.bf16.msra.mxu0 %v170
  %221 = vmatprep.subr.bf16.mxu0 0
  %222 = vmatpush1.bf16.msra.mxu0 %v171
  %223 = vmatprep.subr.bf16.mxu0 0
  %224 = vmatpush1.bf16.msra.mxu0 %v172
  %225 = vmatprep.subr.bf16.mxu0 0
  %226 = vmatpush1.bf16.msra.mxu0 %v173
  %227 = vmatprep.subr.bf16.mxu0 0
  %228 = vmatpush1.bf16.msra.mxu0 %v174
  %229 = vmatprep.subr.bf16.mxu0 0
  %230 = vmatpush1.bf16.msra.mxu0 %v175
  %231 = vmatprep.subr.bf16.mxu0 0
  %232 = vmatpush1.bf16.msra.mxu0 %v176
  %233 = vmatprep.subr.bf16.mxu0 0
  %234 = vmatpush1.bf16.msra.mxu0 %v177
  %235 = vmatprep.subr.bf16.mxu0 0
  %236 = vmatpush1.bf16.msra.mxu0 %v178
  %237 = vmatprep.subr.bf16.mxu0 0
  %238 = vmatpush1.bf16.msra.mxu0 %v179
  %239 = vmatprep.mubr.bf16.mxu0 %v83
  %240 = vmatmul.mubr.bf16.gmra.mrb[0].mxu0 %v82
  %v241 = vpop.f32.mrb[0].mxu0
  %v242 = vadd.f32 0.0, %v241
  %v243 = vpop.f32.mrb[0].mxu0
  %v244 = vpop.f32.mrb[0].mxu0
  %v245 = vadd.f32 0.0, %v244
  %v246 = vpop.f32.mrb[0].mxu0
  %247 = vmatprep.mubr.bf16.mxu0 %v86
  %248 = vmatmul.mubr.bf16.gmra.mrb[0].mxu0 %v85
  %v249 = vpop.f32.mrb[0].mxu0
  %v250 = vadd.f32 0.0, %v249
  %v251 = vpop.f32.mrb[0].mxu0
  %v252 = vpop.f32.mrb[0].mxu0
  %v253 = vadd.f32 0.0, %v252
  %v254 = vpop.f32.mrb[0].mxu0
  %255 = vdwg.mxu0
  %256 = vmatprep.subr.bf16.mxu0 0
  %257 = vmatpush1.bf16.msra.mxu0 %v180
  %258 = vmatprep.subr.bf16.mxu0 0
  %259 = vmatpush1.bf16.msra.mxu0 %v181
  %260 = vmatprep.subr.bf16.mxu0 0
  %261 = vmatpush1.bf16.msra.mxu0 0
  %262 = vmatprep.subr.bf16.mxu0 0
  %263 = vmatpush1.bf16.msra.mxu0 0
  %264 = vmatprep.subr.bf16.mxu0 0
  %265 = vmatpush1.bf16.msra.mxu0 0
  %266 = vmatprep.subr.bf16.mxu0 0
  %267 = vmatpush1.bf16.msra.mxu0 0
  %268 = vmatprep.subr.bf16.mxu0 0
  %269 = vmatpush1.bf16.msra.mxu0 0
  %270 = vmatprep.subr.bf16.mxu0 0
  %271 = vmatpush1.bf16.msra.mxu0 0
  %272 = vmatprep.subr.bf16.mxu0 0
  %273 = vmatpush1.bf16.msra.mxu0 0
  %274 = vmatprep.subr.bf16.mxu0 0
  %275 = vmatpush1.bf16.msra.mxu0 0
  %276 = vmatprep.subr.bf16.mxu0 0
  %277 = vmatpush1.bf16.msra.mxu0 0
  %278 = vmatprep.subr.bf16.mxu0 0
  %279 = vmatpush1.bf16.msra.mxu0 0
  %280 = vmatprep.subr.bf16.mxu0 0
  %281 = vmatpush1.bf16.msra.mxu0 0
  %282 = vmatprep.subr.bf16.mxu0 0
  %283 = vmatpush1.bf16.msra.mxu0 0
  %284 = vmatprep.subr.bf16.mxu0 0
  %285 = vmatpush1.bf16.msra.mxu0 0
  %286 = vmatprep.subr.bf16.mxu0 0
  %287 = vmatpush1.bf16.msra.mxu0 0
  %288 = vmatprep.mubr.bf16.mxu0 0
  %289 = vmatmul.mubr.bf16.gmra.mrb[0].mxu0 %v202
  %v290 = vpop.f32.mrb[0].mxu0
  %v291 = vadd.f32 %v242, %v290
  %v292 = vpop.f32.mrb[0].mxu0
  %v293 = vpop.f32.mrb[0].mxu0
  %v294 = vadd.f32 %v245, %v293
  %v295 = vpop.f32.mrb[0].mxu0
  %296 = vmatprep.mubr.bf16.mxu0 0
  %297 = vmatmul.mubr.bf16.gmra.mrb[0].mxu0 %v205
  %v298 = vpop.f32.mrb[0].mxu0
  %v299 = vadd.f32 %v250, %v298
  %v300 = vpop.f32.mrb[0].mxu0
  %v301 = vpop.f32.mrb[0].mxu0
  %v302 = vadd.f32 %v253, %v301
  %v303 = vpop.f32.mrb[0].mxu0
  %304 = vdwg.mxu0
  %v305 = vsel %vm200, %v291, 0.0
  %v306 = vsel %vm200, %v294, 0.0
  %v307 = vadd.f32 %v305, %v306
  %v308 = vsel %vm200, %v299, 0.0
  %v309 = vadd.f32 %v307, %v308
  %v310 = vsel %vm200, %v302, 0.0
  %v311 = vadd.f32 %v309, %v310
  %v312 = vrot.slane %v311, 4
  %v313 = vadd.f32 %v311, %v312
  %v314 = vrot.slane %v313, 2
  %v315 = vadd.f32 %v313, %v314
  %v316 = vrot.slane %v315, 1
  %v317 = vadd.f32 %v315, %v316
  %v318 = vmul.f32 %v317, 0.03125
  %v319 = vmul.f32 %v291, %v291
  %v320 = vmul.f32 %v294, %v294
  %v321 = vmul.f32 %v299, %v299
  %v322 = vmul.f32 %v302, %v302
  %v323 = vsel %vm200, %v319, 0.0
  %v324 = vsel %vm200, %v320, 0.0
  %v325 = vadd.f32 %v323, %v324
  %v326 = vsel %vm200, %v321, 0.0
  %v327 = vadd.f32 %v325, %v326
  %v328 = vsel %vm200, %v322, 0.0
  %v329 = vadd.f32 %v327, %v328
  %v330 = vrot.slane %v329, 4
  %v331 = vadd.f32 %v329, %v330
  %v332 = vrot.slane %v331, 2
  %v333 = vadd.f32 %v331, %v332
  %v334 = vrot.slane %v333, 1
  %v335 = vadd.f32 %v333, %v334
  %v336 = vmul.f32 %v335, 0.03125
  %v337 = vmul.f32 %v318, %v318
  %v338 = vsub.f32 %v336, %v337
  %v339 = vmax.f32 %v338, 0.0
  %v340 = vld [vmem:[%s2] sm:$0x1]
  %v341 = vadd.f32 %v339, 1e-05
  %v342 = vrsqrt.pop %v341
  %v343 = vmul.f32 %v340, %v342
  %v344 = vld [vmem:[%s3] sm:$0x1]
  %v345 = vmul.f32 %v318, %v343
  %v346 = vsub.f32 %v344, %v345
  %v348 = vlaneseq
  %v349 = vshrl.u32 %v348, 7
  %v350 = vsub.s32 0, %v349
  %v351 = vrot.slane %v343, %v350
  %v353 = vmul.f32 %v291, %v351
  %v354 = vmul.f32 %v294, %v351
  %v355 = vmul.f32 %v299, %v351
  %v356 = vmul.f32 %v302, %v351
  %v358 = vlaneseq
  %v359 = vshrl.u32 %v358, 7
  %v360 = vsub.s32 0, %v359
  %v361 = vrot.slane %v346, %v360
  %v363 = vadd.f32 %v353, %v361
  %v364 = vadd.f32 %v354, %v361
  %v365 = vadd.f32 %v355, %v361
  %v366 = vadd.f32 %v356, %v361
  %v367 = vmax.f32 %v363, 0.0
  %v368 = vmax.f32 %v364, 0.0
  %v369 = vmax.f32 %v365, 0.0
  %v370 = vmax.f32 %v366, 0.0
  %371 = vst.msk [vmem:[%s4] sm:$0xff] %vm200, %v367
  %372 = vst.msk [vmem:[%s4 + $0x8] sm:$0xff] %vm200, %v368
  %373 = vst.msk [vmem:[%s4 + $0x10] sm:$0xff] %vm200, %v369
  %374 = vst.msk [vmem:[%s4 + $0x18] sm:$0xff] %vm200, %v370
  // Predicated region
  $region18: #{unet_forward.34} parent=0 // pred_check
    _
  $region19: #{unet_forward.34} parent=0 // pred_check_branch
    %376 = sbr.rel (0) target = $region21
  $region20: #{unet_forward.34} parent=0 // pred_region
    _
  $region21: #{unet_forward.34} parent=0 // pred_fallthru
    _
  // Predicated region
  $region22: #{unet_forward.34} parent=0 // pred_check
    _
  $region23: #{unet_forward.34} parent=0 // pred_check_branch
    %378 = sbr.rel (0) target = $region25
  $region24: #{unet_forward.34} parent=0 // pred_region
    _
  $region25: #{unet_forward.34} parent=0 // pred_fallthru
    _

// kernel: unet_forward.35
$region0: #{unet_forward.35}
  #allocation0 [shape = 'u32[]', space=smem, size = 0x4, offset = 0x4, fixed_abs, tag = 'smem constant byte address 0x4 - core index']
  #allocation1 [shape = 'u32[144,128]{1,0:T(1,128)}', space=vmem, size = 0x12000, scoped, tag = 'internal scratch']
  %s0 = inlined_call_operand.vmem [shape: f32[4,8,32], index: 0, kind: input, shape index: {}]
  %s1 = inlined_call_operand.vmem [shape: f32[8,32], index: 1, kind: output, shape index: {}]
  %s2 = sld [smem:[#allocation0]]
  $region14: #{unet_forward.35} parent=0
    _
  %s4 = ssub.s32 1, %s2
  %s5 = scalar_select 0, %s4, %s2
  // Predicated region
  $region2: #{unet_forward.35} parent=0 // pred_check
    _
  $region3: #{unet_forward.35} parent=0 // pred_check_branch
    %7 = sbr.rel (0) target = $region5
  $region4: #{unet_forward.35} parent=0 // pred_region
    _
  $region5: #{unet_forward.35} parent=0 // pred_fallthru
    _
  %v8 = vld [vmem:[%s0] sm:$0xff]
  %s9 = scalar_lea.vmem %s0, 8
  %v10 = vld [vmem:[%s9] sm:$0xff]
  %v11 = vmax.f32 %v8, %v10
  %s12 = scalar_lea.vmem %s0, 16
  %v13 = vld [vmem:[%s12] sm:$0xff]
  %s14 = scalar_lea.vmem %s0, 24
  %v15 = vld [vmem:[%s14] sm:$0xff]
  %v16 = vmax.f32 %v13, %v15
  %v17 = vmax.f32 %v11, %v16
  %vm18 = vcmask 261120
  %19 = vst.msk [vmem:[%s1] sm:$0xff] %vm18, %v17
  // Predicated region
  $region6: #{unet_forward.35} parent=0 // pred_check
    _
  $region7: #{unet_forward.35} parent=0 // pred_check_branch
    %21 = sbr.rel (0) target = $region9
  $region8: #{unet_forward.35} parent=0 // pred_region
    _
  $region9: #{unet_forward.35} parent=0 // pred_fallthru
    _
  // Predicated region
  $region10: #{unet_forward.35} parent=0 // pred_check
    _
  $region11: #{unet_forward.35} parent=0 // pred_check_branch
    %23 = sbr.rel (0) target = $region13
  $region12: #{unet_forward.35} parent=0 // pred_region
    _
  $region13: #{unet_forward.35} parent=0 // pred_fallthru
    _

// kernel: unet_forward.36
$region0: #{unet_forward.36}
  #allocation0 [shape = 'u32[]', space=smem, size = 0x4, offset = 0x4, fixed_abs, tag = 'smem constant byte address 0x4 - core index']
  #allocation1 [shape = 'u32[144,128]{1,0:T(1,128)}', space=vmem, size = 0x12000, scoped, tag = 'internal scratch']
  %s0 = inlined_call_operand.vmem [shape: bf16[8,288], index: 0, kind: input, shape index: {}]
  %s1 = inlined_call_operand.vmem [shape: bf16[288,64], index: 1, kind: input, shape index: {}]
  %s2 = inlined_call_operand.vmem [shape: f32[1,64], index: 2, kind: input, shape index: {}]
  %s3 = inlined_call_operand.vmem [shape: f32[1,64], index: 3, kind: input, shape index: {}]
  %s4 = inlined_call_operand.vmem [shape: f32[8,64], index: 4, kind: output, shape index: {}]
  %s5 = sld [smem:[#allocation0]]
  $region26: #{unet_forward.36} parent=0
    _
  %s7 = ssub.s32 1, %s5
  %s8 = scalar_select 0, %s7, %s5
  // Predicated region
  $region2: #{unet_forward.36} parent=0 // pred_check
    _
  $region3: #{unet_forward.36} parent=0 // pred_check_branch
    %10 = sbr.rel (0) target = $region5
  $region4: #{unet_forward.36} parent=0 // pred_region
    _
  $region5: #{unet_forward.36} parent=0 // pred_fallthru
    _
  // Predicated region
  $region6: #{unet_forward.36} parent=0 // pred_check
    _
  $region7: #{unet_forward.36} parent=0 // pred_check_branch
    %12 = sbr.rel (0) target = $region9
  $region8: #{unet_forward.36} parent=0 // pred_region
    _
  $region9: #{unet_forward.36} parent=0 // pred_fallthru
    _
  // Predicated region
  $region10: #{unet_forward.36} parent=0 // pred_check
    _
  $region11: #{unet_forward.36} parent=0 // pred_check_branch
    %14 = sbr.rel (0) target = $region13
  $region12: #{unet_forward.36} parent=0 // pred_region
    _
  $region13: #{unet_forward.36} parent=0 // pred_fallthru
    _
  // Predicated region
  $region14: #{unet_forward.36} parent=0 // pred_check
    _
  $region15: #{unet_forward.36} parent=0 // pred_check_branch
    %16 = sbr.rel (0) target = $region17
  $region16: #{unet_forward.36} parent=0 // pred_region
    _
  $region17: #{unet_forward.36} parent=0 // pred_fallthru
    _
  %v18 = vld [vmem:[%s0] sm:$0xff]
  %v19 = vld [vmem:[%s0 + $0x8] sm:$0xf]
  %v20 = vld [vmem:[%s1] sm:$0xf]
  %v21 = vld [vmem:[%s1 + $0x4] sm:$0xf]
  %v22 = vld [vmem:[%s1 + $0x8] sm:$0xf]
  %v23 = vld [vmem:[%s1 + $0xc] sm:$0xf]
  %v24 = vld [vmem:[%s1 + $0x10] sm:$0xf]
  %v25 = vld [vmem:[%s1 + $0x14] sm:$0xf]
  %v26 = vld [vmem:[%s1 + $0x18] sm:$0xf]
  %v27 = vld [vmem:[%s1 + $0x1c] sm:$0xf]
  %v28 = vld [vmem:[%s1 + $0x20] sm:$0xf]
  %v29 = vld [vmem:[%s1 + $0x24] sm:$0xf]
  %v30 = vld [vmem:[%s1 + $0x28] sm:$0xf]
  %v31 = vld [vmem:[%s1 + $0x2c] sm:$0xf]
  %v32 = vld [vmem:[%s1 + $0x30] sm:$0xf]
  %v33 = vld [vmem:[%s1 + $0x34] sm:$0xf]
  %v34 = vld [vmem:[%s1 + $0x38] sm:$0xf]
  %v35 = vld [vmem:[%s1 + $0x3c] sm:$0xf]
  %v36 = vld [vmem:[%s1 + $0x40] sm:$0xf]
  %v37 = vld [vmem:[%s1 + $0x44] sm:$0xf]
  %v38 = vld [vmem:[%s1 + $0x48] sm:$0xf]
  %v39 = vld [vmem:[%s1 + $0x4c] sm:$0xf]
  %v40 = vld [vmem:[%s1 + $0x50] sm:$0xf]
  %v41 = vld [vmem:[%s1 + $0x54] sm:$0xf]
  %v42 = vld [vmem:[%s1 + $0x58] sm:$0xf]
  %v43 = vld [vmem:[%s1 + $0x5c] sm:$0xf]
  %v44 = vld [vmem:[%s1 + $0x60] sm:$0xf]
  %v45 = vld [vmem:[%s1 + $0x64] sm:$0xf]
  %v46 = vld [vmem:[%s1 + $0x68] sm:$0xf]
  %v47 = vld [vmem:[%s1 + $0x6c] sm:$0xf]
  %v48 = vld [vmem:[%s1 + $0x70] sm:$0xf]
  %v49 = vld [vmem:[%s1 + $0x74] sm:$0xf]
  %v50 = vld [vmem:[%s1 + $0x78] sm:$0xf]
  %v51 = vld [vmem:[%s1 + $0x7c] sm:$0xf]
  %v52 = vld [vmem:[%s1 + $0x80] sm:$0xf]
  %v53 = vld [vmem:[%s1 + $0x84] sm:$0xf]
  %v54 = vld [vmem:[%s1 + $0x88] sm:$0xf]
  %v55 = vld [vmem:[%s1 + $0x8c] sm:$0xf]
  %v58 = vunpack.c.l.b16 %v18
  %v59 = vunpack.c.h.b16 %v18
  %v60 = vunpack.c.l.b16 %v19
  %v61 = vpack.c.b16 %v58, %v58
  %v62 = vpack.c.b16 %v59, %v59
  %v63 = vpack.c.b16 %v60, %v60
  %v102 = vunpack.c.l.b16 %v20
  %v103 = vunpack.c.l.b16 %v21
  %v104 = vunpack.c.l.b16 %v22
  %v105 = vunpack.c.l.b16 %v23
  %v106 = vunpack.c.l.b16 %v24
  %v107 = vunpack.c.l.b16 %v25
  %v108 = vunpack.c.l.b16 %v26
  %v109 = vunpack.c.l.b16 %v27
  %v110 = vunpack.c.l.b16 %v28
  %v111 = vunpack.c.l.b16 %v29
  %v112 = vunpack.c.l.b16 %v30
  %v113 = vunpack.c.l.b16 %v31
  %v114 = vunpack.c.l.b16 %v32
  %v115 = vunpack.c.l.b16 %v33
  %v116 = vunpack.c.l.b16 %v34
  %v117 = vunpack.c.l.b16 %v35
  %v118 = vunpack.c.l.b16 %v36
  %v119 = vunpack.c.l.b16 %v37
  %v120 = vunpack.c.l.b16 %v38
  %v121 = vunpack.c.l.b16 %v39
  %v122 = vunpack.c.l.b16 %v40
  %v123 = vunpack.c.l.b16 %v41
  %v124 = vunpack.c.l.b16 %v42
  %v125 = vunpack.c.l.b16 %v43
  %v126 = vunpack.c.l.b16 %v44
  %v127 = vunpack.c.l.b16 %v45
  %v128 = vunpack.c.l.b16 %v46
  %v129 = vunpack.c.l.b16 %v47
  %v130 = vunpack.c.l.b16 %v48
  %v131 = vunpack.c.l.b16 %v49
  %v132 = vunpack.c.l.b16 %v50
  %v133 = vunpack.c.l.b16 %v51
  %v134 = vunpack.c.l.b16 %v52
  %v135 = vunpack.c.l.b16 %v53
  %v136 = vunpack.c.l.b16 %v54
  %v137 = vunpack.c.l.b16 %v55
  %v138 = vpack.c.b16 %v103, %v102
  %v139 = vpack.c.b16 %v105, %v104
  %v140 = vpack.c.b16 %v107, %v106
  %v141 = vpack.c.b16 %v109, %v108
  %v142 = vpack.c.b16 %v111, %v110
  %v143 = vpack.c.b16 %v113, %v112
  %v144 = vpack.c.b16 %v115, %v114
  %v145 = vpack.c.b16 %v117, %v116
  %v146 = vpack.c.b16 %v119, %v118
  %v147 = vpack.c.b16 %v121, %v120
  %v148 = vpack.c.b16 %v123, %v122
  %v149 = vpack.c.b16 %v125, %v124
  %v150 = vpack.c.b16 %v127, %v126
  %v151 = vpack.c.b16 %v129, %v128
  %v152 = vpack.c.b16 %v131, %v130
  %v153 = vpack.c.b16 %v133, %v132
  %v154 = vpack.c.b16 %v135, %v134
  %v155 = vpack.c.b16 %v137, %v136
  %vm174 = vcmask 261120
  %v176 = vsel %vm174, %v63, 0
  %178 = vmatprep.subr.bf16.mxu0 0
  %179 = vmatpush1.bf16.msra.mxu0 %v138
  %180 = vmatprep.subr.bf16.mxu0 0
  %181 = vmatpush1.bf16.msra.mxu0 %v139
  %182 = vmatprep.subr.bf16.mxu0 0
  %183 = vmatpush1.bf16.msra.mxu0 %v140
  %184 = vmatprep.subr.bf16.mxu0 0
  %185 = vmatpush1.bf16.msra.mxu0 %v141
  %186 = vmatprep.subr.bf16.mxu0 0
  %187 = vmatpush1.bf16.msra.mxu0 %v142
  %188 = vmatprep.subr.bf16.mxu0 0
  %189 = vmatpush1.bf16.msra.mxu0 %v143
  %190 = vmatprep.subr.bf16.mxu0 0
  %191 = vmatpush1.bf16.msra.mxu0 %v144
  %192 = vmatprep.subr.bf16.mxu0 0
  %193 = vmatpush1.bf16.msra.mxu0 %v145
  %194 = vmatprep.subr.bf16.mxu0 0
  %195 = vmatpush1.bf16.msra.mxu0 %v146
  %196 = vmatprep.subr.bf16.mxu0 0
  %197 = vmatpush1.bf16.msra.mxu0 %v147
  %198 = vmatprep.subr.bf16.mxu0 0
  %199 = vmatpush1.bf16.msra.mxu0 %v148
  %200 = vmatprep.subr.bf16.mxu0 0
  %201 = vmatpush1.bf16.msra.mxu0 %v149
  %202 = vmatprep.subr.bf16.mxu0 0
  %203 = vmatpush1.bf16.msra.mxu0 %v150
  %204 = vmatprep.subr.bf16.mxu0 0
  %205 = vmatpush1.bf16.msra.mxu0 %v151
  %206 = vmatprep.subr.bf16.mxu0 0
  %207 = vmatpush1.bf16.msra.mxu0 %v152
  %208 = vmatprep.subr.bf16.mxu0 0
  %209 = vmatpush1.bf16.msra.mxu0 %v153
  %210 = vmatprep.mubr.bf16.mxu0 %v62
  %211 = vmatmul.mubr.bf16.gmra.mrb[0].mxu0 %v61
  %v212 = vpop.f32.mrb[0].mxu0
  %v213 = vadd.f32 0.0, %v212
  %v214 = vpop.f32.mrb[0].mxu0
  %v215 = vpop.f32.mrb[0].mxu0
  %v216 = vpop.f32.mrb[0].mxu0
  %217 = vdwg.mxu0
  %218 = vmatprep.subr.bf16.mxu0 0
  %219 = vmatpush1.bf16.msra.mxu0 %v154
  %220 = vmatprep.subr.bf16.mxu0 0
  %221 = vmatpush1.bf16.msra.mxu0 %v155
  %222 = vmatprep.subr.bf16.mxu0 0
  %223 = vmatpush1.bf16.msra.mxu0 0
  %224 = vmatprep.subr.bf16.mxu0 0
  %225 = vmatpush1.bf16.msra.mxu0 0
  %226 = vmatprep.subr.bf16.mxu0 0
  %227 = vmatpush1.bf16.msra.mxu0 0
  %228 = vmatprep.subr.bf16.mxu0 0
  %229 = vmatpush1.bf16.msra.mxu0 0
  %230 = vmatprep.subr.bf16.mxu0 0
  %231 = vmatpush1.bf16.msra.mxu0 0
  %232 = vmatprep.subr.bf16.mxu0 0
  %233 = vmatpush1.bf16.msra.mxu0 0
  %234 = vmatprep.subr.bf16.mxu0 0
  %235 = vmatpush1.bf16.msra.mxu0 0
  %236 = vmatprep.subr.bf16.mxu0 0
  %237 = vmatpush1.bf16.msra.mxu0 0
  %238 = vmatprep.subr.bf16.mxu0 0
  %239 = vmatpush1.bf16.msra.mxu0 0
  %240 = vmatprep.subr.bf16.mxu0 0
  %241 = vmatpush1.bf16.msra.mxu0 0
  %242 = vmatprep.subr.bf16.mxu0 0
  %243 = vmatpush1.bf16.msra.mxu0 0
  %244 = vmatprep.subr.bf16.mxu0 0
  %245 = vmatpush1.bf16.msra.mxu0 0
  %246 = vmatprep.subr.bf16.mxu0 0
  %247 = vmatpush1.bf16.msra.mxu0 0
  %248 = vmatprep.subr.bf16.mxu0 0
  %249 = vmatpush1.bf16.msra.mxu0 0
  %250 = vmatprep.mubr.bf16.mxu0 0
  %251 = vmatmul.mubr.bf16.gmra.mrb[0].mxu0 %v176
  %v252 = vpop.f32.mrb[0].mxu0
  %v253 = vadd.f32 %v213, %v252
  %v254 = vpop.f32.mrb[0].mxu0
  %v255 = vpop.f32.mrb[0].mxu0
  %v256 = vpop.f32.mrb[0].mxu0
  %257 = vdwg.mxu0
  %vm258 = vcmask 523264
  %v259 = vsel %vm258, %v253, 0.0
  %v260 = vrot.slane %v259, 4
  %v261 = vadd.f32 %v259, %v260
  %v262 = vrot.slane %v261, 2
  %v263 = vadd.f32 %v261, %v262
  %v264 = vrot.slane %v263, 1
  %v265 = vadd.f32 %v263, %v264
  %v266 = vmul.f32 %v265, 0.125
  %v267 = vmul.f32 %v253, %v253
  %v268 = vsel %vm258, %v267, 0.0
  %v269 = vrot.slane %v268, 4
  %v270 = vadd.f32 %v268, %v269
  %v271 = vrot.slane %v270, 2
  %v272 = vadd.f32 %v270, %v271
  %v273 = vrot.slane %v272, 1
  %v274 = vadd.f32 %v272, %v273
  %v275 = vmul.f32 %v274, 0.125
  %v276 = vmul.f32 %v266, %v266
  %v277 = vsub.f32 %v275, %v276
  %v278 = vmax.f32 %v277, 0.0
  %v279 = vld [vmem:[%s2] sm:$0x1]
  %v280 = vadd.f32 %v278, 1e-05
  %v281 = vrsqrt.pop %v280
  %v282 = vmul.f32 %v279, %v281
  %v283 = vld [vmem:[%s3] sm:$0x1]
  %v284 = vmul.f32 %v266, %v282
  %v285 = vsub.f32 %v283, %v284
  %v287 = vlaneseq
  %v288 = vshrl.u32 %v287, 7
  %v289 = vsub.s32 0, %v288
  %v290 = vrot.slane %v282, %v289
  %v292 = vmul.f32 %v253, %v290
  %v294 = vlaneseq
  %v295 = vshrl.u32 %v294, 7
  %v296 = vsub.s32 0, %v295
  %v297 = vrot.slane %v285, %v296
  %v299 = vadd.f32 %v292, %v297
  %v300 = vmax.f32 %v299, 0.0
  %301 = vst.msk [vmem:[%s4] sm:$0xff] %vm258, %v300
  // Predicated region
  $region18: #{unet_forward.36} parent=0 // pred_check
    _
  $region19: #{unet_forward.36} parent=0 // pred_check_branch
    %303 = sbr.rel (0) target = $region21
  $region20: #{unet_forward.36} parent=0 // pred_region
    _
  $region21: #{unet_forward.36} parent=0 // pred_fallthru
    _
  // Predicated region
  $region22: #{unet_forward.36} parent=0 // pred_check
    _
  $region23: #{unet_forward.36} parent=0 // pred_check_branch
    %305 = sbr.rel (0) target = $region25
  $region24: #{unet_forward.36} parent=0 // pred_region
    _
  $region25: #{unet_forward.36} parent=0 // pred_fallthru
    _

// kernel: unet_forward.38
$region0: #{unet_forward.38}
  #allocation0 [shape = 'u32[]', space=smem, size = 0x4, offset = 0x4, fixed_abs, tag = 'smem constant byte address 0x4 - core index']
  #allocation1 [shape = 'u32[144,128]{1,0:T(1,128)}', space=vmem, size = 0x12000, scoped, tag = 'internal scratch']
  %s0 = inlined_call_operand.vmem [shape: f32[4,2,64], index: 0, kind: input, shape index: {}]
  %s1 = inlined_call_operand.vmem [shape: f32[2,64], index: 1, kind: output, shape index: {}]
  %s2 = sld [smem:[#allocation0]]
  $region14: #{unet_forward.38} parent=0
    _
  %s4 = ssub.s32 1, %s2
  %s5 = scalar_select 0, %s4, %s2
  // Predicated region
  $region2: #{unet_forward.38} parent=0 // pred_check
    _
  $region3: #{unet_forward.38} parent=0 // pred_check_branch
    %7 = sbr.rel (0) target = $region5
  $region4: #{unet_forward.38} parent=0 // pred_region
    _
  $region5: #{unet_forward.38} parent=0 // pred_fallthru
    _
  %v8 = vld [vmem:[%s0] sm:$0x3]
  %s9 = scalar_lea.vmem %s0, 2
  %v10 = vld [vmem:[%s9] sm:$0x3]
  %v11 = vmax.f32 %v8, %v10
  %s12 = scalar_lea.vmem %s0, 4
  %v13 = vld [vmem:[%s12] sm:$0x3]
  %s14 = scalar_lea.vmem %s0, 6
  %v15 = vld [vmem:[%s14] sm:$0x3]
  %v16 = vmax.f32 %v13, %v15
  %v17 = vmax.f32 %v11, %v16
  %vm18 = vcmask 517120
  %19 = vst.msk [vmem:[%s1] sm:$0x3] %vm18, %v17
  // Predicated region
  $region6: #{unet_forward.38} parent=0 // pred_check
    _
  $region7: #{unet_forward.38} parent=0 // pred_check_branch
    %21 = sbr.rel (0) target = $region9
  $region8: #{unet_forward.38} parent=0 // pred_region
    _
  $region9: #{unet_forward.38} parent=0 // pred_fallthru
    _
  // Predicated region
  $region10: #{unet_forward.38} parent=0 // pred_check
    _
  $region11: #{unet_forward.38} parent=0 // pred_check_branch
    %23 = sbr.rel (0) target = $region13
  $region12: #{unet_forward.38} parent=0 // pred_region
    _
  $region13: #{unet_forward.38} parent=0 // pred_fallthru
    _

// kernel: unet_forward.37
$region0: #{unet_forward.37}
  #allocation0 [shape = 'u32[]', space=smem, size = 0x4, offset = 0x4, fixed_abs, tag = 'smem constant byte address 0x4 - core index']
  #allocation1 [shape = 'u32[144,128]{1,0:T(1,128)}', space=vmem, size = 0x12000, scoped, tag = 'internal scratch']
  %s0 = inlined_call_operand.vmem [shape: bf16[8,576], index: 0, kind: input, shape index: {}]
  %s1 = inlined_call_operand.vmem [shape: bf16[576,64], index: 1, kind: input, shape index: {}]
  %s2 = inlined_call_operand.vmem [shape: f32[1,64], index: 2, kind: input, shape index: {}]
  %s3 = inlined_call_operand.vmem [shape: f32[1,64], index: 3, kind: input, shape index: {}]
  %s4 = inlined_call_operand.vmem [shape: f32[8,64], index: 4, kind: output, shape index: {}]
  %s5 = sld [smem:[#allocation0]]
  $region26: #{unet_forward.37} parent=0
    _
  %s7 = ssub.s32 1, %s5
  %s8 = scalar_select 0, %s7, %s5
  // Predicated region
  $region2: #{unet_forward.37} parent=0 // pred_check
    _
  $region3: #{unet_forward.37} parent=0 // pred_check_branch
    %10 = sbr.rel (0) target = $region5
  $region4: #{unet_forward.37} parent=0 // pred_region
    _
  $region5: #{unet_forward.37} parent=0 // pred_fallthru
    _
  // Predicated region
  $region6: #{unet_forward.37} parent=0 // pred_check
    _
  $region7: #{unet_forward.37} parent=0 // pred_check_branch
    %12 = sbr.rel (0) target = $region9
  $region8: #{unet_forward.37} parent=0 // pred_region
    _
  $region9: #{unet_forward.37} parent=0 // pred_fallthru
    _
  // Predicated region
  $region10: #{unet_forward.37} parent=0 // pred_check
    _
  $region11: #{unet_forward.37} parent=0 // pred_check_branch
    %14 = sbr.rel (0) target = $region13
  $region12: #{unet_forward.37} parent=0 // pred_region
    _
  $region13: #{unet_forward.37} parent=0 // pred_fallthru
    _
  // Predicated region
  $region14: #{unet_forward.37} parent=0 // pred_check
    _
  $region15: #{unet_forward.37} parent=0 // pred_check_branch
    %16 = sbr.rel (0) target = $region17
  $region16: #{unet_forward.37} parent=0 // pred_region
    _
  $region17: #{unet_forward.37} parent=0 // pred_fallthru
    _
  %v18 = vld [vmem:[%s0] sm:$0xff]
  %v19 = vld [vmem:[%s0 + $0x8] sm:$0xff]
  %v20 = vld [vmem:[%s0 + $0x10] sm:$0xf]
  %v21 = vld [vmem:[%s1] sm:$0xf]
  %v22 = vld [vmem:[%s1 + $0x4] sm:$0xf]
  %v23 = vld [vmem:[%s1 + $0x8] sm:$0xf]
  %v24 = vld [vmem:[%s1 + $0xc] sm:$0xf]
  %v25 = vld [vmem:[%s1 + $0x10] sm:$0xf]
  %v26 = vld [vmem:[%s1 + $0x14] sm:$0xf]
  %v27 = vld [vmem:[%s1 + $0x18] sm:$0xf]
  %v28 = vld [vmem:[%s1 + $0x1c] sm:$0xf]
  %v29 = vld [vmem:[%s1 + $0x20] sm:$0xf]
  %v30 = vld [vmem:[%s1 + $0x24] sm:$0xf]
  %v31 = vld [vmem:[%s1 + $0x28] sm:$0xf]
  %v32 = vld [vmem:[%s1 + $0x2c] sm:$0xf]
  %v33 = vld [vmem:[%s1 + $0x30] sm:$0xf]
  %v34 = vld [vmem:[%s1 + $0x34] sm:$0xf]
  %v35 = vld [vmem:[%s1 + $0x38] sm:$0xf]
  %v36 = vld [vmem:[%s1 + $0x3c] sm:$0xf]
  %v37 = vld [vmem:[%s1 + $0x40] sm:$0xf]
  %v38 = vld [vmem:[%s1 + $0x44] sm:$0xf]
  %v39 = vld [vmem:[%s1 + $0x48] sm:$0xf]
  %v40 = vld [vmem:[%s1 + $0x4c] sm:$0xf]
  %v41 = vld [vmem:[%s1 + $0x50] sm:$0xf]
  %v42 = vld [vmem:[%s1 + $0x54] sm:$0xf]
  %v43 = vld [vmem:[%s1 + $0x58] sm:$0xf]
  %v44 = vld [vmem:[%s1 + $0x5c] sm:$0xf]
  %v45 = vld [vmem:[%s1 + $0x60] sm:$0xf]
  %v46 = vld [vmem:[%s1 + $0x64] sm:$0xf]
  %v47 = vld [vmem:[%s1 + $0x68] sm:$0xf]
  %v48 = vld [vmem:[%s1 + $0x6c] sm:$0xf]
  %v49 = vld [vmem:[%s1 + $0x70] sm:$0xf]
  %v50 = vld [vmem:[%s1 + $0x74] sm:$0xf]
  %v51 = vld [vmem:[%s1 + $0x78] sm:$0xf]
  %v52 = vld [vmem:[%s1 + $0x7c] sm:$0xf]
  %v53 = vld [vmem:[%s1 + $0x80] sm:$0xf]
  %v54 = vld [vmem:[%s1 + $0x84] sm:$0xf]
  %v55 = vld [vmem:[%s1 + $0x88] sm:$0xf]
  %v56 = vld [vmem:[%s1 + $0x8c] sm:$0xf]
  %v57 = vld [vmem:[%s1 + $0x90] sm:$0xf]
  %v58 = vld [vmem:[%s1 + $0x94] sm:$0xf]
  %v59 = vld [vmem:[%s1 + $0x98] sm:$0xf]
  %v60 = vld [vmem:[%s1 + $0x9c] sm:$0xf]
  %v61 = vld [vmem:[%s1 + $0xa0] sm:$0xf]
  %v62 = vld [vmem:[%s1 + $0xa4] sm:$0xf]
  %v63 = vld [vmem:[%s1 + $0xa8] sm:$0xf]
  %v64 = vld [vmem:[%s1 + $0xac] sm:$0xf]
  %v65 = vld [vmem:[%s1 + $0xb0] sm:$0xf]
  %v66 = vld [vmem:[%s1 + $0xb4] sm:$0xf]
  %v67 = vld [vmem:[%s1 + $0xb8] sm:$0xf]
  %v68 = vld [vmem:[%s1 + $0xbc] sm:$0xf]
  %v69 = vld [vmem:[%s1 + $0xc0] sm:$0xf]
  %v70 = vld [vmem:[%s1 + $0xc4] sm:$0xf]
  %v71 = vld [vmem:[%s1 + $0xc8] sm:$0xf]
  %v72 = vld [vmem:[%s1 + $0xcc] sm:$0xf]
  %v73 = vld [vmem:[%s1 + $0xd0] sm:$0xf]
  %v74 = vld [vmem:[%s1 + $0xd4] sm:$0xf]
  %v75 = vld [vmem:[%s1 + $0xd8] sm:$0xf]
  %v76 = vld [vmem:[%s1 + $0xdc] sm:$0xf]
  %v77 = vld [vmem:[%s1 + $0xe0] sm:$0xf]
  %v78 = vld [vmem:[%s1 + $0xe4] sm:$0xf]
  %v79 = vld [vmem:[%s1 + $0xe8] sm:$0xf]
  %v80 = vld [vmem:[%s1 + $0xec] sm:$0xf]
  %v81 = vld [vmem:[%s1 + $0xf0] sm:$0xf]
  %v82 = vld [vmem:[%s1 + $0xf4] sm:$0xf]
  %v83 = vld [vmem:[%s1 + $0xf8] sm:$0xf]
  %v84 = vld [vmem:[%s1 + $0xfc] sm:$0xf]
  %v85 = vld [vmem:[%s1 + $0x100] sm:$0xf]
  %v86 = vld [vmem:[%s1 + $0x104] sm:$0xf]
  %v87 = vld [vmem:[%s1 + $0x108] sm:$0xf]
  %v88 = vld [vmem:[%s1 + $0x10c] sm:$0xf]
  %v89 = vld [vmem:[%s1 + $0x110] sm:$0xf]
  %v90 = vld [vmem:[%s1 + $0x114] sm:$0xf]
  %v91 = vld [vmem:[%s1 + $0x118] sm:$0xf]
  %v92 = vld [vmem:[%s1 + $0x11c] sm:$0xf]
  %v96 = vunpack.c.l.b16 %v18
  %v97 = vunpack.c.h.b16 %v18
  %v98 = vunpack.c.l.b16 %v19
  %v99 = vunpack.c.h.b16 %v19
  %v100 = vunpack.c.l.b16 %v20
  %v101 = vpack.c.b16 %v96, %v96
  %v102 = vpack.c.b16 %v97, %v97
  %v103 = vpack.c.b16 %v98, %v98
  %v104 = vpack.c.b16 %v99, %v99
  %v105 = vpack.c.b16 %v100, %v100
  %v182 = vunpack.c.l.b16 %v21
  %v183 = vunpack.c.l.b16 %v22
  %v184 = vunpack.c.l.b16 %v23
  %v185 = vunpack.c.l.b16 %v24
  %v186 = vunpack.c.l.b16 %v25
  %v187 = vunpack.c.l.b16 %v26
  %v188 = vunpack.c.l.b16 %v27
  %v189 = vunpack.c.l.b16 %v28
  %v190 = vunpack.c.l.b16 %v29
  %v191 = vunpack.c.l.b16 %v30
  %v192 = vunpack.c.l.b16 %v31
  %v193 = vunpack.c.l.b16 %v32
  %v194 = vunpack.c.l.b16 %v33
  %v195 = vunpack.c.l.b16 %v34
  %v196 = vunpack.c.l.b16 %v35
  %v197 = vunpack.c.l.b16 %v36
  %v198 = vunpack.c.l.b16 %v37
  %v199 = vunpack.c.l.b16 %v38
  %v200 = vunpack.c.l.b16 %v39
  %v201 = vunpack.c.l.b16 %v40
  %v202 = vunpack.c.l.b16 %v41
  %v203 = vunpack.c.l.b16 %v42
  %v204 = vunpack.c.l.b16 %v43
  %v205 = vunpack.c.l.b16 %v44
  %v206 = vunpack.c.l.b16 %v45
  %v207 = vunpack.c.l.b16 %v46
  %v208 = vunpack.c.l.b16 %v47
  %v209 = vunpack.c.l.b16 %v48
  %v210 = vunpack.c.l.b16 %v49
  %v211 = vunpack.c.l.b16 %v50
  %v212 = vunpack.c.l.b16 %v51
  %v213 = vunpack.c.l.b16 %v52
  %v214 = vunpack.c.l.b16 %v53
  %v215 = vunpack.c.l.b16 %v54
  %v216 = vunpack.c.l.b16 %v55
  %v217 = vunpack.c.l.b16 %v56
  %v218 = vunpack.c.l.b16 %v57
  %v219 = vunpack.c.l.b16 %v58
  %v220 = vunpack.c.l.b16 %v59
  %v221 = vunpack.c.l.b16 %v60
  %v222 = vunpack.c.l.b16 %v61
  %v223 = vunpack.c.l.b16 %v62
  %v224 = vunpack.c.l.b16 %v63
  %v225 = vunpack.c.l.b16 %v64
  %v226 = vunpack.c.l.b16 %v65
  %v227 = vunpack.c.l.b16 %v66
  %v228 = vunpack.c.l.b16 %v67
  %v229 = vunpack.c.l.b16 %v68
  %v230 = vunpack.c.l.b16 %v69
  %v231 = vunpack.c.l.b16 %v70
  %v232 = vunpack.c.l.b16 %v71
  %v233 = vunpack.c.l.b16 %v72
  %v234 = vunpack.c.l.b16 %v73
  %v235 = vunpack.c.l.b16 %v74
  %v236 = vunpack.c.l.b16 %v75
  %v237 = vunpack.c.l.b16 %v76
  %v238 = vunpack.c.l.b16 %v77
  %v239 = vunpack.c.l.b16 %v78
  %v240 = vunpack.c.l.b16 %v79
  %v241 = vunpack.c.l.b16 %v80
  %v242 = vunpack.c.l.b16 %v81
  %v243 = vunpack.c.l.b16 %v82
  %v244 = vunpack.c.l.b16 %v83
  %v245 = vunpack.c.l.b16 %v84
  %v246 = vunpack.c.l.b16 %v85
  %v247 = vunpack.c.l.b16 %v86
  %v248 = vunpack.c.l.b16 %v87
  %v249 = vunpack.c.l.b16 %v88
  %v250 = vunpack.c.l.b16 %v89
  %v251 = vunpack.c.l.b16 %v90
  %v252 = vunpack.c.l.b16 %v91
  %v253 = vunpack.c.l.b16 %v92
  %v254 = vpack.c.b16 %v183, %v182
  %v255 = vpack.c.b16 %v185, %v184
  %v256 = vpack.c.b16 %v187, %v186
  %v257 = vpack.c.b16 %v189, %v188
  %v258 = vpack.c.b16 %v191, %v190
  %v259 = vpack.c.b16 %v193, %v192
  %v260 = vpack.c.b16 %v195, %v194
  %v261 = vpack.c.b16 %v197, %v196
  %v262 = vpack.c.b16 %v199, %v198
  %v263 = vpack.c.b16 %v201, %v200
  %v264 = vpack.c.b16 %v203, %v202
  %v265 = vpack.c.b16 %v205, %v204
  %v266 = vpack.c.b16 %v207, %v206
  %v267 = vpack.c.b16 %v209, %v208
  %v268 = vpack.c.b16 %v211, %v210
  %v269 = vpack.c.b16 %v213, %v212
  %v270 = vpack.c.b16 %v215, %v214
  %v271 = vpack.c.b16 %v217, %v216
  %v272 = vpack.c.b16 %v219, %v218
  %v273 = vpack.c.b16 %v221, %v220
  %v274 = vpack.c.b16 %v223, %v222
  %v275 = vpack.c.b16 %v225, %v224
  %v276 = vpack.c.b16 %v227, %v226
  %v277 = vpack.c.b16 %v229, %v228
  %v278 = vpack.c.b16 %v231, %v230
  %v279 = vpack.c.b16 %v233, %v232
  %v280 = vpack.c.b16 %v235, %v234
  %v281 = vpack.c.b16 %v237, %v236
  %v282 = vpack.c.b16 %v239, %v238
  %v283 = vpack.c.b16 %v241, %v240
  %v284 = vpack.c.b16 %v243, %v242
  %v285 = vpack.c.b16 %v245, %v244
  %v286 = vpack.c.b16 %v247, %v246
  %v287 = vpack.c.b16 %v249, %v248
  %v288 = vpack.c.b16 %v251, %v250
  %v289 = vpack.c.b16 %v253, %v252
  %vm326 = vcmask 523264
  %v328 = vsel %vm326, %v105, 0
  %330 = vmatprep.subr.bf16.mxu0 0
  %331 = vmatpush1.bf16.msra.mxu0 %v254
  %332 = vmatprep.subr.bf16.mxu0 0
  %333 = vmatpush1.bf16.msra.mxu0 %v255
  %334 = vmatprep.subr.bf16.mxu0 0
  %335 = vmatpush1.bf16.msra.mxu0 %v256
  %336 = vmatprep.subr.bf16.mxu0 0
  %337 = vmatpush1.bf16.msra.mxu0 %v257
  %338 = vmatprep.subr.bf16.mxu0 0
  %339 = vmatpush1.bf16.msra.mxu0 %v258
  %340 = vmatprep.subr.bf16.mxu0 0
  %341 = vmatpush1.bf16.msra.mxu0 %v259
  %342 = vmatprep.subr.bf16.mxu0 0
  %343 = vmatpush1.bf16.msra.mxu0 %v260
  %344 = vmatprep.subr.bf16.mxu0 0
  %345 = vmatpush1.bf16.msra.mxu0 %v261
  %346 = vmatprep.subr.bf16.mxu0 0
  %347 = vmatpush1.bf16.msra.mxu0 %v262
  %348 = vmatprep.subr.bf16.mxu0 0
  %349 = vmatpush1.bf16.msra.mxu0 %v263
  %350 = vmatprep.subr.bf16.mxu0 0
  %351 = vmatpush1.bf16.msra.mxu0 %v264
  %352 = vmatprep.subr.bf16.mxu0 0
  %353 = vmatpush1.bf16.msra.mxu0 %v265
  %354 = vmatprep.subr.bf16.mxu0 0
  %355 = vmatpush1.bf16.msra.mxu0 %v266
  %356 = vmatprep.subr.bf16.mxu0 0
  %357 = vmatpush1.bf16.msra.mxu0 %v267
  %358 = vmatprep.subr.bf16.mxu0 0
  %359 = vmatpush1.bf16.msra.mxu0 %v268
  %360 = vmatprep.subr.bf16.mxu0 0
  %361 = vmatpush1.bf16.msra.mxu0 %v269
  %362 = vmatprep.mubr.bf16.mxu0 %v102
  %363 = vmatmul.mubr.bf16.gmra.mrb[0].mxu0 %v101
  %v364 = vpop.f32.mrb[0].mxu0
  %v365 = vadd.f32 0.0, %v364
  %v366 = vpop.f32.mrb[0].mxu0
  %v367 = vpop.f32.mrb[0].mxu0
  %v368 = vpop.f32.mrb[0].mxu0
  %369 = vdwg.mxu0
  %370 = vmatprep.subr.bf16.mxu0 0
  %371 = vmatpush1.bf16.msra.mxu0 %v270
  %372 = vmatprep.subr.bf16.mxu0 0
  %373 = vmatpush1.bf16.msra.mxu0 %v271
  %374 = vmatprep.subr.bf16.mxu0 0
  %375 = vmatpush1.bf16.msra.mxu0 %v272
  %376 = vmatprep.subr.bf16.mxu0 0
  %377 = vmatpush1.bf16.msra.mxu0 %v273
  %378 = vmatprep.subr.bf16.mxu0 0
  %379 = vmatpush1.bf16.msra.mxu0 %v274
  %380 = vmatprep.subr.bf16.mxu0 0
  %381 = vmatpush1.bf16.msra.mxu0 %v275
  %382 = vmatprep.subr.bf16.mxu0 0
  %383 = vmatpush1.bf16.msra.mxu0 %v276
  %384 = vmatprep.subr.bf16.mxu0 0
  %385 = vmatpush1.bf16.msra.mxu0 %v277
  %386 = vmatprep.subr.bf16.mxu0 0
  %387 = vmatpush1.bf16.msra.mxu0 %v278
  %388 = vmatprep.subr.bf16.mxu0 0
  %389 = vmatpush1.bf16.msra.mxu0 %v279
  %390 = vmatprep.subr.bf16.mxu0 0
  %391 = vmatpush1.bf16.msra.mxu0 %v280
  %392 = vmatprep.subr.bf16.mxu0 0
  %393 = vmatpush1.bf16.msra.mxu0 %v281
  %394 = vmatprep.subr.bf16.mxu0 0
  %395 = vmatpush1.bf16.msra.mxu0 %v282
  %396 = vmatprep.subr.bf16.mxu0 0
  %397 = vmatpush1.bf16.msra.mxu0 %v283
  %398 = vmatprep.subr.bf16.mxu0 0
  %399 = vmatpush1.bf16.msra.mxu0 %v284
  %400 = vmatprep.subr.bf16.mxu0 0
  %401 = vmatpush1.bf16.msra.mxu0 %v285
  %402 = vmatprep.mubr.bf16.mxu0 %v104
  %403 = vmatmul.mubr.bf16.gmra.mrb[0].mxu0 %v103
  %v404 = vpop.f32.mrb[0].mxu0
  %v405 = vadd.f32 %v365, %v404
  %v406 = vpop.f32.mrb[0].mxu0
  %v407 = vpop.f32.mrb[0].mxu0
  %v408 = vpop.f32.mrb[0].mxu0
  %409 = vdwg.mxu0
  %410 = vmatprep.subr.bf16.mxu0 0
  %411 = vmatpush1.bf16.msra.mxu0 %v286
  %412 = vmatprep.subr.bf16.mxu0 0
  %413 = vmatpush1.bf16.msra.mxu0 %v287
  %414 = vmatprep.subr.bf16.mxu0 0
  %415 = vmatpush1.bf16.msra.mxu0 %v288
  %416 = vmatprep.subr.bf16.mxu0 0
  %417 = vmatpush1.bf16.msra.mxu0 %v289
  %418 = vmatprep.subr.bf16.mxu0 0
  %419 = vmatpush1.bf16.msra.mxu0 0
  %420 = vmatprep.subr.bf16.mxu0 0
  %421 = vmatpush1.bf16.msra.mxu0 0
  %422 = vmatprep.subr.bf16.mxu0 0
  %423 = vmatpush1.bf16.msra.mxu0 0
  %424 = vmatprep.subr.bf16.mxu0 0
  %425 = vmatpush1.bf16.msra.mxu0 0
  %426 = vmatprep.subr.bf16.mxu0 0
  %427 = vmatpush1.bf16.msra.mxu0 0
  %428 = vmatprep.subr.bf16.mxu0 0
  %429 = vmatpush1.bf16.msra.mxu0 0
  %430 = vmatprep.subr.bf16.mxu0 0
  %431 = vmatpush1.bf16.msra.mxu0 0
  %432 = vmatprep.subr.bf16.mxu0 0
  %433 = vmatpush1.bf16.msra.mxu0 0
  %434 = vmatprep.subr.bf16.mxu0 0
  %435 = vmatpush1.bf16.msra.mxu0 0
  %436 = vmatprep.subr.bf16.mxu0 0
  %437 = vmatpush1.bf16.msra.mxu0 0
  %438 = vmatprep.subr.bf16.mxu0 0
  %439 = vmatpush1.bf16.msra.mxu0 0
  %440 = vmatprep.subr.bf16.mxu0 0
  %441 = vmatpush1.bf16.msra.mxu0 0
  %442 = vmatprep.mubr.bf16.mxu0 0
  %443 = vmatmul.mubr.bf16.gmra.mrb[0].mxu0 %v328
  %v444 = vpop.f32.mrb[0].mxu0
  %v445 = vadd.f32 %v405, %v444
  %v446 = vpop.f32.mrb[0].mxu0
  %v447 = vpop.f32.mrb[0].mxu0
  %v448 = vpop.f32.mrb[0].mxu0
  %449 = vdwg.mxu0
  %v450 = vsel %vm326, %v445, 0.0
  %v451 = vrot.slane %v450, 4
  %v452 = vadd.f32 %v450, %v451
  %v453 = vrot.slane %v452, 2
  %v454 = vadd.f32 %v452, %v453
  %v455 = vrot.slane %v454, 1
  %v456 = vadd.f32 %v454, %v455
  %v457 = vmul.f32 %v456, 0.125
  %v458 = vmul.f32 %v445, %v445
  %v459 = vsel %vm326, %v458, 0.0
  %v460 = vrot.slane %v459, 4
  %v461 = vadd.f32 %v459, %v460
  %v462 = vrot.slane %v461, 2
  %v463 = vadd.f32 %v461, %v462
  %v464 = vrot.slane %v463, 1
  %v465 = vadd.f32 %v463, %v464
  %v466 = vmul.f32 %v465, 0.125
  %v467 = vmul.f32 %v457, %v457
  %v468 = vsub.f32 %v466, %v467
  %v469 = vmax.f32 %v468, 0.0
  %v470 = vld [vmem:[%s2] sm:$0x1]
  %v471 = vadd.f32 %v469, 1e-05
  %v472 = vrsqrt.pop %v471
  %v473 = vmul.f32 %v470, %v472
  %v474 = vld [vmem:[%s3] sm:$0x1]
  %v475 = vmul.f32 %v457, %v473
  %v476 = vsub.f32 %v474, %v475
  %v478 = vlaneseq
  %v479 = vshrl.u32 %v478, 7
  %v480 = vsub.s32 0, %v479
  %v481 = vrot.slane %v473, %v480
  %v483 = vmul.f32 %v445, %v481
  %v485 = vlaneseq
  %v486 = vshrl.u32 %v485, 7
  %v487 = vsub.s32 0, %v486
  %v488 = vrot.slane %v476, %v487
  %v490 = vadd.f32 %v483, %v488
  %v491 = vmax.f32 %v490, 0.0
  %492 = vst.msk [vmem:[%s4] sm:$0xff] %vm326, %v491
  // Predicated region
  $region18: #{unet_forward.37} parent=0 // pred_check
    _
  $region19: #{unet_forward.37} parent=0 // pred_check_branch
    %494 = sbr.rel (0) target = $region21
  $region20: #{unet_forward.37} parent=0 // pred_region
    _
  $region21: #{unet_forward.37} parent=0 // pred_fallthru
    _
  // Predicated region
  $region22: #{unet_forward.37} parent=0 // pred_check
    _
  $region23: #{unet_forward.37} parent=0 // pred_check_branch
    %496 = sbr.rel (0) target = $region25
  $region24: #{unet_forward.37} parent=0 // pred_region
    _
  $region25: #{unet_forward.37} parent=0 // pred_fallthru
    _

// kernel: unet_forward.39
$region0: #{unet_forward.39}
  #allocation0 [shape = 'u32[]', space=smem, size = 0x4, offset = 0x4, fixed_abs, tag = 'smem constant byte address 0x4 - core index']
  #allocation1 [shape = 'u32[144,128]{1,0:T(1,128)}', space=vmem, size = 0x12000, scoped, tag = 'internal scratch']
  %s0 = inlined_call_operand.vmem [shape: bf16[8,576], index: 0, kind: input, shape index: {}]
  %s1 = inlined_call_operand.vmem [shape: bf16[576,128], index: 1, kind: input, shape index: {}]
  %s2 = inlined_call_operand.vmem [shape: f32[1,128], index: 2, kind: input, shape index: {}]
  %s3 = inlined_call_operand.vmem [shape: f32[1,128], index: 3, kind: input, shape index: {}]
  %s4 = inlined_call_operand.vmem [shape: f32[8,128], index: 4, kind: output, shape index: {}]
  %s5 = sld [smem:[#allocation0]]
  $region26: #{unet_forward.39} parent=0
    _
  %s7 = ssub.s32 1, %s5
  %s8 = scalar_select 0, %s7, %s5
  // Predicated region
  $region2: #{unet_forward.39} parent=0 // pred_check
    _
  $region3: #{unet_forward.39} parent=0 // pred_check_branch
    %10 = sbr.rel (0) target = $region5
  $region4: #{unet_forward.39} parent=0 // pred_region
    _
  $region5: #{unet_forward.39} parent=0 // pred_fallthru
    _
  // Predicated region
  $region6: #{unet_forward.39} parent=0 // pred_check
    _
  $region7: #{unet_forward.39} parent=0 // pred_check_branch
    %12 = sbr.rel (0) target = $region9
  $region8: #{unet_forward.39} parent=0 // pred_region
    _
  $region9: #{unet_forward.39} parent=0 // pred_fallthru
    _
  // Predicated region
  $region10: #{unet_forward.39} parent=0 // pred_check
    _
  $region11: #{unet_forward.39} parent=0 // pred_check_branch
    %14 = sbr.rel (0) target = $region13
  $region12: #{unet_forward.39} parent=0 // pred_region
    _
  $region13: #{unet_forward.39} parent=0 // pred_fallthru
    _
  // Predicated region
  $region14: #{unet_forward.39} parent=0 // pred_check
    _
  $region15: #{unet_forward.39} parent=0 // pred_check_branch
    %16 = sbr.rel (0) target = $region17
  $region16: #{unet_forward.39} parent=0 // pred_region
    _
  $region17: #{unet_forward.39} parent=0 // pred_fallthru
    _
  %v18 = vld [vmem:[%s0] sm:$0xff]
  %v19 = vld [vmem:[%s0 + $0x8] sm:$0xff]
  %v20 = vld [vmem:[%s0 + $0x10] sm:$0xf]
  %v21 = vld [vmem:[%s1] sm:$0xf]
  %v22 = vld [vmem:[%s1 + $0x4] sm:$0xf]
  %v23 = vld [vmem:[%s1 + $0x8] sm:$0xf]
  %v24 = vld [vmem:[%s1 + $0xc] sm:$0xf]
  %v25 = vld [vmem:[%s1 + $0x10] sm:$0xf]
  %v26 = vld [vmem:[%s1 + $0x14] sm:$0xf]
  %v27 = vld [vmem:[%s1 + $0x18] sm:$0xf]
  %v28 = vld [vmem:[%s1 + $0x1c] sm:$0xf]
  %v29 = vld [vmem:[%s1 + $0x20] sm:$0xf]
  %v30 = vld [vmem:[%s1 + $0x24] sm:$0xf]
  %v31 = vld [vmem:[%s1 + $0x28] sm:$0xf]
  %v32 = vld [vmem:[%s1 + $0x2c] sm:$0xf]
  %v33 = vld [vmem:[%s1 + $0x30] sm:$0xf]
  %v34 = vld [vmem:[%s1 + $0x34] sm:$0xf]
  %v35 = vld [vmem:[%s1 + $0x38] sm:$0xf]
  %v36 = vld [vmem:[%s1 + $0x3c] sm:$0xf]
  %v37 = vld [vmem:[%s1 + $0x40] sm:$0xf]
  %v38 = vld [vmem:[%s1 + $0x44] sm:$0xf]
  %v39 = vld [vmem:[%s1 + $0x48] sm:$0xf]
  %v40 = vld [vmem:[%s1 + $0x4c] sm:$0xf]
  %v41 = vld [vmem:[%s1 + $0x50] sm:$0xf]
  %v42 = vld [vmem:[%s1 + $0x54] sm:$0xf]
  %v43 = vld [vmem:[%s1 + $0x58] sm:$0xf]
  %v44 = vld [vmem:[%s1 + $0x5c] sm:$0xf]
  %v45 = vld [vmem:[%s1 + $0x60] sm:$0xf]
  %v46 = vld [vmem:[%s1 + $0x64] sm:$0xf]
  %v47 = vld [vmem:[%s1 + $0x68] sm:$0xf]
  %v48 = vld [vmem:[%s1 + $0x6c] sm:$0xf]
  %v49 = vld [vmem:[%s1 + $0x70] sm:$0xf]
  %v50 = vld [vmem:[%s1 + $0x74] sm:$0xf]
  %v51 = vld [vmem:[%s1 + $0x78] sm:$0xf]
  %v52 = vld [vmem:[%s1 + $0x7c] sm:$0xf]
  %v53 = vld [vmem:[%s1 + $0x80] sm:$0xf]
  %v54 = vld [vmem:[%s1 + $0x84] sm:$0xf]
  %v55 = vld [vmem:[%s1 + $0x88] sm:$0xf]
  %v56 = vld [vmem:[%s1 + $0x8c] sm:$0xf]
  %v57 = vld [vmem:[%s1 + $0x90] sm:$0xf]
  %v58 = vld [vmem:[%s1 + $0x94] sm:$0xf]
  %v59 = vld [vmem:[%s1 + $0x98] sm:$0xf]
  %v60 = vld [vmem:[%s1 + $0x9c] sm:$0xf]
  %v61 = vld [vmem:[%s1 + $0xa0] sm:$0xf]
  %v62 = vld [vmem:[%s1 + $0xa4] sm:$0xf]
  %v63 = vld [vmem:[%s1 + $0xa8] sm:$0xf]
  %v64 = vld [vmem:[%s1 + $0xac] sm:$0xf]
  %v65 = vld [vmem:[%s1 + $0xb0] sm:$0xf]
  %v66 = vld [vmem:[%s1 + $0xb4] sm:$0xf]
  %v67 = vld [vmem:[%s1 + $0xb8] sm:$0xf]
  %v68 = vld [vmem:[%s1 + $0xbc] sm:$0xf]
  %v69 = vld [vmem:[%s1 + $0xc0] sm:$0xf]
  %v70 = vld [vmem:[%s1 + $0xc4] sm:$0xf]
  %v71 = vld [vmem:[%s1 + $0xc8] sm:$0xf]
  %v72 = vld [vmem:[%s1 + $0xcc] sm:$0xf]
  %v73 = vld [vmem:[%s1 + $0xd0] sm:$0xf]
  %v74 = vld [vmem:[%s1 + $0xd4] sm:$0xf]
  %v75 = vld [vmem:[%s1 + $0xd8] sm:$0xf]
  %v76 = vld [vmem:[%s1 + $0xdc] sm:$0xf]
  %v77 = vld [vmem:[%s1 + $0xe0] sm:$0xf]
  %v78 = vld [vmem:[%s1 + $0xe4] sm:$0xf]
  %v79 = vld [vmem:[%s1 + $0xe8] sm:$0xf]
  %v80 = vld [vmem:[%s1 + $0xec] sm:$0xf]
  %v81 = vld [vmem:[%s1 + $0xf0] sm:$0xf]
  %v82 = vld [vmem:[%s1 + $0xf4] sm:$0xf]
  %v83 = vld [vmem:[%s1 + $0xf8] sm:$0xf]
  %v84 = vld [vmem:[%s1 + $0xfc] sm:$0xf]
  %v85 = vld [vmem:[%s1 + $0x100] sm:$0xf]
  %v86 = vld [vmem:[%s1 + $0x104] sm:$0xf]
  %v87 = vld [vmem:[%s1 + $0x108] sm:$0xf]
  %v88 = vld [vmem:[%s1 + $0x10c] sm:$0xf]
  %v89 = vld [vmem:[%s1 + $0x110] sm:$0xf]
  %v90 = vld [vmem:[%s1 + $0x114] sm:$0xf]
  %v91 = vld [vmem:[%s1 + $0x118] sm:$0xf]
  %v92 = vld [vmem:[%s1 + $0x11c] sm:$0xf]
  %v96 = vunpack.c.l.b16 %v18
  %v97 = vunpack.c.h.b16 %v18
  %v98 = vunpack.c.l.b16 %v19
  %v99 = vunpack.c.h.b16 %v19
  %v100 = vunpack.c.l.b16 %v20
  %v101 = vpack.c.b16 %v96, %v96
  %v102 = vpack.c.b16 %v97, %v97
  %v103 = vpack.c.b16 %v98, %v98
  %v104 = vpack.c.b16 %v99, %v99
  %v105 = vpack.c.b16 %v100, %v100
  %v182 = vunpack.c.l.b16 %v21
  %v183 = vunpack.c.l.b16 %v22
  %v184 = vunpack.c.l.b16 %v23
  %v185 = vunpack.c.l.b16 %v24
  %v186 = vunpack.c.l.b16 %v25
  %v187 = vunpack.c.l.b16 %v26
  %v188 = vunpack.c.l.b16 %v27
  %v189 = vunpack.c.l.b16 %v28
  %v190 = vunpack.c.l.b16 %v29
  %v191 = vunpack.c.l.b16 %v30
  %v192 = vunpack.c.l.b16 %v31
  %v193 = vunpack.c.l.b16 %v32
  %v194 = vunpack.c.l.b16 %v33
  %v195 = vunpack.c.l.b16 %v34
  %v196 = vunpack.c.l.b16 %v35
  %v197 = vunpack.c.l.b16 %v36
  %v198 = vunpack.c.l.b16 %v37
  %v199 = vunpack.c.l.b16 %v38
  %v200 = vunpack.c.l.b16 %v39
  %v201 = vunpack.c.l.b16 %v40
  %v202 = vunpack.c.l.b16 %v41
  %v203 = vunpack.c.l.b16 %v42
  %v204 = vunpack.c.l.b16 %v43
  %v205 = vunpack.c.l.b16 %v44
  %v206 = vunpack.c.l.b16 %v45
  %v207 = vunpack.c.l.b16 %v46
  %v208 = vunpack.c.l.b16 %v47
  %v209 = vunpack.c.l.b16 %v48
  %v210 = vunpack.c.l.b16 %v49
  %v211 = vunpack.c.l.b16 %v50
  %v212 = vunpack.c.l.b16 %v51
  %v213 = vunpack.c.l.b16 %v52
  %v214 = vunpack.c.l.b16 %v53
  %v215 = vunpack.c.l.b16 %v54
  %v216 = vunpack.c.l.b16 %v55
  %v217 = vunpack.c.l.b16 %v56
  %v218 = vunpack.c.l.b16 %v57
  %v219 = vunpack.c.l.b16 %v58
  %v220 = vunpack.c.l.b16 %v59
  %v221 = vunpack.c.l.b16 %v60
  %v222 = vunpack.c.l.b16 %v61
  %v223 = vunpack.c.l.b16 %v62
  %v224 = vunpack.c.l.b16 %v63
  %v225 = vunpack.c.l.b16 %v64
  %v226 = vunpack.c.l.b16 %v65
  %v227 = vunpack.c.l.b16 %v66
  %v228 = vunpack.c.l.b16 %v67
  %v229 = vunpack.c.l.b16 %v68
  %v230 = vunpack.c.l.b16 %v69
  %v231 = vunpack.c.l.b16 %v70
  %v232 = vunpack.c.l.b16 %v71
  %v233 = vunpack.c.l.b16 %v72
  %v234 = vunpack.c.l.b16 %v73
  %v235 = vunpack.c.l.b16 %v74
  %v236 = vunpack.c.l.b16 %v75
  %v237 = vunpack.c.l.b16 %v76
  %v238 = vunpack.c.l.b16 %v77
  %v239 = vunpack.c.l.b16 %v78
  %v240 = vunpack.c.l.b16 %v79
  %v241 = vunpack.c.l.b16 %v80
  %v242 = vunpack.c.l.b16 %v81
  %v243 = vunpack.c.l.b16 %v82
  %v244 = vunpack.c.l.b16 %v83
  %v245 = vunpack.c.l.b16 %v84
  %v246 = vunpack.c.l.b16 %v85
  %v247 = vunpack.c.l.b16 %v86
  %v248 = vunpack.c.l.b16 %v87
  %v249 = vunpack.c.l.b16 %v88
  %v250 = vunpack.c.l.b16 %v89
  %v251 = vunpack.c.l.b16 %v90
  %v252 = vunpack.c.l.b16 %v91
  %v253 = vunpack.c.l.b16 %v92
  %v254 = vpack.c.b16 %v183, %v182
  %v255 = vpack.c.b16 %v185, %v184
  %v256 = vpack.c.b16 %v187, %v186
  %v257 = vpack.c.b16 %v189, %v188
  %v258 = vpack.c.b16 %v191, %v190
  %v259 = vpack.c.b16 %v193, %v192
  %v260 = vpack.c.b16 %v195, %v194
  %v261 = vpack.c.b16 %v197, %v196
  %v262 = vpack.c.b16 %v199, %v198
  %v263 = vpack.c.b16 %v201, %v200
  %v264 = vpack.c.b16 %v203, %v202
  %v265 = vpack.c.b16 %v205, %v204
  %v266 = vpack.c.b16 %v207, %v206
  %v267 = vpack.c.b16 %v209, %v208
  %v268 = vpack.c.b16 %v211, %v210
  %v269 = vpack.c.b16 %v213, %v212
  %v270 = vpack.c.b16 %v215, %v214
  %v271 = vpack.c.b16 %v217, %v216
  %v272 = vpack.c.b16 %v219, %v218
  %v273 = vpack.c.b16 %v221, %v220
  %v274 = vpack.c.b16 %v223, %v222
  %v275 = vpack.c.b16 %v225, %v224
  %v276 = vpack.c.b16 %v227, %v226
  %v277 = vpack.c.b16 %v229, %v228
  %v278 = vpack.c.b16 %v231, %v230
  %v279 = vpack.c.b16 %v233, %v232
  %v280 = vpack.c.b16 %v235, %v234
  %v281 = vpack.c.b16 %v237, %v236
  %v282 = vpack.c.b16 %v239, %v238
  %v283 = vpack.c.b16 %v241, %v240
  %v284 = vpack.c.b16 %v243, %v242
  %v285 = vpack.c.b16 %v245, %v244
  %v286 = vpack.c.b16 %v247, %v246
  %v287 = vpack.c.b16 %v249, %v248
  %v288 = vpack.c.b16 %v251, %v250
  %v289 = vpack.c.b16 %v253, %v252
  %vm326 = vcmask 523264
  %v328 = vsel %vm326, %v105, 0
  %330 = vmatprep.subr.bf16.mxu0 0
  %331 = vmatpush1.bf16.msra.mxu0 %v254
  %332 = vmatprep.subr.bf16.mxu0 0
  %333 = vmatpush1.bf16.msra.mxu0 %v255
  %334 = vmatprep.subr.bf16.mxu0 0
  %335 = vmatpush1.bf16.msra.mxu0 %v256
  %336 = vmatprep.subr.bf16.mxu0 0
  %337 = vmatpush1.bf16.msra.mxu0 %v257
  %338 = vmatprep.subr.bf16.mxu0 0
  %339 = vmatpush1.bf16.msra.mxu0 %v258
  %340 = vmatprep.subr.bf16.mxu0 0
  %341 = vmatpush1.bf16.msra.mxu0 %v259
  %342 = vmatprep.subr.bf16.mxu0 0
  %343 = vmatpush1.bf16.msra.mxu0 %v260
  %344 = vmatprep.subr.bf16.mxu0 0
  %345 = vmatpush1.bf16.msra.mxu0 %v261
  %346 = vmatprep.subr.bf16.mxu0 0
  %347 = vmatpush1.bf16.msra.mxu0 %v262
  %348 = vmatprep.subr.bf16.mxu0 0
  %349 = vmatpush1.bf16.msra.mxu0 %v263
  %350 = vmatprep.subr.bf16.mxu0 0
  %351 = vmatpush1.bf16.msra.mxu0 %v264
  %352 = vmatprep.subr.bf16.mxu0 0
  %353 = vmatpush1.bf16.msra.mxu0 %v265
  %354 = vmatprep.subr.bf16.mxu0 0
  %355 = vmatpush1.bf16.msra.mxu0 %v266
  %356 = vmatprep.subr.bf16.mxu0 0
  %357 = vmatpush1.bf16.msra.mxu0 %v267
  %358 = vmatprep.subr.bf16.mxu0 0
  %359 = vmatpush1.bf16.msra.mxu0 %v268
  %360 = vmatprep.subr.bf16.mxu0 0
  %361 = vmatpush1.bf16.msra.mxu0 %v269
  %362 = vmatprep.mubr.bf16.mxu0 %v102
  %363 = vmatmul.mubr.bf16.gmra.mrb[0].mxu0 %v101
  %v364 = vpop.f32.mrb[0].mxu0
  %v365 = vadd.f32 0.0, %v364
  %v366 = vpop.f32.mrb[0].mxu0
  %v367 = vpop.f32.mrb[0].mxu0
  %v368 = vpop.f32.mrb[0].mxu0
  %369 = vdwg.mxu0
  %370 = vmatprep.subr.bf16.mxu0 0
  %371 = vmatpush1.bf16.msra.mxu0 %v270
  %372 = vmatprep.subr.bf16.mxu0 0
  %373 = vmatpush1.bf16.msra.mxu0 %v271
  %374 = vmatprep.subr.bf16.mxu0 0
  %375 = vmatpush1.bf16.msra.mxu0 %v272
  %376 = vmatprep.subr.bf16.mxu0 0
  %377 = vmatpush1.bf16.msra.mxu0 %v273
  %378 = vmatprep.subr.bf16.mxu0 0
  %379 = vmatpush1.bf16.msra.mxu0 %v274
  %380 = vmatprep.subr.bf16.mxu0 0
  %381 = vmatpush1.bf16.msra.mxu0 %v275
  %382 = vmatprep.subr.bf16.mxu0 0
  %383 = vmatpush1.bf16.msra.mxu0 %v276
  %384 = vmatprep.subr.bf16.mxu0 0
  %385 = vmatpush1.bf16.msra.mxu0 %v277
  %386 = vmatprep.subr.bf16.mxu0 0
  %387 = vmatpush1.bf16.msra.mxu0 %v278
  %388 = vmatprep.subr.bf16.mxu0 0
  %389 = vmatpush1.bf16.msra.mxu0 %v279
  %390 = vmatprep.subr.bf16.mxu0 0
  %391 = vmatpush1.bf16.msra.mxu0 %v280
  %392 = vmatprep.subr.bf16.mxu0 0
  %393 = vmatpush1.bf16.msra.mxu0 %v281
  %394 = vmatprep.subr.bf16.mxu0 0
  %395 = vmatpush1.bf16.msra.mxu0 %v282
  %396 = vmatprep.subr.bf16.mxu0 0
  %397 = vmatpush1.bf16.msra.mxu0 %v283
  %398 = vmatprep.subr.bf16.mxu0 0
  %399 = vmatpush1.bf16.msra.mxu0 %v284
  %400 = vmatprep.subr.bf16.mxu0 0
  %401 = vmatpush1.bf16.msra.mxu0 %v285
  %402 = vmatprep.mubr.bf16.mxu0 %v104
  %403 = vmatmul.mubr.bf16.gmra.mrb[0].mxu0 %v103
  %v404 = vpop.f32.mrb[0].mxu0
  %v405 = vadd.f32 %v365, %v404
  %v406 = vpop.f32.mrb[0].mxu0
  %v407 = vpop.f32.mrb[0].mxu0
  %v408 = vpop.f32.mrb[0].mxu0
  %409 = vdwg.mxu0
  %410 = vmatprep.subr.bf16.mxu0 0
  %411 = vmatpush1.bf16.msra.mxu0 %v286
  %412 = vmatprep.subr.bf16.mxu0 0
  %413 = vmatpush1.bf16.msra.mxu0 %v287
  %414 = vmatprep.subr.bf16.mxu0 0
  %415 = vmatpush1.bf16.msra.mxu0 %v288
  %416 = vmatprep.subr.bf16.mxu0 0
  %417 = vmatpush1.bf16.msra.mxu0 %v289
  %418 = vmatprep.subr.bf16.mxu0 0
  %419 = vmatpush1.bf16.msra.mxu0 0
  %420 = vmatprep.subr.bf16.mxu0 0
  %421 = vmatpush1.bf16.msra.mxu0 0
  %422 = vmatprep.subr.bf16.mxu0 0
  %423 = vmatpush1.bf16.msra.mxu0 0
  %424 = vmatprep.subr.bf16.mxu0 0
  %425 = vmatpush1.bf16.msra.mxu0 0
  %426 = vmatprep.subr.bf16.mxu0 0
  %427 = vmatpush1.bf16.msra.mxu0 0
  %428 = vmatprep.subr.bf16.mxu0 0
  %429 = vmatpush1.bf16.msra.mxu0 0
  %430 = vmatprep.subr.bf16.mxu0 0
  %431 = vmatpush1.bf16.msra.mxu0 0
  %432 = vmatprep.subr.bf16.mxu0 0
  %433 = vmatpush1.bf16.msra.mxu0 0
  %434 = vmatprep.subr.bf16.mxu0 0
  %435 = vmatpush1.bf16.msra.mxu0 0
  %436 = vmatprep.subr.bf16.mxu0 0
  %437 = vmatpush1.bf16.msra.mxu0 0
  %438 = vmatprep.subr.bf16.mxu0 0
  %439 = vmatpush1.bf16.msra.mxu0 0
  %440 = vmatprep.subr.bf16.mxu0 0
  %441 = vmatpush1.bf16.msra.mxu0 0
  %442 = vmatprep.mubr.bf16.mxu0 0
  %443 = vmatmul.mubr.bf16.gmra.mrb[0].mxu0 %v328
  %v444 = vpop.f32.mrb[0].mxu0
  %v445 = vadd.f32 %v405, %v444
  %v446 = vpop.f32.mrb[0].mxu0
  %v447 = vpop.f32.mrb[0].mxu0
  %v448 = vpop.f32.mrb[0].mxu0
  %449 = vdwg.mxu0
  %v450 = vrot.slane %v445, 4
  %v451 = vadd.f32 %v445, %v450
  %v452 = vrot.slane %v451, 2
  %v453 = vadd.f32 %v451, %v452
  %v454 = vrot.slane %v453, 1
  %v455 = vadd.f32 %v453, %v454
  %v456 = vmul.f32 %v455, 0.5
  %v457 = vmul.f32 %v445, %v445
  %v458 = vrot.slane %v457, 4
  %v459 = vadd.f32 %v457, %v458
  %v460 = vrot.slane %v459, 2
  %v461 = vadd.f32 %v459, %v460
  %v462 = vrot.slane %v461, 1
  %v463 = vadd.f32 %v461, %v462
  %v464 = vmul.f32 %v463, 0.5
  %v465 = vmul.f32 %v456, %v456
  %v466 = vsub.f32 %v464, %v465
  %v467 = vmax.f32 %v466, 0.0
  %v468 = vld [vmem:[%s2] sm:$0x1]
  %v469 = vadd.f32 %v467, 1e-05
  %v470 = vrsqrt.pop %v469
  %v471 = vmul.f32 %v468, %v470
  %v472 = vld [vmem:[%s3] sm:$0x1]
  %v473 = vmul.f32 %v456, %v471
  %v474 = vsub.f32 %v472, %v473
  %v476 = vlaneseq
  %v477 = vshrl.u32 %v476, 7
  %v478 = vsub.s32 0, %v477
  %v479 = vrot.slane %v471, %v478
  %v481 = vmul.f32 %v445, %v479
  %v483 = vlaneseq
  %v484 = vshrl.u32 %v483, 7
  %v485 = vsub.s32 0, %v484
  %v486 = vrot.slane %v474, %v485
  %v488 = vadd.f32 %v481, %v486
  %v489 = vmax.f32 %v488, 0.0
  %490 = vst [vmem:[%s4] sm:$0xff] %v489
  // Predicated region
  $region18: #{unet_forward.39} parent=0 // pred_check
    _
  $region19: #{unet_forward.39} parent=0 // pred_check_branch
    %492 = sbr.rel (0) target = $region21
  $region20: #{unet_forward.39} parent=0 // pred_region
    _
  $region21: #{unet_forward.39} parent=0 // pred_fallthru
    _
  // Predicated region
  $region22: #{unet_forward.39} parent=0 // pred_check
    _
  $region23: #{unet_forward.39} parent=0 // pred_check_branch
    %494 = sbr.rel (0) target = $region25
  $region24: #{unet_forward.39} parent=0 // pred_region
    _
  $region25: #{unet_forward.39} parent=0 // pred_fallthru
    _

// kernel: tile.23
$region0: #{tile.23}
  #allocation0 [shape = 's32[1]{0}', space=sflag, size = 0x4, scoped, tag = 'scoped memory for tile.23']
  %s0 = inlined_call_operand.vmem [shape: f32[64], index: 0, kind: input, shape index: {}]
  %s1 = inlined_call_operand.vmem [shape: f32[4,64], index: 1, kind: output, shape index: {}]
  // Predicated region
  $region2: #{tile.23} parent=0 // pred_check
    _
  $region3: #{tile.23} parent=0 // pred_check_branch
    %3 = sbr.rel (0) target = $region5
  $region4: #{tile.23} parent=0 // pred_region
    _
  $region5: #{tile.23} parent=0 // pred_fallthru
    _
  %v4 = vld [vmem:[%s0] ss:$0 sm:$0xff]
  %5 = vst [vmem:[%s1] sm:$0xf] %v4

// kernel: tile.24
$region0: #{tile.24}
  %s0 = inlined_call_operand.vmem [shape: f32[4,64], index: 0, kind: input, shape index: {}]
  %s1 = inlined_call_operand.vmem [shape: f32[1,256], index: 1, kind: output, shape index: {}]
  $region1: #{tile.24} parent=0
    #allocation0 [shape = 'u8[8192]{0}', space=vmem, size = 0x2000, scoped, tag = 'scoped mem for output reshape']
    #allocation1 [shape = 'u8[4096]{0}', space=vmem, size = 0x1000, scoped, tag = 'scoped mem for input reshape']
    %s3 = sshllo.u32 0, 4
    %v4 = vld [vmem:[%s0] sm:%s3]
    %5 = vst [vmem:[#allocation1] sm:%s3] %v4
    %s6 = smov 3
    %v7 = vld [vmem:[#allocation1] ss:$2 sm:%s6]
    %vm8 = vcmask 523264
    %9 = vst.msk [vmem:[#allocation0] ss:$8 sm:$0x3] %vm8, %v7
    %s10 = scalar_lea.vmem [#allocation1], 1
    %s11 = smov 3
    %v12 = vld [vmem:[%s10] ss:$2 sm:%s11]
    %13 = vrot.lane.b32.xlu0 %v12, 64
    %v14 = vpop.permute.xlu0 %13
    %vm15 = vcmask 1048064
    %16 = vst.msk [vmem:[#allocation0] ss:$8 sm:$0x3] %vm15, %v14
    %s18 = sshllo.u32 0, 1
    %v20 = vld [vmem:[#allocation0] sm:%s18]
    %s21 = sshllo.u32 0, 1
    %22 = vst [vmem:[%s1] sm:%s21] %v20
    %s23 = scalar_lea.vmem [#allocation0], 8
    %v24 = vld [vmem:[%s23] sm:%s18]
    %s25 = sshllo.u32 0, 1
    %s26 = scalar_lea.vmem %s1, 1
    %27 = vst [vmem:[%s26] sm:%s25] %v24

// kernel: unet_forward.40
$region0: #{unet_forward.40}
  #allocation0 [shape = 'u32[]', space=smem, size = 0x4, offset = 0x4, fixed_abs, tag = 'smem constant byte address 0x4 - core index']
  #allocation1 [shape = 'u32[144,128]{1,0:T(1,128)}', space=vmem, size = 0x12000, scoped, tag = 'internal scratch']
  %s0 = inlined_call_operand.vmem [shape: bf16[8,1152], index: 0, kind: input, shape index: {}]
  %s1 = inlined_call_operand.vmem [shape: bf16[1152,128], index: 1, kind: input, shape index: {}]
  %s2 = inlined_call_operand.vmem [shape: f32[1,128], index: 2, kind: input, shape index: {}]
  %s3 = inlined_call_operand.vmem [shape: f32[1,128], index: 3, kind: input, shape index: {}]
  %s4 = inlined_call_operand.vmem [shape: f32[8,128], index: 4, kind: output, shape index: {}]
  %s5 = sld [smem:[#allocation0]]
  $region26: #{unet_forward.40} parent=0
    _
  %s7 = ssub.s32 1, %s5
  %s8 = scalar_select 0, %s7, %s5
  // Predicated region
  $region2: #{unet_forward.40} parent=0 // pred_check
    _
  $region3: #{unet_forward.40} parent=0 // pred_check_branch
    %10 = sbr.rel (0) target = $region5
  $region4: #{unet_forward.40} parent=0 // pred_region
    _
  $region5: #{unet_forward.40} parent=0 // pred_fallthru
    _
  // Predicated region
  $region6: #{unet_forward.40} parent=0 // pred_check
    _
  $region7: #{unet_forward.40} parent=0 // pred_check_branch
    %12 = sbr.rel (0) target = $region9
  $region8: #{unet_forward.40} parent=0 // pred_region
    _
  $region9: #{unet_forward.40} parent=0 // pred_fallthru
    _
  // Predicated region
  $region10: #{unet_forward.40} parent=0 // pred_check
    _
  $region11: #{unet_forward.40} parent=0 // pred_check_branch
    %14 = sbr.rel (0) target = $region13
  $region12: #{unet_forward.40} parent=0 // pred_region
    _
  $region13: #{unet_forward.40} parent=0 // pred_fallthru
    _
  // Predicated region
  $region14: #{unet_forward.40} parent=0 // pred_check
    _
  $region15: #{unet_forward.40} parent=0 // pred_check_branch
    %16 = sbr.rel (0) target = $region17
  $region16: #{unet_forward.40} parent=0 // pred_region
    _
  $region17: #{unet_forward.40} parent=0 // pred_fallthru
    _
  %v18 = vld [vmem:[%s0] sm:$0xff]
  %v19 = vld [vmem:[%s0 + $0x8] sm:$0xff]
  %v20 = vld [vmem:[%s0 + $0x10] sm:$0xff]
  %v21 = vld [vmem:[%s0 + $0x18] sm:$0xff]
  %v22 = vld [vmem:[%s0 + $0x20] sm:$0xf]
  %v23 = vld [vmem:[%s1] sm:$0xf]
  %v24 = vld [vmem:[%s1 + $0x4] sm:$0xf]
  %v25 = vld [vmem:[%s1 + $0x8] sm:$0xf]
  %v26 = vld [vmem:[%s1 + $0xc] sm:$0xf]
  %v27 = vld [vmem:[%s1 + $0x10] sm:$0xf]
  %v28 = vld [vmem:[%s1 + $0x14] sm:$0xf]
  %v29 = vld [vmem:[%s1 + $0x18] sm:$0xf]
  %v30 = vld [vmem:[%s1 + $0x1c] sm:$0xf]
  %v31 = vld [vmem:[%s1 + $0x20] sm:$0xf]
  %v32 = vld [vmem:[%s1 + $0x24] sm:$0xf]
  %v33 = vld [vmem:[%s1 + $0x28] sm:$0xf]
  %v34 = vld [vmem:[%s1 + $0x2c] sm:$0xf]
  %v35 = vld [vmem:[%s1 + $0x30] sm:$0xf]
  %v36 = vld [vmem:[%s1 + $0x34] sm:$0xf]
  %v37 = vld [vmem:[%s1 + $0x38] sm:$0xf]
  %v38 = vld [vmem:[%s1 + $0x3c] sm:$0xf]
  %v39 = vld [vmem:[%s1 + $0x40] sm:$0xf]
  %v40 = vld [vmem:[%s1 + $0x44] sm:$0xf]
  %v41 = vld [vmem:[%s1 + $0x48] sm:$0xf]
  %v42 = vld [vmem:[%s1 + $0x4c] sm:$0xf]
  %v43 = vld [vmem:[%s1 + $0x50] sm:$0xf]
  %v44 = vld [vmem:[%s1 + $0x54] sm:$0xf]
  %v45 = vld [vmem:[%s1 + $0x58] sm:$0xf]
  %v46 = vld [vmem:[%s1 + $0x5c] sm:$0xf]
  %v47 = vld [vmem:[%s1 + $0x60] sm:$0xf]
  %v48 = vld [vmem:[%s1 + $0x64] sm:$0xf]
  %v49 = vld [vmem:[%s1 + $0x68] sm:$0xf]
  %v50 = vld [vmem:[%s1 + $0x6c] sm:$0xf]
  %v51 = vld [vmem:[%s1 + $0x70] sm:$0xf]
  %v52 = vld [vmem:[%s1 + $0x74] sm:$0xf]
  %v53 = vld [vmem:[%s1 + $0x78] sm:$0xf]
  %v54 = vld [vmem:[%s1 + $0x7c] sm:$0xf]
  %v55 = vld [vmem:[%s1 + $0x80] sm:$0xf]
  %v56 = vld [vmem:[%s1 + $0x84] sm:$0xf]
  %v57 = vld [vmem:[%s1 + $0x88] sm:$0xf]
  %v58 = vld [vmem:[%s1 + $0x8c] sm:$0xf]
  %v59 = vld [vmem:[%s1 + $0x90] sm:$0xf]
  %v60 = vld [vmem:[%s1 + $0x94] sm:$0xf]
  %v61 = vld [vmem:[%s1 + $0x98] sm:$0xf]
  %v62 = vld [vmem:[%s1 + $0x9c] sm:$0xf]
  %v63 = vld [vmem:[%s1 + $0xa0] sm:$0xf]
  %v64 = vld [vmem:[%s1 + $0xa4] sm:$0xf]
  %v65 = vld [vmem:[%s1 + $0xa8] sm:$0xf]
  %v66 = vld [vmem:[%s1 + $0xac] sm:$0xf]
  %v67 = vld [vmem:[%s1 + $0xb0] sm:$0xf]
  %v68 = vld [vmem:[%s1 + $0xb4] sm:$0xf]
  %v69 = vld [vmem:[%s1 + $0xb8] sm:$0xf]
  %v70 = vld [vmem:[%s1 + $0xbc] sm:$0xf]
  %v71 = vld [vmem:[%s1 + $0xc0] sm:$0xf]
  %v72 = vld [vmem:[%s1 + $0xc4] sm:$0xf]
  %v73 = vld [vmem:[%s1 + $0xc8] sm:$0xf]
  %v74 = vld [vmem:[%s1 + $0xcc] sm:$0xf]
  %v75 = vld [vmem:[%s1 + $0xd0] sm:$0xf]
  %v76 = vld [vmem:[%s1 + $0xd4] sm:$0xf]
  %v77 = vld [vmem:[%s1 + $0xd8] sm:$0xf]
  %v78 = vld [vmem:[%s1 + $0xdc] sm:$0xf]
  %v79 = vld [vmem:[%s1 + $0xe0] sm:$0xf]
  %v80 = vld [vmem:[%s1 + $0xe4] sm:$0xf]
  %v81 = vld [vmem:[%s1 + $0xe8] sm:$0xf]
  %v82 = vld [vmem:[%s1 + $0xec] sm:$0xf]
  %v83 = vld [vmem:[%s1 + $0xf0] sm:$0xf]
  %v84 = vld [vmem:[%s1 + $0xf4] sm:$0xf]
  %v85 = vld [vmem:[%s1 + $0xf8] sm:$0xf]
  %v86 = vld [vmem:[%s1 + $0xfc] sm:$0xf]
  %v87 = vld [vmem:[%s1 + $0x100] sm:$0xf]
  %v88 = vld [vmem:[%s1 + $0x104] sm:$0xf]
  %v89 = vld [vmem:[%s1 + $0x108] sm:$0xf]
  %v90 = vld [vmem:[%s1 + $0x10c] sm:$0xf]
  %v91 = vld [vmem:[%s1 + $0x110] sm:$0xf]
  %v92 = vld [vmem:[%s1 + $0x114] sm:$0xf]
  %v93 = vld [vmem:[%s1 + $0x118] sm:$0xf]
  %v94 = vld [vmem:[%s1 + $0x11c] sm:$0xf]
  %v95 = vld [vmem:[%s1 + $0x120] sm:$0xf]
  %v96 = vld [vmem:[%s1 + $0x124] sm:$0xf]
  %v97 = vld [vmem:[%s1 + $0x128] sm:$0xf]
  %v98 = vld [vmem:[%s1 + $0x12c] sm:$0xf]
  %v99 = vld [vmem:[%s1 + $0x130] sm:$0xf]
  %v100 = vld [vmem:[%s1 + $0x134] sm:$0xf]
  %v101 = vld [vmem:[%s1 + $0x138] sm:$0xf]
  %v102 = vld [vmem:[%s1 + $0x13c] sm:$0xf]
  %v103 = vld [vmem:[%s1 + $0x140] sm:$0xf]
  %v104 = vld [vmem:[%s1 + $0x144] sm:$0xf]
  %v105 = vld [vmem:[%s1 + $0x148] sm:$0xf]
  %v106 = vld [vmem:[%s1 + $0x14c] sm:$0xf]
  %v107 = vld [vmem:[%s1 + $0x150] sm:$0xf]
  %v108 = vld [vmem:[%s1 + $0x154] sm:$0xf]
  %v109 = vld [vmem:[%s1 + $0x158] sm:$0xf]
  %v110 = vld [vmem:[%s1 + $0x15c] sm:$0xf]
  %v111 = vld [vmem:[%s1 + $0x160] sm:$0xf]
  %v112 = vld [vmem:[%s1 + $0x164] sm:$0xf]
  %v113 = vld [vmem:[%s1 + $0x168] sm:$0xf]
  %v114 = vld [vmem:[%s1 + $0x16c] sm:$0xf]
  %v115 = vld [vmem:[%s1 + $0x170] sm:$0xf]
  %v116 = vld [vmem:[%s1 + $0x174] sm:$0xf]
  %v117 = vld [vmem:[%s1 + $0x178] sm:$0xf]
  %v118 = vld [vmem:[%s1 + $0x17c] sm:$0xf]
  %v119 = vld [vmem:[%s1 + $0x180] sm:$0xf]
  %v120 = vld [vmem:[%s1 + $0x184] sm:$0xf]
  %v121 = vld [vmem:[%s1 + $0x188] sm:$0xf]
  %v122 = vld [vmem:[%s1 + $0x18c] sm:$0xf]
  %v123 = vld [vmem:[%s1 + $0x190] sm:$0xf]
  %v124 = vld [vmem:[%s1 + $0x194] sm:$0xf]
  %v125 = vld [vmem:[%s1 + $0x198] sm:$0xf]
  %v126 = vld [vmem:[%s1 + $0x19c] sm:$0xf]
  %v127 = vld [vmem:[%s1 + $0x1a0] sm:$0xf]
  %v128 = vld [vmem:[%s1 + $0x1a4] sm:$0xf]
  %v129 = vld [vmem:[%s1 + $0x1a8] sm:$0xf]
  %v130 = vld [vmem:[%s1 + $0x1ac] sm:$0xf]
  %v131 = vld [vmem:[%s1 + $0x1b0] sm:$0xf]
  %v132 = vld [vmem:[%s1 + $0x1b4] sm:$0xf]
  %v133 = vld [vmem:[%s1 + $0x1b8] sm:$0xf]
  %v134 = vld [vmem:[%s1 + $0x1bc] sm:$0xf]
  %v135 = vld [vmem:[%s1 + $0x1c0] sm:$0xf]
  %v136 = vld [vmem:[%s1 + $0x1c4] sm:$0xf]
  %v137 = vld [vmem:[%s1 + $0x1c8] sm:$0xf]
  %v138 = vld [vmem:[%s1 + $0x1cc] sm:$0xf]
  %v139 = vld [vmem:[%s1 + $0x1d0] sm:$0xf]
  %v140 = vld [vmem:[%s1 + $0x1d4] sm:$0xf]
  %v141 = vld [vmem:[%s1 + $0x1d8] sm:$0xf]
  %v142 = vld [vmem:[%s1 + $0x1dc] sm:$0xf]
  %v143 = vld [vmem:[%s1 + $0x1e0] sm:$0xf]
  %v144 = vld [vmem:[%s1 + $0x1e4] sm:$0xf]
  %v145 = vld [vmem:[%s1 + $0x1e8] sm:$0xf]
  %v146 = vld [vmem:[%s1 + $0x1ec] sm:$0xf]
  %v147 = vld [vmem:[%s1 + $0x1f0] sm:$0xf]
  %v148 = vld [vmem:[%s1 + $0x1f4] sm:$0xf]
  %v149 = vld [vmem:[%s1 + $0x1f8] sm:$0xf]
  %v150 = vld [vmem:[%s1 + $0x1fc] sm:$0xf]
  %v151 = vld [vmem:[%s1 + $0x200] sm:$0xf]
  %v152 = vld [vmem:[%s1 + $0x204] sm:$0xf]
  %v153 = vld [vmem:[%s1 + $0x208] sm:$0xf]
  %v154 = vld [vmem:[%s1 + $0x20c] sm:$0xf]
  %v155 = vld [vmem:[%s1 + $0x210] sm:$0xf]
  %v156 = vld [vmem:[%s1 + $0x214] sm:$0xf]
  %v157 = vld [vmem:[%s1 + $0x218] sm:$0xf]
  %v158 = vld [vmem:[%s1 + $0x21c] sm:$0xf]
  %v159 = vld [vmem:[%s1 + $0x220] sm:$0xf]
  %v160 = vld [vmem:[%s1 + $0x224] sm:$0xf]
  %v161 = vld [vmem:[%s1 + $0x228] sm:$0xf]
  %v162 = vld [vmem:[%s1 + $0x22c] sm:$0xf]
  %v163 = vld [vmem:[%s1 + $0x230] sm:$0xf]
  %v164 = vld [vmem:[%s1 + $0x234] sm:$0xf]
  %v165 = vld [vmem:[%s1 + $0x238] sm:$0xf]
  %v166 = vld [vmem:[%s1 + $0x23c] sm:$0xf]
  %v172 = vunpack.c.l.b16 %v18
  %v173 = vunpack.c.h.b16 %v18
  %v174 = vunpack.c.l.b16 %v19
  %v175 = vunpack.c.h.b16 %v19
  %v176 = vunpack.c.l.b16 %v20
  %v177 = vunpack.c.h.b16 %v20
  %v178 = vunpack.c.l.b16 %v21
  %v179 = vunpack.c.h.b16 %v21
  %v180 = vunpack.c.l.b16 %v22
  %v181 = vpack.c.b16 %v172, %v172
  %v182 = vpack.c.b16 %v173, %v173
  %v183 = vpack.c.b16 %v174, %v174
  %v184 = vpack.c.b16 %v175, %v175
  %v185 = vpack.c.b16 %v176, %v176
  %v186 = vpack.c.b16 %v177, %v177
  %v187 = vpack.c.b16 %v178, %v178
  %v188 = vpack.c.b16 %v179, %v179
  %v189 = vpack.c.b16 %v180, %v180
  %v343 = vunpack.c.l.b16 %v23
  %v344 = vunpack.c.l.b16 %v24
  %v345 = vunpack.c.l.b16 %v25
  %v346 = vunpack.c.l.b16 %v26
  %v347 = vunpack.c.l.b16 %v27
  %v348 = vunpack.c.l.b16 %v28
  %v349 = vunpack.c.l.b16 %v29
  %v350 = vunpack.c.l.b16 %v30
  %v351 = vunpack.c.l.b16 %v31
  %v352 = vunpack.c.l.b16 %v32
  %v353 = vunpack.c.l.b16 %v33
  %v354 = vunpack.c.l.b16 %v34
  %v355 = vunpack.c.l.b16 %v35
  %v356 = vunpack.c.l.b16 %v36
  %v357 = vunpack.c.l.b16 %v37
  %v358 = vunpack.c.l.b16 %v38
  %v359 = vunpack.c.l.b16 %v39
  %v360 = vunpack.c.l.b16 %v40
  %v361 = vunpack.c.l.b16 %v41
  %v362 = vunpack.c.l.b16 %v42
  %v363 = vunpack.c.l.b16 %v43
  %v364 = vunpack.c.l.b16 %v44
  %v365 = vunpack.c.l.b16 %v45
  %v366 = vunpack.c.l.b16 %v46
  %v367 = vunpack.c.l.b16 %v47
  %v368 = vunpack.c.l.b16 %v48
  %v369 = vunpack.c.l.b16 %v49
  %v370 = vunpack.c.l.b16 %v50
  %v371 = vunpack.c.l.b16 %v51
  %v372 = vunpack.c.l.b16 %v52
  %v373 = vunpack.c.l.b16 %v53
  %v374 = vunpack.c.l.b16 %v54
  %v375 = vunpack.c.l.b16 %v55
  %v376 = vunpack.c.l.b16 %v56
  %v377 = vunpack.c.l.b16 %v57
  %v378 = vunpack.c.l.b16 %v58
  %v379 = vunpack.c.l.b16 %v59
  %v380 = vunpack.c.l.b16 %v60
  %v381 = vunpack.c.l.b16 %v61
  %v382 = vunpack.c.l.b16 %v62
  %v383 = vunpack.c.l.b16 %v63
  %v384 = vunpack.c.l.b16 %v64
  %v385 = vunpack.c.l.b16 %v65
  %v386 = vunpack.c.l.b16 %v66
  %v387 = vunpack.c.l.b16 %v67
  %v388 = vunpack.c.l.b16 %v68
  %v389 = vunpack.c.l.b16 %v69
  %v390 = vunpack.c.l.b16 %v70
  %v391 = vunpack.c.l.b16 %v71
  %v392 = vunpack.c.l.b16 %v72
  %v393 = vunpack.c.l.b16 %v73
  %v394 = vunpack.c.l.b16 %v74
  %v395 = vunpack.c.l.b16 %v75
  %v396 = vunpack.c.l.b16 %v76
  %v397 = vunpack.c.l.b16 %v77
  %v398 = vunpack.c.l.b16 %v78
  %v399 = vunpack.c.l.b16 %v79
  %v400 = vunpack.c.l.b16 %v80
  %v401 = vunpack.c.l.b16 %v81
  %v402 = vunpack.c.l.b16 %v82
  %v403 = vunpack.c.l.b16 %v83
  %v404 = vunpack.c.l.b16 %v84
  %v405 = vunpack.c.l.b16 %v85
  %v406 = vunpack.c.l.b16 %v86
  %v407 = vunpack.c.l.b16 %v87
  %v408 = vunpack.c.l.b16 %v88
  %v409 = vunpack.c.l.b16 %v89
  %v410 = vunpack.c.l.b16 %v90
  %v411 = vunpack.c.l.b16 %v91
  %v412 = vunpack.c.l.b16 %v92
  %v413 = vunpack.c.l.b16 %v93
  %v414 = vunpack.c.l.b16 %v94
  %v415 = vunpack.c.l.b16 %v95
  %v416 = vunpack.c.l.b16 %v96
  %v417 = vunpack.c.l.b16 %v97
  %v418 = vunpack.c.l.b16 %v98
  %v419 = vunpack.c.l.b16 %v99
  %v420 = vunpack.c.l.b16 %v100
  %v421 = vunpack.c.l.b16 %v101
  %v422 = vunpack.c.l.b16 %v102
  %v423 = vunpack.c.l.b16 %v103
  %v424 = vunpack.c.l.b16 %v104
  %v425 = vunpack.c.l.b16 %v105
  %v426 = vunpack.c.l.b16 %v106
  %v427 = vunpack.c.l.b16 %v107
  %v428 = vunpack.c.l.b16 %v108
  %v429 = vunpack.c.l.b16 %v109
  %v430 = vunpack.c.l.b16 %v110
  %v431 = vunpack.c.l.b16 %v111
  %v432 = vunpack.c.l.b16 %v112
  %v433 = vunpack.c.l.b16 %v113
  %v434 = vunpack.c.l.b16 %v114
  %v435 = vunpack.c.l.b16 %v115
  %v436 = vunpack.c.l.b16 %v116
  %v437 = vunpack.c.l.b16 %v117
  %v438 = vunpack.c.l.b16 %v118
  %v439 = vunpack.c.l.b16 %v119
  %v440 = vunpack.c.l.b16 %v120
  %v441 = vunpack.c.l.b16 %v121
  %v442 = vunpack.c.l.b16 %v122
  %v443 = vunpack.c.l.b16 %v123
  %v444 = vunpack.c.l.b16 %v124
  %v445 = vunpack.c.l.b16 %v125
  %v446 = vunpack.c.l.b16 %v126
  %v447 = vunpack.c.l.b16 %v127
  %v448 = vunpack.c.l.b16 %v128
  %v449 = vunpack.c.l.b16 %v129
  %v450 = vunpack.c.l.b16 %v130
  %v451 = vunpack.c.l.b16 %v131
  %v452 = vunpack.c.l.b16 %v132
  %v453 = vunpack.c.l.b16 %v133
  %v454 = vunpack.c.l.b16 %v134
  %v455 = vunpack.c.l.b16 %v135
  %v456 = vunpack.c.l.b16 %v136
  %v457 = vunpack.c.l.b16 %v137
  %v458 = vunpack.c.l.b16 %v138
  %v459 = vunpack.c.l.b16 %v139
  %v460 = vunpack.c.l.b16 %v140
  %v461 = vunpack.c.l.b16 %v141
  %v462 = vunpack.c.l.b16 %v142
  %v463 = vunpack.c.l.b16 %v143
  %v464 = vunpack.c.l.b16 %v144
  %v465 = vunpack.c.l.b16 %v145
  %v466 = vunpack.c.l.b16 %v146
  %v467 = vunpack.c.l.b16 %v147
  %v468 = vunpack.c.l.b16 %v148
  %v469 = vunpack.c.l.b16 %v149
  %v470 = vunpack.c.l.b16 %v150
  %v471 = vunpack.c.l.b16 %v151
  %v472 = vunpack.c.l.b16 %v152
  %v473 = vunpack.c.l.b16 %v153
  %v474 = vunpack.c.l.b16 %v154
  %v475 = vunpack.c.l.b16 %v155
  %v476 = vunpack.c.l.b16 %v156
  %v477 = vunpack.c.l.b16 %v157
  %v478 = vunpack.c.l.b16 %v158
  %v479 = vunpack.c.l.b16 %v159
  %v480 = vunpack.c.l.b16 %v160
  %v481 = vunpack.c.l.b16 %v161
  %v482 = vunpack.c.l.b16 %v162
  %v483 = vunpack.c.l.b16 %v163
  %v484 = vunpack.c.l.b16 %v164
  %v485 = vunpack.c.l.b16 %v165
  %v486 = vunpack.c.l.b16 %v166
  %v487 = vpack.c.b16 %v344, %v343
  %v488 = vpack.c.b16 %v346, %v345
  %v489 = vpack.c.b16 %v348, %v347
  %v490 = vpack.c.b16 %v350, %v349
  %v491 = vpack.c.b16 %v352, %v351
  %v492 = vpack.c.b16 %v354, %v353
  %v493 = vpack.c.b16 %v356, %v355
  %v494 = vpack.c.b16 %v358, %v357
  %v495 = vpack.c.b16 %v360, %v359
  %v496 = vpack.c.b16 %v362, %v361
  %v497 = vpack.c.b16 %v364, %v363
  %v498 = vpack.c.b16 %v366, %v365
  %v499 = vpack.c.b16 %v368, %v367
  %v500 = vpack.c.b16 %v370, %v369
  %v501 = vpack.c.b16 %v372, %v371
  %v502 = vpack.c.b16 %v374, %v373
  %v503 = vpack.c.b16 %v376, %v375
  %v504 = vpack.c.b16 %v378, %v377
  %v505 = vpack.c.b16 %v380, %v379
  %v506 = vpack.c.b16 %v382, %v381
  %v507 = vpack.c.b16 %v384, %v383
  %v508 = vpack.c.b16 %v386, %v385
  %v509 = vpack.c.b16 %v388, %v387
  %v510 = vpack.c.b16 %v390, %v389
  %v511 = vpack.c.b16 %v392, %v391
  %v512 = vpack.c.b16 %v394, %v393
  %v513 = vpack.c.b16 %v396, %v395
  %v514 = vpack.c.b16 %v398, %v397
  %v515 = vpack.c.b16 %v400, %v399
  %v516 = vpack.c.b16 %v402, %v401
  %v517 = vpack.c.b16 %v404, %v403
  %v518 = vpack.c.b16 %v406, %v405
  %v519 = vpack.c.b16 %v408, %v407
  %v520 = vpack.c.b16 %v410, %v409
  %v521 = vpack.c.b16 %v412, %v411
  %v522 = vpack.c.b16 %v414, %v413
  %v523 = vpack.c.b16 %v416, %v415
  %v524 = vpack.c.b16 %v418, %v417
  %v525 = vpack.c.b16 %v420, %v419
  %v526 = vpack.c.b16 %v422, %v421
  %v527 = vpack.c.b16 %v424, %v423
  %v528 = vpack.c.b16 %v426, %v425
  %v529 = vpack.c.b16 %v428, %v427
  %v530 = vpack.c.b16 %v430, %v429
  %v531 = vpack.c.b16 %v432, %v431
  %v532 = vpack.c.b16 %v434, %v433
  %v533 = vpack.c.b16 %v436, %v435
  %v534 = vpack.c.b16 %v438, %v437
  %v535 = vpack.c.b16 %v440, %v439
  %v536 = vpack.c.b16 %v442, %v441
  %v537 = vpack.c.b16 %v444, %v443
  %v538 = vpack.c.b16 %v446, %v445
  %v539 = vpack.c.b16 %v448, %v447
  %v540 = vpack.c.b16 %v450, %v449
  %v541 = vpack.c.b16 %v452, %v451
  %v542 = vpack.c.b16 %v454, %v453
  %v543 = vpack.c.b16 %v456, %v455
  %v544 = vpack.c.b16 %v458, %v457
  %v545 = vpack.c.b16 %v460, %v459
  %v546 = vpack.c.b16 %v462, %v461
  %v547 = vpack.c.b16 %v464, %v463
  %v548 = vpack.c.b16 %v466, %v465
  %v549 = vpack.c.b16 %v468, %v467
  %v550 = vpack.c.b16 %v470, %v469
  %v551 = vpack.c.b16 %v472, %v471
  %v552 = vpack.c.b16 %v474, %v473
  %v553 = vpack.c.b16 %v476, %v475
  %v554 = vpack.c.b16 %v478, %v477
  %v555 = vpack.c.b16 %v480, %v479
  %v556 = vpack.c.b16 %v482, %v481
  %v557 = vpack.c.b16 %v484, %v483
  %v558 = vpack.c.b16 %v486, %v485
  %631 = vmatprep.subr.bf16.mxu0 0
  %632 = vmatpush1.bf16.msra.mxu0 %v487
  %633 = vmatprep.subr.bf16.mxu0 0
  %634 = vmatpush1.bf16.msra.mxu0 %v488
  %635 = vmatprep.subr.bf16.mxu0 0
  %636 = vmatpush1.bf16.msra.mxu0 %v489
  %637 = vmatprep.subr.bf16.mxu0 0
  %638 = vmatpush1.bf16.msra.mxu0 %v490
  %639 = vmatprep.subr.bf16.mxu0 0
  %640 = vmatpush1.bf16.msra.mxu0 %v491
  %641 = vmatprep.subr.bf16.mxu0 0
  %642 = vmatpush1.bf16.msra.mxu0 %v492
  %643 = vmatprep.subr.bf16.mxu0 0
  %644 = vmatpush1.bf16.msra.mxu0 %v493
  %645 = vmatprep.subr.bf16.mxu0 0
  %646 = vmatpush1.bf16.msra.mxu0 %v494
  %647 = vmatprep.subr.bf16.mxu0 0
  %648 = vmatpush1.bf16.msra.mxu0 %v495
  %649 = vmatprep.subr.bf16.mxu0 0
  %650 = vmatpush1.bf16.msra.mxu0 %v496
  %651 = vmatprep.subr.bf16.mxu0 0
  %652 = vmatpush1.bf16.msra.mxu0 %v497
  %653 = vmatprep.subr.bf16.mxu0 0
  %654 = vmatpush1.bf16.msra.mxu0 %v498
  %655 = vmatprep.subr.bf16.mxu0 0
  %656 = vmatpush1.bf16.msra.mxu0 %v499
  %657 = vmatprep.subr.bf16.mxu0 0
  %658 = vmatpush1.bf16.msra.mxu0 %v500
  %659 = vmatprep.subr.bf16.mxu0 0
  %660 = vmatpush1.bf16.msra.mxu0 %v501
  %661 = vmatprep.subr.bf16.mxu0 0
  %662 = vmatpush1.bf16.msra.mxu0 %v502
  %663 = vmatprep.mubr.bf16.mxu0 %v182
  %664 = vmatmul.mubr.bf16.gmra.mrb[0].mxu0 %v181
  %v665 = vpop.f32.mrb[0].mxu0
  %v666 = vadd.f32 0.0, %v665
  %v667 = vpop.f32.mrb[0].mxu0
  %v668 = vpop.f32.mrb[0].mxu0
  %v669 = vpop.f32.mrb[0].mxu0
  %670 = vdwg.mxu0
  %671 = vmatprep.subr.bf16.mxu0 0
  %672 = vmatpush1.bf16.msra.mxu0 %v503
  %673 = vmatprep.subr.bf16.mxu0 0
  %674 = vmatpush1.bf16.msra.mxu0 %v504
  %675 = vmatprep.subr.bf16.mxu0 0
  %676 = vmatpush1.bf16.msra.mxu0 %v505
  %677 = vmatprep.subr.bf16.mxu0 0
  %678 = vmatpush1.bf16.msra.mxu0 %v506
  %679 = vmatprep.subr.bf16.mxu0 0
  %680 = vmatpush1.bf16.msra.mxu0 %v507
  %681 = vmatprep.subr.bf16.mxu0 0
  %682 = vmatpush1.bf16.msra.mxu0 %v508
  %683 = vmatprep.subr.bf16.mxu0 0
  %684 = vmatpush1.bf16.msra.mxu0 %v509
  %685 = vmatprep.subr.bf16.mxu0 0
  %686 = vmatpush1.bf16.msra.mxu0 %v510
  %687 = vmatprep.subr.bf16.mxu0 0
  %688 = vmatpush1.bf16.msra.mxu0 %v511
  %689 = vmatprep.subr.bf16.mxu0 0
  %690 = vmatpush1.bf16.msra.mxu0 %v512
  %691 = vmatprep.subr.bf16.mxu0 0
  %692 = vmatpush1.bf16.msra.mxu0 %v513
  %693 = vmatprep.subr.bf16.mxu0 0
  %694 = vmatpush1.bf16.msra.mxu0 %v514
  %695 = vmatprep.subr.bf16.mxu0 0
  %696 = vmatpush1.bf16.msra.mxu0 %v515
  %697 = vmatprep.subr.bf16.mxu0 0
  %698 = vmatpush1.bf16.msra.mxu0 %v516
  %699 = vmatprep.subr.bf16.mxu0 0
  %700 = vmatpush1.bf16.msra.mxu0 %v517
  %701 = vmatprep.subr.bf16.mxu0 0
  %702 = vmatpush1.bf16.msra.mxu0 %v518
  %703 = vmatprep.mubr.bf16.mxu0 %v184
  %704 = vmatmul.mubr.bf16.gmra.mrb[0].mxu0 %v183
  %v705 = vpop.f32.mrb[0].mxu0
  %v706 = vadd.f32 %v666, %v705
  %v707 = vpop.f32.mrb[0].mxu0
  %v708 = vpop.f32.mrb[0].mxu0
  %v709 = vpop.f32.mrb[0].mxu0
  %710 = vdwg.mxu0
  %711 = vmatprep.subr.bf16.mxu0 0
  %712 = vmatpush1.bf16.msra.mxu0 %v519
  %713 = vmatprep.subr.bf16.mxu0 0
  %714 = vmatpush1.bf16.msra.mxu0 %v520
  %715 = vmatprep.subr.bf16.mxu0 0
  %716 = vmatpush1.bf16.msra.mxu0 %v521
  %717 = vmatprep.subr.bf16.mxu0 0
  %718 = vmatpush1.bf16.msra.mxu0 %v522
  %719 = vmatprep.subr.bf16.mxu0 0
  %720 = vmatpush1.bf16.msra.mxu0 %v523
  %721 = vmatprep.subr.bf16.mxu0 0
  %722 = vmatpush1.bf16.msra.mxu0 %v524
  %723 = vmatprep.subr.bf16.mxu0 0
  %724 = vmatpush1.bf16.msra.mxu0 %v525
  %725 = vmatprep.subr.bf16.mxu0 0
  %726 = vmatpush1.bf16.msra.mxu0 %v526
  %727 = vmatprep.subr.bf16.mxu0 0
  %728 = vmatpush1.bf16.msra.mxu0 %v527
  %729 = vmatprep.subr.bf16.mxu0 0
  %730 = vmatpush1.bf16.msra.mxu0 %v528
  %731 = vmatprep.subr.bf16.mxu0 0
  %732 = vmatpush1.bf16.msra.mxu0 %v529
  %733 = vmatprep.subr.bf16.mxu0 0
  %734 = vmatpush1.bf16.msra.mxu0 %v530
  %735 = vmatprep.subr.bf16.mxu0 0
  %736 = vmatpush1.bf16.msra.mxu0 %v531
  %737 = vmatprep.subr.bf16.mxu0 0
  %738 = vmatpush1.bf16.msra.mxu0 %v532
  %739 = vmatprep.subr.bf16.mxu0 0
  %740 = vmatpush1.bf16.msra.mxu0 %v533
  %741 = vmatprep.subr.bf16.mxu0 0
  %742 = vmatpush1.bf16.msra.mxu0 %v534
  %743 = vmatprep.mubr.bf16.mxu0 %v186
  %744 = vmatmul.mubr.bf16.gmra.mrb[0].mxu0 %v185
  %v745 = vpop.f32.mrb[0].mxu0
  %v746 = vadd.f32 %v706, %v745
  %v747 = vpop.f32.mrb[0].mxu0
  %v748 = vpop.f32.mrb[0].mxu0
  %v749 = vpop.f32.mrb[0].mxu0
  %750 = vdwg.mxu0
  %751 = vmatprep.subr.bf16.mxu0 0
  %752 = vmatpush1.bf16.msra.mxu0 %v535
  %753 = vmatprep.subr.bf16.mxu0 0
  %754 = vmatpush1.bf16.msra.mxu0 %v536
  %755 = vmatprep.subr.bf16.mxu0 0
  %756 = vmatpush1.bf16.msra.mxu0 %v537
  %757 = vmatprep.subr.bf16.mxu0 0
  %758 = vmatpush1.bf16.msra.mxu0 %v538
  %759 = vmatprep.subr.bf16.mxu0 0
  %760 = vmatpush1.bf16.msra.mxu0 %v539
  %761 = vmatprep.subr.bf16.mxu0 0
  %762 = vmatpush1.bf16.msra.mxu0 %v540
  %763 = vmatprep.subr.bf16.mxu0 0
  %764 = vmatpush1.bf16.msra.mxu0 %v541
  %765 = vmatprep.subr.bf16.mxu0 0
  %766 = vmatpush1.bf16.msra.mxu0 %v542
  %767 = vmatprep.subr.bf16.mxu0 0
  %768 = vmatpush1.bf16.msra.mxu0 %v543
  %769 = vmatprep.subr.bf16.mxu0 0
  %770 = vmatpush1.bf16.msra.mxu0 %v544
  %771 = vmatprep.subr.bf16.mxu0 0
  %772 = vmatpush1.bf16.msra.mxu0 %v545
  %773 = vmatprep.subr.bf16.mxu0 0
  %774 = vmatpush1.bf16.msra.mxu0 %v546
  %775 = vmatprep.subr.bf16.mxu0 0
  %776 = vmatpush1.bf16.msra.mxu0 %v547
  %777 = vmatprep.subr.bf16.mxu0 0
  %778 = vmatpush1.bf16.msra.mxu0 %v548
  %779 = vmatprep.subr.bf16.mxu0 0
  %780 = vmatpush1.bf16.msra.mxu0 %v549
  %781 = vmatprep.subr.bf16.mxu0 0
  %782 = vmatpush1.bf16.msra.mxu0 %v550
  %783 = vmatprep.mubr.bf16.mxu0 %v188
  %784 = vmatmul.mubr.bf16.gmra.mrb[0].mxu0 %v187
  %v785 = vpop.f32.mrb[0].mxu0
  %v786 = vadd.f32 %v746, %v785
  %v787 = vpop.f32.mrb[0].mxu0
  %v788 = vpop.f32.mrb[0].mxu0
  %v789 = vpop.f32.mrb[0].mxu0
  %790 = vdwg.mxu0
  %791 = vmatprep.subr.bf16.mxu0 0
  %792 = vmatpush1.bf16.msra.mxu0 %v551
  %793 = vmatprep.subr.bf16.mxu0 0
  %794 = vmatpush1.bf16.msra.mxu0 %v552
  %795 = vmatprep.subr.bf16.mxu0 0
  %796 = vmatpush1.bf16.msra.mxu0 %v553
  %797 = vmatprep.subr.bf16.mxu0 0
  %798 = vmatpush1.bf16.msra.mxu0 %v554
  %799 = vmatprep.subr.bf16.mxu0 0
  %800 = vmatpush1.bf16.msra.mxu0 %v555
  %801 = vmatprep.subr.bf16.mxu0 0
  %802 = vmatpush1.bf16.msra.mxu0 %v556
  %803 = vmatprep.subr.bf16.mxu0 0
  %804 = vmatpush1.bf16.msra.mxu0 %v557
  %805 = vmatprep.subr.bf16.mxu0 0
  %806 = vmatpush1.bf16.msra.mxu0 %v558
  %807 = vmatprep.subr.bf16.mxu0 0
  %808 = vmatpush1.bf16.msra.mxu0 0
  %809 = vmatprep.subr.bf16.mxu0 0
  %810 = vmatpush1.bf16.msra.mxu0 0
  %811 = vmatprep.subr.bf16.mxu0 0
  %812 = vmatpush1.bf16.msra.mxu0 0
  %813 = vmatprep.subr.bf16.mxu0 0
  %814 = vmatpush1.bf16.msra.mxu0 0
  %815 = vmatprep.subr.bf16.mxu0 0
  %816 = vmatpush1.bf16.msra.mxu0 0
  %817 = vmatprep.subr.bf16.mxu0 0
  %818 = vmatpush1.bf16.msra.mxu0 0
  %819 = vmatprep.subr.bf16.mxu0 0
  %820 = vmatpush1.bf16.msra.mxu0 0
  %821 = vmatprep.subr.bf16.mxu0 0
  %822 = vmatpush1.bf16.msra.mxu0 0
  %823 = vmatprep.mubr.bf16.mxu0 0
  %824 = vmatmul.mubr.bf16.gmra.mrb[0].mxu0 %v189
  %v825 = vpop.f32.mrb[0].mxu0
  %v826 = vadd.f32 %v786, %v825
  %v827 = vpop.f32.mrb[0].mxu0
  %v828 = vpop.f32.mrb[0].mxu0
  %v829 = vpop.f32.mrb[0].mxu0
  %830 = vdwg.mxu0
  %v831 = vrot.slane %v826, 4
  %v832 = vadd.f32 %v826, %v831
  %v833 = vrot.slane %v832, 2
  %v834 = vadd.f32 %v832, %v833
  %v835 = vrot.slane %v834, 1
  %v836 = vadd.f32 %v834, %v835
  %v837 = vmul.f32 %v836, 0.5
  %v838 = vmul.f32 %v826, %v826
  %v839 = vrot.slane %v838, 4
  %v840 = vadd.f32 %v838, %v839
  %v841 = vrot.slane %v840, 2
  %v842 = vadd.f32 %v840, %v841
  %v843 = vrot.slane %v842, 1
  %v844 = vadd.f32 %v842, %v843
  %v845 = vmul.f32 %v844, 0.5
  %v846 = vmul.f32 %v837, %v837
  %v847 = vsub.f32 %v845, %v846
  %v848 = vmax.f32 %v847, 0.0
  %v849 = vld [vmem:[%s2] sm:$0x1]
  %v850 = vadd.f32 %v848, 1e-05
  %v851 = vrsqrt.pop %v850
  %v852 = vmul.f32 %v849, %v851
  %v853 = vld [vmem:[%s3] sm:$0x1]
  %v854 = vmul.f32 %v837, %v852
  %v855 = vsub.f32 %v853, %v854
  %v857 = vlaneseq
  %v858 = vshrl.u32 %v857, 7
  %v859 = vsub.s32 0, %v858
  %v860 = vrot.slane %v852, %v859
  %v862 = vmul.f32 %v826, %v860
  %v864 = vlaneseq
  %v865 = vshrl.u32 %v864, 7
  %v866 = vsub.s32 0, %v865
  %v867 = vrot.slane %v855, %v866
  %v869 = vadd.f32 %v862, %v867
  %v870 = vmax.f32 %v869, 0.0
  %871 = vst [vmem:[%s4] sm:$0xff] %v870
  // Predicated region
  $region18: #{unet_forward.40} parent=0 // pred_check
    _
  $region19: #{unet_forward.40} parent=0 // pred_check_branch
    %873 = sbr.rel (0) target = $region21
  $region20: #{unet_forward.40} parent=0 // pred_region
    _
  $region21: #{unet_forward.40} parent=0 // pred_fallthru
    _
  // Predicated region
  $region22: #{unet_forward.40} parent=0 // pred_check
    _
  $region23: #{unet_forward.40} parent=0 // pred_check_branch
    %875 = sbr.rel (0) target = $region25
  $region24: #{unet_forward.40} parent=0 // pred_region
    _
  $region25: #{unet_forward.40} parent=0 // pred_fallthru
    _

// kernel: unet_forward.41
$region0: #{unet_forward.41}
  #allocation0 [shape = 'u32[]', space=smem, size = 0x4, offset = 0x4, fixed_abs, tag = 'smem constant byte address 0x4 - core index']
  #allocation1 [shape = 'u32[144,128]{1,0:T(1,128)}', space=vmem, size = 0x12000, scoped, tag = 'internal scratch']
  %s0 = inlined_call_operand.vmem [shape: bf16[2,128], index: 0, kind: input, shape index: {}]
  %s1 = inlined_call_operand.vmem [shape: bf16[128,256], index: 1, kind: input, shape index: {}]
  %s2 = inlined_call_operand.vmem [shape: f32[1,256], index: 2, kind: input, shape index: {}]
  %s3 = inlined_call_operand.vmem [shape: f32[2,256], index: 3, kind: output, shape index: {}]
  %s4 = sld [smem:[#allocation0]]
  $region22: #{unet_forward.41} parent=0
    _
  %s6 = ssub.s32 1, %s4
  %s7 = scalar_select 0, %s6, %s4
  // Predicated region
  $region2: #{unet_forward.41} parent=0 // pred_check
    _
  $region3: #{unet_forward.41} parent=0 // pred_check_branch
    %9 = sbr.rel (0) target = $region5
  $region4: #{unet_forward.41} parent=0 // pred_region
    _
  $region5: #{unet_forward.41} parent=0 // pred_fallthru
    _
  // Predicated region
  $region6: #{unet_forward.41} parent=0 // pred_check
    _
  $region7: #{unet_forward.41} parent=0 // pred_check_branch
    %11 = sbr.rel (0) target = $region9
  $region8: #{unet_forward.41} parent=0 // pred_region
    _
  $region9: #{unet_forward.41} parent=0 // pred_fallthru
    _
  // Predicated region
  $region10: #{unet_forward.41} parent=0 // pred_check
    _
  $region11: #{unet_forward.41} parent=0 // pred_check_branch
    %13 = sbr.rel (0) target = $region13
  $region12: #{unet_forward.41} parent=0 // pred_region
    _
  $region13: #{unet_forward.41} parent=0 // pred_fallthru
    _
  %v15 = vld [vmem:[%s0] sm:$0x1]
  %v16 = vld [vmem:[%s1] sm:$0xff]
  %v17 = vld [vmem:[%s1 + $0x8] sm:$0xff]
  %v18 = vld [vmem:[%s1 + $0x10] sm:$0xff]
  %v19 = vld [vmem:[%s1 + $0x18] sm:$0xff]
  %v20 = vld [vmem:[%s1 + $0x20] sm:$0xff]
  %v21 = vld [vmem:[%s1 + $0x28] sm:$0xff]
  %v22 = vld [vmem:[%s1 + $0x30] sm:$0xff]
  %v23 = vld [vmem:[%s1 + $0x38] sm:$0xff]
  %v24 = vld [vmem:[%s1 + $0x40] sm:$0xff]
  %v25 = vld [vmem:[%s1 + $0x48] sm:$0xff]
  %v26 = vld [vmem:[%s1 + $0x50] sm:$0xff]
  %v27 = vld [vmem:[%s1 + $0x58] sm:$0xff]
  %v28 = vld [vmem:[%s1 + $0x60] sm:$0xff]
  %v29 = vld [vmem:[%s1 + $0x68] sm:$0xff]
  %v30 = vld [vmem:[%s1 + $0x70] sm:$0xff]
  %v31 = vld [vmem:[%s1 + $0x78] sm:$0xff]
  %v32 = vld [vmem:[%s2] sm:$0x3]
  %v34 = vlaneseq
  %v35 = vshrl.u32 %v34, 7
  %v36 = vsub.s32 0, %v35
  %v37 = vrot.slane %v32, %v36
  %v38 = vlaneseq
  %v39 = vshrl.u32 %v38, 7
  %v40 = vsub.s32 1, %v39
  %v41 = vrot.slane %v32, %v40
  %v60 = vunpack.c.l.b16 %v16
  %v61 = vunpack.c.h.b16 %v16
  %v62 = vunpack.c.l.b16 %v17
  %v63 = vunpack.c.h.b16 %v17
  %v64 = vunpack.c.l.b16 %v18
  %v65 = vunpack.c.h.b16 %v18
  %v66 = vunpack.c.l.b16 %v19
  %v67 = vunpack.c.h.b16 %v19
  %v68 = vunpack.c.l.b16 %v20
  %v69 = vunpack.c.h.b16 %v20
  %v70 = vunpack.c.l.b16 %v21
  %v71 = vunpack.c.h.b16 %v21
  %v72 = vunpack.c.l.b16 %v22
  %v73 = vunpack.c.h.b16 %v22
  %v74 = vunpack.c.l.b16 %v23
  %v75 = vunpack.c.h.b16 %v23
  %v76 = vunpack.c.l.b16 %v24
  %v77 = vunpack.c.h.b16 %v24
  %v78 = vunpack.c.l.b16 %v25
  %v79 = vunpack.c.h.b16 %v25
  %v80 = vunpack.c.l.b16 %v26
  %v81 = vunpack.c.h.b16 %v26
  %v82 = vunpack.c.l.b16 %v27
  %v83 = vunpack.c.h.b16 %v27
  %v84 = vunpack.c.l.b16 %v28
  %v85 = vunpack.c.h.b16 %v28
  %v86 = vunpack.c.l.b16 %v29
  %v87 = vunpack.c.h.b16 %v29
  %v88 = vunpack.c.l.b16 %v30
  %v89 = vunpack.c.h.b16 %v30
  %v90 = vunpack.c.l.b16 %v31
  %v91 = vunpack.c.h.b16 %v31
  %v92 = vpack.c.b16 %v62, %v60
  %v93 = vpack.c.b16 %v63, %v61
  %v94 = vpack.c.b16 %v66, %v64
  %v95 = vpack.c.b16 %v67, %v65
  %v96 = vpack.c.b16 %v70, %v68
  %v97 = vpack.c.b16 %v71, %v69
  %v98 = vpack.c.b16 %v74, %v72
  %v99 = vpack.c.b16 %v75, %v73
  %v100 = vpack.c.b16 %v78, %v76
  %v101 = vpack.c.b16 %v79, %v77
  %v102 = vpack.c.b16 %v82, %v80
  %v103 = vpack.c.b16 %v83, %v81
  %v104 = vpack.c.b16 %v86, %v84
  %v105 = vpack.c.b16 %v87, %v85
  %v106 = vpack.c.b16 %v90, %v88
  %v107 = vpack.c.b16 %v91, %v89
  %124 = vmatprep.subr.bf16.mxu0 %v93
  %125 = vmatpush1.bf16.msra.mxu0 %v92
  %126 = vmatprep.subr.bf16.mxu0 %v95
  %127 = vmatpush1.bf16.msra.mxu0 %v94
  %128 = vmatprep.subr.bf16.mxu0 %v97
  %129 = vmatpush1.bf16.msra.mxu0 %v96
  %130 = vmatprep.subr.bf16.mxu0 %v99
  %131 = vmatpush1.bf16.msra.mxu0 %v98
  %132 = vmatprep.subr.bf16.mxu0 %v101
  %133 = vmatpush1.bf16.msra.mxu0 %v100
  %134 = vmatprep.subr.bf16.mxu0 %v103
  %135 = vmatpush1.bf16.msra.mxu0 %v102
  %136 = vmatprep.subr.bf16.mxu0 %v105
  %137 = vmatpush1.bf16.msra.mxu0 %v104
  %138 = vmatprep.subr.bf16.mxu0 %v107
  %139 = vmatpush1.bf16.msra.mxu0 %v106
  %140 = vmatprep.subr.bf16.mxu0 0
  %141 = vmatpush1.bf16.msra.mxu0 0
  %142 = vmatprep.subr.bf16.mxu0 0
  %143 = vmatpush1.bf16.msra.mxu0 0
  %144 = vmatprep.subr.bf16.mxu0 0
  %145 = vmatpush1.bf16.msra.mxu0 0
  %146 = vmatprep.subr.bf16.mxu0 0
  %147 = vmatpush1.bf16.msra.mxu0 0
  %148 = vmatprep.subr.bf16.mxu0 0
  %149 = vmatpush1.bf16.msra.mxu0 0
  %150 = vmatprep.subr.bf16.mxu0 0
  %151 = vmatpush1.bf16.msra.mxu0 0
  %152 = vmatprep.subr.bf16.mxu0 0
  %153 = vmatpush1.bf16.msra.mxu0 0
  %154 = vmatprep.subr.bf16.mxu0 0
  %155 = vmatpush1.bf16.msra.mxu0 0
  %156 = vmatprep.mubr.bf16.mxu0 0
  %157 = vmatmul.mubr.bf16.gmra.mrb[0].mxu0 %v15
  %v158 = vpop.f32.mrb[0].mxu0
  %v159 = vadd.f32 %v37, %v158
  %v160 = vpop.f32.mrb[0].mxu0
  %v161 = vadd.f32 %v41, %v160
  %v162 = vpop.f32.mrb[0].mxu0
  %v163 = vpop.f32.mrb[0].mxu0
  %164 = vdwg.mxu0
  %v167 = vcombine.low %v159, %v161
  %v169 = vunpack.c.l.s4 1983009808
  %v170 = vunpack.c.0.s8 %v169
  %v171 = vlaneseq
  %v172 = vshrl.u32 %v171, 7
  %v173 = vsub.s32 %v170, %v172
  %v174 = vrot.slane %v167, %v173
  %176 = vst [vmem:[%s3] sm:$0xf] %v174
  // Predicated region
  $region14: #{unet_forward.41} parent=0 // pred_check
    _
  $region15: #{unet_forward.41} parent=0 // pred_check_branch
    %178 = sbr.rel (0) target = $region17
  $region16: #{unet_forward.41} parent=0 // pred_region
    _
  $region17: #{unet_forward.41} parent=0 // pred_fallthru
    _
  // Predicated region
  $region18: #{unet_forward.41} parent=0 // pred_check
    _
  $region19: #{unet_forward.41} parent=0 // pred_check_branch
    %180 = sbr.rel (0) target = $region21
  $region20: #{unet_forward.41} parent=0 // pred_region
    _
  $region21: #{unet_forward.41} parent=0 // pred_fallthru
    _

// kernel: tile.28
$region0: #{tile.28}
  #allocation0 [shape = 's32[1]{0}', space=sflag, size = 0x4, scoped, tag = 'scoped memory for tile.28']
  %s0 = inlined_call_operand.vmem [shape: f32[32], index: 0, kind: input, shape index: {}]
  %s1 = inlined_call_operand.vmem [shape: f32[4,32], index: 1, kind: output, shape index: {}]
  // Predicated region
  $region2: #{tile.28} parent=0 // pred_check
    _
  $region3: #{tile.28} parent=0 // pred_check_branch
    %3 = sbr.rel (0) target = $region5
  $region4: #{tile.28} parent=0 // pred_region
    _
  $region5: #{tile.28} parent=0 // pred_fallthru
    _
  %v4 = vld [vmem:[%s0] ss:$0 sm:$0xff]
  %5 = vst [vmem:[%s1] sm:$0xf] %v4

// kernel: tile.29
$region0: #{tile.29}
  %s0 = inlined_call_operand.vmem [shape: f32[4,32], index: 0, kind: input, shape index: {}]
  %s1 = inlined_call_operand.vmem [shape: f32[1,128], index: 1, kind: output, shape index: {}]
  $region1: #{tile.29} parent=0
    #allocation0 [shape = 'u8[4096]{0}', space=vmem, size = 0x1000, scoped, tag = 'scoped mem for output reshape']
    #allocation1 [shape = 'u8[4096]{0}', space=vmem, size = 0x1000, scoped, tag = 'scoped mem for input reshape']
    %s3 = sshllo.u32 0, 4
    %v4 = vld [vmem:[%s0] sm:%s3]
    %5 = vst [vmem:[#allocation1] sm:%s3] %v4
    %v6 = vld [vmem:[#allocation1] sm:$0x1]
    %vm7 = vcmask 261120
    %8 = vst.msk [vmem:[#allocation0] sm:$0x1] %vm7, %v6
    %s9 = scalar_lea.vmem [#allocation1], 3
    %v10 = vld [vmem:[%s9] sm:$0x1]
    %11 = vrot.lane.b32.xlu0 %v10, 96
    %v12 = vpop.permute.xlu0 %11
    %vm13 = vcmask 1048320
    %14 = vst.msk [vmem:[#allocation0] sm:$0x1] %vm13, %v12
    %s15 = scalar_lea.vmem [#allocation1], 2
    %v16 = vld [vmem:[%s15] sm:$0x1]
    %17 = vrot.lane.b32.xlu0 %v16, 64
    %v18 = vpop.permute.xlu0 %17
    %vm19 = vcmask 785920
    %20 = vst.msk [vmem:[#allocation0] sm:$0x1] %vm19, %v18
    %s21 = scalar_lea.vmem [#allocation1], 1
    %v22 = vld [vmem:[%s21] sm:$0x1]
    %23 = vrot.lane.b32.xlu0 %v22, 32
    %v24 = vpop.permute.xlu0 %23
    %vm25 = vcmask 523520
    %26 = vst.msk [vmem:[#allocation0] sm:$0x1] %vm25, %v24
    %s28 = sshllo.u32 0, 1
    %v30 = vld [vmem:[#allocation0] sm:%s28]
    %s31 = sshllo.u32 0, 1
    %32 = vst [vmem:[%s1] sm:%s31] %v30

// kernel: unet_forward.44
$region0: #{unet_forward.44}
  #allocation0 [shape = 'u32[]', space=smem, size = 0x4, offset = 0x4, fixed_abs, tag = 'smem constant byte address 0x4 - core index']
  #allocation1 [shape = 'u32[144,128]{1,0:T(1,128)}', space=vmem, size = 0x12000, scoped, tag = 'internal scratch']
  %s0 = inlined_call_operand.vmem [shape: bf16[8,64], index: 0, kind: input, shape index: {}]
  %s1 = inlined_call_operand.vmem [shape: bf16[64,128], index: 1, kind: input, shape index: {}]
  %s2 = inlined_call_operand.vmem [shape: f32[1,128], index: 2, kind: input, shape index: {}]
  %s3 = inlined_call_operand.vmem [shape: f32[8,128], index: 3, kind: output, shape index: {}]
  %s4 = sld [smem:[#allocation0]]
  $region22: #{unet_forward.44} parent=0
    _
  %s6 = ssub.s32 1, %s4
  %s7 = scalar_select 0, %s6, %s4
  // Predicated region
  $region2: #{unet_forward.44} parent=0 // pred_check
    _
  $region3: #{unet_forward.44} parent=0 // pred_check_branch
    %9 = sbr.rel (0) target = $region5
  $region4: #{unet_forward.44} parent=0 // pred_region
    _
  $region5: #{unet_forward.44} parent=0 // pred_fallthru
    _
  // Predicated region
  $region6: #{unet_forward.44} parent=0 // pred_check
    _
  $region7: #{unet_forward.44} parent=0 // pred_check_branch
    %11 = sbr.rel (0) target = $region9
  $region8: #{unet_forward.44} parent=0 // pred_region
    _
  $region9: #{unet_forward.44} parent=0 // pred_fallthru
    _
  // Predicated region
  $region10: #{unet_forward.44} parent=0 // pred_check
    _
  $region11: #{unet_forward.44} parent=0 // pred_check_branch
    %13 = sbr.rel (0) target = $region13
  $region12: #{unet_forward.44} parent=0 // pred_region
    _
  $region13: #{unet_forward.44} parent=0 // pred_fallthru
    _
  %v15 = vld [vmem:[%s0] sm:$0xf]
  %v16 = vld [vmem:[%s1] sm:$0xf]
  %v17 = vld [vmem:[%s1 + $0x4] sm:$0xf]
  %v18 = vld [vmem:[%s1 + $0x8] sm:$0xf]
  %v19 = vld [vmem:[%s1 + $0xc] sm:$0xf]
  %v20 = vld [vmem:[%s1 + $0x10] sm:$0xf]
  %v21 = vld [vmem:[%s1 + $0x14] sm:$0xf]
  %v22 = vld [vmem:[%s1 + $0x18] sm:$0xf]
  %v23 = vld [vmem:[%s1 + $0x1c] sm:$0xf]
  %v24 = vld [vmem:[%s2] sm:$0x1]
  %v26 = vlaneseq
  %v27 = vshrl.u32 %v26, 7
  %v28 = vsub.s32 0, %v27
  %v29 = vrot.slane %v24, %v28
  %v39 = vunpack.c.l.b16 %v16
  %v40 = vunpack.c.l.b16 %v17
  %v41 = vunpack.c.l.b16 %v18
  %v42 = vunpack.c.l.b16 %v19
  %v43 = vunpack.c.l.b16 %v20
  %v44 = vunpack.c.l.b16 %v21
  %v45 = vunpack.c.l.b16 %v22
  %v46 = vunpack.c.l.b16 %v23
  %v47 = vpack.c.b16 %v40, %v39
  %v48 = vpack.c.b16 %v42, %v41
  %v49 = vpack.c.b16 %v44, %v43
  %v50 = vpack.c.b16 %v46, %v45
  %vm55 = vcmask 523264
  %v57 = vsel %vm55, %v15, 0
  %59 = vmatprep.subr.bf16.mxu0 0
  %60 = vmatpush1.bf16.msra.mxu0 %v47
  %61 = vmatprep.subr.bf16.mxu0 0
  %62 = vmatpush1.bf16.msra.mxu0 %v48
  %63 = vmatprep.subr.bf16.mxu0 0
  %64 = vmatpush1.bf16.msra.mxu0 %v49
  %65 = vmatprep.subr.bf16.mxu0 0
  %66 = vmatpush1.bf16.msra.mxu0 %v50
  %67 = vmatprep.subr.bf16.mxu0 0
  %68 = vmatpush1.bf16.msra.mxu0 0
  %69 = vmatprep.subr.bf16.mxu0 0
  %70 = vmatpush1.bf16.msra.mxu0 0
  %71 = vmatprep.subr.bf16.mxu0 0
  %72 = vmatpush1.bf16.msra.mxu0 0
  %73 = vmatprep.subr.bf16.mxu0 0
  %74 = vmatpush1.bf16.msra.mxu0 0
  %75 = vmatprep.subr.bf16.mxu0 0
  %76 = vmatpush1.bf16.msra.mxu0 0
  %77 = vmatprep.subr.bf16.mxu0 0
  %78 = vmatpush1.bf16.msra.mxu0 0
  %79 = vmatprep.subr.bf16.mxu0 0
  %80 = vmatpush1.bf16.msra.mxu0 0
  %81 = vmatprep.subr.bf16.mxu0 0
  %82 = vmatpush1.bf16.msra.mxu0 0
  %83 = vmatprep.subr.bf16.mxu0 0
  %84 = vmatpush1.bf16.msra.mxu0 0
  %85 = vmatprep.subr.bf16.mxu0 0
  %86 = vmatpush1.bf16.msra.mxu0 0
  %87 = vmatprep.subr.bf16.mxu0 0
  %88 = vmatpush1.bf16.msra.mxu0 0
  %89 = vmatprep.subr.bf16.mxu0 0
  %90 = vmatpush1.bf16.msra.mxu0 0
  %91 = vmatprep.mubr.bf16.mxu0 0
  %92 = vmatmul.mubr.bf16.gmra.mrb[0].mxu0 %v57
  %v93 = vpop.f32.mrb[0].mxu0
  %v94 = vadd.f32 %v29, %v93
  %v95 = vpop.f32.mrb[0].mxu0
  %v96 = vpop.f32.mrb[0].mxu0
  %v97 = vpop.f32.mrb[0].mxu0
  %98 = vdwg.mxu0
  %99 = vst [vmem:[%s3] sm:$0xff] %v94
  // Predicated region
  $region14: #{unet_forward.44} parent=0 // pred_check
    _
  $region15: #{unet_forward.44} parent=0 // pred_check_branch
    %101 = sbr.rel (0) target = $region17
  $region16: #{unet_forward.44} parent=0 // pred_region
    _
  $region17: #{unet_forward.44} parent=0 // pred_fallthru
    _
  // Predicated region
  $region18: #{unet_forward.44} parent=0 // pred_check
    _
  $region19: #{unet_forward.44} parent=0 // pred_check_branch
    %103 = sbr.rel (0) target = $region21
  $region20: #{unet_forward.44} parent=0 // pred_region
    _
  $region21: #{unet_forward.44} parent=0 // pred_fallthru
    _

// kernel: unet_forward.42
$region0: #{unet_forward.42}
  #allocation0 [shape = 'u32[]', space=smem, size = 0x4, offset = 0x4, fixed_abs, tag = 'smem constant byte address 0x4 - core index']
  #allocation1 [shape = 'u32[144,128]{1,0:T(1,128)}', space=vmem, size = 0x12000, scoped, tag = 'internal scratch']
  %s0 = inlined_call_operand.vmem [shape: bf16[8,1152], index: 0, kind: input, shape index: {}]
  %s1 = inlined_call_operand.vmem [shape: bf16[1152,64], index: 1, kind: input, shape index: {}]
  %s2 = inlined_call_operand.vmem [shape: f32[1,64], index: 2, kind: input, shape index: {}]
  %s3 = inlined_call_operand.vmem [shape: f32[1,64], index: 3, kind: input, shape index: {}]
  %s4 = inlined_call_operand.vmem [shape: f32[8,64], index: 4, kind: output, shape index: {}]
  %s5 = sld [smem:[#allocation0]]
  $region26: #{unet_forward.42} parent=0
    _
  %s7 = ssub.s32 1, %s5
  %s8 = scalar_select 0, %s7, %s5
  // Predicated region
  $region2: #{unet_forward.42} parent=0 // pred_check
    _
  $region3: #{unet_forward.42} parent=0 // pred_check_branch
    %10 = sbr.rel (0) target = $region5
  $region4: #{unet_forward.42} parent=0 // pred_region
    _
  $region5: #{unet_forward.42} parent=0 // pred_fallthru
    _
  // Predicated region
  $region6: #{unet_forward.42} parent=0 // pred_check
    _
  $region7: #{unet_forward.42} parent=0 // pred_check_branch
    %12 = sbr.rel (0) target = $region9
  $region8: #{unet_forward.42} parent=0 // pred_region
    _
  $region9: #{unet_forward.42} parent=0 // pred_fallthru
    _
  // Predicated region
  $region10: #{unet_forward.42} parent=0 // pred_check
    _
  $region11: #{unet_forward.42} parent=0 // pred_check_branch
    %14 = sbr.rel (0) target = $region13
  $region12: #{unet_forward.42} parent=0 // pred_region
    _
  $region13: #{unet_forward.42} parent=0 // pred_fallthru
    _
  // Predicated region
  $region14: #{unet_forward.42} parent=0 // pred_check
    _
  $region15: #{unet_forward.42} parent=0 // pred_check_branch
    %16 = sbr.rel (0) target = $region17
  $region16: #{unet_forward.42} parent=0 // pred_region
    _
  $region17: #{unet_forward.42} parent=0 // pred_fallthru
    _
  %v18 = vld [vmem:[%s0] sm:$0xff]
  %v19 = vld [vmem:[%s0 + $0x8] sm:$0xff]
  %v20 = vld [vmem:[%s0 + $0x10] sm:$0xff]
  %v21 = vld [vmem:[%s0 + $0x18] sm:$0xff]
  %v22 = vld [vmem:[%s0 + $0x20] sm:$0xf]
  %v23 = vld [vmem:[%s1] sm:$0xf]
  %v24 = vld [vmem:[%s1 + $0x4] sm:$0xf]
  %v25 = vld [vmem:[%s1 + $0x8] sm:$0xf]
  %v26 = vld [vmem:[%s1 + $0xc] sm:$0xf]
  %v27 = vld [vmem:[%s1 + $0x10] sm:$0xf]
  %v28 = vld [vmem:[%s1 + $0x14] sm:$0xf]
  %v29 = vld [vmem:[%s1 + $0x18] sm:$0xf]
  %v30 = vld [vmem:[%s1 + $0x1c] sm:$0xf]
  %v31 = vld [vmem:[%s1 + $0x20] sm:$0xf]
  %v32 = vld [vmem:[%s1 + $0x24] sm:$0xf]
  %v33 = vld [vmem:[%s1 + $0x28] sm:$0xf]
  %v34 = vld [vmem:[%s1 + $0x2c] sm:$0xf]
  %v35 = vld [vmem:[%s1 + $0x30] sm:$0xf]
  %v36 = vld [vmem:[%s1 + $0x34] sm:$0xf]
  %v37 = vld [vmem:[%s1 + $0x38] sm:$0xf]
  %v38 = vld [vmem:[%s1 + $0x3c] sm:$0xf]
  %v39 = vld [vmem:[%s1 + $0x40] sm:$0xf]
  %v40 = vld [vmem:[%s1 + $0x44] sm:$0xf]
  %v41 = vld [vmem:[%s1 + $0x48] sm:$0xf]
  %v42 = vld [vmem:[%s1 + $0x4c] sm:$0xf]
  %v43 = vld [vmem:[%s1 + $0x50] sm:$0xf]
  %v44 = vld [vmem:[%s1 + $0x54] sm:$0xf]
  %v45 = vld [vmem:[%s1 + $0x58] sm:$0xf]
  %v46 = vld [vmem:[%s1 + $0x5c] sm:$0xf]
  %v47 = vld [vmem:[%s1 + $0x60] sm:$0xf]
  %v48 = vld [vmem:[%s1 + $0x64] sm:$0xf]
  %v49 = vld [vmem:[%s1 + $0x68] sm:$0xf]
  %v50 = vld [vmem:[%s1 + $0x6c] sm:$0xf]
  %v51 = vld [vmem:[%s1 + $0x70] sm:$0xf]
  %v52 = vld [vmem:[%s1 + $0x74] sm:$0xf]
  %v53 = vld [vmem:[%s1 + $0x78] sm:$0xf]
  %v54 = vld [vmem:[%s1 + $0x7c] sm:$0xf]
  %v55 = vld [vmem:[%s1 + $0x80] sm:$0xf]
  %v56 = vld [vmem:[%s1 + $0x84] sm:$0xf]
  %v57 = vld [vmem:[%s1 + $0x88] sm:$0xf]
  %v58 = vld [vmem:[%s1 + $0x8c] sm:$0xf]
  %v59 = vld [vmem:[%s1 + $0x90] sm:$0xf]
  %v60 = vld [vmem:[%s1 + $0x94] sm:$0xf]
  %v61 = vld [vmem:[%s1 + $0x98] sm:$0xf]
  %v62 = vld [vmem:[%s1 + $0x9c] sm:$0xf]
  %v63 = vld [vmem:[%s1 + $0xa0] sm:$0xf]
  %v64 = vld [vmem:[%s1 + $0xa4] sm:$0xf]
  %v65 = vld [vmem:[%s1 + $0xa8] sm:$0xf]
  %v66 = vld [vmem:[%s1 + $0xac] sm:$0xf]
  %v67 = vld [vmem:[%s1 + $0xb0] sm:$0xf]
  %v68 = vld [vmem:[%s1 + $0xb4] sm:$0xf]
  %v69 = vld [vmem:[%s1 + $0xb8] sm:$0xf]
  %v70 = vld [vmem:[%s1 + $0xbc] sm:$0xf]
  %v71 = vld [vmem:[%s1 + $0xc0] sm:$0xf]
  %v72 = vld [vmem:[%s1 + $0xc4] sm:$0xf]
  %v73 = vld [vmem:[%s1 + $0xc8] sm:$0xf]
  %v74 = vld [vmem:[%s1 + $0xcc] sm:$0xf]
  %v75 = vld [vmem:[%s1 + $0xd0] sm:$0xf]
  %v76 = vld [vmem:[%s1 + $0xd4] sm:$0xf]
  %v77 = vld [vmem:[%s1 + $0xd8] sm:$0xf]
  %v78 = vld [vmem:[%s1 + $0xdc] sm:$0xf]
  %v79 = vld [vmem:[%s1 + $0xe0] sm:$0xf]
  %v80 = vld [vmem:[%s1 + $0xe4] sm:$0xf]
  %v81 = vld [vmem:[%s1 + $0xe8] sm:$0xf]
  %v82 = vld [vmem:[%s1 + $0xec] sm:$0xf]
  %v83 = vld [vmem:[%s1 + $0xf0] sm:$0xf]
  %v84 = vld [vmem:[%s1 + $0xf4] sm:$0xf]
  %v85 = vld [vmem:[%s1 + $0xf8] sm:$0xf]
  %v86 = vld [vmem:[%s1 + $0xfc] sm:$0xf]
  %v87 = vld [vmem:[%s1 + $0x100] sm:$0xf]
  %v88 = vld [vmem:[%s1 + $0x104] sm:$0xf]
  %v89 = vld [vmem:[%s1 + $0x108] sm:$0xf]
  %v90 = vld [vmem:[%s1 + $0x10c] sm:$0xf]
  %v91 = vld [vmem:[%s1 + $0x110] sm:$0xf]
  %v92 = vld [vmem:[%s1 + $0x114] sm:$0xf]
  %v93 = vld [vmem:[%s1 + $0x118] sm:$0xf]
  %v94 = vld [vmem:[%s1 + $0x11c] sm:$0xf]
  %v95 = vld [vmem:[%s1 + $0x120] sm:$0xf]
  %v96 = vld [vmem:[%s1 + $0x124] sm:$0xf]
  %v97 = vld [vmem:[%s1 + $0x128] sm:$0xf]
  %v98 = vld [vmem:[%s1 + $0x12c] sm:$0xf]
  %v99 = vld [vmem:[%s1 + $0x130] sm:$0xf]
  %v100 = vld [vmem:[%s1 + $0x134] sm:$0xf]
  %v101 = vld [vmem:[%s1 + $0x138] sm:$0xf]
  %v102 = vld [vmem:[%s1 + $0x13c] sm:$0xf]
  %v103 = vld [vmem:[%s1 + $0x140] sm:$0xf]
  %v104 = vld [vmem:[%s1 + $0x144] sm:$0xf]
  %v105 = vld [vmem:[%s1 + $0x148] sm:$0xf]
  %v106 = vld [vmem:[%s1 + $0x14c] sm:$0xf]
  %v107 = vld [vmem:[%s1 + $0x150] sm:$0xf]
  %v108 = vld [vmem:[%s1 + $0x154] sm:$0xf]
  %v109 = vld [vmem:[%s1 + $0x158] sm:$0xf]
  %v110 = vld [vmem:[%s1 + $0x15c] sm:$0xf]
  %v111 = vld [vmem:[%s1 + $0x160] sm:$0xf]
  %v112 = vld [vmem:[%s1 + $0x164] sm:$0xf]
  %v113 = vld [vmem:[%s1 + $0x168] sm:$0xf]
  %v114 = vld [vmem:[%s1 + $0x16c] sm:$0xf]
  %v115 = vld [vmem:[%s1 + $0x170] sm:$0xf]
  %v116 = vld [vmem:[%s1 + $0x174] sm:$0xf]
  %v117 = vld [vmem:[%s1 + $0x178] sm:$0xf]
  %v118 = vld [vmem:[%s1 + $0x17c] sm:$0xf]
  %v119 = vld [vmem:[%s1 + $0x180] sm:$0xf]
  %v120 = vld [vmem:[%s1 + $0x184] sm:$0xf]
  %v121 = vld [vmem:[%s1 + $0x188] sm:$0xf]
  %v122 = vld [vmem:[%s1 + $0x18c] sm:$0xf]
  %v123 = vld [vmem:[%s1 + $0x190] sm:$0xf]
  %v124 = vld [vmem:[%s1 + $0x194] sm:$0xf]
  %v125 = vld [vmem:[%s1 + $0x198] sm:$0xf]
  %v126 = vld [vmem:[%s1 + $0x19c] sm:$0xf]
  %v127 = vld [vmem:[%s1 + $0x1a0] sm:$0xf]
  %v128 = vld [vmem:[%s1 + $0x1a4] sm:$0xf]
  %v129 = vld [vmem:[%s1 + $0x1a8] sm:$0xf]
  %v130 = vld [vmem:[%s1 + $0x1ac] sm:$0xf]
  %v131 = vld [vmem:[%s1 + $0x1b0] sm:$0xf]
  %v132 = vld [vmem:[%s1 + $0x1b4] sm:$0xf]
  %v133 = vld [vmem:[%s1 + $0x1b8] sm:$0xf]
  %v134 = vld [vmem:[%s1 + $0x1bc] sm:$0xf]
  %v135 = vld [vmem:[%s1 + $0x1c0] sm:$0xf]
  %v136 = vld [vmem:[%s1 + $0x1c4] sm:$0xf]
  %v137 = vld [vmem:[%s1 + $0x1c8] sm:$0xf]
  %v138 = vld [vmem:[%s1 + $0x1cc] sm:$0xf]
  %v139 = vld [vmem:[%s1 + $0x1d0] sm:$0xf]
  %v140 = vld [vmem:[%s1 + $0x1d4] sm:$0xf]
  %v141 = vld [vmem:[%s1 + $0x1d8] sm:$0xf]
  %v142 = vld [vmem:[%s1 + $0x1dc] sm:$0xf]
  %v143 = vld [vmem:[%s1 + $0x1e0] sm:$0xf]
  %v144 = vld [vmem:[%s1 + $0x1e4] sm:$0xf]
  %v145 = vld [vmem:[%s1 + $0x1e8] sm:$0xf]
  %v146 = vld [vmem:[%s1 + $0x1ec] sm:$0xf]
  %v147 = vld [vmem:[%s1 + $0x1f0] sm:$0xf]
  %v148 = vld [vmem:[%s1 + $0x1f4] sm:$0xf]
  %v149 = vld [vmem:[%s1 + $0x1f8] sm:$0xf]
  %v150 = vld [vmem:[%s1 + $0x1fc] sm:$0xf]
  %v151 = vld [vmem:[%s1 + $0x200] sm:$0xf]
  %v152 = vld [vmem:[%s1 + $0x204] sm:$0xf]
  %v153 = vld [vmem:[%s1 + $0x208] sm:$0xf]
  %v154 = vld [vmem:[%s1 + $0x20c] sm:$0xf]
  %v155 = vld [vmem:[%s1 + $0x210] sm:$0xf]
  %v156 = vld [vmem:[%s1 + $0x214] sm:$0xf]
  %v157 = vld [vmem:[%s1 + $0x218] sm:$0xf]
  %v158 = vld [vmem:[%s1 + $0x21c] sm:$0xf]
  %v159 = vld [vmem:[%s1 + $0x220] sm:$0xf]
  %v160 = vld [vmem:[%s1 + $0x224] sm:$0xf]
  %v161 = vld [vmem:[%s1 + $0x228] sm:$0xf]
  %v162 = vld [vmem:[%s1 + $0x22c] sm:$0xf]
  %v163 = vld [vmem:[%s1 + $0x230] sm:$0xf]
  %v164 = vld [vmem:[%s1 + $0x234] sm:$0xf]
  %v165 = vld [vmem:[%s1 + $0x238] sm:$0xf]
  %v166 = vld [vmem:[%s1 + $0x23c] sm:$0xf]
  %v172 = vunpack.c.l.b16 %v18
  %v173 = vunpack.c.h.b16 %v18
  %v174 = vunpack.c.l.b16 %v19
  %v175 = vunpack.c.h.b16 %v19
  %v176 = vunpack.c.l.b16 %v20
  %v177 = vunpack.c.h.b16 %v20
  %v178 = vunpack.c.l.b16 %v21
  %v179 = vunpack.c.h.b16 %v21
  %v180 = vunpack.c.l.b16 %v22
  %v181 = vpack.c.b16 %v172, %v172
  %v182 = vpack.c.b16 %v173, %v173
  %v183 = vpack.c.b16 %v174, %v174
  %v184 = vpack.c.b16 %v175, %v175
  %v185 = vpack.c.b16 %v176, %v176
  %v186 = vpack.c.b16 %v177, %v177
  %v187 = vpack.c.b16 %v178, %v178
  %v188 = vpack.c.b16 %v179, %v179
  %v189 = vpack.c.b16 %v180, %v180
  %v343 = vunpack.c.l.b16 %v23
  %v344 = vunpack.c.l.b16 %v24
  %v345 = vunpack.c.l.b16 %v25
  %v346 = vunpack.c.l.b16 %v26
  %v347 = vunpack.c.l.b16 %v27
  %v348 = vunpack.c.l.b16 %v28
  %v349 = vunpack.c.l.b16 %v29
  %v350 = vunpack.c.l.b16 %v30
  %v351 = vunpack.c.l.b16 %v31
  %v352 = vunpack.c.l.b16 %v32
  %v353 = vunpack.c.l.b16 %v33
  %v354 = vunpack.c.l.b16 %v34
  %v355 = vunpack.c.l.b16 %v35
  %v356 = vunpack.c.l.b16 %v36
  %v357 = vunpack.c.l.b16 %v37
  %v358 = vunpack.c.l.b16 %v38
  %v359 = vunpack.c.l.b16 %v39
  %v360 = vunpack.c.l.b16 %v40
  %v361 = vunpack.c.l.b16 %v41
  %v362 = vunpack.c.l.b16 %v42
  %v363 = vunpack.c.l.b16 %v43
  %v364 = vunpack.c.l.b16 %v44
  %v365 = vunpack.c.l.b16 %v45
  %v366 = vunpack.c.l.b16 %v46
  %v367 = vunpack.c.l.b16 %v47
  %v368 = vunpack.c.l.b16 %v48
  %v369 = vunpack.c.l.b16 %v49
  %v370 = vunpack.c.l.b16 %v50
  %v371 = vunpack.c.l.b16 %v51
  %v372 = vunpack.c.l.b16 %v52
  %v373 = vunpack.c.l.b16 %v53
  %v374 = vunpack.c.l.b16 %v54
  %v375 = vunpack.c.l.b16 %v55
  %v376 = vunpack.c.l.b16 %v56
  %v377 = vunpack.c.l.b16 %v57
  %v378 = vunpack.c.l.b16 %v58
  %v379 = vunpack.c.l.b16 %v59
  %v380 = vunpack.c.l.b16 %v60
  %v381 = vunpack.c.l.b16 %v61
  %v382 = vunpack.c.l.b16 %v62
  %v383 = vunpack.c.l.b16 %v63
  %v384 = vunpack.c.l.b16 %v64
  %v385 = vunpack.c.l.b16 %v65
  %v386 = vunpack.c.l.b16 %v66
  %v387 = vunpack.c.l.b16 %v67
  %v388 = vunpack.c.l.b16 %v68
  %v389 = vunpack.c.l.b16 %v69
  %v390 = vunpack.c.l.b16 %v70
  %v391 = vunpack.c.l.b16 %v71
  %v392 = vunpack.c.l.b16 %v72
  %v393 = vunpack.c.l.b16 %v73
  %v394 = vunpack.c.l.b16 %v74
  %v395 = vunpack.c.l.b16 %v75
  %v396 = vunpack.c.l.b16 %v76
  %v397 = vunpack.c.l.b16 %v77
  %v398 = vunpack.c.l.b16 %v78
  %v399 = vunpack.c.l.b16 %v79
  %v400 = vunpack.c.l.b16 %v80
  %v401 = vunpack.c.l.b16 %v81
  %v402 = vunpack.c.l.b16 %v82
  %v403 = vunpack.c.l.b16 %v83
  %v404 = vunpack.c.l.b16 %v84
  %v405 = vunpack.c.l.b16 %v85
  %v406 = vunpack.c.l.b16 %v86
  %v407 = vunpack.c.l.b16 %v87
  %v408 = vunpack.c.l.b16 %v88
  %v409 = vunpack.c.l.b16 %v89
  %v410 = vunpack.c.l.b16 %v90
  %v411 = vunpack.c.l.b16 %v91
  %v412 = vunpack.c.l.b16 %v92
  %v413 = vunpack.c.l.b16 %v93
  %v414 = vunpack.c.l.b16 %v94
  %v415 = vunpack.c.l.b16 %v95
  %v416 = vunpack.c.l.b16 %v96
  %v417 = vunpack.c.l.b16 %v97
  %v418 = vunpack.c.l.b16 %v98
  %v419 = vunpack.c.l.b16 %v99
  %v420 = vunpack.c.l.b16 %v100
  %v421 = vunpack.c.l.b16 %v101
  %v422 = vunpack.c.l.b16 %v102
  %v423 = vunpack.c.l.b16 %v103
  %v424 = vunpack.c.l.b16 %v104
  %v425 = vunpack.c.l.b16 %v105
  %v426 = vunpack.c.l.b16 %v106
  %v427 = vunpack.c.l.b16 %v107
  %v428 = vunpack.c.l.b16 %v108
  %v429 = vunpack.c.l.b16 %v109
  %v430 = vunpack.c.l.b16 %v110
  %v431 = vunpack.c.l.b16 %v111
  %v432 = vunpack.c.l.b16 %v112
  %v433 = vunpack.c.l.b16 %v113
  %v434 = vunpack.c.l.b16 %v114
  %v435 = vunpack.c.l.b16 %v115
  %v436 = vunpack.c.l.b16 %v116
  %v437 = vunpack.c.l.b16 %v117
  %v438 = vunpack.c.l.b16 %v118
  %v439 = vunpack.c.l.b16 %v119
  %v440 = vunpack.c.l.b16 %v120
  %v441 = vunpack.c.l.b16 %v121
  %v442 = vunpack.c.l.b16 %v122
  %v443 = vunpack.c.l.b16 %v123
  %v444 = vunpack.c.l.b16 %v124
  %v445 = vunpack.c.l.b16 %v125
  %v446 = vunpack.c.l.b16 %v126
  %v447 = vunpack.c.l.b16 %v127
  %v448 = vunpack.c.l.b16 %v128
  %v449 = vunpack.c.l.b16 %v129
  %v450 = vunpack.c.l.b16 %v130
  %v451 = vunpack.c.l.b16 %v131
  %v452 = vunpack.c.l.b16 %v132
  %v453 = vunpack.c.l.b16 %v133
  %v454 = vunpack.c.l.b16 %v134
  %v455 = vunpack.c.l.b16 %v135
  %v456 = vunpack.c.l.b16 %v136
  %v457 = vunpack.c.l.b16 %v137
  %v458 = vunpack.c.l.b16 %v138
  %v459 = vunpack.c.l.b16 %v139
  %v460 = vunpack.c.l.b16 %v140
  %v461 = vunpack.c.l.b16 %v141
  %v462 = vunpack.c.l.b16 %v142
  %v463 = vunpack.c.l.b16 %v143
  %v464 = vunpack.c.l.b16 %v144
  %v465 = vunpack.c.l.b16 %v145
  %v466 = vunpack.c.l.b16 %v146
  %v467 = vunpack.c.l.b16 %v147
  %v468 = vunpack.c.l.b16 %v148
  %v469 = vunpack.c.l.b16 %v149
  %v470 = vunpack.c.l.b16 %v150
  %v471 = vunpack.c.l.b16 %v151
  %v472 = vunpack.c.l.b16 %v152
  %v473 = vunpack.c.l.b16 %v153
  %v474 = vunpack.c.l.b16 %v154
  %v475 = vunpack.c.l.b16 %v155
  %v476 = vunpack.c.l.b16 %v156
  %v477 = vunpack.c.l.b16 %v157
  %v478 = vunpack.c.l.b16 %v158
  %v479 = vunpack.c.l.b16 %v159
  %v480 = vunpack.c.l.b16 %v160
  %v481 = vunpack.c.l.b16 %v161
  %v482 = vunpack.c.l.b16 %v162
  %v483 = vunpack.c.l.b16 %v163
  %v484 = vunpack.c.l.b16 %v164
  %v485 = vunpack.c.l.b16 %v165
  %v486 = vunpack.c.l.b16 %v166
  %v487 = vpack.c.b16 %v344, %v343
  %v488 = vpack.c.b16 %v346, %v345
  %v489 = vpack.c.b16 %v348, %v347
  %v490 = vpack.c.b16 %v350, %v349
  %v491 = vpack.c.b16 %v352, %v351
  %v492 = vpack.c.b16 %v354, %v353
  %v493 = vpack.c.b16 %v356, %v355
  %v494 = vpack.c.b16 %v358, %v357
  %v495 = vpack.c.b16 %v360, %v359
  %v496 = vpack.c.b16 %v362, %v361
  %v497 = vpack.c.b16 %v364, %v363
  %v498 = vpack.c.b16 %v366, %v365
  %v499 = vpack.c.b16 %v368, %v367
  %v500 = vpack.c.b16 %v370, %v369
  %v501 = vpack.c.b16 %v372, %v371
  %v502 = vpack.c.b16 %v374, %v373
  %v503 = vpack.c.b16 %v376, %v375
  %v504 = vpack.c.b16 %v378, %v377
  %v505 = vpack.c.b16 %v380, %v379
  %v506 = vpack.c.b16 %v382, %v381
  %v507 = vpack.c.b16 %v384, %v383
  %v508 = vpack.c.b16 %v386, %v385
  %v509 = vpack.c.b16 %v388, %v387
  %v510 = vpack.c.b16 %v390, %v389
  %v511 = vpack.c.b16 %v392, %v391
  %v512 = vpack.c.b16 %v394, %v393
  %v513 = vpack.c.b16 %v396, %v395
  %v514 = vpack.c.b16 %v398, %v397
  %v515 = vpack.c.b16 %v400, %v399
  %v516 = vpack.c.b16 %v402, %v401
  %v517 = vpack.c.b16 %v404, %v403
  %v518 = vpack.c.b16 %v406, %v405
  %v519 = vpack.c.b16 %v408, %v407
  %v520 = vpack.c.b16 %v410, %v409
  %v521 = vpack.c.b16 %v412, %v411
  %v522 = vpack.c.b16 %v414, %v413
  %v523 = vpack.c.b16 %v416, %v415
  %v524 = vpack.c.b16 %v418, %v417
  %v525 = vpack.c.b16 %v420, %v419
  %v526 = vpack.c.b16 %v422, %v421
  %v527 = vpack.c.b16 %v424, %v423
  %v528 = vpack.c.b16 %v426, %v425
  %v529 = vpack.c.b16 %v428, %v427
  %v530 = vpack.c.b16 %v430, %v429
  %v531 = vpack.c.b16 %v432, %v431
  %v532 = vpack.c.b16 %v434, %v433
  %v533 = vpack.c.b16 %v436, %v435
  %v534 = vpack.c.b16 %v438, %v437
  %v535 = vpack.c.b16 %v440, %v439
  %v536 = vpack.c.b16 %v442, %v441
  %v537 = vpack.c.b16 %v444, %v443
  %v538 = vpack.c.b16 %v446, %v445
  %v539 = vpack.c.b16 %v448, %v447
  %v540 = vpack.c.b16 %v450, %v449
  %v541 = vpack.c.b16 %v452, %v451
  %v542 = vpack.c.b16 %v454, %v453
  %v543 = vpack.c.b16 %v456, %v455
  %v544 = vpack.c.b16 %v458, %v457
  %v545 = vpack.c.b16 %v460, %v459
  %v546 = vpack.c.b16 %v462, %v461
  %v547 = vpack.c.b16 %v464, %v463
  %v548 = vpack.c.b16 %v466, %v465
  %v549 = vpack.c.b16 %v468, %v467
  %v550 = vpack.c.b16 %v470, %v469
  %v551 = vpack.c.b16 %v472, %v471
  %v552 = vpack.c.b16 %v474, %v473
  %v553 = vpack.c.b16 %v476, %v475
  %v554 = vpack.c.b16 %v478, %v477
  %v555 = vpack.c.b16 %v480, %v479
  %v556 = vpack.c.b16 %v482, %v481
  %v557 = vpack.c.b16 %v484, %v483
  %v558 = vpack.c.b16 %v486, %v485
  %631 = vmatprep.subr.bf16.mxu0 0
  %632 = vmatpush1.bf16.msra.mxu0 %v487
  %633 = vmatprep.subr.bf16.mxu0 0
  %634 = vmatpush1.bf16.msra.mxu0 %v488
  %635 = vmatprep.subr.bf16.mxu0 0
  %636 = vmatpush1.bf16.msra.mxu0 %v489
  %637 = vmatprep.subr.bf16.mxu0 0
  %638 = vmatpush1.bf16.msra.mxu0 %v490
  %639 = vmatprep.subr.bf16.mxu0 0
  %640 = vmatpush1.bf16.msra.mxu0 %v491
  %641 = vmatprep.subr.bf16.mxu0 0
  %642 = vmatpush1.bf16.msra.mxu0 %v492
  %643 = vmatprep.subr.bf16.mxu0 0
  %644 = vmatpush1.bf16.msra.mxu0 %v493
  %645 = vmatprep.subr.bf16.mxu0 0
  %646 = vmatpush1.bf16.msra.mxu0 %v494
  %647 = vmatprep.subr.bf16.mxu0 0
  %648 = vmatpush1.bf16.msra.mxu0 %v495
  %649 = vmatprep.subr.bf16.mxu0 0
  %650 = vmatpush1.bf16.msra.mxu0 %v496
  %651 = vmatprep.subr.bf16.mxu0 0
  %652 = vmatpush1.bf16.msra.mxu0 %v497
  %653 = vmatprep.subr.bf16.mxu0 0
  %654 = vmatpush1.bf16.msra.mxu0 %v498
  %655 = vmatprep.subr.bf16.mxu0 0
  %656 = vmatpush1.bf16.msra.mxu0 %v499
  %657 = vmatprep.subr.bf16.mxu0 0
  %658 = vmatpush1.bf16.msra.mxu0 %v500
  %659 = vmatprep.subr.bf16.mxu0 0
  %660 = vmatpush1.bf16.msra.mxu0 %v501
  %661 = vmatprep.subr.bf16.mxu0 0
  %662 = vmatpush1.bf16.msra.mxu0 %v502
  %663 = vmatprep.mubr.bf16.mxu0 %v182
  %664 = vmatmul.mubr.bf16.gmra.mrb[0].mxu0 %v181
  %v665 = vpop.f32.mrb[0].mxu0
  %v666 = vadd.f32 0.0, %v665
  %v667 = vpop.f32.mrb[0].mxu0
  %v668 = vpop.f32.mrb[0].mxu0
  %v669 = vpop.f32.mrb[0].mxu0
  %670 = vdwg.mxu0
  %671 = vmatprep.subr.bf16.mxu0 0
  %672 = vmatpush1.bf16.msra.mxu0 %v503
  %673 = vmatprep.subr.bf16.mxu0 0
  %674 = vmatpush1.bf16.msra.mxu0 %v504
  %675 = vmatprep.subr.bf16.mxu0 0
  %676 = vmatpush1.bf16.msra.mxu0 %v505
  %677 = vmatprep.subr.bf16.mxu0 0
  %678 = vmatpush1.bf16.msra.mxu0 %v506
  %679 = vmatprep.subr.bf16.mxu0 0
  %680 = vmatpush1.bf16.msra.mxu0 %v507
  %681 = vmatprep.subr.bf16.mxu0 0
  %682 = vmatpush1.bf16.msra.mxu0 %v508
  %683 = vmatprep.subr.bf16.mxu0 0
  %684 = vmatpush1.bf16.msra.mxu0 %v509
  %685 = vmatprep.subr.bf16.mxu0 0
  %686 = vmatpush1.bf16.msra.mxu0 %v510
  %687 = vmatprep.subr.bf16.mxu0 0
  %688 = vmatpush1.bf16.msra.mxu0 %v511
  %689 = vmatprep.subr.bf16.mxu0 0
  %690 = vmatpush1.bf16.msra.mxu0 %v512
  %691 = vmatprep.subr.bf16.mxu0 0
  %692 = vmatpush1.bf16.msra.mxu0 %v513
  %693 = vmatprep.subr.bf16.mxu0 0
  %694 = vmatpush1.bf16.msra.mxu0 %v514
  %695 = vmatprep.subr.bf16.mxu0 0
  %696 = vmatpush1.bf16.msra.mxu0 %v515
  %697 = vmatprep.subr.bf16.mxu0 0
  %698 = vmatpush1.bf16.msra.mxu0 %v516
  %699 = vmatprep.subr.bf16.mxu0 0
  %700 = vmatpush1.bf16.msra.mxu0 %v517
  %701 = vmatprep.subr.bf16.mxu0 0
  %702 = vmatpush1.bf16.msra.mxu0 %v518
  %703 = vmatprep.mubr.bf16.mxu0 %v184
  %704 = vmatmul.mubr.bf16.gmra.mrb[0].mxu0 %v183
  %v705 = vpop.f32.mrb[0].mxu0
  %v706 = vadd.f32 %v666, %v705
  %v707 = vpop.f32.mrb[0].mxu0
  %v708 = vpop.f32.mrb[0].mxu0
  %v709 = vpop.f32.mrb[0].mxu0
  %710 = vdwg.mxu0
  %711 = vmatprep.subr.bf16.mxu0 0
  %712 = vmatpush1.bf16.msra.mxu0 %v519
  %713 = vmatprep.subr.bf16.mxu0 0
  %714 = vmatpush1.bf16.msra.mxu0 %v520
  %715 = vmatprep.subr.bf16.mxu0 0
  %716 = vmatpush1.bf16.msra.mxu0 %v521
  %717 = vmatprep.subr.bf16.mxu0 0
  %718 = vmatpush1.bf16.msra.mxu0 %v522
  %719 = vmatprep.subr.bf16.mxu0 0
  %720 = vmatpush1.bf16.msra.mxu0 %v523
  %721 = vmatprep.subr.bf16.mxu0 0
  %722 = vmatpush1.bf16.msra.mxu0 %v524
  %723 = vmatprep.subr.bf16.mxu0 0
  %724 = vmatpush1.bf16.msra.mxu0 %v525
  %725 = vmatprep.subr.bf16.mxu0 0
  %726 = vmatpush1.bf16.msra.mxu0 %v526
  %727 = vmatprep.subr.bf16.mxu0 0
  %728 = vmatpush1.bf16.msra.mxu0 %v527
  %729 = vmatprep.subr.bf16.mxu0 0
  %730 = vmatpush1.bf16.msra.mxu0 %v528
  %731 = vmatprep.subr.bf16.mxu0 0
  %732 = vmatpush1.bf16.msra.mxu0 %v529
  %733 = vmatprep.subr.bf16.mxu0 0
  %734 = vmatpush1.bf16.msra.mxu0 %v530
  %735 = vmatprep.subr.bf16.mxu0 0
  %736 = vmatpush1.bf16.msra.mxu0 %v531
  %737 = vmatprep.subr.bf16.mxu0 0
  %738 = vmatpush1.bf16.msra.mxu0 %v532
  %739 = vmatprep.subr.bf16.mxu0 0
  %740 = vmatpush1.bf16.msra.mxu0 %v533
  %741 = vmatprep.subr.bf16.mxu0 0
  %742 = vmatpush1.bf16.msra.mxu0 %v534
  %743 = vmatprep.mubr.bf16.mxu0 %v186
  %744 = vmatmul.mubr.bf16.gmra.mrb[0].mxu0 %v185
  %v745 = vpop.f32.mrb[0].mxu0
  %v746 = vadd.f32 %v706, %v745
  %v747 = vpop.f32.mrb[0].mxu0
  %v748 = vpop.f32.mrb[0].mxu0
  %v749 = vpop.f32.mrb[0].mxu0
  %750 = vdwg.mxu0
  %751 = vmatprep.subr.bf16.mxu0 0
  %752 = vmatpush1.bf16.msra.mxu0 %v535
  %753 = vmatprep.subr.bf16.mxu0 0
  %754 = vmatpush1.bf16.msra.mxu0 %v536
  %755 = vmatprep.subr.bf16.mxu0 0
  %756 = vmatpush1.bf16.msra.mxu0 %v537
  %757 = vmatprep.subr.bf16.mxu0 0
  %758 = vmatpush1.bf16.msra.mxu0 %v538
  %759 = vmatprep.subr.bf16.mxu0 0
  %760 = vmatpush1.bf16.msra.mxu0 %v539
  %761 = vmatprep.subr.bf16.mxu0 0
  %762 = vmatpush1.bf16.msra.mxu0 %v540
  %763 = vmatprep.subr.bf16.mxu0 0
  %764 = vmatpush1.bf16.msra.mxu0 %v541
  %765 = vmatprep.subr.bf16.mxu0 0
  %766 = vmatpush1.bf16.msra.mxu0 %v542
  %767 = vmatprep.subr.bf16.mxu0 0
  %768 = vmatpush1.bf16.msra.mxu0 %v543
  %769 = vmatprep.subr.bf16.mxu0 0
  %770 = vmatpush1.bf16.msra.mxu0 %v544
  %771 = vmatprep.subr.bf16.mxu0 0
  %772 = vmatpush1.bf16.msra.mxu0 %v545
  %773 = vmatprep.subr.bf16.mxu0 0
  %774 = vmatpush1.bf16.msra.mxu0 %v546
  %775 = vmatprep.subr.bf16.mxu0 0
  %776 = vmatpush1.bf16.msra.mxu0 %v547
  %777 = vmatprep.subr.bf16.mxu0 0
  %778 = vmatpush1.bf16.msra.mxu0 %v548
  %779 = vmatprep.subr.bf16.mxu0 0
  %780 = vmatpush1.bf16.msra.mxu0 %v549
  %781 = vmatprep.subr.bf16.mxu0 0
  %782 = vmatpush1.bf16.msra.mxu0 %v550
  %783 = vmatprep.mubr.bf16.mxu0 %v188
  %784 = vmatmul.mubr.bf16.gmra.mrb[0].mxu0 %v187
  %v785 = vpop.f32.mrb[0].mxu0
  %v786 = vadd.f32 %v746, %v785
  %v787 = vpop.f32.mrb[0].mxu0
  %v788 = vpop.f32.mrb[0].mxu0
  %v789 = vpop.f32.mrb[0].mxu0
  %790 = vdwg.mxu0
  %791 = vmatprep.subr.bf16.mxu0 0
  %792 = vmatpush1.bf16.msra.mxu0 %v551
  %793 = vmatprep.subr.bf16.mxu0 0
  %794 = vmatpush1.bf16.msra.mxu0 %v552
  %795 = vmatprep.subr.bf16.mxu0 0
  %796 = vmatpush1.bf16.msra.mxu0 %v553
  %797 = vmatprep.subr.bf16.mxu0 0
  %798 = vmatpush1.bf16.msra.mxu0 %v554
  %799 = vmatprep.subr.bf16.mxu0 0
  %800 = vmatpush1.bf16.msra.mxu0 %v555
  %801 = vmatprep.subr.bf16.mxu0 0
  %802 = vmatpush1.bf16.msra.mxu0 %v556
  %803 = vmatprep.subr.bf16.mxu0 0
  %804 = vmatpush1.bf16.msra.mxu0 %v557
  %805 = vmatprep.subr.bf16.mxu0 0
  %806 = vmatpush1.bf16.msra.mxu0 %v558
  %807 = vmatprep.subr.bf16.mxu0 0
  %808 = vmatpush1.bf16.msra.mxu0 0
  %809 = vmatprep.subr.bf16.mxu0 0
  %810 = vmatpush1.bf16.msra.mxu0 0
  %811 = vmatprep.subr.bf16.mxu0 0
  %812 = vmatpush1.bf16.msra.mxu0 0
  %813 = vmatprep.subr.bf16.mxu0 0
  %814 = vmatpush1.bf16.msra.mxu0 0
  %815 = vmatprep.subr.bf16.mxu0 0
  %816 = vmatpush1.bf16.msra.mxu0 0
  %817 = vmatprep.subr.bf16.mxu0 0
  %818 = vmatpush1.bf16.msra.mxu0 0
  %819 = vmatprep.subr.bf16.mxu0 0
  %820 = vmatpush1.bf16.msra.mxu0 0
  %821 = vmatprep.subr.bf16.mxu0 0
  %822 = vmatpush1.bf16.msra.mxu0 0
  %823 = vmatprep.mubr.bf16.mxu0 0
  %824 = vmatmul.mubr.bf16.gmra.mrb[0].mxu0 %v189
  %v825 = vpop.f32.mrb[0].mxu0
  %v826 = vadd.f32 %v786, %v825
  %v827 = vpop.f32.mrb[0].mxu0
  %v828 = vpop.f32.mrb[0].mxu0
  %v829 = vpop.f32.mrb[0].mxu0
  %830 = vdwg.mxu0
  %vm831 = vcmask 523264
  %v832 = vsel %vm831, %v826, 0.0
  %v833 = vrot.slane %v832, 4
  %v834 = vadd.f32 %v832, %v833
  %v835 = vrot.slane %v834, 2
  %v836 = vadd.f32 %v834, %v835
  %v837 = vrot.slane %v836, 1
  %v838 = vadd.f32 %v836, %v837
  %v839 = vmul.f32 %v838, 0.125
  %v840 = vmul.f32 %v826, %v826
  %v841 = vsel %vm831, %v840, 0.0
  %v842 = vrot.slane %v841, 4
  %v843 = vadd.f32 %v841, %v842
  %v844 = vrot.slane %v843, 2
  %v845 = vadd.f32 %v843, %v844
  %v846 = vrot.slane %v845, 1
  %v847 = vadd.f32 %v845, %v846
  %v848 = vmul.f32 %v847, 0.125
  %v849 = vmul.f32 %v839, %v839
  %v850 = vsub.f32 %v848, %v849
  %v851 = vmax.f32 %v850, 0.0
  %v852 = vld [vmem:[%s2] sm:$0x1]
  %v853 = vadd.f32 %v851, 1e-05
  %v854 = vrsqrt.pop %v853
  %v855 = vmul.f32 %v852, %v854
  %v856 = vld [vmem:[%s3] sm:$0x1]
  %v857 = vmul.f32 %v839, %v855
  %v858 = vsub.f32 %v856, %v857
  %v860 = vlaneseq
  %v861 = vshrl.u32 %v860, 7
  %v862 = vsub.s32 0, %v861
  %v863 = vrot.slane %v855, %v862
  %v865 = vmul.f32 %v826, %v863
  %v867 = vlaneseq
  %v868 = vshrl.u32 %v867, 7
  %v869 = vsub.s32 0, %v868
  %v870 = vrot.slane %v858, %v869
  %v872 = vadd.f32 %v865, %v870
  %v873 = vmax.f32 %v872, 0.0
  %874 = vst.msk [vmem:[%s4] sm:$0xff] %vm831, %v873
  // Predicated region
  $region18: #{unet_forward.42} parent=0 // pred_check
    _
  $region19: #{unet_forward.42} parent=0 // pred_check_branch
    %876 = sbr.rel (0) target = $region21
  $region20: #{unet_forward.42} parent=0 // pred_region
    _
  $region21: #{unet_forward.42} parent=0 // pred_fallthru
    _
  // Predicated region
  $region22: #{unet_forward.42} parent=0 // pred_check
    _
  $region23: #{unet_forward.42} parent=0 // pred_check_branch
    %878 = sbr.rel (0) target = $region25
  $region24: #{unet_forward.42} parent=0 // pred_region
    _
  $region25: #{unet_forward.42} parent=0 // pred_fallthru
    _

// kernel: tile.33
$region0: #{tile.33}
  #allocation0 [shape = 's32[1]{0}', space=sflag, size = 0x4, scoped, tag = 'scoped memory for tile.33']
  %s0 = inlined_call_operand.vmem [shape: f32[16], index: 0, kind: input, shape index: {}]
  %s1 = inlined_call_operand.vmem [shape: f32[4,16], index: 1, kind: output, shape index: {}]
  // Predicated region
  $region2: #{tile.33} parent=0 // pred_check
    _
  $region3: #{tile.33} parent=0 // pred_check_branch
    %3 = sbr.rel (0) target = $region5
  $region4: #{tile.33} parent=0 // pred_region
    _
  $region5: #{tile.33} parent=0 // pred_fallthru
    _
  %v4 = vld [vmem:[%s0] ss:$0 sm:$0xff]
  %5 = vst [vmem:[%s1] sm:$0xf] %v4

// kernel: tile.34
$region0: #{tile.34}
  %s0 = inlined_call_operand.vmem [shape: f32[4,16], index: 0, kind: input, shape index: {}]
  %s1 = inlined_call_operand.vmem [shape: f32[1,64], index: 1, kind: output, shape index: {}]
  $region1: #{tile.34} parent=0
    #allocation0 [shape = 'u8[4096]{0}', space=vmem, size = 0x1000, scoped, tag = 'scoped mem for output reshape']
    #allocation1 [shape = 'u8[4096]{0}', space=vmem, size = 0x1000, scoped, tag = 'scoped mem for input reshape']
    %s3 = sshllo.u32 0, 4
    %v4 = vld [vmem:[%s0] sm:%s3]
    %5 = vst [vmem:[#allocation1] sm:%s3] %v4
    %v6 = vld [vmem:[#allocation1] sm:$0x1]
    %vm7 = vcmask 130048
    %8 = vst.msk [vmem:[#allocation0] sm:$0x1] %vm7, %v6
    %s9 = scalar_lea.vmem [#allocation1], 3
    %v10 = vld [vmem:[%s9] sm:$0x1]
    %11 = vrot.lane.b32.xlu0 %v10, 48
    %v12 = vpop.permute.xlu0 %11
    %vm13 = vcmask 523648
    %14 = vst.msk [vmem:[#allocation0] sm:$0x1] %vm13, %v12
    %s15 = scalar_lea.vmem [#allocation1], 2
    %v16 = vld [vmem:[%s15] sm:$0x1]
    %17 = vrot.lane.b32.xlu0 %v16, 32
    %v18 = vpop.permute.xlu0 %17
    %vm19 = vcmask 392448
    %20 = vst.msk [vmem:[#allocation0] sm:$0x1] %vm19, %v18
    %s21 = scalar_lea.vmem [#allocation1], 1
    %v22 = vld [vmem:[%s21] sm:$0x1]
    %23 = vrot.lane.b32.xlu0 %v22, 16
    %v24 = vpop.permute.xlu0 %23
    %vm25 = vcmask 261248
    %26 = vst.msk [vmem:[#allocation0] sm:$0x1] %vm25, %v24
    %s28 = sshllo.u32 0, 1
    %v30 = vld [vmem:[#allocation0] sm:%s28]
    %s31 = sshllo.u32 0, 1
    %32 = vst [vmem:[%s1] sm:%s31] %v30

// kernel: unet_forward.47
$region0: #{unet_forward.47}
  #allocation0 [shape = 'u32[]', space=smem, size = 0x4, offset = 0x4, fixed_abs, tag = 'smem constant byte address 0x4 - core index']
  #allocation1 [shape = 'u32[144,128]{1,0:T(1,128)}', space=vmem, size = 0x12000, scoped, tag = 'internal scratch']
  %s0 = inlined_call_operand.vmem [shape: bf16[32,32], index: 0, kind: input, shape index: {}]
  %s1 = inlined_call_operand.vmem [shape: bf16[32,64], index: 1, kind: input, shape index: {}]
  %s2 = inlined_call_operand.vmem [shape: f32[1,64], index: 2, kind: input, shape index: {}]
  %s3 = inlined_call_operand.vmem [shape: f32[32,64], index: 3, kind: output, shape index: {}]
  %s4 = sld [smem:[#allocation0]]
  $region22: #{unet_forward.47} parent=0
    _
  %s6 = ssub.s32 1, %s4
  %s7 = scalar_select 0, %s6, %s4
  // Predicated region
  $region2: #{unet_forward.47} parent=0 // pred_check
    _
  $region3: #{unet_forward.47} parent=0 // pred_check_branch
    %9 = sbr.rel (0) target = $region5
  $region4: #{unet_forward.47} parent=0 // pred_region
    _
  $region5: #{unet_forward.47} parent=0 // pred_fallthru
    _
  // Predicated region
  $region6: #{unet_forward.47} parent=0 // pred_check
    _
  $region7: #{unet_forward.47} parent=0 // pred_check_branch
    %11 = sbr.rel (0) target = $region9
  $region8: #{unet_forward.47} parent=0 // pred_region
    _
  $region9: #{unet_forward.47} parent=0 // pred_fallthru
    _
  // Predicated region
  $region10: #{unet_forward.47} parent=0 // pred_check
    _
  $region11: #{unet_forward.47} parent=0 // pred_check_branch
    %13 = sbr.rel (0) target = $region13
  $region12: #{unet_forward.47} parent=0 // pred_region
    _
  $region13: #{unet_forward.47} parent=0 // pred_fallthru
    _
  %v15 = vld [vmem:[%s0] sm:$0xf]
  %v16 = vld [vmem:[%s0 + $0x4] sm:$0xf]
  %v17 = vld [vmem:[%s0 + $0x8] sm:$0xf]
  %v18 = vld [vmem:[%s0 + $0xc] sm:$0xf]
  %v19 = vld [vmem:[%s1] sm:$0xf]
  %v20 = vld [vmem:[%s1 + $0x4] sm:$0xf]
  %v21 = vld [vmem:[%s1 + $0x8] sm:$0xf]
  %v22 = vld [vmem:[%s1 + $0xc] sm:$0xf]
  %v23 = vld [vmem:[%s2] sm:$0x1]
  %v25 = vlaneseq
  %v26 = vshrl.u32 %v25, 7
  %v27 = vsub.s32 0, %v26
  %v28 = vrot.slane %v23, %v27
  %v34 = vunpack.c.l.b16 %v15
  %v35 = vunpack.c.l.b16 %v16
  %v36 = vunpack.c.l.b16 %v17
  %v37 = vunpack.c.l.b16 %v18
  %v38 = vpack.c.b16 %v35, %v34
  %v39 = vpack.c.b16 %v37, %v36
  %v44 = vunpack.c.l.b16 %v19
  %v45 = vunpack.c.l.b16 %v20
  %v46 = vunpack.c.l.b16 %v21
  %v47 = vunpack.c.l.b16 %v22
  %v48 = vpack.c.b16 %v45, %v44
  %v49 = vpack.c.b16 %v47, %v46
  %vm52 = vcmask 261120
  %v54 = vsel %vm52, %v38, 0
  %v57 = vsel %vm52, %v39, 0
  %59 = vmatprep.subr.bf16.mxu0 0
  %60 = vmatpush1.bf16.msra.mxu0 %v48
  %61 = vmatprep.subr.bf16.mxu0 0
  %62 = vmatpush1.bf16.msra.mxu0 %v49
  %63 = vmatprep.subr.bf16.mxu0 0
  %64 = vmatpush1.bf16.msra.mxu0 0
  %65 = vmatprep.subr.bf16.mxu0 0
  %66 = vmatpush1.bf16.msra.mxu0 0
  %67 = vmatprep.subr.bf16.mxu0 0
  %68 = vmatpush1.bf16.msra.mxu0 0
  %69 = vmatprep.subr.bf16.mxu0 0
  %70 = vmatpush1.bf16.msra.mxu0 0
  %71 = vmatprep.subr.bf16.mxu0 0
  %72 = vmatpush1.bf16.msra.mxu0 0
  %73 = vmatprep.subr.bf16.mxu0 0
  %74 = vmatpush1.bf16.msra.mxu0 0
  %75 = vmatprep.subr.bf16.mxu0 0
  %76 = vmatpush1.bf16.msra.mxu0 0
  %77 = vmatprep.subr.bf16.mxu0 0
  %78 = vmatpush1.bf16.msra.mxu0 0
  %79 = vmatprep.subr.bf16.mxu0 0
  %80 = vmatpush1.bf16.msra.mxu0 0
  %81 = vmatprep.subr.bf16.mxu0 0
  %82 = vmatpush1.bf16.msra.mxu0 0
  %83 = vmatprep.subr.bf16.mxu0 0
  %84 = vmatpush1.bf16.msra.mxu0 0
  %85 = vmatprep.subr.bf16.mxu0 0
  %86 = vmatpush1.bf16.msra.mxu0 0
  %87 = vmatprep.subr.bf16.mxu0 0
  %88 = vmatpush1.bf16.msra.mxu0 0
  %89 = vmatprep.subr.bf16.mxu0 0
  %90 = vmatpush1.bf16.msra.mxu0 0
  %91 = vmatprep.mubr.bf16.mxu0 0
  %92 = vmatmul.mubr.bf16.gmra.mrb[0].mxu0 %v54
  %v93 = vpop.f32.mrb[0].mxu0
  %v94 = vadd.f32 %v28, %v93
  %v95 = vpop.f32.mrb[0].mxu0
  %v96 = vpop.f32.mrb[0].mxu0
  %v97 = vadd.f32 %v28, %v96
  %v98 = vpop.f32.mrb[0].mxu0
  %99 = vmatprep.mubr.bf16.mxu0 0
  %100 = vmatmul.mubr.bf16.gmra.mrb[0].mxu0 %v57
  %v101 = vpop.f32.mrb[0].mxu0
  %v102 = vadd.f32 %v28, %v101
  %v103 = vpop.f32.mrb[0].mxu0
  %v104 = vpop.f32.mrb[0].mxu0
  %v105 = vadd.f32 %v28, %v104
  %v106 = vpop.f32.mrb[0].mxu0
  %107 = vdwg.mxu0
  %vm108 = vcmask 523264
  %109 = vst.msk [vmem:[%s3] sm:$0xff] %vm108, %v94
  %110 = vst.msk [vmem:[%s3 + $0x8] sm:$0xff] %vm108, %v97
  %111 = vst.msk [vmem:[%s3 + $0x10] sm:$0xff] %vm108, %v102
  %112 = vst.msk [vmem:[%s3 + $0x18] sm:$0xff] %vm108, %v105
  // Predicated region
  $region14: #{unet_forward.47} parent=0 // pred_check
    _
  $region15: #{unet_forward.47} parent=0 // pred_check_branch
    %114 = sbr.rel (0) target = $region17
  $region16: #{unet_forward.47} parent=0 // pred_region
    _
  $region17: #{unet_forward.47} parent=0 // pred_fallthru
    _
  // Predicated region
  $region18: #{unet_forward.47} parent=0 // pred_check
    _
  $region19: #{unet_forward.47} parent=0 // pred_check_branch
    %116 = sbr.rel (0) target = $region21
  $region20: #{unet_forward.47} parent=0 // pred_region
    _
  $region21: #{unet_forward.47} parent=0 // pred_fallthru
    _

// kernel: unet_forward.45
$region0: #{unet_forward.45}
  #allocation0 [shape = 'u32[]', space=smem, size = 0x4, offset = 0x4, fixed_abs, tag = 'smem constant byte address 0x4 - core index']
  #allocation1 [shape = 'u32[144,128]{1,0:T(1,128)}', space=vmem, size = 0x12000, scoped, tag = 'internal scratch']
  %s0 = inlined_call_operand.vmem [shape: bf16[32,576], index: 0, kind: input, shape index: {}]
  %s1 = inlined_call_operand.vmem [shape: bf16[576,32], index: 1, kind: input, shape index: {}]
  %s2 = inlined_call_operand.vmem [shape: f32[1,32], index: 2, kind: input, shape index: {}]
  %s3 = inlined_call_operand.vmem [shape: f32[1,32], index: 3, kind: input, shape index: {}]
  %s4 = inlined_call_operand.vmem [shape: f32[32,32], index: 4, kind: output, shape index: {}]
  %s5 = sld [smem:[#allocation0]]
  $region26: #{unet_forward.45} parent=0
    _
  %s7 = ssub.s32 1, %s5
  %s8 = scalar_select 0, %s7, %s5
  // Predicated region
  $region2: #{unet_forward.45} parent=0 // pred_check
    _
  $region3: #{unet_forward.45} parent=0 // pred_check_branch
    %10 = sbr.rel (0) target = $region5
  $region4: #{unet_forward.45} parent=0 // pred_region
    _
  $region5: #{unet_forward.45} parent=0 // pred_fallthru
    _
  // Predicated region
  $region6: #{unet_forward.45} parent=0 // pred_check
    _
  $region7: #{unet_forward.45} parent=0 // pred_check_branch
    %12 = sbr.rel (0) target = $region9
  $region8: #{unet_forward.45} parent=0 // pred_region
    _
  $region9: #{unet_forward.45} parent=0 // pred_fallthru
    _
  // Predicated region
  $region10: #{unet_forward.45} parent=0 // pred_check
    _
  $region11: #{unet_forward.45} parent=0 // pred_check_branch
    %14 = sbr.rel (0) target = $region13
  $region12: #{unet_forward.45} parent=0 // pred_region
    _
  $region13: #{unet_forward.45} parent=0 // pred_fallthru
    _
  // Predicated region
  $region14: #{unet_forward.45} parent=0 // pred_check
    _
  $region15: #{unet_forward.45} parent=0 // pred_check_branch
    %16 = sbr.rel (0) target = $region17
  $region16: #{unet_forward.45} parent=0 // pred_region
    _
  $region17: #{unet_forward.45} parent=0 // pred_fallthru
    _
  %v18 = vld [vmem:[%s0] sm:$0xff]
  %v19 = vld [vmem:[%s0 + $0x8] sm:$0xff]
  %v20 = vld [vmem:[%s0 + $0x10] sm:$0xf]
  %v21 = vld [vmem:[%s0 + $0x14] sm:$0xff]
  %v22 = vld [vmem:[%s0 + $0x1c] sm:$0xff]
  %v23 = vld [vmem:[%s0 + $0x24] sm:$0xf]
  %v24 = vld [vmem:[%s0 + $0x28] sm:$0xff]
  %v25 = vld [vmem:[%s0 + $0x30] sm:$0xff]
  %v26 = vld [vmem:[%s0 + $0x38] sm:$0xf]
  %v27 = vld [vmem:[%s0 + $0x3c] sm:$0xff]
  %v28 = vld [vmem:[%s0 + $0x44] sm:$0xff]
  %v29 = vld [vmem:[%s0 + $0x4c] sm:$0xf]
  %v30 = vld [vmem:[%s1] sm:$0xf]
  %v31 = vld [vmem:[%s1 + $0x4] sm:$0xf]
  %v32 = vld [vmem:[%s1 + $0x8] sm:$0xf]
  %v33 = vld [vmem:[%s1 + $0xc] sm:$0xf]
  %v34 = vld [vmem:[%s1 + $0x10] sm:$0xf]
  %v35 = vld [vmem:[%s1 + $0x14] sm:$0xf]
  %v36 = vld [vmem:[%s1 + $0x18] sm:$0xf]
  %v37 = vld [vmem:[%s1 + $0x1c] sm:$0xf]
  %v38 = vld [vmem:[%s1 + $0x20] sm:$0xf]
  %v39 = vld [vmem:[%s1 + $0x24] sm:$0xf]
  %v40 = vld [vmem:[%s1 + $0x28] sm:$0xf]
  %v41 = vld [vmem:[%s1 + $0x2c] sm:$0xf]
  %v42 = vld [vmem:[%s1 + $0x30] sm:$0xf]
  %v43 = vld [vmem:[%s1 + $0x34] sm:$0xf]
  %v44 = vld [vmem:[%s1 + $0x38] sm:$0xf]
  %v45 = vld [vmem:[%s1 + $0x3c] sm:$0xf]
  %v46 = vld [vmem:[%s1 + $0x40] sm:$0xf]
  %v47 = vld [vmem:[%s1 + $0x44] sm:$0xf]
  %v48 = vld [vmem:[%s1 + $0x48] sm:$0xf]
  %v49 = vld [vmem:[%s1 + $0x4c] sm:$0xf]
  %v50 = vld [vmem:[%s1 + $0x50] sm:$0xf]
  %v51 = vld [vmem:[%s1 + $0x54] sm:$0xf]
  %v52 = vld [vmem:[%s1 + $0x58] sm:$0xf]
  %v53 = vld [vmem:[%s1 + $0x5c] sm:$0xf]
  %v54 = vld [vmem:[%s1 + $0x60] sm:$0xf]
  %v55 = vld [vmem:[%s1 + $0x64] sm:$0xf]
  %v56 = vld [vmem:[%s1 + $0x68] sm:$0xf]
  %v57 = vld [vmem:[%s1 + $0x6c] sm:$0xf]
  %v58 = vld [vmem:[%s1 + $0x70] sm:$0xf]
  %v59 = vld [vmem:[%s1 + $0x74] sm:$0xf]
  %v60 = vld [vmem:[%s1 + $0x78] sm:$0xf]
  %v61 = vld [vmem:[%s1 + $0x7c] sm:$0xf]
  %v62 = vld [vmem:[%s1 + $0x80] sm:$0xf]
  %v63 = vld [vmem:[%s1 + $0x84] sm:$0xf]
  %v64 = vld [vmem:[%s1 + $0x88] sm:$0xf]
  %v65 = vld [vmem:[%s1 + $0x8c] sm:$0xf]
  %v66 = vld [vmem:[%s1 + $0x90] sm:$0xf]
  %v67 = vld [vmem:[%s1 + $0x94] sm:$0xf]
  %v68 = vld [vmem:[%s1 + $0x98] sm:$0xf]
  %v69 = vld [vmem:[%s1 + $0x9c] sm:$0xf]
  %v70 = vld [vmem:[%s1 + $0xa0] sm:$0xf]
  %v71 = vld [vmem:[%s1 + $0xa4] sm:$0xf]
  %v72 = vld [vmem:[%s1 + $0xa8] sm:$0xf]
  %v73 = vld [vmem:[%s1 + $0xac] sm:$0xf]
  %v74 = vld [vmem:[%s1 + $0xb0] sm:$0xf]
  %v75 = vld [vmem:[%s1 + $0xb4] sm:$0xf]
  %v76 = vld [vmem:[%s1 + $0xb8] sm:$0xf]
  %v77 = vld [vmem:[%s1 + $0xbc] sm:$0xf]
  %v78 = vld [vmem:[%s1 + $0xc0] sm:$0xf]
  %v79 = vld [vmem:[%s1 + $0xc4] sm:$0xf]
  %v80 = vld [vmem:[%s1 + $0xc8] sm:$0xf]
  %v81 = vld [vmem:[%s1 + $0xcc] sm:$0xf]
  %v82 = vld [vmem:[%s1 + $0xd0] sm:$0xf]
  %v83 = vld [vmem:[%s1 + $0xd4] sm:$0xf]
  %v84 = vld [vmem:[%s1 + $0xd8] sm:$0xf]
  %v85 = vld [vmem:[%s1 + $0xdc] sm:$0xf]
  %v86 = vld [vmem:[%s1 + $0xe0] sm:$0xf]
  %v87 = vld [vmem:[%s1 + $0xe4] sm:$0xf]
  %v88 = vld [vmem:[%s1 + $0xe8] sm:$0xf]
  %v89 = vld [vmem:[%s1 + $0xec] sm:$0xf]
  %v90 = vld [vmem:[%s1 + $0xf0] sm:$0xf]
  %v91 = vld [vmem:[%s1 + $0xf4] sm:$0xf]
  %v92 = vld [vmem:[%s1 + $0xf8] sm:$0xf]
  %v93 = vld [vmem:[%s1 + $0xfc] sm:$0xf]
  %v94 = vld [vmem:[%s1 + $0x100] sm:$0xf]
  %v95 = vld [vmem:[%s1 + $0x104] sm:$0xf]
  %v96 = vld [vmem:[%s1 + $0x108] sm:$0xf]
  %v97 = vld [vmem:[%s1 + $0x10c] sm:$0xf]
  %v98 = vld [vmem:[%s1 + $0x110] sm:$0xf]
  %v99 = vld [vmem:[%s1 + $0x114] sm:$0xf]
  %v100 = vld [vmem:[%s1 + $0x118] sm:$0xf]
  %v101 = vld [vmem:[%s1 + $0x11c] sm:$0xf]
  %v114 = vunpack.c.l.b16 %v18
  %v115 = vunpack.c.h.b16 %v18
  %v116 = vunpack.c.l.b16 %v19
  %v117 = vunpack.c.h.b16 %v19
  %v118 = vunpack.c.l.b16 %v20
  %v119 = vunpack.c.l.b16 %v21
  %v120 = vunpack.c.h.b16 %v21
  %v121 = vunpack.c.l.b16 %v22
  %v122 = vunpack.c.h.b16 %v22
  %v123 = vunpack.c.l.b16 %v23
  %v124 = vunpack.c.l.b16 %v24
  %v125 = vunpack.c.h.b16 %v24
  %v126 = vunpack.c.l.b16 %v25
  %v127 = vunpack.c.h.b16 %v25
  %v128 = vunpack.c.l.b16 %v26
  %v129 = vunpack.c.l.b16 %v27
  %v130 = vunpack.c.h.b16 %v27
  %v131 = vunpack.c.l.b16 %v28
  %v132 = vunpack.c.h.b16 %v28
  %v133 = vunpack.c.l.b16 %v29
  %v134 = vpack.c.b16 %v119, %v114
  %v135 = vpack.c.b16 %v120, %v115
  %v136 = vpack.c.b16 %v121, %v116
  %v137 = vpack.c.b16 %v122, %v117
  %v138 = vpack.c.b16 %v123, %v118
  %v139 = vpack.c.b16 %v129, %v124
  %v140 = vpack.c.b16 %v130, %v125
  %v141 = vpack.c.b16 %v131, %v126
  %v142 = vpack.c.b16 %v132, %v127
  %v143 = vpack.c.b16 %v133, %v128
  %v224 = vunpack.c.l.b16 %v30
  %v225 = vunpack.c.l.b16 %v31
  %v226 = vunpack.c.l.b16 %v32
  %v227 = vunpack.c.l.b16 %v33
  %v228 = vunpack.c.l.b16 %v34
  %v229 = vunpack.c.l.b16 %v35
  %v230 = vunpack.c.l.b16 %v36
  %v231 = vunpack.c.l.b16 %v37
  %v232 = vunpack.c.l.b16 %v38
  %v233 = vunpack.c.l.b16 %v39
  %v234 = vunpack.c.l.b16 %v40
  %v235 = vunpack.c.l.b16 %v41
  %v236 = vunpack.c.l.b16 %v42
  %v237 = vunpack.c.l.b16 %v43
  %v238 = vunpack.c.l.b16 %v44
  %v239 = vunpack.c.l.b16 %v45
  %v240 = vunpack.c.l.b16 %v46
  %v241 = vunpack.c.l.b16 %v47
  %v242 = vunpack.c.l.b16 %v48
  %v243 = vunpack.c.l.b16 %v49
  %v244 = vunpack.c.l.b16 %v50
  %v245 = vunpack.c.l.b16 %v51
  %v246 = vunpack.c.l.b16 %v52
  %v247 = vunpack.c.l.b16 %v53
  %v248 = vunpack.c.l.b16 %v54
  %v249 = vunpack.c.l.b16 %v55
  %v250 = vunpack.c.l.b16 %v56
  %v251 = vunpack.c.l.b16 %v57
  %v252 = vunpack.c.l.b16 %v58
  %v253 = vunpack.c.l.b16 %v59
  %v254 = vunpack.c.l.b16 %v60
  %v255 = vunpack.c.l.b16 %v61
  %v256 = vunpack.c.l.b16 %v62
  %v257 = vunpack.c.l.b16 %v63
  %v258 = vunpack.c.l.b16 %v64
  %v259 = vunpack.c.l.b16 %v65
  %v260 = vunpack.c.l.b16 %v66
  %v261 = vunpack.c.l.b16 %v67
  %v262 = vunpack.c.l.b16 %v68
  %v263 = vunpack.c.l.b16 %v69
  %v264 = vunpack.c.l.b16 %v70
  %v265 = vunpack.c.l.b16 %v71
  %v266 = vunpack.c.l.b16 %v72
  %v267 = vunpack.c.l.b16 %v73
  %v268 = vunpack.c.l.b16 %v74
  %v269 = vunpack.c.l.b16 %v75
  %v270 = vunpack.c.l.b16 %v76
  %v271 = vunpack.c.l.b16 %v77
  %v272 = vunpack.c.l.b16 %v78
  %v273 = vunpack.c.l.b16 %v79
  %v274 = vunpack.c.l.b16 %v80
  %v275 = vunpack.c.l.b16 %v81
  %v276 = vunpack.c.l.b16 %v82
  %v277 = vunpack.c.l.b16 %v83
  %v278 = vunpack.c.l.b16 %v84
  %v279 = vunpack.c.l.b16 %v85
  %v280 = vunpack.c.l.b16 %v86
  %v281 = vunpack.c.l.b16 %v87
  %v282 = vunpack.c.l.b16 %v88
  %v283 = vunpack.c.l.b16 %v89
  %v284 = vunpack.c.l.b16 %v90
  %v285 = vunpack.c.l.b16 %v91
  %v286 = vunpack.c.l.b16 %v92
  %v287 = vunpack.c.l.b16 %v93
  %v288 = vunpack.c.l.b16 %v94
  %v289 = vunpack.c.l.b16 %v95
  %v290 = vunpack.c.l.b16 %v96
  %v291 = vunpack.c.l.b16 %v97
  %v292 = vunpack.c.l.b16 %v98
  %v293 = vunpack.c.l.b16 %v99
  %v294 = vunpack.c.l.b16 %v100
  %v295 = vunpack.c.l.b16 %v101
  %v296 = vpack.c.b16 %v225, %v224
  %v297 = vpack.c.b16 %v227, %v226
  %v298 = vpack.c.b16 %v229, %v228
  %v299 = vpack.c.b16 %v231, %v230
  %v300 = vpack.c.b16 %v233, %v232
  %v301 = vpack.c.b16 %v235, %v234
  %v302 = vpack.c.b16 %v237, %v236
  %v303 = vpack.c.b16 %v239, %v238
  %v304 = vpack.c.b16 %v241, %v240
  %v305 = vpack.c.b16 %v243, %v242
  %v306 = vpack.c.b16 %v245, %v244
  %v307 = vpack.c.b16 %v247, %v246
  %v308 = vpack.c.b16 %v249, %v248
  %v309 = vpack.c.b16 %v251, %v250
  %v310 = vpack.c.b16 %v253, %v252
  %v311 = vpack.c.b16 %v255, %v254
  %v312 = vpack.c.b16 %v257, %v256
  %v313 = vpack.c.b16 %v259, %v258
  %v314 = vpack.c.b16 %v261, %v260
  %v315 = vpack.c.b16 %v263, %v262
  %v316 = vpack.c.b16 %v265, %v264
  %v317 = vpack.c.b16 %v267, %v266
  %v318 = vpack.c.b16 %v269, %v268
  %v319 = vpack.c.b16 %v271, %v270
  %v320 = vpack.c.b16 %v273, %v272
  %v321 = vpack.c.b16 %v275, %v274
  %v322 = vpack.c.b16 %v277, %v276
  %v323 = vpack.c.b16 %v279, %v278
  %v324 = vpack.c.b16 %v281, %v280
  %v325 = vpack.c.b16 %v283, %v282
  %v326 = vpack.c.b16 %v285, %v284
  %v327 = vpack.c.b16 %v287, %v286
  %v328 = vpack.c.b16 %v289, %v288
  %v329 = vpack.c.b16 %v291, %v290
  %v330 = vpack.c.b16 %v293, %v292
  %v331 = vpack.c.b16 %v295, %v294
  %vm368 = vcmask 523264
  %v370 = vsel %vm368, %v138, 0
  %v373 = vsel %vm368, %v143, 0
  %375 = vmatprep.subr.bf16.mxu0 0
  %376 = vmatpush1.bf16.msra.mxu0 %v296
  %377 = vmatprep.subr.bf16.mxu0 0
  %378 = vmatpush1.bf16.msra.mxu0 %v297
  %379 = vmatprep.subr.bf16.mxu0 0
  %380 = vmatpush1.bf16.msra.mxu0 %v298
  %381 = vmatprep.subr.bf16.mxu0 0
  %382 = vmatpush1.bf16.msra.mxu0 %v299
  %383 = vmatprep.subr.bf16.mxu0 0
  %384 = vmatpush1.bf16.msra.mxu0 %v300
  %385 = vmatprep.subr.bf16.mxu0 0
  %386 = vmatpush1.bf16.msra.mxu0 %v301
  %387 = vmatprep.subr.bf16.mxu0 0
  %388 = vmatpush1.bf16.msra.mxu0 %v302
  %389 = vmatprep.subr.bf16.mxu0 0
  %390 = vmatpush1.bf16.msra.mxu0 %v303
  %391 = vmatprep.subr.bf16.mxu0 0
  %392 = vmatpush1.bf16.msra.mxu0 %v304
  %393 = vmatprep.subr.bf16.mxu0 0
  %394 = vmatpush1.bf16.msra.mxu0 %v305
  %395 = vmatprep.subr.bf16.mxu0 0
  %396 = vmatpush1.bf16.msra.mxu0 %v306
  %397 = vmatprep.subr.bf16.mxu0 0
  %398 = vmatpush1.bf16.msra.mxu0 %v307
  %399 = vmatprep.subr.bf16.mxu0 0
  %400 = vmatpush1.bf16.msra.mxu0 %v308
  %401 = vmatprep.subr.bf16.mxu0 0
  %402 = vmatpush1.bf16.msra.mxu0 %v309
  %403 = vmatprep.subr.bf16.mxu0 0
  %404 = vmatpush1.bf16.msra.mxu0 %v310
  %405 = vmatprep.subr.bf16.mxu0 0
  %406 = vmatpush1.bf16.msra.mxu0 %v311
  %407 = vmatprep.mubr.bf16.mxu0 %v135
  %408 = vmatmul.mubr.bf16.gmra.mrb[0].mxu0 %v134
  %v409 = vpop.f32.mrb[0].mxu0
  %v410 = vadd.f32 0.0, %v409
  %v411 = vpop.f32.mrb[0].mxu0
  %v412 = vpop.f32.mrb[0].mxu0
  %v413 = vadd.f32 0.0, %v412
  %v414 = vpop.f32.mrb[0].mxu0
  %415 = vmatprep.mubr.bf16.mxu0 %v140
  %416 = vmatmul.mubr.bf16.gmra.mrb[0].mxu0 %v139
  %v417 = vpop.f32.mrb[0].mxu0
  %v418 = vadd.f32 0.0, %v417
  %v419 = vpop.f32.mrb[0].mxu0
  %v420 = vpop.f32.mrb[0].mxu0
  %v421 = vadd.f32 0.0, %v420
  %v422 = vpop.f32.mrb[0].mxu0
  %423 = vdwg.mxu0
  %424 = vmatprep.subr.bf16.mxu0 0
  %425 = vmatpush1.bf16.msra.mxu0 %v312
  %426 = vmatprep.subr.bf16.mxu0 0
  %427 = vmatpush1.bf16.msra.mxu0 %v313
  %428 = vmatprep.subr.bf16.mxu0 0
  %429 = vmatpush1.bf16.msra.mxu0 %v314
  %430 = vmatprep.subr.bf16.mxu0 0
  %431 = vmatpush1.bf16.msra.mxu0 %v315
  %432 = vmatprep.subr.bf16.mxu0 0
  %433 = vmatpush1.bf16.msra.mxu0 %v316
  %434 = vmatprep.subr.bf16.mxu0 0
  %435 = vmatpush1.bf16.msra.mxu0 %v317
  %436 = vmatprep.subr.bf16.mxu0 0
  %437 = vmatpush1.bf16.msra.mxu0 %v318
  %438 = vmatprep.subr.bf16.mxu0 0
  %439 = vmatpush1.bf16.msra.mxu0 %v319
  %440 = vmatprep.subr.bf16.mxu0 0
  %441 = vmatpush1.bf16.msra.mxu0 %v320
  %442 = vmatprep.subr.bf16.mxu0 0
  %443 = vmatpush1.bf16.msra.mxu0 %v321
  %444 = vmatprep.subr.bf16.mxu0 0
  %445 = vmatpush1.bf16.msra.mxu0 %v322
  %446 = vmatprep.subr.bf16.mxu0 0
  %447 = vmatpush1.bf16.msra.mxu0 %v323
  %448 = vmatprep.subr.bf16.mxu0 0
  %449 = vmatpush1.bf16.msra.mxu0 %v324
  %450 = vmatprep.subr.bf16.mxu0 0
  %451 = vmatpush1.bf16.msra.mxu0 %v325
  %452 = vmatprep.subr.bf16.mxu0 0
  %453 = vmatpush1.bf16.msra.mxu0 %v326
  %454 = vmatprep.subr.bf16.mxu0 0
  %455 = vmatpush1.bf16.msra.mxu0 %v327
  %456 = vmatprep.mubr.bf16.mxu0 %v137
  %457 = vmatmul.mubr.bf16.gmra.mrb[0].mxu0 %v136
  %v458 = vpop.f32.mrb[0].mxu0
  %v459 = vadd.f32 %v410, %v458
  %v460 = vpop.f32.mrb[0].mxu0
  %v461 = vpop.f32.mrb[0].mxu0
  %v462 = vadd.f32 %v413, %v461
  %v463 = vpop.f32.mrb[0].mxu0
  %464 = vmatprep.mubr.bf16.mxu0 %v142
  %465 = vmatmul.mubr.bf16.gmra.mrb[0].mxu0 %v141
  %v466 = vpop.f32.mrb[0].mxu0
  %v467 = vadd.f32 %v418, %v466
  %v468 = vpop.f32.mrb[0].mxu0
  %v469 = vpop.f32.mrb[0].mxu0
  %v470 = vadd.f32 %v421, %v469
  %v471 = vpop.f32.mrb[0].mxu0
  %472 = vdwg.mxu0
  %473 = vmatprep.subr.bf16.mxu0 0
  %474 = vmatpush1.bf16.msra.mxu0 %v328
  %475 = vmatprep.subr.bf16.mxu0 0
  %476 = vmatpush1.bf16.msra.mxu0 %v329
  %477 = vmatprep.subr.bf16.mxu0 0
  %478 = vmatpush1.bf16.msra.mxu0 %v330
  %479 = vmatprep.subr.bf16.mxu0 0
  %480 = vmatpush1.bf16.msra.mxu0 %v331
  %481 = vmatprep.subr.bf16.mxu0 0
  %482 = vmatpush1.bf16.msra.mxu0 0
  %483 = vmatprep.subr.bf16.mxu0 0
  %484 = vmatpush1.bf16.msra.mxu0 0
  %485 = vmatprep.subr.bf16.mxu0 0
  %486 = vmatpush1.bf16.msra.mxu0 0
  %487 = vmatprep.subr.bf16.mxu0 0
  %488 = vmatpush1.bf16.msra.mxu0 0
  %489 = vmatprep.subr.bf16.mxu0 0
  %490 = vmatpush1.bf16.msra.mxu0 0
  %491 = vmatprep.subr.bf16.mxu0 0
  %492 = vmatpush1.bf16.msra.mxu0 0
  %493 = vmatprep.subr.bf16.mxu0 0
  %494 = vmatpush1.bf16.msra.mxu0 0
  %495 = vmatprep.subr.bf16.mxu0 0
  %496 = vmatpush1.bf16.msra.mxu0 0
  %497 = vmatprep.subr.bf16.mxu0 0
  %498 = vmatpush1.bf16.msra.mxu0 0
  %499 = vmatprep.subr.bf16.mxu0 0
  %500 = vmatpush1.bf16.msra.mxu0 0
  %501 = vmatprep.subr.bf16.mxu0 0
  %502 = vmatpush1.bf16.msra.mxu0 0
  %503 = vmatprep.subr.bf16.mxu0 0
  %504 = vmatpush1.bf16.msra.mxu0 0
  %505 = vmatprep.mubr.bf16.mxu0 0
  %506 = vmatmul.mubr.bf16.gmra.mrb[0].mxu0 %v370
  %v507 = vpop.f32.mrb[0].mxu0
  %v508 = vadd.f32 %v459, %v507
  %v509 = vpop.f32.mrb[0].mxu0
  %v510 = vpop.f32.mrb[0].mxu0
  %v511 = vadd.f32 %v462, %v510
  %v512 = vpop.f32.mrb[0].mxu0
  %513 = vmatprep.mubr.bf16.mxu0 0
  %514 = vmatmul.mubr.bf16.gmra.mrb[0].mxu0 %v373
  %v515 = vpop.f32.mrb[0].mxu0
  %v516 = vadd.f32 %v467, %v515
  %v517 = vpop.f32.mrb[0].mxu0
  %v518 = vpop.f32.mrb[0].mxu0
  %v519 = vadd.f32 %v470, %v518
  %v520 = vpop.f32.mrb[0].mxu0
  %521 = vdwg.mxu0
  %vm522 = vcmask 261120
  %v523 = vsel %vm522, %v508, 0.0
  %v524 = vsel %vm522, %v511, 0.0
  %v525 = vadd.f32 %v523, %v524
  %v526 = vsel %vm522, %v516, 0.0
  %v527 = vadd.f32 %v525, %v526
  %v528 = vsel %vm522, %v519, 0.0
  %v529 = vadd.f32 %v527, %v528
  %v530 = vrot.slane %v529, 4
  %v531 = vadd.f32 %v529, %v530
  %v532 = vrot.slane %v531, 2
  %v533 = vadd.f32 %v531, %v532
  %v534 = vrot.slane %v533, 1
  %v535 = vadd.f32 %v533, %v534
  %v536 = vmul.f32 %v535, 0.03125
  %v537 = vmul.f32 %v508, %v508
  %v538 = vmul.f32 %v511, %v511
  %v539 = vmul.f32 %v516, %v516
  %v540 = vmul.f32 %v519, %v519
  %v541 = vsel %vm522, %v537, 0.0
  %v542 = vsel %vm522, %v538, 0.0
  %v543 = vadd.f32 %v541, %v542
  %v544 = vsel %vm522, %v539, 0.0
  %v545 = vadd.f32 %v543, %v544
  %v546 = vsel %vm522, %v540, 0.0
  %v547 = vadd.f32 %v545, %v546
  %v548 = vrot.slane %v547, 4
  %v549 = vadd.f32 %v547, %v548
  %v550 = vrot.slane %v549, 2
  %v551 = vadd.f32 %v549, %v550
  %v552 = vrot.slane %v551, 1
  %v553 = vadd.f32 %v551, %v552
  %v554 = vmul.f32 %v553, 0.03125
  %v555 = vmul.f32 %v536, %v536
  %v556 = vsub.f32 %v554, %v555
  %v557 = vmax.f32 %v556, 0.0
  %v558 = vld [vmem:[%s2] sm:$0x1]
  %v559 = vadd.f32 %v557, 1e-05
  %v560 = vrsqrt.pop %v559
  %v561 = vmul.f32 %v558, %v560
  %v562 = vld [vmem:[%s3] sm:$0x1]
  %v563 = vmul.f32 %v536, %v561
  %v564 = vsub.f32 %v562, %v563
  %v566 = vlaneseq
  %v567 = vshrl.u32 %v566, 7
  %v568 = vsub.s32 0, %v567
  %v569 = vrot.slane %v561, %v568
  %v571 = vmul.f32 %v508, %v569
  %v572 = vmul.f32 %v511, %v569
  %v573 = vmul.f32 %v516, %v569
  %v574 = vmul.f32 %v519, %v569
  %v576 = vlaneseq
  %v577 = vshrl.u32 %v576, 7
  %v578 = vsub.s32 0, %v577
  %v579 = vrot.slane %v564, %v578
  %v581 = vadd.f32 %v571, %v579
  %v582 = vadd.f32 %v572, %v579
  %v583 = vadd.f32 %v573, %v579
  %v584 = vadd.f32 %v574, %v579
  %v585 = vmax.f32 %v581, 0.0
  %v586 = vmax.f32 %v582, 0.0
  %v587 = vmax.f32 %v583, 0.0
  %v588 = vmax.f32 %v584, 0.0
  %589 = vst.msk [vmem:[%s4] sm:$0xff] %vm522, %v585
  %590 = vst.msk [vmem:[%s4 + $0x8] sm:$0xff] %vm522, %v586
  %591 = vst.msk [vmem:[%s4 + $0x10] sm:$0xff] %vm522, %v587
  %592 = vst.msk [vmem:[%s4 + $0x18] sm:$0xff] %vm522, %v588
  // Predicated region
  $region18: #{unet_forward.45} parent=0 // pred_check
    _
  $region19: #{unet_forward.45} parent=0 // pred_check_branch
    %594 = sbr.rel (0) target = $region21
  $region20: #{unet_forward.45} parent=0 // pred_region
    _
  $region21: #{unet_forward.45} parent=0 // pred_fallthru
    _
  // Predicated region
  $region22: #{unet_forward.45} parent=0 // pred_check
    _
  $region23: #{unet_forward.45} parent=0 // pred_check_branch
    %596 = sbr.rel (0) target = $region25
  $region24: #{unet_forward.45} parent=0 // pred_region
    _
  $region25: #{unet_forward.45} parent=0 // pred_fallthru
    _

// kernel: tile.38
$region0: #{tile.38}
  #allocation0 [shape = 's32[1]{0}', space=sflag, size = 0x4, scoped, tag = 'scoped memory for tile.38']
  %s0 = inlined_call_operand.vmem [shape: f32[8], index: 0, kind: input, shape index: {}]
  %s1 = inlined_call_operand.vmem [shape: f32[4,8], index: 1, kind: output, shape index: {}]
  // Predicated region
  $region2: #{tile.38} parent=0 // pred_check
    _
  $region3: #{tile.38} parent=0 // pred_check_branch
    %3 = sbr.rel (0) target = $region5
  $region4: #{tile.38} parent=0 // pred_region
    _
  $region5: #{tile.38} parent=0 // pred_fallthru
    _
  %v4 = vld [vmem:[%s0] ss:$0 sm:$0xff]
  %5 = vst [vmem:[%s1] sm:$0xf] %v4

// kernel: tile.39
$region0: #{tile.39}
  %s0 = inlined_call_operand.vmem [shape: f32[4,8], index: 0, kind: input, shape index: {}]
  %s1 = inlined_call_operand.vmem [shape: f32[1,32], index: 1, kind: output, shape index: {}]
  $region1: #{tile.39} parent=0
    #allocation0 [shape = 'u8[4096]{0}', space=vmem, size = 0x1000, scoped, tag = 'scoped mem for output reshape']
    #allocation1 [shape = 'u8[4096]{0}', space=vmem, size = 0x1000, scoped, tag = 'scoped mem for input reshape']
    %s3 = sshllo.u32 0, 4
    %v4 = vld [vmem:[%s0] sm:%s3]
    %5 = vst [vmem:[#allocation1] sm:%s3] %v4
    %v6 = vld [vmem:[#allocation1] sm:$0x1]
    %vm7 = vcmask 64512
    %8 = vst.msk [vmem:[#allocation0] sm:$0x1] %vm7, %v6
    %s9 = scalar_lea.vmem [#allocation1], 3
    %v10 = vld [vmem:[%s9] sm:$0x1]
    %11 = vrot.lane.b32.xlu0 %v10, 24
    %v12 = vpop.permute.xlu0 %11
    %vm13 = vcmask 261312
    %14 = vst.msk [vmem:[#allocation0] sm:$0x1] %vm13, %v12
    %s15 = scalar_lea.vmem [#allocation1], 2
    %v16 = vld [vmem:[%s15] sm:$0x1]
    %17 = vrot.lane.b32.xlu0 %v16, 16
    %v18 = vpop.permute.xlu0 %17
    %vm19 = vcmask 195712
    %20 = vst.msk [vmem:[#allocation0] sm:$0x1] %vm19, %v18
    %s21 = scalar_lea.vmem [#allocation1], 1
    %v22 = vld [vmem:[%s21] sm:$0x1]
    %23 = vrot.lane.b32.xlu0 %v22, 8
    %v24 = vpop.permute.xlu0 %23
    %vm25 = vcmask 130112
    %26 = vst.msk [vmem:[#allocation0] sm:$0x1] %vm25, %v24
    %s28 = sshllo.u32 0, 1
    %v30 = vld [vmem:[#allocation0] sm:%s28]
    %s31 = sshllo.u32 0, 1
    %32 = vst [vmem:[%s1] sm:%s31] %v30

// kernel: unet_forward.48
$region0: #{unet_forward.48}
  #allocation0 [shape = 'u32[]', space=smem, size = 0x4, offset = 0x4, fixed_abs, tag = 'smem constant byte address 0x4 - core index']
  #allocation1 [shape = 'u32[144,128]{1,0:T(1,128)}', space=vmem, size = 0x12000, scoped, tag = 'internal scratch']
  %s0 = inlined_call_operand.vmem [shape: bf16[128,288], index: 0, kind: input, shape index: {}]
  %s1 = inlined_call_operand.vmem [shape: bf16[288,16], index: 1, kind: input, shape index: {}]
  %s2 = inlined_call_operand.vmem [shape: f32[1,16], index: 2, kind: input, shape index: {}]
  %s3 = inlined_call_operand.vmem [shape: f32[1,16], index: 3, kind: input, shape index: {}]
  %s4 = inlined_call_operand.vmem [shape: f32[128,16], index: 4, kind: output, shape index: {}]
  %s5 = sld [smem:[#allocation0]]
  $region26: #{unet_forward.48} parent=0
    _
  %s7 = ssub.s32 1, %s5
  %s8 = scalar_select 0, %s7, %s5
  // Predicated region
  $region2: #{unet_forward.48} parent=0 // pred_check
    _
  $region3: #{unet_forward.48} parent=0 // pred_check_branch
    %10 = sbr.rel (0) target = $region5
  $region4: #{unet_forward.48} parent=0 // pred_region
    _
  $region5: #{unet_forward.48} parent=0 // pred_fallthru
    _
  // Predicated region
  $region6: #{unet_forward.48} parent=0 // pred_check
    _
  $region7: #{unet_forward.48} parent=0 // pred_check_branch
    %12 = sbr.rel (0) target = $region9
  $region8: #{unet_forward.48} parent=0 // pred_region
    _
  $region9: #{unet_forward.48} parent=0 // pred_fallthru
    _
  // Predicated region
  $region10: #{unet_forward.48} parent=0 // pred_check
    _
  $region11: #{unet_forward.48} parent=0 // pred_check_branch
    %14 = sbr.rel (0) target = $region13
  $region12: #{unet_forward.48} parent=0 // pred_region
    _
  $region13: #{unet_forward.48} parent=0 // pred_fallthru
    _
  // Predicated region
  $region14: #{unet_forward.48} parent=0 // pred_check
    _
  $region15: #{unet_forward.48} parent=0 // pred_check_branch
    %16 = sbr.rel (0) target = $region17
  $region16: #{unet_forward.48} parent=0 // pred_region
    _
  $region17: #{unet_forward.48} parent=0 // pred_fallthru
    _
  %v18 = vld [vmem:[%s0] sm:$0xff]
  %v19 = vld [vmem:[%s0 + $0x8] sm:$0xf]
  %v20 = vld [vmem:[%s0 + $0xc] sm:$0xff]
  %v21 = vld [vmem:[%s0 + $0x14] sm:$0xf]
  %v22 = vld [vmem:[%s0 + $0x18] sm:$0xff]
  %v23 = vld [vmem:[%s0 + $0x20] sm:$0xf]
  %v24 = vld [vmem:[%s0 + $0x24] sm:$0xff]
  %v25 = vld [vmem:[%s0 + $0x2c] sm:$0xf]
  %v26 = vld [vmem:[%s0 + $0x30] sm:$0xff]
  %v27 = vld [vmem:[%s0 + $0x38] sm:$0xf]
  %v28 = vld [vmem:[%s0 + $0x3c] sm:$0xff]
  %v29 = vld [vmem:[%s0 + $0x44] sm:$0xf]
  %v30 = vld [vmem:[%s0 + $0x48] sm:$0xff]
  %v31 = vld [vmem:[%s0 + $0x50] sm:$0xf]
  %v32 = vld [vmem:[%s0 + $0x54] sm:$0xff]
  %v33 = vld [vmem:[%s0 + $0x5c] sm:$0xf]
  %v34 = vld [vmem:[%s0 + $0x60] sm:$0xff]
  %v35 = vld [vmem:[%s0 + $0x68] sm:$0xf]
  %v36 = vld [vmem:[%s0 + $0x6c] sm:$0xff]
  %v37 = vld [vmem:[%s0 + $0x74] sm:$0xf]
  %v38 = vld [vmem:[%s0 + $0x78] sm:$0xff]
  %v39 = vld [vmem:[%s0 + $0x80] sm:$0xf]
  %v40 = vld [vmem:[%s0 + $0x84] sm:$0xff]
  %v41 = vld [vmem:[%s0 + $0x8c] sm:$0xf]
  %v42 = vld [vmem:[%s0 + $0x90] sm:$0xff]
  %v43 = vld [vmem:[%s0 + $0x98] sm:$0xf]
  %v44 = vld [vmem:[%s0 + $0x9c] sm:$0xff]
  %v45 = vld [vmem:[%s0 + $0xa4] sm:$0xf]
  %v46 = vld [vmem:[%s0 + $0xa8] sm:$0xff]
  %v47 = vld [vmem:[%s0 + $0xb0] sm:$0xf]
  %v48 = vld [vmem:[%s0 + $0xb4] sm:$0xff]
  %v49 = vld [vmem:[%s0 + $0xbc] sm:$0xf]
  %v50 = vld [vmem:[%s1] sm:$0xf]
  %v51 = vld [vmem:[%s1 + $0x4] sm:$0xf]
  %v52 = vld [vmem:[%s1 + $0x8] sm:$0xf]
  %v53 = vld [vmem:[%s1 + $0xc] sm:$0xf]
  %v54 = vld [vmem:[%s1 + $0x10] sm:$0xf]
  %v55 = vld [vmem:[%s1 + $0x14] sm:$0xf]
  %v56 = vld [vmem:[%s1 + $0x18] sm:$0xf]
  %v57 = vld [vmem:[%s1 + $0x1c] sm:$0xf]
  %v58 = vld [vmem:[%s1 + $0x20] sm:$0xf]
  %v59 = vld [vmem:[%s1 + $0x24] sm:$0xf]
  %v60 = vld [vmem:[%s1 + $0x28] sm:$0xf]
  %v61 = vld [vmem:[%s1 + $0x2c] sm:$0xf]
  %v62 = vld [vmem:[%s1 + $0x30] sm:$0xf]
  %v63 = vld [vmem:[%s1 + $0x34] sm:$0xf]
  %v64 = vld [vmem:[%s1 + $0x38] sm:$0xf]
  %v65 = vld [vmem:[%s1 + $0x3c] sm:$0xf]
  %v66 = vld [vmem:[%s1 + $0x40] sm:$0xf]
  %v67 = vld [vmem:[%s1 + $0x44] sm:$0xf]
  %v68 = vld [vmem:[%s1 + $0x48] sm:$0xf]
  %v69 = vld [vmem:[%s1 + $0x4c] sm:$0xf]
  %v70 = vld [vmem:[%s1 + $0x50] sm:$0xf]
  %v71 = vld [vmem:[%s1 + $0x54] sm:$0xf]
  %v72 = vld [vmem:[%s1 + $0x58] sm:$0xf]
  %v73 = vld [vmem:[%s1 + $0x5c] sm:$0xf]
  %v74 = vld [vmem:[%s1 + $0x60] sm:$0xf]
  %v75 = vld [vmem:[%s1 + $0x64] sm:$0xf]
  %v76 = vld [vmem:[%s1 + $0x68] sm:$0xf]
  %v77 = vld [vmem:[%s1 + $0x6c] sm:$0xf]
  %v78 = vld [vmem:[%s1 + $0x70] sm:$0xf]
  %v79 = vld [vmem:[%s1 + $0x74] sm:$0xf]
  %v80 = vld [vmem:[%s1 + $0x78] sm:$0xf]
  %v81 = vld [vmem:[%s1 + $0x7c] sm:$0xf]
  %v82 = vld [vmem:[%s1 + $0x80] sm:$0xf]
  %v83 = vld [vmem:[%s1 + $0x84] sm:$0xf]
  %v84 = vld [vmem:[%s1 + $0x88] sm:$0xf]
  %v85 = vld [vmem:[%s1 + $0x8c] sm:$0xf]
  %v118 = vunpack.c.l.b16 %v18
  %v119 = vunpack.c.h.b16 %v18
  %v120 = vunpack.c.l.b16 %v19
  %v121 = vunpack.c.l.b16 %v20
  %v122 = vunpack.c.h.b16 %v20
  %v123 = vunpack.c.l.b16 %v21
  %v124 = vunpack.c.l.b16 %v22
  %v125 = vunpack.c.h.b16 %v22
  %v126 = vunpack.c.l.b16 %v23
  %v127 = vunpack.c.l.b16 %v24
  %v128 = vunpack.c.h.b16 %v24
  %v129 = vunpack.c.l.b16 %v25
  %v130 = vunpack.c.l.b16 %v26
  %v131 = vunpack.c.h.b16 %v26
  %v132 = vunpack.c.l.b16 %v27
  %v133 = vunpack.c.l.b16 %v28
  %v134 = vunpack.c.h.b16 %v28
  %v135 = vunpack.c.l.b16 %v29
  %v136 = vunpack.c.l.b16 %v30
  %v137 = vunpack.c.h.b16 %v30
  %v138 = vunpack.c.l.b16 %v31
  %v139 = vunpack.c.l.b16 %v32
  %v140 = vunpack.c.h.b16 %v32
  %v141 = vunpack.c.l.b16 %v33
  %v142 = vunpack.c.l.b16 %v34
  %v143 = vunpack.c.h.b16 %v34
  %v144 = vunpack.c.l.b16 %v35
  %v145 = vunpack.c.l.b16 %v36
  %v146 = vunpack.c.h.b16 %v36
  %v147 = vunpack.c.l.b16 %v37
  %v148 = vunpack.c.l.b16 %v38
  %v149 = vunpack.c.h.b16 %v38
  %v150 = vunpack.c.l.b16 %v39
  %v151 = vunpack.c.l.b16 %v40
  %v152 = vunpack.c.h.b16 %v40
  %v153 = vunpack.c.l.b16 %v41
  %v154 = vunpack.c.l.b16 %v42
  %v155 = vunpack.c.h.b16 %v42
  %v156 = vunpack.c.l.b16 %v43
  %v157 = vunpack.c.l.b16 %v44
  %v158 = vunpack.c.h.b16 %v44
  %v159 = vunpack.c.l.b16 %v45
  %v160 = vunpack.c.l.b16 %v46
  %v161 = vunpack.c.h.b16 %v46
  %v162 = vunpack.c.l.b16 %v47
  %v163 = vunpack.c.l.b16 %v48
  %v164 = vunpack.c.h.b16 %v48
  %v165 = vunpack.c.l.b16 %v49
  %v166 = vpack.c.b16 %v121, %v118
  %v167 = vpack.c.b16 %v122, %v119
  %v168 = vpack.c.b16 %v123, %v120
  %v169 = vpack.c.b16 %v127, %v124
  %v170 = vpack.c.b16 %v128, %v125
  %v171 = vpack.c.b16 %v129, %v126
  %v172 = vpack.c.b16 %v133, %v130
  %v173 = vpack.c.b16 %v134, %v131
  %v174 = vpack.c.b16 %v135, %v132
  %v175 = vpack.c.b16 %v139, %v136
  %v176 = vpack.c.b16 %v140, %v137
  %v177 = vpack.c.b16 %v141, %v138
  %v178 = vpack.c.b16 %v145, %v142
  %v179 = vpack.c.b16 %v146, %v143
  %v180 = vpack.c.b16 %v147, %v144
  %v181 = vpack.c.b16 %v151, %v148
  %v182 = vpack.c.b16 %v152, %v149
  %v183 = vpack.c.b16 %v153, %v150
  %v184 = vpack.c.b16 %v157, %v154
  %v185 = vpack.c.b16 %v158, %v155
  %v186 = vpack.c.b16 %v159, %v156
  %v187 = vpack.c.b16 %v163, %v160
  %v188 = vpack.c.b16 %v164, %v161
  %v189 = vpack.c.b16 %v165, %v162
  %v242 = vunpack.c.l.b16 %v50
  %v243 = vunpack.c.l.b16 %v51
  %v244 = vunpack.c.l.b16 %v52
  %v245 = vunpack.c.l.b16 %v53
  %v246 = vunpack.c.l.b16 %v54
  %v247 = vunpack.c.l.b16 %v55
  %v248 = vunpack.c.l.b16 %v56
  %v249 = vunpack.c.l.b16 %v57
  %v250 = vunpack.c.l.b16 %v58
  %v251 = vunpack.c.l.b16 %v59
  %v252 = vunpack.c.l.b16 %v60
  %v253 = vunpack.c.l.b16 %v61
  %v254 = vunpack.c.l.b16 %v62
  %v255 = vunpack.c.l.b16 %v63
  %v256 = vunpack.c.l.b16 %v64
  %v257 = vunpack.c.l.b16 %v65
  %v258 = vunpack.c.l.b16 %v66
  %v259 = vunpack.c.l.b16 %v67
  %v260 = vunpack.c.l.b16 %v68
  %v261 = vunpack.c.l.b16 %v69
  %v262 = vunpack.c.l.b16 %v70
  %v263 = vunpack.c.l.b16 %v71
  %v264 = vunpack.c.l.b16 %v72
  %v265 = vunpack.c.l.b16 %v73
  %v266 = vunpack.c.l.b16 %v74
  %v267 = vunpack.c.l.b16 %v75
  %v268 = vunpack.c.l.b16 %v76
  %v269 = vunpack.c.l.b16 %v77
  %v270 = vunpack.c.l.b16 %v78
  %v271 = vunpack.c.l.b16 %v79
  %v272 = vunpack.c.l.b16 %v80
  %v273 = vunpack.c.l.b16 %v81
  %v274 = vunpack.c.l.b16 %v82
  %v275 = vunpack.c.l.b16 %v83
  %v276 = vunpack.c.l.b16 %v84
  %v277 = vunpack.c.l.b16 %v85
  %v278 = vpack.c.b16 %v243, %v242
  %v279 = vpack.c.b16 %v245, %v244
  %v280 = vpack.c.b16 %v247, %v246
  %v281 = vpack.c.b16 %v249, %v248
  %v282 = vpack.c.b16 %v251, %v250
  %v283 = vpack.c.b16 %v253, %v252
  %v284 = vpack.c.b16 %v255, %v254
  %v285 = vpack.c.b16 %v257, %v256
  %v286 = vpack.c.b16 %v259, %v258
  %v287 = vpack.c.b16 %v261, %v260
  %v288 = vpack.c.b16 %v263, %v262
  %v289 = vpack.c.b16 %v265, %v264
  %v290 = vpack.c.b16 %v267, %v266
  %v291 = vpack.c.b16 %v269, %v268
  %v292 = vpack.c.b16 %v271, %v270
  %v293 = vpack.c.b16 %v273, %v272
  %v294 = vpack.c.b16 %v275, %v274
  %v295 = vpack.c.b16 %v277, %v276
  %vm314 = vcmask 261120
  %v316 = vsel %vm314, %v168, 0
  %v319 = vsel %vm314, %v171, 0
  %v322 = vsel %vm314, %v174, 0
  %v325 = vsel %vm314, %v177, 0
  %v328 = vsel %vm314, %v180, 0
  %v331 = vsel %vm314, %v183, 0
  %v334 = vsel %vm314, %v186, 0
  %v337 = vsel %vm314, %v189, 0
  %339 = vmatprep.subr.bf16.mxu0 0
  %340 = vmatpush1.bf16.msra.mxu0 %v278
  %341 = vmatprep.subr.bf16.mxu0 0
  %342 = vmatpush1.bf16.msra.mxu0 %v279
  %343 = vmatprep.subr.bf16.mxu0 0
  %344 = vmatpush1.bf16.msra.mxu0 %v280
  %345 = vmatprep.subr.bf16.mxu0 0
  %346 = vmatpush1.bf16.msra.mxu0 %v281
  %347 = vmatprep.subr.bf16.mxu0 0
  %348 = vmatpush1.bf16.msra.mxu0 %v282
  %349 = vmatprep.subr.bf16.mxu0 0
  %350 = vmatpush1.bf16.msra.mxu0 %v283
  %351 = vmatprep.subr.bf16.mxu0 0
  %352 = vmatpush1.bf16.msra.mxu0 %v284
  %353 = vmatprep.subr.bf16.mxu0 0
  %354 = vmatpush1.bf16.msra.mxu0 %v285
  %355 = vmatprep.subr.bf16.mxu0 0
  %356 = vmatpush1.bf16.msra.mxu0 %v286
  %357 = vmatprep.subr.bf16.mxu0 0
  %358 = vmatpush1.bf16.msra.mxu0 %v287
  %359 = vmatprep.subr.bf16.mxu0 0
  %360 = vmatpush1.bf16.msra.mxu0 %v288
  %361 = vmatprep.subr.bf16.mxu0 0
  %362 = vmatpush1.bf16.msra.mxu0 %v289
  %363 = vmatprep.subr.bf16.mxu0 0
  %364 = vmatpush1.bf16.msra.mxu0 %v290
  %365 = vmatprep.subr.bf16.mxu0 0
  %366 = vmatpush1.bf16.msra.mxu0 %v291
  %367 = vmatprep.subr.bf16.mxu0 0
  %368 = vmatpush1.bf16.msra.mxu0 %v292
  %369 = vmatprep.subr.bf16.mxu0 0
  %370 = vmatpush1.bf16.msra.mxu0 %v293
  %371 = vmatprep.mubr.bf16.mxu0 %v167
  %372 = vmatmul.mubr.bf16.gmra.mrb[0].mxu0 %v166
  %v373 = vpop.f32.mrb[0].mxu0
  %v374 = vadd.f32 0.0, %v373
  %v375 = vpop.f32.mrb[0].mxu0
  %v376 = vpop.f32.mrb[0].mxu0
  %v377 = vadd.f32 0.0, %v376
  %v378 = vpop.f32.mrb[0].mxu0
  %379 = vmatprep.mubr.bf16.mxu0 %v170
  %380 = vmatmul.mubr.bf16.gmra.mrb[0].mxu0 %v169
  %v381 = vpop.f32.mrb[0].mxu0
  %v382 = vadd.f32 0.0, %v381
  %v383 = vpop.f32.mrb[0].mxu0
  %v384 = vpop.f32.mrb[0].mxu0
  %v385 = vadd.f32 0.0, %v384
  %v386 = vpop.f32.mrb[0].mxu0
  %387 = vmatprep.mubr.bf16.mxu0 %v173
  %388 = vmatmul.mubr.bf16.gmra.mrb[0].mxu0 %v172
  %v389 = vpop.f32.mrb[0].mxu0
  %v390 = vadd.f32 0.0, %v389
  %v391 = vpop.f32.mrb[0].mxu0
  %v392 = vpop.f32.mrb[0].mxu0
  %v393 = vadd.f32 0.0, %v392
  %v394 = vpop.f32.mrb[0].mxu0
  %395 = vmatprep.mubr.bf16.mxu0 %v176
  %396 = vmatmul.mubr.bf16.gmra.mrb[0].mxu0 %v175
  %v397 = vpop.f32.mrb[0].mxu0
  %v398 = vadd.f32 0.0, %v397
  %v399 = vpop.f32.mrb[0].mxu0
  %v400 = vpop.f32.mrb[0].mxu0
  %v401 = vadd.f32 0.0, %v400
  %v402 = vpop.f32.mrb[0].mxu0
  %403 = vmatprep.mubr.bf16.mxu0 %v179
  %404 = vmatmul.mubr.bf16.gmra.mrb[0].mxu0 %v178
  %v405 = vpop.f32.mrb[0].mxu0
  %v406 = vadd.f32 0.0, %v405
  %v407 = vpop.f32.mrb[0].mxu0
  %v408 = vpop.f32.mrb[0].mxu0
  %v409 = vadd.f32 0.0, %v408
  %v410 = vpop.f32.mrb[0].mxu0
  %411 = vmatprep.mubr.bf16.mxu0 %v182
  %412 = vmatmul.mubr.bf16.gmra.mrb[0].mxu0 %v181
  %v413 = vpop.f32.mrb[0].mxu0
  %v414 = vadd.f32 0.0, %v413
  %v415 = vpop.f32.mrb[0].mxu0
  %v416 = vpop.f32.mrb[0].mxu0
  %v417 = vadd.f32 0.0, %v416
  %v418 = vpop.f32.mrb[0].mxu0
  %419 = vmatprep.mubr.bf16.mxu0 %v185
  %420 = vmatmul.mubr.bf16.gmra.mrb[0].mxu0 %v184
  %v421 = vpop.f32.mrb[0].mxu0
  %v422 = vadd.f32 0.0, %v421
  %v423 = vpop.f32.mrb[0].mxu0
  %v424 = vpop.f32.mrb[0].mxu0
  %v425 = vadd.f32 0.0, %v424
  %v426 = vpop.f32.mrb[0].mxu0
  %427 = vmatprep.mubr.bf16.mxu0 %v188
  %428 = vmatmul.mubr.bf16.gmra.mrb[0].mxu0 %v187
  %v429 = vpop.f32.mrb[0].mxu0
  %v430 = vadd.f32 0.0, %v429
  %v431 = vpop.f32.mrb[0].mxu0
  %v432 = vpop.f32.mrb[0].mxu0
  %v433 = vadd.f32 0.0, %v432
  %v434 = vpop.f32.mrb[0].mxu0
  %435 = vdwg.mxu0
  %436 = vmatprep.subr.bf16.mxu0 0
  %437 = vmatpush1.bf16.msra.mxu0 %v294
  %438 = vmatprep.subr.bf16.mxu0 0
  %439 = vmatpush1.bf16.msra.mxu0 %v295
  %440 = vmatprep.subr.bf16.mxu0 0
  %441 = vmatpush1.bf16.msra.mxu0 0
  %442 = vmatprep.subr.bf16.mxu0 0
  %443 = vmatpush1.bf16.msra.mxu0 0
  %444 = vmatprep.subr.bf16.mxu0 0
  %445 = vmatpush1.bf16.msra.mxu0 0
  %446 = vmatprep.subr.bf16.mxu0 0
  %447 = vmatpush1.bf16.msra.mxu0 0
  %448 = vmatprep.subr.bf16.mxu0 0
  %449 = vmatpush1.bf16.msra.mxu0 0
  %450 = vmatprep.subr.bf16.mxu0 0
  %451 = vmatpush1.bf16.msra.mxu0 0
  %452 = vmatprep.subr.bf16.mxu0 0
  %453 = vmatpush1.bf16.msra.mxu0 0
  %454 = vmatprep.subr.bf16.mxu0 0
  %455 = vmatpush1.bf16.msra.mxu0 0
  %456 = vmatprep.subr.bf16.mxu0 0
  %457 = vmatpush1.bf16.msra.mxu0 0
  %458 = vmatprep.subr.bf16.mxu0 0
  %459 = vmatpush1.bf16.msra.mxu0 0
  %460 = vmatprep.subr.bf16.mxu0 0
  %461 = vmatpush1.bf16.msra.mxu0 0
  %462 = vmatprep.subr.bf16.mxu0 0
  %463 = vmatpush1.bf16.msra.mxu0 0
  %464 = vmatprep.subr.bf16.mxu0 0
  %465 = vmatpush1.bf16.msra.mxu0 0
  %466 = vmatprep.subr.bf16.mxu0 0
  %467 = vmatpush1.bf16.msra.mxu0 0
  %468 = vmatprep.mubr.bf16.mxu0 0
  %469 = vmatmul.mubr.bf16.gmra.mrb[0].mxu0 %v316
  %v470 = vpop.f32.mrb[0].mxu0
  %v471 = vadd.f32 %v374, %v470
  %v472 = vpop.f32.mrb[0].mxu0
  %v473 = vpop.f32.mrb[0].mxu0
  %v474 = vadd.f32 %v377, %v473
  %v475 = vpop.f32.mrb[0].mxu0
  %476 = vmatprep.mubr.bf16.mxu0 0
  %477 = vmatmul.mubr.bf16.gmra.mrb[0].mxu0 %v319
  %v478 = vpop.f32.mrb[0].mxu0
  %v479 = vadd.f32 %v382, %v478
  %v480 = vpop.f32.mrb[0].mxu0
  %v481 = vpop.f32.mrb[0].mxu0
  %v482 = vadd.f32 %v385, %v481
  %v483 = vpop.f32.mrb[0].mxu0
  %484 = vmatprep.mubr.bf16.mxu0 0
  %485 = vmatmul.mubr.bf16.gmra.mrb[0].mxu0 %v322
  %v486 = vpop.f32.mrb[0].mxu0
  %v487 = vadd.f32 %v390, %v486
  %v488 = vpop.f32.mrb[0].mxu0
  %v489 = vpop.f32.mrb[0].mxu0
  %v490 = vadd.f32 %v393, %v489
  %v491 = vpop.f32.mrb[0].mxu0
  %492 = vmatprep.mubr.bf16.mxu0 0
  %493 = vmatmul.mubr.bf16.gmra.mrb[0].mxu0 %v325
  %v494 = vpop.f32.mrb[0].mxu0
  %v495 = vadd.f32 %v398, %v494
  %v496 = vpop.f32.mrb[0].mxu0
  %v497 = vpop.f32.mrb[0].mxu0
  %v498 = vadd.f32 %v401, %v497
  %v499 = vpop.f32.mrb[0].mxu0
  %500 = vmatprep.mubr.bf16.mxu0 0
  %501 = vmatmul.mubr.bf16.gmra.mrb[0].mxu0 %v328
  %v502 = vpop.f32.mrb[0].mxu0
  %v503 = vadd.f32 %v406, %v502
  %v504 = vpop.f32.mrb[0].mxu0
  %v505 = vpop.f32.mrb[0].mxu0
  %v506 = vadd.f32 %v409, %v505
  %v507 = vpop.f32.mrb[0].mxu0
  %508 = vmatprep.mubr.bf16.mxu0 0
  %509 = vmatmul.mubr.bf16.gmra.mrb[0].mxu0 %v331
  %v510 = vpop.f32.mrb[0].mxu0
  %v511 = vadd.f32 %v414, %v510
  %v512 = vpop.f32.mrb[0].mxu0
  %v513 = vpop.f32.mrb[0].mxu0
  %v514 = vadd.f32 %v417, %v513
  %v515 = vpop.f32.mrb[0].mxu0
  %516 = vmatprep.mubr.bf16.mxu0 0
  %517 = vmatmul.mubr.bf16.gmra.mrb[0].mxu0 %v334
  %v518 = vpop.f32.mrb[0].mxu0
  %v519 = vadd.f32 %v422, %v518
  %v520 = vpop.f32.mrb[0].mxu0
  %v521 = vpop.f32.mrb[0].mxu0
  %v522 = vadd.f32 %v425, %v521
  %v523 = vpop.f32.mrb[0].mxu0
  %524 = vmatprep.mubr.bf16.mxu0 0
  %525 = vmatmul.mubr.bf16.gmra.mrb[0].mxu0 %v337
  %v526 = vpop.f32.mrb[0].mxu0
  %v527 = vadd.f32 %v430, %v526
  %v528 = vpop.f32.mrb[0].mxu0
  %v529 = vpop.f32.mrb[0].mxu0
  %v530 = vadd.f32 %v433, %v529
  %v531 = vpop.f32.mrb[0].mxu0
  %532 = vdwg.mxu0
  %vm533 = vcmask 130048
  %v534 = vsel %vm533, %v471, 0.0
  %v535 = vsel %vm533, %v474, 0.0
  %v536 = vadd.f32 %v534, %v535
  %v537 = vsel %vm533, %v479, 0.0
  %v538 = vadd.f32 %v536, %v537
  %v539 = vsel %vm533, %v482, 0.0
  %v540 = vadd.f32 %v538, %v539
  %v541 = vsel %vm533, %v487, 0.0
  %v542 = vadd.f32 %v540, %v541
  %v543 = vsel %vm533, %v490, 0.0
  %v544 = vadd.f32 %v542, %v543
  %v545 = vsel %vm533, %v495, 0.0
  %v546 = vadd.f32 %v544, %v545
  %v547 = vsel %vm533, %v498, 0.0
  %v548 = vadd.f32 %v546, %v547
  %v549 = vsel %vm533, %v503, 0.0
  %v550 = vadd.f32 %v548, %v549
  %v551 = vsel %vm533, %v506, 0.0
  %v552 = vadd.f32 %v550, %v551
  %v553 = vsel %vm533, %v511, 0.0
  %v554 = vadd.f32 %v552, %v553
  %v555 = vsel %vm533, %v514, 0.0
  %v556 = vadd.f32 %v554, %v555
  %v557 = vsel %vm533, %v519, 0.0
  %v558 = vadd.f32 %v556, %v557
  %v559 = vsel %vm533, %v522, 0.0
  %v560 = vadd.f32 %v558, %v559
  %v561 = vsel %vm533, %v527, 0.0
  %v562 = vadd.f32 %v560, %v561
  %v563 = vsel %vm533, %v530, 0.0
  %v564 = vadd.f32 %v562, %v563
  %v565 = vrot.slane %v564, 4
  %v566 = vadd.f32 %v564, %v565
  %v567 = vrot.slane %v566, 2
  %v568 = vadd.f32 %v566, %v567
  %v569 = vrot.slane %v568, 1
  %v570 = vadd.f32 %v568, %v569
  %v571 = vmul.f32 %v570, 0.0078125
  %v572 = vmul.f32 %v471, %v471
  %v573 = vmul.f32 %v474, %v474
  %v574 = vmul.f32 %v479, %v479
  %v575 = vmul.f32 %v482, %v482
  %v576 = vmul.f32 %v487, %v487
  %v577 = vmul.f32 %v490, %v490
  %v578 = vmul.f32 %v495, %v495
  %v579 = vmul.f32 %v498, %v498
  %v580 = vmul.f32 %v503, %v503
  %v581 = vmul.f32 %v506, %v506
  %v582 = vmul.f32 %v511, %v511
  %v583 = vmul.f32 %v514, %v514
  %v584 = vmul.f32 %v519, %v519
  %v585 = vmul.f32 %v522, %v522
  %v586 = vmul.f32 %v527, %v527
  %v587 = vmul.f32 %v530, %v530
  %v588 = vsel %vm533, %v572, 0.0
  %v589 = vsel %vm533, %v573, 0.0
  %v590 = vadd.f32 %v588, %v589
  %v591 = vsel %vm533, %v574, 0.0
  %v592 = vadd.f32 %v590, %v591
  %v593 = vsel %vm533, %v575, 0.0
  %v594 = vadd.f32 %v592, %v593
  %v595 = vsel %vm533, %v576, 0.0
  %v596 = vadd.f32 %v594, %v595
  %v597 = vsel %vm533, %v577, 0.0
  %v598 = vadd.f32 %v596, %v597
  %v599 = vsel %vm533, %v578, 0.0
  %v600 = vadd.f32 %v598, %v599
  %v601 = vsel %vm533, %v579, 0.0
  %v602 = vadd.f32 %v600, %v601
  %v603 = vsel %vm533, %v580, 0.0
  %v604 = vadd.f32 %v602, %v603
  %v605 = vsel %vm533, %v581, 0.0
  %v606 = vadd.f32 %v604, %v605
  %v607 = vsel %vm533, %v582, 0.0
  %v608 = vadd.f32 %v606, %v607
  %v609 = vsel %vm533, %v583, 0.0
  %v610 = vadd.f32 %v608, %v609
  %v611 = vsel %vm533, %v584, 0.0
  %v612 = vadd.f32 %v610, %v611
  %v613 = vsel %vm533, %v585, 0.0
  %v614 = vadd.f32 %v612, %v613
  %v615 = vsel %vm533, %v586, 0.0
  %v616 = vadd.f32 %v614, %v615
  %v617 = vsel %vm533, %v587, 0.0
  %v618 = vadd.f32 %v616, %v617
  %v619 = vrot.slane %v618, 4
  %v620 = vadd.f32 %v618, %v619
  %v621 = vrot.slane %v620, 2
  %v622 = vadd.f32 %v620, %v621
  %v623 = vrot.slane %v622, 1
  %v624 = vadd.f32 %v622, %v623
  %v625 = vmul.f32 %v624, 0.0078125
  %v626 = vmul.f32 %v571, %v571
  %v627 = vsub.f32 %v625, %v626
  %v628 = vmax.f32 %v627, 0.0
  %v629 = vld [vmem:[%s2] sm:$0x1]
  %v630 = vadd.f32 %v628, 1e-05
  %v631 = vrsqrt.pop %v630
  %v632 = vmul.f32 %v629, %v631
  %v633 = vld [vmem:[%s3] sm:$0x1]
  %v634 = vmul.f32 %v571, %v632
  %v635 = vsub.f32 %v633, %v634
  %v637 = vlaneseq
  %v638 = vshrl.u32 %v637, 7
  %v639 = vsub.s32 0, %v638
  %v640 = vrot.slane %v632, %v639
  %v642 = vmul.f32 %v471, %v640
  %v643 = vmul.f32 %v474, %v640
  %v644 = vmul.f32 %v479, %v640
  %v645 = vmul.f32 %v482, %v640
  %v646 = vmul.f32 %v487, %v640
  %v647 = vmul.f32 %v490, %v640
  %v648 = vmul.f32 %v495, %v640
  %v649 = vmul.f32 %v498, %v640
  %v650 = vmul.f32 %v503, %v640
  %v651 = vmul.f32 %v506, %v640
  %v652 = vmul.f32 %v511, %v640
  %v653 = vmul.f32 %v514, %v640
  %v654 = vmul.f32 %v519, %v640
  %v655 = vmul.f32 %v522, %v640
  %v656 = vmul.f32 %v527, %v640
  %v657 = vmul.f32 %v530, %v640
  %v659 = vlaneseq
  %v660 = vshrl.u32 %v659, 7
  %v661 = vsub.s32 0, %v660
  %v662 = vrot.slane %v635, %v661
  %v664 = vadd.f32 %v642, %v662
  %v665 = vadd.f32 %v643, %v662
  %v666 = vadd.f32 %v644, %v662
  %v667 = vadd.f32 %v645, %v662
  %v668 = vadd.f32 %v646, %v662
  %v669 = vadd.f32 %v647, %v662
  %v670 = vadd.f32 %v648, %v662
  %v671 = vadd.f32 %v649, %v662
  %v672 = vadd.f32 %v650, %v662
  %v673 = vadd.f32 %v651, %v662
  %v674 = vadd.f32 %v652, %v662
  %v675 = vadd.f32 %v653, %v662
  %v676 = vadd.f32 %v654, %v662
  %v677 = vadd.f32 %v655, %v662
  %v678 = vadd.f32 %v656, %v662
  %v679 = vadd.f32 %v657, %v662
  %v680 = vmax.f32 %v664, 0.0
  %v681 = vmax.f32 %v665, 0.0
  %v682 = vmax.f32 %v666, 0.0
  %v683 = vmax.f32 %v667, 0.0
  %v684 = vmax.f32 %v668, 0.0
  %v685 = vmax.f32 %v669, 0.0
  %v686 = vmax.f32 %v670, 0.0
  %v687 = vmax.f32 %v671, 0.0
  %v688 = vmax.f32 %v672, 0.0
  %v689 = vmax.f32 %v673, 0.0
  %v690 = vmax.f32 %v674, 0.0
  %v691 = vmax.f32 %v675, 0.0
  %v692 = vmax.f32 %v676, 0.0
  %v693 = vmax.f32 %v677, 0.0
  %v694 = vmax.f32 %v678, 0.0
  %v695 = vmax.f32 %v679, 0.0
  %696 = vst.msk [vmem:[%s4] sm:$0xff] %vm533, %v680
  %697 = vst.msk [vmem:[%s4 + $0x8] sm:$0xff] %vm533, %v681
  %698 = vst.msk [vmem:[%s4 + $0x10] sm:$0xff] %vm533, %v682
  %699 = vst.msk [vmem:[%s4 + $0x18] sm:$0xff] %vm533, %v683
  %700 = vst.msk [vmem:[%s4 + $0x20] sm:$0xff] %vm533, %v684
  %701 = vst.msk [vmem:[%s4 + $0x28] sm:$0xff] %vm533, %v685
  %702 = vst.msk [vmem:[%s4 + $0x30] sm:$0xff] %vm533, %v686
  %703 = vst.msk [vmem:[%s4 + $0x38] sm:$0xff] %vm533, %v687
  %704 = vst.msk [vmem:[%s4 + $0x40] sm:$0xff] %vm533, %v688
  %705 = vst.msk [vmem:[%s4 + $0x48] sm:$0xff] %vm533, %v689
  %706 = vst.msk [vmem:[%s4 + $0x50] sm:$0xff] %vm533, %v690
  %707 = vst.msk [vmem:[%s4 + $0x58] sm:$0xff] %vm533, %v691
  %708 = vst.msk [vmem:[%s4 + $0x60] sm:$0xff] %vm533, %v692
  %709 = vst.msk [vmem:[%s4 + $0x68] sm:$0xff] %vm533, %v693
  %710 = vst.msk [vmem:[%s4 + $0x70] sm:$0xff] %vm533, %v694
  %711 = vst.msk [vmem:[%s4 + $0x78] sm:$0xff] %vm533, %v695
  // Predicated region
  $region18: #{unet_forward.48} parent=0 // pred_check
    _
  $region19: #{unet_forward.48} parent=0 // pred_check_branch
    %713 = sbr.rel (0) target = $region21
  $region20: #{unet_forward.48} parent=0 // pred_region
    _
  $region21: #{unet_forward.48} parent=0 // pred_fallthru
    _
  // Predicated region
  $region22: #{unet_forward.48} parent=0 // pred_check
    _
  $region23: #{unet_forward.48} parent=0 // pred_check_branch
    %715 = sbr.rel (0) target = $region25
  $region24: #{unet_forward.48} parent=0 // pred_region
    _
  $region25: #{unet_forward.48} parent=0 // pred_fallthru
    _

// kernel: unet_forward.50
$region0: #{unet_forward.50}
  #allocation0 [shape = 'u32[]', space=smem, size = 0x4, offset = 0x4, fixed_abs, tag = 'smem constant byte address 0x4 - core index']
  #allocation1 [shape = 'u32[144,128]{1,0:T(1,128)}', space=vmem, size = 0x12000, scoped, tag = 'internal scratch']
  %s0 = inlined_call_operand.vmem [shape: bf16[128,16], index: 0, kind: input, shape index: {}]
  %s1 = inlined_call_operand.vmem [shape: bf16[16,32], index: 1, kind: input, shape index: {}]
  %s2 = inlined_call_operand.vmem [shape: f32[1,32], index: 2, kind: input, shape index: {}]
  %s3 = inlined_call_operand.vmem [shape: f32[128,32], index: 3, kind: output, shape index: {}]
  %s4 = sld [smem:[#allocation0]]
  $region22: #{unet_forward.50} parent=0
    _
  %s6 = ssub.s32 1, %s4
  %s7 = scalar_select 0, %s6, %s4
  // Predicated region
  $region2: #{unet_forward.50} parent=0 // pred_check
    _
  $region3: #{unet_forward.50} parent=0 // pred_check_branch
    %9 = sbr.rel (0) target = $region5
  $region4: #{unet_forward.50} parent=0 // pred_region
    _
  $region5: #{unet_forward.50} parent=0 // pred_fallthru
    _
  // Predicated region
  $region6: #{unet_forward.50} parent=0 // pred_check
    _
  $region7: #{unet_forward.50} parent=0 // pred_check_branch
    %11 = sbr.rel (0) target = $region9
  $region8: #{unet_forward.50} parent=0 // pred_region
    _
  $region9: #{unet_forward.50} parent=0 // pred_fallthru
    _
  // Predicated region
  $region10: #{unet_forward.50} parent=0 // pred_check
    _
  $region11: #{unet_forward.50} parent=0 // pred_check_branch
    %13 = sbr.rel (0) target = $region13
  $region12: #{unet_forward.50} parent=0 // pred_region
    _
  $region13: #{unet_forward.50} parent=0 // pred_fallthru
    _
  %v15 = vld [vmem:[%s0] sm:$0xf]
  %v16 = vld [vmem:[%s0 + $0x4] sm:$0xf]
  %v17 = vld [vmem:[%s0 + $0x8] sm:$0xf]
  %v18 = vld [vmem:[%s0 + $0xc] sm:$0xf]
  %v19 = vld [vmem:[%s0 + $0x10] sm:$0xf]
  %v20 = vld [vmem:[%s0 + $0x14] sm:$0xf]
  %v21 = vld [vmem:[%s0 + $0x18] sm:$0xf]
  %v22 = vld [vmem:[%s0 + $0x1c] sm:$0xf]
  %v23 = vld [vmem:[%s0 + $0x20] sm:$0xf]
  %v24 = vld [vmem:[%s0 + $0x24] sm:$0xf]
  %v25 = vld [vmem:[%s0 + $0x28] sm:$0xf]
  %v26 = vld [vmem:[%s0 + $0x2c] sm:$0xf]
  %v27 = vld [vmem:[%s0 + $0x30] sm:$0xf]
  %v28 = vld [vmem:[%s0 + $0x34] sm:$0xf]
  %v29 = vld [vmem:[%s0 + $0x38] sm:$0xf]
  %v30 = vld [vmem:[%s0 + $0x3c] sm:$0xf]
  %v31 = vld [vmem:[%s1] sm:$0xf]
  %v32 = vld [vmem:[%s1 + $0x4] sm:$0xf]
  %v33 = vld [vmem:[%s2] sm:$0x1]
  %v35 = vlaneseq
  %v36 = vshrl.u32 %v35, 7
  %v37 = vsub.s32 0, %v36
  %v38 = vrot.slane %v33, %v37
  %v56 = vunpack.c.l.b16 %v15
  %v57 = vunpack.c.l.b16 %v16
  %v58 = vunpack.c.l.b16 %v17
  %v59 = vunpack.c.l.b16 %v18
  %v60 = vunpack.c.l.b16 %v19
  %v61 = vunpack.c.l.b16 %v20
  %v62 = vunpack.c.l.b16 %v21
  %v63 = vunpack.c.l.b16 %v22
  %v64 = vunpack.c.l.b16 %v23
  %v65 = vunpack.c.l.b16 %v24
  %v66 = vunpack.c.l.b16 %v25
  %v67 = vunpack.c.l.b16 %v26
  %v68 = vunpack.c.l.b16 %v27
  %v69 = vunpack.c.l.b16 %v28
  %v70 = vunpack.c.l.b16 %v29
  %v71 = vunpack.c.l.b16 %v30
  %v72 = vpack.c.b16 %v57, %v56
  %v73 = vpack.c.b16 %v59, %v58
  %v74 = vpack.c.b16 %v61, %v60
  %v75 = vpack.c.b16 %v63, %v62
  %v76 = vpack.c.b16 %v65, %v64
  %v77 = vpack.c.b16 %v67, %v66
  %v78 = vpack.c.b16 %v69, %v68
  %v79 = vpack.c.b16 %v71, %v70
  %v82 = vunpack.c.l.b16 %v31
  %v83 = vunpack.c.l.b16 %v32
  %v84 = vpack.c.b16 %v83, %v82
  %vm86 = vcmask 130048
  %v88 = vsel %vm86, %v72, 0
  %v91 = vsel %vm86, %v73, 0
  %v94 = vsel %vm86, %v74, 0
  %v97 = vsel %vm86, %v75, 0
  %v100 = vsel %vm86, %v76, 0
  %v103 = vsel %vm86, %v77, 0
  %v106 = vsel %vm86, %v78, 0
  %v109 = vsel %vm86, %v79, 0
  %111 = vmatprep.subr.bf16.mxu0 0
  %112 = vmatpush1.bf16.msra.mxu0 %v84
  %113 = vmatprep.subr.bf16.mxu0 0
  %114 = vmatpush1.bf16.msra.mxu0 0
  %115 = vmatprep.subr.bf16.mxu0 0
  %116 = vmatpush1.bf16.msra.mxu0 0
  %117 = vmatprep.subr.bf16.mxu0 0
  %118 = vmatpush1.bf16.msra.mxu0 0
  %119 = vmatprep.subr.bf16.mxu0 0
  %120 = vmatpush1.bf16.msra.mxu0 0
  %121 = vmatprep.subr.bf16.mxu0 0
  %122 = vmatpush1.bf16.msra.mxu0 0
  %123 = vmatprep.subr.bf16.mxu0 0
  %124 = vmatpush1.bf16.msra.mxu0 0
  %125 = vmatprep.subr.bf16.mxu0 0
  %126 = vmatpush1.bf16.msra.mxu0 0
  %127 = vmatprep.subr.bf16.mxu0 0
  %128 = vmatpush1.bf16.msra.mxu0 0
  %129 = vmatprep.subr.bf16.mxu0 0
  %130 = vmatpush1.bf16.msra.mxu0 0
  %131 = vmatprep.subr.bf16.mxu0 0
  %132 = vmatpush1.bf16.msra.mxu0 0
  %133 = vmatprep.subr.bf16.mxu0 0
  %134 = vmatpush1.bf16.msra.mxu0 0
  %135 = vmatprep.subr.bf16.mxu0 0
  %136 = vmatpush1.bf16.msra.mxu0 0
  %137 = vmatprep.subr.bf16.mxu0 0
  %138 = vmatpush1.bf16.msra.mxu0 0
  %139 = vmatprep.subr.bf16.mxu0 0
  %140 = vmatpush1.bf16.msra.mxu0 0
  %141 = vmatprep.subr.bf16.mxu0 0
  %142 = vmatpush1.bf16.msra.mxu0 0
  %143 = vmatprep.mubr.bf16.mxu0 0
  %144 = vmatmul.mubr.bf16.gmra.mrb[0].mxu0 %v88
  %v145 = vpop.f32.mrb[0].mxu0
  %v146 = vadd.f32 %v38, %v145
  %v147 = vpop.f32.mrb[0].mxu0
  %v148 = vpop.f32.mrb[0].mxu0
  %v149 = vadd.f32 %v38, %v148
  %v150 = vpop.f32.mrb[0].mxu0
  %151 = vmatprep.mubr.bf16.mxu0 0
  %152 = vmatmul.mubr.bf16.gmra.mrb[0].mxu0 %v91
  %v153 = vpop.f32.mrb[0].mxu0
  %v154 = vadd.f32 %v38, %v153
  %v155 = vpop.f32.mrb[0].mxu0
  %v156 = vpop.f32.mrb[0].mxu0
  %v157 = vadd.f32 %v38, %v156
  %v158 = vpop.f32.mrb[0].mxu0
  %159 = vmatprep.mubr.bf16.mxu0 0
  %160 = vmatmul.mubr.bf16.gmra.mrb[0].mxu0 %v94
  %v161 = vpop.f32.mrb[0].mxu0
  %v162 = vadd.f32 %v38, %v161
  %v163 = vpop.f32.mrb[0].mxu0
  %v164 = vpop.f32.mrb[0].mxu0
  %v165 = vadd.f32 %v38, %v164
  %v166 = vpop.f32.mrb[0].mxu0
  %167 = vmatprep.mubr.bf16.mxu0 0
  %168 = vmatmul.mubr.bf16.gmra.mrb[0].mxu0 %v97
  %v169 = vpop.f32.mrb[0].mxu0
  %v170 = vadd.f32 %v38, %v169
  %v171 = vpop.f32.mrb[0].mxu0
  %v172 = vpop.f32.mrb[0].mxu0
  %v173 = vadd.f32 %v38, %v172
  %v174 = vpop.f32.mrb[0].mxu0
  %175 = vmatprep.mubr.bf16.mxu0 0
  %176 = vmatmul.mubr.bf16.gmra.mrb[0].mxu0 %v100
  %v177 = vpop.f32.mrb[0].mxu0
  %v178 = vadd.f32 %v38, %v177
  %v179 = vpop.f32.mrb[0].mxu0
  %v180 = vpop.f32.mrb[0].mxu0
  %v181 = vadd.f32 %v38, %v180
  %v182 = vpop.f32.mrb[0].mxu0
  %183 = vmatprep.mubr.bf16.mxu0 0
  %184 = vmatmul.mubr.bf16.gmra.mrb[0].mxu0 %v103
  %v185 = vpop.f32.mrb[0].mxu0
  %v186 = vadd.f32 %v38, %v185
  %v187 = vpop.f32.mrb[0].mxu0
  %v188 = vpop.f32.mrb[0].mxu0
  %v189 = vadd.f32 %v38, %v188
  %v190 = vpop.f32.mrb[0].mxu0
  %191 = vmatprep.mubr.bf16.mxu0 0
  %192 = vmatmul.mubr.bf16.gmra.mrb[0].mxu0 %v106
  %v193 = vpop.f32.mrb[0].mxu0
  %v194 = vadd.f32 %v38, %v193
  %v195 = vpop.f32.mrb[0].mxu0
  %v196 = vpop.f32.mrb[0].mxu0
  %v197 = vadd.f32 %v38, %v196
  %v198 = vpop.f32.mrb[0].mxu0
  %199 = vmatprep.mubr.bf16.mxu0 0
  %200 = vmatmul.mubr.bf16.gmra.mrb[0].mxu0 %v109
  %v201 = vpop.f32.mrb[0].mxu0
  %v202 = vadd.f32 %v38, %v201
  %v203 = vpop.f32.mrb[0].mxu0
  %v204 = vpop.f32.mrb[0].mxu0
  %v205 = vadd.f32 %v38, %v204
  %v206 = vpop.f32.mrb[0].mxu0
  %207 = vdwg.mxu0
  %vm208 = vcmask 261120
  %209 = vst.msk [vmem:[%s3] sm:$0xff] %vm208, %v146
  %210 = vst.msk [vmem:[%s3 + $0x8] sm:$0xff] %vm208, %v149
  %211 = vst.msk [vmem:[%s3 + $0x10] sm:$0xff] %vm208, %v154
  %212 = vst.msk [vmem:[%s3 + $0x18] sm:$0xff] %vm208, %v157
  %213 = vst.msk [vmem:[%s3 + $0x20] sm:$0xff] %vm208, %v162
  %214 = vst.msk [vmem:[%s3 + $0x28] sm:$0xff] %vm208, %v165
  %215 = vst.msk [vmem:[%s3 + $0x30] sm:$0xff] %vm208, %v170
  %216 = vst.msk [vmem:[%s3 + $0x38] sm:$0xff] %vm208, %v173
  %217 = vst.msk [vmem:[%s3 + $0x40] sm:$0xff] %vm208, %v178
  %218 = vst.msk [vmem:[%s3 + $0x48] sm:$0xff] %vm208, %v181
  %219 = vst.msk [vmem:[%s3 + $0x50] sm:$0xff] %vm208, %v186
  %220 = vst.msk [vmem:[%s3 + $0x58] sm:$0xff] %vm208, %v189
  %221 = vst.msk [vmem:[%s3 + $0x60] sm:$0xff] %vm208, %v194
  %222 = vst.msk [vmem:[%s3 + $0x68] sm:$0xff] %vm208, %v197
  %223 = vst.msk [vmem:[%s3 + $0x70] sm:$0xff] %vm208, %v202
  %224 = vst.msk [vmem:[%s3 + $0x78] sm:$0xff] %vm208, %v205
  // Predicated region
  $region14: #{unet_forward.50} parent=0 // pred_check
    _
  $region15: #{unet_forward.50} parent=0 // pred_check_branch
    %226 = sbr.rel (0) target = $region17
  $region16: #{unet_forward.50} parent=0 // pred_region
    _
  $region17: #{unet_forward.50} parent=0 // pred_fallthru
    _
  // Predicated region
  $region18: #{unet_forward.50} parent=0 // pred_check
    _
  $region19: #{unet_forward.50} parent=0 // pred_check_branch
    %228 = sbr.rel (0) target = $region21
  $region20: #{unet_forward.50} parent=0 // pred_region
    _
  $region21: #{unet_forward.50} parent=0 // pred_fallthru
    _

// kernel: unet_forward.51
$region0: #{unet_forward.51}
  #allocation0 [shape = 'u32[]', space=smem, size = 0x4, offset = 0x4, fixed_abs, tag = 'smem constant byte address 0x4 - core index']
  #allocation1 [shape = 'u32[144,128]{1,0:T(1,128)}', space=vmem, size = 0x12000, scoped, tag = 'internal scratch']
  %s0 = inlined_call_operand.vmem [shape: bf16[512,144], index: 0, kind: input, shape index: {}]
  %s1 = inlined_call_operand.vmem [shape: bf16[144,8], index: 1, kind: input, shape index: {}]
  %s2 = inlined_call_operand.vmem [shape: f32[1,8], index: 2, kind: input, shape index: {}]
  %s3 = inlined_call_operand.vmem [shape: f32[1,8], index: 3, kind: input, shape index: {}]
  %s4 = inlined_call_operand.vmem [shape: f32[512,8], index: 4, kind: output, shape index: {}]
  %s5 = sld [smem:[#allocation0]]
  $region26: #{unet_forward.51} parent=0
    _
  %s7 = ssub.s32 1, %s5
  %s8 = scalar_select 0, %s7, %s5
  // Predicated region
  $region2: #{unet_forward.51} parent=0 // pred_check
    _
  $region3: #{unet_forward.51} parent=0 // pred_check_branch
    %10 = sbr.rel (0) target = $region5
  $region4: #{unet_forward.51} parent=0 // pred_region
    _
  $region5: #{unet_forward.51} parent=0 // pred_fallthru
    _
  // Predicated region
  $region6: #{unet_forward.51} parent=0 // pred_check
    _
  $region7: #{unet_forward.51} parent=0 // pred_check_branch
    %12 = sbr.rel (0) target = $region9
  $region8: #{unet_forward.51} parent=0 // pred_region
    _
  $region9: #{unet_forward.51} parent=0 // pred_fallthru
    _
  // Predicated region
  $region10: #{unet_forward.51} parent=0 // pred_check
    _
  $region11: #{unet_forward.51} parent=0 // pred_check_branch
    %14 = sbr.rel (0) target = $region13
  $region12: #{unet_forward.51} parent=0 // pred_region
    _
  $region13: #{unet_forward.51} parent=0 // pred_fallthru
    _
  // Predicated region
  $region14: #{unet_forward.51} parent=0 // pred_check
    _
  $region15: #{unet_forward.51} parent=0 // pred_check_branch
    %16 = sbr.rel (0) target = $region17
  $region16: #{unet_forward.51} parent=0 // pred_region
    _
  $region17: #{unet_forward.51} parent=0 // pred_fallthru
    _
  %v18 = vld [vmem:[%s0] sm:$0xff]
  %v19 = vld [vmem:[%s0 + $0x8] sm:$0xff]
  %v20 = vld [vmem:[%s0 + $0x10] sm:$0xff]
  %v21 = vld [vmem:[%s0 + $0x18] sm:$0xff]
  %v22 = vld [vmem:[%s0 + $0x20] sm:$0xff]
  %v23 = vld [vmem:[%s0 + $0x28] sm:$0xff]
  %v24 = vld [vmem:[%s0 + $0x30] sm:$0xff]
  %v25 = vld [vmem:[%s0 + $0x38] sm:$0xff]
  %v26 = vld [vmem:[%s0 + $0x40] sm:$0xff]
  %v27 = vld [vmem:[%s0 + $0x48] sm:$0xff]
  %v28 = vld [vmem:[%s0 + $0x50] sm:$0xff]
  %v29 = vld [vmem:[%s0 + $0x58] sm:$0xff]
  %v30 = vld [vmem:[%s0 + $0x60] sm:$0xff]
  %v31 = vld [vmem:[%s0 + $0x68] sm:$0xff]
  %v32 = vld [vmem:[%s0 + $0x70] sm:$0xff]
  %v33 = vld [vmem:[%s0 + $0x78] sm:$0xff]
  %v34 = vld [vmem:[%s0 + $0x80] sm:$0xff]
  %v35 = vld [vmem:[%s0 + $0x88] sm:$0xff]
  %v36 = vld [vmem:[%s0 + $0x90] sm:$0xff]
  %v37 = vld [vmem:[%s0 + $0x98] sm:$0xff]
  %v38 = vld [vmem:[%s0 + $0xa0] sm:$0xff]
  %v39 = vld [vmem:[%s0 + $0xa8] sm:$0xff]
  %v40 = vld [vmem:[%s0 + $0xb0] sm:$0xff]
  %v41 = vld [vmem:[%s0 + $0xb8] sm:$0xff]
  %v42 = vld [vmem:[%s0 + $0xc0] sm:$0xff]
  %v43 = vld [vmem:[%s0 + $0xc8] sm:$0xff]
  %v44 = vld [vmem:[%s0 + $0xd0] sm:$0xff]
  %v45 = vld [vmem:[%s0 + $0xd8] sm:$0xff]
  %v46 = vld [vmem:[%s0 + $0xe0] sm:$0xff]
  %v47 = vld [vmem:[%s0 + $0xe8] sm:$0xff]
  %v48 = vld [vmem:[%s0 + $0xf0] sm:$0xff]
  %v49 = vld [vmem:[%s0 + $0xf8] sm:$0xff]
  %v50 = vld [vmem:[%s0 + $0x100] sm:$0xff]
  %v51 = vld [vmem:[%s0 + $0x108] sm:$0xff]
  %v52 = vld [vmem:[%s0 + $0x110] sm:$0xff]
  %v53 = vld [vmem:[%s0 + $0x118] sm:$0xff]
  %v54 = vld [vmem:[%s0 + $0x120] sm:$0xff]
  %v55 = vld [vmem:[%s0 + $0x128] sm:$0xff]
  %v56 = vld [vmem:[%s0 + $0x130] sm:$0xff]
  %v57 = vld [vmem:[%s0 + $0x138] sm:$0xff]
  %v58 = vld [vmem:[%s0 + $0x140] sm:$0xff]
  %v59 = vld [vmem:[%s0 + $0x148] sm:$0xff]
  %v60 = vld [vmem:[%s0 + $0x150] sm:$0xff]
  %v61 = vld [vmem:[%s0 + $0x158] sm:$0xff]
  %v62 = vld [vmem:[%s0 + $0x160] sm:$0xff]
  %v63 = vld [vmem:[%s0 + $0x168] sm:$0xff]
  %v64 = vld [vmem:[%s0 + $0x170] sm:$0xff]
  %v65 = vld [vmem:[%s0 + $0x178] sm:$0xff]
  %v66 = vld [vmem:[%s0 + $0x180] sm:$0xff]
  %v67 = vld [vmem:[%s0 + $0x188] sm:$0xff]
  %v68 = vld [vmem:[%s0 + $0x190] sm:$0xff]
  %v69 = vld [vmem:[%s0 + $0x198] sm:$0xff]
  %v70 = vld [vmem:[%s0 + $0x1a0] sm:$0xff]
  %v71 = vld [vmem:[%s0 + $0x1a8] sm:$0xff]
  %v72 = vld [vmem:[%s0 + $0x1b0] sm:$0xff]
  %v73 = vld [vmem:[%s0 + $0x1b8] sm:$0xff]
  %v74 = vld [vmem:[%s0 + $0x1c0] sm:$0xff]
  %v75 = vld [vmem:[%s0 + $0x1c8] sm:$0xff]
  %v76 = vld [vmem:[%s0 + $0x1d0] sm:$0xff]
  %v77 = vld [vmem:[%s0 + $0x1d8] sm:$0xff]
  %v78 = vld [vmem:[%s0 + $0x1e0] sm:$0xff]
  %v79 = vld [vmem:[%s0 + $0x1e8] sm:$0xff]
  %v80 = vld [vmem:[%s0 + $0x1f0] sm:$0xff]
  %v81 = vld [vmem:[%s0 + $0x1f8] sm:$0xff]
  %v82 = vld [vmem:[%s1] sm:$0xf]
  %v83 = vld [vmem:[%s1 + $0x4] sm:$0xf]
  %v84 = vld [vmem:[%s1 + $0x8] sm:$0xf]
  %v85 = vld [vmem:[%s1 + $0xc] sm:$0xf]
  %v86 = vld [vmem:[%s1 + $0x10] sm:$0xf]
  %v87 = vld [vmem:[%s1 + $0x14] sm:$0xf]
  %v88 = vld [vmem:[%s1 + $0x18] sm:$0xf]
  %v89 = vld [vmem:[%s1 + $0x1c] sm:$0xf]
  %v90 = vld [vmem:[%s1 + $0x20] sm:$0xf]
  %v91 = vld [vmem:[%s1 + $0x24] sm:$0xf]
  %v92 = vld [vmem:[%s1 + $0x28] sm:$0xf]
  %v93 = vld [vmem:[%s1 + $0x2c] sm:$0xf]
  %v94 = vld [vmem:[%s1 + $0x30] sm:$0xf]
  %v95 = vld [vmem:[%s1 + $0x34] sm:$0xf]
  %v96 = vld [vmem:[%s1 + $0x38] sm:$0xf]
  %v97 = vld [vmem:[%s1 + $0x3c] sm:$0xf]
  %v98 = vld [vmem:[%s1 + $0x40] sm:$0xf]
  %v99 = vld [vmem:[%s1 + $0x44] sm:$0xf]
  %v164 = vunpack.c.l.b16 %v18
  %v165 = vunpack.c.h.b16 %v18
  %v166 = vunpack.c.l.b16 %v19
  %v167 = vunpack.c.h.b16 %v19
  %v168 = vunpack.c.l.b16 %v20
  %v169 = vunpack.c.h.b16 %v20
  %v170 = vunpack.c.l.b16 %v21
  %v171 = vunpack.c.h.b16 %v21
  %v172 = vunpack.c.l.b16 %v22
  %v173 = vunpack.c.h.b16 %v22
  %v174 = vunpack.c.l.b16 %v23
  %v175 = vunpack.c.h.b16 %v23
  %v176 = vunpack.c.l.b16 %v24
  %v177 = vunpack.c.h.b16 %v24
  %v178 = vunpack.c.l.b16 %v25
  %v179 = vunpack.c.h.b16 %v25
  %v180 = vunpack.c.l.b16 %v26
  %v181 = vunpack.c.h.b16 %v26
  %v182 = vunpack.c.l.b16 %v27
  %v183 = vunpack.c.h.b16 %v27
  %v184 = vunpack.c.l.b16 %v28
  %v185 = vunpack.c.h.b16 %v28
  %v186 = vunpack.c.l.b16 %v29
  %v187 = vunpack.c.h.b16 %v29
  %v188 = vunpack.c.l.b16 %v30
  %v189 = vunpack.c.h.b16 %v30
  %v190 = vunpack.c.l.b16 %v31
  %v191 = vunpack.c.h.b16 %v31
  %v192 = vunpack.c.l.b16 %v32
  %v193 = vunpack.c.h.b16 %v32
  %v194 = vunpack.c.l.b16 %v33
  %v195 = vunpack.c.h.b16 %v33
  %v196 = vunpack.c.l.b16 %v34
  %v197 = vunpack.c.h.b16 %v34
  %v198 = vunpack.c.l.b16 %v35
  %v199 = vunpack.c.h.b16 %v35
  %v200 = vunpack.c.l.b16 %v36
  %v201 = vunpack.c.h.b16 %v36
  %v202 = vunpack.c.l.b16 %v37
  %v203 = vunpack.c.h.b16 %v37
  %v204 = vunpack.c.l.b16 %v38
  %v205 = vunpack.c.h.b16 %v38
  %v206 = vunpack.c.l.b16 %v39
  %v207 = vunpack.c.h.b16 %v39
  %v208 = vunpack.c.l.b16 %v40
  %v209 = vunpack.c.h.b16 %v40
  %v210 = vunpack.c.l.b16 %v41
  %v211 = vunpack.c.h.b16 %v41
  %v212 = vunpack.c.l.b16 %v42
  %v213 = vunpack.c.h.b16 %v42
  %v214 = vunpack.c.l.b16 %v43
  %v215 = vunpack.c.h.b16 %v43
  %v216 = vunpack.c.l.b16 %v44
  %v217 = vunpack.c.h.b16 %v44
  %v218 = vunpack.c.l.b16 %v45
  %v219 = vunpack.c.h.b16 %v45
  %v220 = vunpack.c.l.b16 %v46
  %v221 = vunpack.c.h.b16 %v46
  %v222 = vunpack.c.l.b16 %v47
  %v223 = vunpack.c.h.b16 %v47
  %v224 = vunpack.c.l.b16 %v48
  %v225 = vunpack.c.h.b16 %v48
  %v226 = vunpack.c.l.b16 %v49
  %v227 = vunpack.c.h.b16 %v49
  %v228 = vunpack.c.l.b16 %v50
  %v229 = vunpack.c.h.b16 %v50
  %v230 = vunpack.c.l.b16 %v51
  %v231 = vunpack.c.h.b16 %v51
  %v232 = vunpack.c.l.b16 %v52
  %v233 = vunpack.c.h.b16 %v52
  %v234 = vunpack.c.l.b16 %v53
  %v235 = vunpack.c.h.b16 %v53
  %v236 = vunpack.c.l.b16 %v54
  %v237 = vunpack.c.h.b16 %v54
  %v238 = vunpack.c.l.b16 %v55
  %v239 = vunpack.c.h.b16 %v55
  %v240 = vunpack.c.l.b16 %v56
  %v241 = vunpack.c.h.b16 %v56
  %v242 = vunpack.c.l.b16 %v57
  %v243 = vunpack.c.h.b16 %v57
  %v244 = vunpack.c.l.b16 %v58
  %v245 = vunpack.c.h.b16 %v58
  %v246 = vunpack.c.l.b16 %v59
  %v247 = vunpack.c.h.b16 %v59
  %v248 = vunpack.c.l.b16 %v60
  %v249 = vunpack.c.h.b16 %v60
  %v250 = vunpack.c.l.b16 %v61
  %v251 = vunpack.c.h.b16 %v61
  %v252 = vunpack.c.l.b16 %v62
  %v253 = vunpack.c.h.b16 %v62
  %v254 = vunpack.c.l.b16 %v63
  %v255 = vunpack.c.h.b16 %v63
  %v256 = vunpack.c.l.b16 %v64
  %v257 = vunpack.c.h.b16 %v64
  %v258 = vunpack.c.l.b16 %v65
  %v259 = vunpack.c.h.b16 %v65
  %v260 = vunpack.c.l.b16 %v66
  %v261 = vunpack.c.h.b16 %v66
  %v262 = vunpack.c.l.b16 %v67
  %v263 = vunpack.c.h.b16 %v67
  %v264 = vunpack.c.l.b16 %v68
  %v265 = vunpack.c.h.b16 %v68
  %v266 = vunpack.c.l.b16 %v69
  %v267 = vunpack.c.h.b16 %v69
  %v268 = vunpack.c.l.b16 %v70
  %v269 = vunpack.c.h.b16 %v70
  %v270 = vunpack.c.l.b16 %v71
  %v271 = vunpack.c.h.b16 %v71
  %v272 = vunpack.c.l.b16 %v72
  %v273 = vunpack.c.h.b16 %v72
  %v274 = vunpack.c.l.b16 %v73
  %v275 = vunpack.c.h.b16 %v73
  %v276 = vunpack.c.l.b16 %v74
  %v277 = vunpack.c.h.b16 %v74
  %v278 = vunpack.c.l.b16 %v75
  %v279 = vunpack.c.h.b16 %v75
  %v280 = vunpack.c.l.b16 %v76
  %v281 = vunpack.c.h.b16 %v76
  %v282 = vunpack.c.l.b16 %v77
  %v283 = vunpack.c.h.b16 %v77
  %v284 = vunpack.c.l.b16 %v78
  %v285 = vunpack.c.h.b16 %v78
  %v286 = vunpack.c.l.b16 %v79
  %v287 = vunpack.c.h.b16 %v79
  %v288 = vunpack.c.l.b16 %v80
  %v289 = vunpack.c.h.b16 %v80
  %v290 = vunpack.c.l.b16 %v81
  %v291 = vunpack.c.h.b16 %v81
  %v292 = vpack.c.b16 %v166, %v164
  %v293 = vpack.c.b16 %v167, %v165
  %v294 = vpack.c.b16 %v170, %v168
  %v295 = vpack.c.b16 %v171, %v169
  %v296 = vpack.c.b16 %v174, %v172
  %v297 = vpack.c.b16 %v175, %v173
  %v298 = vpack.c.b16 %v178, %v176
  %v299 = vpack.c.b16 %v179, %v177
  %v300 = vpack.c.b16 %v182, %v180
  %v301 = vpack.c.b16 %v183, %v181
  %v302 = vpack.c.b16 %v186, %v184
  %v303 = vpack.c.b16 %v187, %v185
  %v304 = vpack.c.b16 %v190, %v188
  %v305 = vpack.c.b16 %v191, %v189
  %v306 = vpack.c.b16 %v194, %v192
  %v307 = vpack.c.b16 %v195, %v193
  %v308 = vpack.c.b16 %v198, %v196
  %v309 = vpack.c.b16 %v199, %v197
  %v310 = vpack.c.b16 %v202, %v200
  %v311 = vpack.c.b16 %v203, %v201
  %v312 = vpack.c.b16 %v206, %v204
  %v313 = vpack.c.b16 %v207, %v205
  %v314 = vpack.c.b16 %v210, %v208
  %v315 = vpack.c.b16 %v211, %v209
  %v316 = vpack.c.b16 %v214, %v212
  %v317 = vpack.c.b16 %v215, %v213
  %v318 = vpack.c.b16 %v218, %v216
  %v319 = vpack.c.b16 %v219, %v217
  %v320 = vpack.c.b16 %v222, %v220
  %v321 = vpack.c.b16 %v223, %v221
  %v322 = vpack.c.b16 %v226, %v224
  %v323 = vpack.c.b16 %v227, %v225
  %v324 = vpack.c.b16 %v230, %v228
  %v325 = vpack.c.b16 %v231, %v229
  %v326 = vpack.c.b16 %v234, %v232
  %v327 = vpack.c.b16 %v235, %v233
  %v328 = vpack.c.b16 %v238, %v236
  %v329 = vpack.c.b16 %v239, %v237
  %v330 = vpack.c.b16 %v242, %v240
  %v331 = vpack.c.b16 %v243, %v241
  %v332 = vpack.c.b16 %v246, %v244
  %v333 = vpack.c.b16 %v247, %v245
  %v334 = vpack.c.b16 %v250, %v248
  %v335 = vpack.c.b16 %v251, %v249
  %v336 = vpack.c.b16 %v254, %v252
  %v337 = vpack.c.b16 %v255, %v253
  %v338 = vpack.c.b16 %v258, %v256
  %v339 = vpack.c.b16 %v259, %v257
  %v340 = vpack.c.b16 %v262, %v260
  %v341 = vpack.c.b16 %v263, %v261
  %v342 = vpack.c.b16 %v266, %v264
  %v343 = vpack.c.b16 %v267, %v265
  %v344 = vpack.c.b16 %v270, %v268
  %v345 = vpack.c.b16 %v271, %v269
  %v346 = vpack.c.b16 %v274, %v272
  %v347 = vpack.c.b16 %v275, %v273
  %v348 = vpack.c.b16 %v278, %v276
  %v349 = vpack.c.b16 %v279, %v277
  %v350 = vpack.c.b16 %v282, %v280
  %v351 = vpack.c.b16 %v283, %v281
  %v352 = vpack.c.b16 %v286, %v284
  %v353 = vpack.c.b16 %v287, %v285
  %v354 = vpack.c.b16 %v290, %v288
  %v355 = vpack.c.b16 %v291, %v289
  %v406 = vunpack.c.l.b16 %v82
  %v407 = vunpack.c.l.b16 %v83
  %v408 = vunpack.c.l.b16 %v84
  %v409 = vunpack.c.l.b16 %v85
  %v410 = vunpack.c.l.b16 %v86
  %v411 = vunpack.c.l.b16 %v87
  %v412 = vunpack.c.l.b16 %v88
  %v413 = vunpack.c.l.b16 %v89
  %v414 = vunpack.c.l.b16 %v90
  %v415 = vunpack.c.l.b16 %v91
  %v416 = vunpack.c.l.b16 %v92
  %v417 = vunpack.c.l.b16 %v93
  %v418 = vunpack.c.l.b16 %v94
  %v419 = vunpack.c.l.b16 %v95
  %v420 = vunpack.c.l.b16 %v96
  %v421 = vunpack.c.l.b16 %v97
  %v422 = vunpack.c.l.b16 %v98
  %v423 = vunpack.c.l.b16 %v99
  %v424 = vpack.c.b16 %v407, %v406
  %v425 = vpack.c.b16 %v409, %v408
  %v426 = vpack.c.b16 %v411, %v410
  %v427 = vpack.c.b16 %v413, %v412
  %v428 = vpack.c.b16 %v415, %v414
  %v429 = vpack.c.b16 %v417, %v416
  %v430 = vpack.c.b16 %v419, %v418
  %v431 = vpack.c.b16 %v421, %v420
  %v432 = vpack.c.b16 %v423, %v422
  %vm442 = vcmask 130048
  %v444 = vsel %vm442, %v293, 0
  %v447 = vsel %vm442, %v295, 0
  %v450 = vsel %vm442, %v297, 0
  %v453 = vsel %vm442, %v299, 0
  %v456 = vsel %vm442, %v301, 0
  %v459 = vsel %vm442, %v303, 0
  %v462 = vsel %vm442, %v305, 0
  %v465 = vsel %vm442, %v307, 0
  %v468 = vsel %vm442, %v309, 0
  %v471 = vsel %vm442, %v311, 0
  %v474 = vsel %vm442, %v313, 0
  %v477 = vsel %vm442, %v315, 0
  %v480 = vsel %vm442, %v317, 0
  %v483 = vsel %vm442, %v319, 0
  %v486 = vsel %vm442, %v321, 0
  %v489 = vsel %vm442, %v323, 0
  %v492 = vsel %vm442, %v325, 0
  %v495 = vsel %vm442, %v327, 0
  %v498 = vsel %vm442, %v329, 0
  %v501 = vsel %vm442, %v331, 0
  %v504 = vsel %vm442, %v333, 0
  %v507 = vsel %vm442, %v335, 0
  %v510 = vsel %vm442, %v337, 0
  %v513 = vsel %vm442, %v339, 0
  %v516 = vsel %vm442, %v341, 0
  %v519 = vsel %vm442, %v343, 0
  %v522 = vsel %vm442, %v345, 0
  %v525 = vsel %vm442, %v347, 0
  %v528 = vsel %vm442, %v349, 0
  %v531 = vsel %vm442, %v351, 0
  %v534 = vsel %vm442, %v353, 0
  %v537 = vsel %vm442, %v355, 0
  %539 = vmatprep.subr.bf16.mxu0 0
  %540 = vmatpush1.bf16.msra.mxu0 %v424
  %541 = vmatprep.subr.bf16.mxu0 0
  %542 = vmatpush1.bf16.msra.mxu0 %v425
  %543 = vmatprep.subr.bf16.mxu0 0
  %544 = vmatpush1.bf16.msra.mxu0 %v426
  %545 = vmatprep.subr.bf16.mxu0 0
  %546 = vmatpush1.bf16.msra.mxu0 %v427
  %547 = vmatprep.subr.bf16.mxu0 0
  %548 = vmatpush1.bf16.msra.mxu0 %v428
  %549 = vmatprep.subr.bf16.mxu0 0
  %550 = vmatpush1.bf16.msra.mxu0 %v429
  %551 = vmatprep.subr.bf16.mxu0 0
  %552 = vmatpush1.bf16.msra.mxu0 %v430
  %553 = vmatprep.subr.bf16.mxu0 0
  %554 = vmatpush1.bf16.msra.mxu0 %v431
  %555 = vmatprep.subr.bf16.mxu0 0
  %556 = vmatpush1.bf16.msra.mxu0 %v432
  %557 = vmatprep.subr.bf16.mxu0 0
  %558 = vmatpush1.bf16.msra.mxu0 0
  %559 = vmatprep.subr.bf16.mxu0 0
  %560 = vmatpush1.bf16.msra.mxu0 0
  %561 = vmatprep.subr.bf16.mxu0 0
  %562 = vmatpush1.bf16.msra.mxu0 0
  %563 = vmatprep.subr.bf16.mxu0 0
  %564 = vmatpush1.bf16.msra.mxu0 0
  %565 = vmatprep.subr.bf16.mxu0 0
  %566 = vmatpush1.bf16.msra.mxu0 0
  %567 = vmatprep.subr.bf16.mxu0 0
  %568 = vmatpush1.bf16.msra.mxu0 0
  %569 = vmatprep.subr.bf16.mxu0 0
  %570 = vmatpush1.bf16.msra.mxu0 0
  %571 = vmatprep.mubr.bf16.mxu0 %v444
  %572 = vmatmul.mubr.bf16.gmra.mrb[0].mxu0 %v292
  %v573 = vpop.f32.mrb[0].mxu0
  %v574 = vadd.f32 0.0, %v573
  %v575 = vpop.f32.mrb[0].mxu0
  %v576 = vpop.f32.mrb[0].mxu0
  %v577 = vadd.f32 0.0, %v576
  %v578 = vpop.f32.mrb[0].mxu0
  %579 = vmatprep.mubr.bf16.mxu0 %v447
  %580 = vmatmul.mubr.bf16.gmra.mrb[0].mxu0 %v294
  %v581 = vpop.f32.mrb[0].mxu0
  %v582 = vadd.f32 0.0, %v581
  %v583 = vpop.f32.mrb[0].mxu0
  %v584 = vpop.f32.mrb[0].mxu0
  %v585 = vadd.f32 0.0, %v584
  %v586 = vpop.f32.mrb[0].mxu0
  %587 = vmatprep.mubr.bf16.mxu0 %v450
  %588 = vmatmul.mubr.bf16.gmra.mrb[0].mxu0 %v296
  %v589 = vpop.f32.mrb[0].mxu0
  %v590 = vadd.f32 0.0, %v589
  %v591 = vpop.f32.mrb[0].mxu0
  %v592 = vpop.f32.mrb[0].mxu0
  %v593 = vadd.f32 0.0, %v592
  %v594 = vpop.f32.mrb[0].mxu0
  %595 = vmatprep.mubr.bf16.mxu0 %v453
  %596 = vmatmul.mubr.bf16.gmra.mrb[0].mxu0 %v298
  %v597 = vpop.f32.mrb[0].mxu0
  %v598 = vadd.f32 0.0, %v597
  %v599 = vpop.f32.mrb[0].mxu0
  %v600 = vpop.f32.mrb[0].mxu0
  %v601 = vadd.f32 0.0, %v600
  %v602 = vpop.f32.mrb[0].mxu0
  %603 = vmatprep.mubr.bf16.mxu0 %v456
  %604 = vmatmul.mubr.bf16.gmra.mrb[0].mxu0 %v300
  %v605 = vpop.f32.mrb[0].mxu0
  %v606 = vadd.f32 0.0, %v605
  %v607 = vpop.f32.mrb[0].mxu0
  %v608 = vpop.f32.mrb[0].mxu0
  %v609 = vadd.f32 0.0, %v608
  %v610 = vpop.f32.mrb[0].mxu0
  %611 = vmatprep.mubr.bf16.mxu0 %v459
  %612 = vmatmul.mubr.bf16.gmra.mrb[0].mxu0 %v302
  %v613 = vpop.f32.mrb[0].mxu0
  %v614 = vadd.f32 0.0, %v613
  %v615 = vpop.f32.mrb[0].mxu0
  %v616 = vpop.f32.mrb[0].mxu0
  %v617 = vadd.f32 0.0, %v616
  %v618 = vpop.f32.mrb[0].mxu0
  %619 = vmatprep.mubr.bf16.mxu0 %v462
  %620 = vmatmul.mubr.bf16.gmra.mrb[0].mxu0 %v304
  %v621 = vpop.f32.mrb[0].mxu0
  %v622 = vadd.f32 0.0, %v621
  %v623 = vpop.f32.mrb[0].mxu0
  %v624 = vpop.f32.mrb[0].mxu0
  %v625 = vadd.f32 0.0, %v624
  %v626 = vpop.f32.mrb[0].mxu0
  %627 = vmatprep.mubr.bf16.mxu0 %v465
  %628 = vmatmul.mubr.bf16.gmra.mrb[0].mxu0 %v306
  %v629 = vpop.f32.mrb[0].mxu0
  %v630 = vadd.f32 0.0, %v629
  %v631 = vpop.f32.mrb[0].mxu0
  %v632 = vpop.f32.mrb[0].mxu0
  %v633 = vadd.f32 0.0, %v632
  %v634 = vpop.f32.mrb[0].mxu0
  %635 = vmatprep.mubr.bf16.mxu0 %v468
  %636 = vmatmul.mubr.bf16.gmra.mrb[0].mxu0 %v308
  %v637 = vpop.f32.mrb[0].mxu0
  %v638 = vadd.f32 0.0, %v637
  %v639 = vpop.f32.mrb[0].mxu0
  %v640 = vpop.f32.mrb[0].mxu0
  %v641 = vadd.f32 0.0, %v640
  %v642 = vpop.f32.mrb[0].mxu0
  %643 = vmatprep.mubr.bf16.mxu0 %v471
  %644 = vmatmul.mubr.bf16.gmra.mrb[0].mxu0 %v310
  %v645 = vpop.f32.mrb[0].mxu0
  %v646 = vadd.f32 0.0, %v645
  %v647 = vpop.f32.mrb[0].mxu0
  %v648 = vpop.f32.mrb[0].mxu0
  %v649 = vadd.f32 0.0, %v648
  %v650 = vpop.f32.mrb[0].mxu0
  %651 = vmatprep.mubr.bf16.mxu0 %v474
  %652 = vmatmul.mubr.bf16.gmra.mrb[0].mxu0 %v312
  %v653 = vpop.f32.mrb[0].mxu0
  %v654 = vadd.f32 0.0, %v653
  %v655 = vpop.f32.mrb[0].mxu0
  %v656 = vpop.f32.mrb[0].mxu0
  %v657 = vadd.f32 0.0, %v656
  %v658 = vpop.f32.mrb[0].mxu0
  %659 = vmatprep.mubr.bf16.mxu0 %v477
  %660 = vmatmul.mubr.bf16.gmra.mrb[0].mxu0 %v314
  %v661 = vpop.f32.mrb[0].mxu0
  %v662 = vadd.f32 0.0, %v661
  %v663 = vpop.f32.mrb[0].mxu0
  %v664 = vpop.f32.mrb[0].mxu0
  %v665 = vadd.f32 0.0, %v664
  %v666 = vpop.f32.mrb[0].mxu0
  %667 = vmatprep.mubr.bf16.mxu0 %v480
  %668 = vmatmul.mubr.bf16.gmra.mrb[0].mxu0 %v316
  %v669 = vpop.f32.mrb[0].mxu0
  %v670 = vadd.f32 0.0, %v669
  %v671 = vpop.f32.mrb[0].mxu0
  %v672 = vpop.f32.mrb[0].mxu0
  %v673 = vadd.f32 0.0, %v672
  %v674 = vpop.f32.mrb[0].mxu0
  %675 = vmatprep.mubr.bf16.mxu0 %v483
  %676 = vmatmul.mubr.bf16.gmra.mrb[0].mxu0 %v318
  %v677 = vpop.f32.mrb[0].mxu0
  %v678 = vadd.f32 0.0, %v677
  %v679 = vpop.f32.mrb[0].mxu0
  %v680 = vpop.f32.mrb[0].mxu0
  %v681 = vadd.f32 0.0, %v680
  %v682 = vpop.f32.mrb[0].mxu0
  %683 = vmatprep.mubr.bf16.mxu0 %v486
  %684 = vmatmul.mubr.bf16.gmra.mrb[0].mxu0 %v320
  %v685 = vpop.f32.mrb[0].mxu0
  %v686 = vadd.f32 0.0, %v685
  %v687 = vpop.f32.mrb[0].mxu0
  %v688 = vpop.f32.mrb[0].mxu0
  %v689 = vadd.f32 0.0, %v688
  %v690 = vpop.f32.mrb[0].mxu0
  %691 = vmatprep.mubr.bf16.mxu0 %v489
  %692 = vmatmul.mubr.bf16.gmra.mrb[0].mxu0 %v322
  %v693 = vpop.f32.mrb[0].mxu0
  %v694 = vadd.f32 0.0, %v693
  %v695 = vpop.f32.mrb[0].mxu0
  %v696 = vpop.f32.mrb[0].mxu0
  %v697 = vadd.f32 0.0, %v696
  %v698 = vpop.f32.mrb[0].mxu0
  %699 = vmatprep.mubr.bf16.mxu0 %v492
  %700 = vmatmul.mubr.bf16.gmra.mrb[0].mxu0 %v324
  %v701 = vpop.f32.mrb[0].mxu0
  %v702 = vadd.f32 0.0, %v701
  %v703 = vpop.f32.mrb[0].mxu0
  %v704 = vpop.f32.mrb[0].mxu0
  %v705 = vadd.f32 0.0, %v704
  %v706 = vpop.f32.mrb[0].mxu0
  %707 = vmatprep.mubr.bf16.mxu0 %v495
  %708 = vmatmul.mubr.bf16.gmra.mrb[0].mxu0 %v326
  %v709 = vpop.f32.mrb[0].mxu0
  %v710 = vadd.f32 0.0, %v709
  %v711 = vpop.f32.mrb[0].mxu0
  %v712 = vpop.f32.mrb[0].mxu0
  %v713 = vadd.f32 0.0, %v712
  %v714 = vpop.f32.mrb[0].mxu0
  %715 = vmatprep.mubr.bf16.mxu0 %v498
  %716 = vmatmul.mubr.bf16.gmra.mrb[0].mxu0 %v328
  %v717 = vpop.f32.mrb[0].mxu0
  %v718 = vadd.f32 0.0, %v717
  %v719 = vpop.f32.mrb[0].mxu0
  %v720 = vpop.f32.mrb[0].mxu0
  %v721 = vadd.f32 0.0, %v720
  %v722 = vpop.f32.mrb[0].mxu0
  %723 = vmatprep.mubr.bf16.mxu0 %v501
  %724 = vmatmul.mubr.bf16.gmra.mrb[0].mxu0 %v330
  %v725 = vpop.f32.mrb[0].mxu0
  %v726 = vadd.f32 0.0, %v725
  %v727 = vpop.f32.mrb[0].mxu0
  %v728 = vpop.f32.mrb[0].mxu0
  %v729 = vadd.f32 0.0, %v728
  %v730 = vpop.f32.mrb[0].mxu0
  %731 = vmatprep.mubr.bf16.mxu0 %v504
  %732 = vmatmul.mubr.bf16.gmra.mrb[0].mxu0 %v332
  %v733 = vpop.f32.mrb[0].mxu0
  %v734 = vadd.f32 0.0, %v733
  %v735 = vpop.f32.mrb[0].mxu0
  %v736 = vpop.f32.mrb[0].mxu0
  %v737 = vadd.f32 0.0, %v736
  %v738 = vpop.f32.mrb[0].mxu0
  %739 = vmatprep.mubr.bf16.mxu0 %v507
  %740 = vmatmul.mubr.bf16.gmra.mrb[0].mxu0 %v334
  %v741 = vpop.f32.mrb[0].mxu0
  %v742 = vadd.f32 0.0, %v741
  %v743 = vpop.f32.mrb[0].mxu0
  %v744 = vpop.f32.mrb[0].mxu0
  %v745 = vadd.f32 0.0, %v744
  %v746 = vpop.f32.mrb[0].mxu0
  %747 = vmatprep.mubr.bf16.mxu0 %v510
  %748 = vmatmul.mubr.bf16.gmra.mrb[0].mxu0 %v336
  %v749 = vpop.f32.mrb[0].mxu0
  %v750 = vadd.f32 0.0, %v749
  %v751 = vpop.f32.mrb[0].mxu0
  %v752 = vpop.f32.mrb[0].mxu0
  %v753 = vadd.f32 0.0, %v752
  %v754 = vpop.f32.mrb[0].mxu0
  %755 = vmatprep.mubr.bf16.mxu0 %v513
  %756 = vmatmul.mubr.bf16.gmra.mrb[0].mxu0 %v338
  %v757 = vpop.f32.mrb[0].mxu0
  %v758 = vadd.f32 0.0, %v757
  %v759 = vpop.f32.mrb[0].mxu0
  %v760 = vpop.f32.mrb[0].mxu0
  %v761 = vadd.f32 0.0, %v760
  %v762 = vpop.f32.mrb[0].mxu0
  %763 = vmatprep.mubr.bf16.mxu0 %v516
  %764 = vmatmul.mubr.bf16.gmra.mrb[0].mxu0 %v340
  %v765 = vpop.f32.mrb[0].mxu0
  %v766 = vadd.f32 0.0, %v765
  %v767 = vpop.f32.mrb[0].mxu0
  %v768 = vpop.f32.mrb[0].mxu0
  %v769 = vadd.f32 0.0, %v768
  %v770 = vpop.f32.mrb[0].mxu0
  %771 = vmatprep.mubr.bf16.mxu0 %v519
  %772 = vmatmul.mubr.bf16.gmra.mrb[0].mxu0 %v342
  %v773 = vpop.f32.mrb[0].mxu0
  %v774 = vadd.f32 0.0, %v773
  %v775 = vpop.f32.mrb[0].mxu0
  %v776 = vpop.f32.mrb[0].mxu0
  %v777 = vadd.f32 0.0, %v776
  %v778 = vpop.f32.mrb[0].mxu0
  %779 = vmatprep.mubr.bf16.mxu0 %v522
  %780 = vmatmul.mubr.bf16.gmra.mrb[0].mxu0 %v344
  %v781 = vpop.f32.mrb[0].mxu0
  %v782 = vadd.f32 0.0, %v781
  %v783 = vpop.f32.mrb[0].mxu0
  %v784 = vpop.f32.mrb[0].mxu0
  %v785 = vadd.f32 0.0, %v784
  %v786 = vpop.f32.mrb[0].mxu0
  %787 = vmatprep.mubr.bf16.mxu0 %v525
  %788 = vmatmul.mubr.bf16.gmra.mrb[0].mxu0 %v346
  %v789 = vpop.f32.mrb[0].mxu0
  %v790 = vadd.f32 0.0, %v789
  %v791 = vpop.f32.mrb[0].mxu0
  %v792 = vpop.f32.mrb[0].mxu0
  %v793 = vadd.f32 0.0, %v792
  %v794 = vpop.f32.mrb[0].mxu0
  %795 = vmatprep.mubr.bf16.mxu0 %v528
  %796 = vmatmul.mubr.bf16.gmra.mrb[0].mxu0 %v348
  %v797 = vpop.f32.mrb[0].mxu0
  %v798 = vadd.f32 0.0, %v797
  %v799 = vpop.f32.mrb[0].mxu0
  %v800 = vpop.f32.mrb[0].mxu0
  %v801 = vadd.f32 0.0, %v800
  %v802 = vpop.f32.mrb[0].mxu0
  %803 = vmatprep.mubr.bf16.mxu0 %v531
  %804 = vmatmul.mubr.bf16.gmra.mrb[0].mxu0 %v350
  %v805 = vpop.f32.mrb[0].mxu0
  %v806 = vadd.f32 0.0, %v805
  %v807 = vpop.f32.mrb[0].mxu0
  %v808 = vpop.f32.mrb[0].mxu0
  %v809 = vadd.f32 0.0, %v808
  %v810 = vpop.f32.mrb[0].mxu0
  %811 = vmatprep.mubr.bf16.mxu0 %v534
  %812 = vmatmul.mubr.bf16.gmra.mrb[0].mxu0 %v352
  %v813 = vpop.f32.mrb[0].mxu0
  %v814 = vadd.f32 0.0, %v813
  %v815 = vpop.f32.mrb[0].mxu0
  %v816 = vpop.f32.mrb[0].mxu0
  %v817 = vadd.f32 0.0, %v816
  %v818 = vpop.f32.mrb[0].mxu0
  %819 = vmatprep.mubr.bf16.mxu0 %v537
  %820 = vmatmul.mubr.bf16.gmra.mrb[0].mxu0 %v354
  %v821 = vpop.f32.mrb[0].mxu0
  %v822 = vadd.f32 0.0, %v821
  %v823 = vpop.f32.mrb[0].mxu0
  %v824 = vpop.f32.mrb[0].mxu0
  %v825 = vadd.f32 0.0, %v824
  %v826 = vpop.f32.mrb[0].mxu0
  %827 = vdwg.mxu0
  %vm828 = vcmask 64512
  %v829 = vsel %vm828, %v574, 0.0
  %v830 = vsel %vm828, %v577, 0.0
  %v831 = vadd.f32 %v829, %v830
  %v832 = vsel %vm828, %v582, 0.0
  %v833 = vadd.f32 %v831, %v832
  %v834 = vsel %vm828, %v585, 0.0
  %v835 = vadd.f32 %v833, %v834
  %v836 = vsel %vm828, %v590, 0.0
  %v837 = vadd.f32 %v835, %v836
  %v838 = vsel %vm828, %v593, 0.0
  %v839 = vadd.f32 %v837, %v838
  %v840 = vsel %vm828, %v598, 0.0
  %v841 = vadd.f32 %v839, %v840
  %v842 = vsel %vm828, %v601, 0.0
  %v843 = vadd.f32 %v841, %v842
  %v844 = vsel %vm828, %v606, 0.0
  %v845 = vadd.f32 %v843, %v844
  %v846 = vsel %vm828, %v609, 0.0
  %v847 = vadd.f32 %v845, %v846
  %v848 = vsel %vm828, %v614, 0.0
  %v849 = vadd.f32 %v847, %v848
  %v850 = vsel %vm828, %v617, 0.0
  %v851 = vadd.f32 %v849, %v850
  %v852 = vsel %vm828, %v622, 0.0
  %v853 = vadd.f32 %v851, %v852
  %v854 = vsel %vm828, %v625, 0.0
  %v855 = vadd.f32 %v853, %v854
  %v856 = vsel %vm828, %v630, 0.0
  %v857 = vadd.f32 %v855, %v856
  %v858 = vsel %vm828, %v633, 0.0
  %v859 = vadd.f32 %v857, %v858
  %v860 = vsel %vm828, %v638, 0.0
  %v861 = vadd.f32 %v859, %v860
  %v862 = vsel %vm828, %v641, 0.0
  %v863 = vadd.f32 %v861, %v862
  %v864 = vsel %vm828, %v646, 0.0
  %v865 = vadd.f32 %v863, %v864
  %v866 = vsel %vm828, %v649, 0.0
  %v867 = vadd.f32 %v865, %v866
  %v868 = vsel %vm828, %v654, 0.0
  %v869 = vadd.f32 %v867, %v868
  %v870 = vsel %vm828, %v657, 0.0
  %v871 = vadd.f32 %v869, %v870
  %v872 = vsel %vm828, %v662, 0.0
  %v873 = vadd.f32 %v871, %v872
  %v874 = vsel %vm828, %v665, 0.0
  %v875 = vadd.f32 %v873, %v874
  %v876 = vsel %vm828, %v670, 0.0
  %v877 = vadd.f32 %v875, %v876
  %v878 = vsel %vm828, %v673, 0.0
  %v879 = vadd.f32 %v877, %v878
  %v880 = vsel %vm828, %v678, 0.0
  %v881 = vadd.f32 %v879, %v880
  %v882 = vsel %vm828, %v681, 0.0
  %v883 = vadd.f32 %v881, %v882
  %v884 = vsel %vm828, %v686, 0.0
  %v885 = vadd.f32 %v883, %v884
  %v886 = vsel %vm828, %v689, 0.0
  %v887 = vadd.f32 %v885, %v886
  %v888 = vsel %vm828, %v694, 0.0
  %v889 = vadd.f32 %v887, %v888
  %v890 = vsel %vm828, %v697, 0.0
  %v891 = vadd.f32 %v889, %v890
  %v892 = vsel %vm828, %v702, 0.0
  %v893 = vadd.f32 %v891, %v892
  %v894 = vsel %vm828, %v705, 0.0
  %v895 = vadd.f32 %v893, %v894
  %v896 = vsel %vm828, %v710, 0.0
  %v897 = vadd.f32 %v895, %v896
  %v898 = vsel %vm828, %v713, 0.0
  %v899 = vadd.f32 %v897, %v898
  %v900 = vsel %vm828, %v718, 0.0
  %v901 = vadd.f32 %v899, %v900
  %v902 = vsel %vm828, %v721, 0.0
  %v903 = vadd.f32 %v901, %v902
  %v904 = vsel %vm828, %v726, 0.0
  %v905 = vadd.f32 %v903, %v904
  %v906 = vsel %vm828, %v729, 0.0
  %v907 = vadd.f32 %v905, %v906
  %v908 = vsel %vm828, %v734, 0.0
  %v909 = vadd.f32 %v907, %v908
  %v910 = vsel %vm828, %v737, 0.0
  %v911 = vadd.f32 %v909, %v910
  %v912 = vsel %vm828, %v742, 0.0
  %v913 = vadd.f32 %v911, %v912
  %v914 = vsel %vm828, %v745, 0.0
  %v915 = vadd.f32 %v913, %v914
  %v916 = vsel %vm828, %v750, 0.0
  %v917 = vadd.f32 %v915, %v916
  %v918 = vsel %vm828, %v753, 0.0
  %v919 = vadd.f32 %v917, %v918
  %v920 = vsel %vm828, %v758, 0.0
  %v921 = vadd.f32 %v919, %v920
  %v922 = vsel %vm828, %v761, 0.0
  %v923 = vadd.f32 %v921, %v922
  %v924 = vsel %vm828, %v766, 0.0
  %v925 = vadd.f32 %v923, %v924
  %v926 = vsel %vm828, %v769, 0.0
  %v927 = vadd.f32 %v925, %v926
  %v928 = vsel %vm828, %v774, 0.0
  %v929 = vadd.f32 %v927, %v928
  %v930 = vsel %vm828, %v777, 0.0
  %v931 = vadd.f32 %v929, %v930
  %v932 = vsel %vm828, %v782, 0.0
  %v933 = vadd.f32 %v931, %v932
  %v934 = vsel %vm828, %v785, 0.0
  %v935 = vadd.f32 %v933, %v934
  %v936 = vsel %vm828, %v790, 0.0
  %v937 = vadd.f32 %v935, %v936
  %v938 = vsel %vm828, %v793, 0.0
  %v939 = vadd.f32 %v937, %v938
  %v940 = vsel %vm828, %v798, 0.0
  %v941 = vadd.f32 %v939, %v940
  %v942 = vsel %vm828, %v801, 0.0
  %v943 = vadd.f32 %v941, %v942
  %v944 = vsel %vm828, %v806, 0.0
  %v945 = vadd.f32 %v943, %v944
  %v946 = vsel %vm828, %v809, 0.0
  %v947 = vadd.f32 %v945, %v946
  %v948 = vsel %vm828, %v814, 0.0
  %v949 = vadd.f32 %v947, %v948
  %v950 = vsel %vm828, %v817, 0.0
  %v951 = vadd.f32 %v949, %v950
  %v952 = vsel %vm828, %v822, 0.0
  %v953 = vadd.f32 %v951, %v952
  %v954 = vsel %vm828, %v825, 0.0
  %v955 = vadd.f32 %v953, %v954
  %v956 = vrot.slane %v955, 4
  %v957 = vadd.f32 %v955, %v956
  %v958 = vrot.slane %v957, 2
  %v959 = vadd.f32 %v957, %v958
  %v960 = vrot.slane %v959, 1
  %v961 = vadd.f32 %v959, %v960
  %v962 = vmul.f32 %v961, 0.001953125
  %v963 = vmul.f32 %v574, %v574
  %v964 = vmul.f32 %v577, %v577
  %v965 = vmul.f32 %v582, %v582
  %v966 = vmul.f32 %v585, %v585
  %v967 = vmul.f32 %v590, %v590
  %v968 = vmul.f32 %v593, %v593
  %v969 = vmul.f32 %v598, %v598
  %v970 = vmul.f32 %v601, %v601
  %v971 = vmul.f32 %v606, %v606
  %v972 = vmul.f32 %v609, %v609
  %v973 = vmul.f32 %v614, %v614
  %v974 = vmul.f32 %v617, %v617
  %v975 = vmul.f32 %v622, %v622
  %v976 = vmul.f32 %v625, %v625
  %v977 = vmul.f32 %v630, %v630
  %v978 = vmul.f32 %v633, %v633
  %v979 = vmul.f32 %v638, %v638
  %v980 = vmul.f32 %v641, %v641
  %v981 = vmul.f32 %v646, %v646
  %v982 = vmul.f32 %v649, %v649
  %v983 = vmul.f32 %v654, %v654
  %v984 = vmul.f32 %v657, %v657
  %v985 = vmul.f32 %v662, %v662
  %v986 = vmul.f32 %v665, %v665
  %v987 = vmul.f32 %v670, %v670
  %v988 = vmul.f32 %v673, %v673
  %v989 = vmul.f32 %v678, %v678
  %v990 = vmul.f32 %v681, %v681
  %v991 = vmul.f32 %v686, %v686
  %v992 = vmul.f32 %v689, %v689
  %v993 = vmul.f32 %v694, %v694
  %v994 = vmul.f32 %v697, %v697
  %v995 = vmul.f32 %v702, %v702
  %v996 = vmul.f32 %v705, %v705
  %v997 = vmul.f32 %v710, %v710
  %v998 = vmul.f32 %v713, %v713
  %v999 = vmul.f32 %v718, %v718
  %v1000 = vmul.f32 %v721, %v721
  %v1001 = vmul.f32 %v726, %v726
  %v1002 = vmul.f32 %v729, %v729
  %v1003 = vmul.f32 %v734, %v734
  %v1004 = vmul.f32 %v737, %v737
  %v1005 = vmul.f32 %v742, %v742
  %v1006 = vmul.f32 %v745, %v745
  %v1007 = vmul.f32 %v750, %v750
  %v1008 = vmul.f32 %v753, %v753
  %v1009 = vmul.f32 %v758, %v758
  %v1010 = vmul.f32 %v761, %v761
  %v1011 = vmul.f32 %v766, %v766
  %v1012 = vmul.f32 %v769, %v769
  %v1013 = vmul.f32 %v774, %v774
  %v1014 = vmul.f32 %v777, %v777
  %v1015 = vmul.f32 %v782, %v782
  %v1016 = vmul.f32 %v785, %v785
  %v1017 = vmul.f32 %v790, %v790
  %v1018 = vmul.f32 %v793, %v793
  %v1019 = vmul.f32 %v798, %v798
  %v1020 = vmul.f32 %v801, %v801
  %v1021 = vmul.f32 %v806, %v806
  %v1022 = vmul.f32 %v809, %v809
  %v1023 = vmul.f32 %v814, %v814
  %v1024 = vmul.f32 %v817, %v817
  %v1025 = vmul.f32 %v822, %v822
  %v1026 = vmul.f32 %v825, %v825
  %v1027 = vsel %vm828, %v963, 0.0
  %v1028 = vsel %vm828, %v964, 0.0
  %v1029 = vadd.f32 %v1027, %v1028
  %v1030 = vsel %vm828, %v965, 0.0
  %v1031 = vadd.f32 %v1029, %v1030
  %v1032 = vsel %vm828, %v966, 0.0
  %v1033 = vadd.f32 %v1031, %v1032
  %v1034 = vsel %vm828, %v967, 0.0
  %v1035 = vadd.f32 %v1033, %v1034
  %v1036 = vsel %vm828, %v968, 0.0
  %v1037 = vadd.f32 %v1035, %v1036
  %v1038 = vsel %vm828, %v969, 0.0
  %v1039 = vadd.f32 %v1037, %v1038
  %v1040 = vsel %vm828, %v970, 0.0
  %v1041 = vadd.f32 %v1039, %v1040
  %v1042 = vsel %vm828, %v971, 0.0
  %v1043 = vadd.f32 %v1041, %v1042
  %v1044 = vsel %vm828, %v972, 0.0
  %v1045 = vadd.f32 %v1043, %v1044
  %v1046 = vsel %vm828, %v973, 0.0
  %v1047 = vadd.f32 %v1045, %v1046
  %v1048 = vsel %vm828, %v974, 0.0
  %v1049 = vadd.f32 %v1047, %v1048
  %v1050 = vsel %vm828, %v975, 0.0
  %v1051 = vadd.f32 %v1049, %v1050
  %v1052 = vsel %vm828, %v976, 0.0
  %v1053 = vadd.f32 %v1051, %v1052
  %v1054 = vsel %vm828, %v977, 0.0
  %v1055 = vadd.f32 %v1053, %v1054
  %v1056 = vsel %vm828, %v978, 0.0
  %v1057 = vadd.f32 %v1055, %v1056
  %v1058 = vsel %vm828, %v979, 0.0
  %v1059 = vadd.f32 %v1057, %v1058
  %v1060 = vsel %vm828, %v980, 0.0
  %v1061 = vadd.f32 %v1059, %v1060
  %v1062 = vsel %vm828, %v981, 0.0
  %v1063 = vadd.f32 %v1061, %v1062
  %v1064 = vsel %vm828, %v982, 0.0
  %v1065 = vadd.f32 %v1063, %v1064
  %v1066 = vsel %vm828, %v983, 0.0
  %v1067 = vadd.f32 %v1065, %v1066
  %v1068 = vsel %vm828, %v984, 0.0
  %v1069 = vadd.f32 %v1067, %v1068
  %v1070 = vsel %vm828, %v985, 0.0
  %v1071 = vadd.f32 %v1069, %v1070
  %v1072 = vsel %vm828, %v986, 0.0
  %v1073 = vadd.f32 %v1071, %v1072
  %v1074 = vsel %vm828, %v987, 0.0
  %v1075 = vadd.f32 %v1073, %v1074
  %v1076 = vsel %vm828, %v988, 0.0
  %v1077 = vadd.f32 %v1075, %v1076
  %v1078 = vsel %vm828, %v989, 0.0
  %v1079 = vadd.f32 %v1077, %v1078
  %v1080 = vsel %vm828, %v990, 0.0
  %v1081 = vadd.f32 %v1079, %v1080
  %v1082 = vsel %vm828, %v991, 0.0
  %v1083 = vadd.f32 %v1081, %v1082
  %v1084 = vsel %vm828, %v992, 0.0
  %v1085 = vadd.f32 %v1083, %v1084
  %v1086 = vsel %vm828, %v993, 0.0
  %v1087 = vadd.f32 %v1085, %v1086
  %v1088 = vsel %vm828, %v994, 0.0
  %v1089 = vadd.f32 %v1087, %v1088
  %v1090 = vsel %vm828, %v995, 0.0
  %v1091 = vadd.f32 %v1089, %v1090
  %v1092 = vsel %vm828, %v996, 0.0
  %v1093 = vadd.f32 %v1091, %v1092
  %v1094 = vsel %vm828, %v997, 0.0
  %v1095 = vadd.f32 %v1093, %v1094
  %v1096 = vsel %vm828, %v998, 0.0
  %v1097 = vadd.f32 %v1095, %v1096
  %v1098 = vsel %vm828, %v999, 0.0
  %v1099 = vadd.f32 %v1097, %v1098
  %v1100 = vsel %vm828, %v1000, 0.0
  %v1101 = vadd.f32 %v1099, %v1100
  %v1102 = vsel %vm828, %v1001, 0.0
  %v1103 = vadd.f32 %v1101, %v1102
  %v1104 = vsel %vm828, %v1002, 0.0
  %v1105 = vadd.f32 %v1103, %v1104
  %v1106 = vsel %vm828, %v1003, 0.0
  %v1107 = vadd.f32 %v1105, %v1106
  %v1108 = vsel %vm828, %v1004, 0.0
  %v1109 = vadd.f32 %v1107, %v1108
  %v1110 = vsel %vm828, %v1005, 0.0
  %v1111 = vadd.f32 %v1109, %v1110
  %v1112 = vsel %vm828, %v1006, 0.0
  %v1113 = vadd.f32 %v1111, %v1112
  %v1114 = vsel %vm828, %v1007, 0.0
  %v1115 = vadd.f32 %v1113, %v1114
  %v1116 = vsel %vm828, %v1008, 0.0
  %v1117 = vadd.f32 %v1115, %v1116
  %v1118 = vsel %vm828, %v1009, 0.0
  %v1119 = vadd.f32 %v1117, %v1118
  %v1120 = vsel %vm828, %v1010, 0.0
  %v1121 = vadd.f32 %v1119, %v1120
  %v1122 = vsel %vm828, %v1011, 0.0
  %v1123 = vadd.f32 %v1121, %v1122
  %v1124 = vsel %vm828, %v1012, 0.0
  %v1125 = vadd.f32 %v1123, %v1124
  %v1126 = vsel %vm828, %v1013, 0.0
  %v1127 = vadd.f32 %v1125, %v1126
  %v1128 = vsel %vm828, %v1014, 0.0
  %v1129 = vadd.f32 %v1127, %v1128
  %v1130 = vsel %vm828, %v1015, 0.0
  %v1131 = vadd.f32 %v1129, %v1130
  %v1132 = vsel %vm828, %v1016, 0.0
  %v1133 = vadd.f32 %v1131, %v1132
  %v1134 = vsel %vm828, %v1017, 0.0
  %v1135 = vadd.f32 %v1133, %v1134
  %v1136 = vsel %vm828, %v1018, 0.0
  %v1137 = vadd.f32 %v1135, %v1136
  %v1138 = vsel %vm828, %v1019, 0.0
  %v1139 = vadd.f32 %v1137, %v1138
  %v1140 = vsel %vm828, %v1020, 0.0
  %v1141 = vadd.f32 %v1139, %v1140
  %v1142 = vsel %vm828, %v1021, 0.0
  %v1143 = vadd.f32 %v1141, %v1142
  %v1144 = vsel %vm828, %v1022, 0.0
  %v1145 = vadd.f32 %v1143, %v1144
  %v1146 = vsel %vm828, %v1023, 0.0
  %v1147 = vadd.f32 %v1145, %v1146
  %v1148 = vsel %vm828, %v1024, 0.0
  %v1149 = vadd.f32 %v1147, %v1148
  %v1150 = vsel %vm828, %v1025, 0.0
  %v1151 = vadd.f32 %v1149, %v1150
  %v1152 = vsel %vm828, %v1026, 0.0
  %v1153 = vadd.f32 %v1151, %v1152
  %v1154 = vrot.slane %v1153, 4
  %v1155 = vadd.f32 %v1153, %v1154
  %v1156 = vrot.slane %v1155, 2
  %v1157 = vadd.f32 %v1155, %v1156
  %v1158 = vrot.slane %v1157, 1
  %v1159 = vadd.f32 %v1157, %v1158
  %v1160 = vmul.f32 %v1159, 0.001953125
  %v1161 = vmul.f32 %v962, %v962
  %v1162 = vsub.f32 %v1160, %v1161
  %v1163 = vmax.f32 %v1162, 0.0
  %v1164 = vld [vmem:[%s2] sm:$0x1]
  %v1165 = vadd.f32 %v1163, 1e-05
  %v1166 = vrsqrt.pop %v1165
  %v1167 = vmul.f32 %v1164, %v1166
  %v1168 = vld [vmem:[%s3] sm:$0x1]
  %v1169 = vmul.f32 %v962, %v1167
  %v1170 = vsub.f32 %v1168, %v1169
  %v1172 = vlaneseq
  %v1173 = vshrl.u32 %v1172, 7
  %v1174 = vsub.s32 0, %v1173
  %v1175 = vrot.slane %v1167, %v1174
  %v1177 = vmul.f32 %v574, %v1175
  %v1178 = vmul.f32 %v577, %v1175
  %v1179 = vmul.f32 %v582, %v1175
  %v1180 = vmul.f32 %v585, %v1175
  %v1181 = vmul.f32 %v590, %v1175
  %v1182 = vmul.f32 %v593, %v1175
  %v1183 = vmul.f32 %v598, %v1175
  %v1184 = vmul.f32 %v601, %v1175
  %v1185 = vmul.f32 %v606, %v1175
  %v1186 = vmul.f32 %v609, %v1175
  %v1187 = vmul.f32 %v614, %v1175
  %v1188 = vmul.f32 %v617, %v1175
  %v1189 = vmul.f32 %v622, %v1175
  %v1190 = vmul.f32 %v625, %v1175
  %v1191 = vmul.f32 %v630, %v1175
  %v1192 = vmul.f32 %v633, %v1175
  %v1193 = vmul.f32 %v638, %v1175
  %v1194 = vmul.f32 %v641, %v1175
  %v1195 = vmul.f32 %v646, %v1175
  %v1196 = vmul.f32 %v649, %v1175
  %v1197 = vmul.f32 %v654, %v1175
  %v1198 = vmul.f32 %v657, %v1175
  %v1199 = vmul.f32 %v662, %v1175
  %v1200 = vmul.f32 %v665, %v1175
  %v1201 = vmul.f32 %v670, %v1175
  %v1202 = vmul.f32 %v673, %v1175
  %v1203 = vmul.f32 %v678, %v1175
  %v1204 = vmul.f32 %v681, %v1175
  %v1205 = vmul.f32 %v686, %v1175
  %v1206 = vmul.f32 %v689, %v1175
  %v1207 = vmul.f32 %v694, %v1175
  %v1208 = vmul.f32 %v697, %v1175
  %v1209 = vmul.f32 %v702, %v1175
  %v1210 = vmul.f32 %v705, %v1175
  %v1211 = vmul.f32 %v710, %v1175
  %v1212 = vmul.f32 %v713, %v1175
  %v1213 = vmul.f32 %v718, %v1175
  %v1214 = vmul.f32 %v721, %v1175
  %v1215 = vmul.f32 %v726, %v1175
  %v1216 = vmul.f32 %v729, %v1175
  %v1217 = vmul.f32 %v734, %v1175
  %v1218 = vmul.f32 %v737, %v1175
  %v1219 = vmul.f32 %v742, %v1175
  %v1220 = vmul.f32 %v745, %v1175
  %v1221 = vmul.f32 %v750, %v1175
  %v1222 = vmul.f32 %v753, %v1175
  %v1223 = vmul.f32 %v758, %v1175
  %v1224 = vmul.f32 %v761, %v1175
  %v1225 = vmul.f32 %v766, %v1175
  %v1226 = vmul.f32 %v769, %v1175
  %v1227 = vmul.f32 %v774, %v1175
  %v1228 = vmul.f32 %v777, %v1175
  %v1229 = vmul.f32 %v782, %v1175
  %v1230 = vmul.f32 %v785, %v1175
  %v1231 = vmul.f32 %v790, %v1175
  %v1232 = vmul.f32 %v793, %v1175
  %v1233 = vmul.f32 %v798, %v1175
  %v1234 = vmul.f32 %v801, %v1175
  %v1235 = vmul.f32 %v806, %v1175
  %v1236 = vmul.f32 %v809, %v1175
  %v1237 = vmul.f32 %v814, %v1175
  %v1238 = vmul.f32 %v817, %v1175
  %v1239 = vmul.f32 %v822, %v1175
  %v1240 = vmul.f32 %v825, %v1175
  %v1242 = vlaneseq
  %v1243 = vshrl.u32 %v1242, 7
  %v1244 = vsub.s32 0, %v1243
  %v1245 = vrot.slane %v1170, %v1244
  %v1247 = vadd.f32 %v1177, %v1245
  %v1248 = vadd.f32 %v1178, %v1245
  %v1249 = vadd.f32 %v1179, %v1245
  %v1250 = vadd.f32 %v1180, %v1245
  %v1251 = vadd.f32 %v1181, %v1245
  %v1252 = vadd.f32 %v1182, %v1245
  %v1253 = vadd.f32 %v1183, %v1245
  %v1254 = vadd.f32 %v1184, %v1245
  %v1255 = vadd.f32 %v1185, %v1245
  %v1256 = vadd.f32 %v1186, %v1245
  %v1257 = vadd.f32 %v1187, %v1245
  %v1258 = vadd.f32 %v1188, %v1245
  %v1259 = vadd.f32 %v1189, %v1245
  %v1260 = vadd.f32 %v1190, %v1245
  %v1261 = vadd.f32 %v1191, %v1245
  %v1262 = vadd.f32 %v1192, %v1245
  %v1263 = vadd.f32 %v1193, %v1245
  %v1264 = vadd.f32 %v1194, %v1245
  %v1265 = vadd.f32 %v1195, %v1245
  %v1266 = vadd.f32 %v1196, %v1245
  %v1267 = vadd.f32 %v1197, %v1245
  %v1268 = vadd.f32 %v1198, %v1245
  %v1269 = vadd.f32 %v1199, %v1245
  %v1270 = vadd.f32 %v1200, %v1245
  %v1271 = vadd.f32 %v1201, %v1245
  %v1272 = vadd.f32 %v1202, %v1245
  %v1273 = vadd.f32 %v1203, %v1245
  %v1274 = vadd.f32 %v1204, %v1245
  %v1275 = vadd.f32 %v1205, %v1245
  %v1276 = vadd.f32 %v1206, %v1245
  %v1277 = vadd.f32 %v1207, %v1245
  %v1278 = vadd.f32 %v1208, %v1245
  %v1279 = vadd.f32 %v1209, %v1245
  %v1280 = vadd.f32 %v1210, %v1245
  %v1281 = vadd.f32 %v1211, %v1245
  %v1282 = vadd.f32 %v1212, %v1245
  %v1283 = vadd.f32 %v1213, %v1245
  %v1284 = vadd.f32 %v1214, %v1245
  %v1285 = vadd.f32 %v1215, %v1245
  %v1286 = vadd.f32 %v1216, %v1245
  %v1287 = vadd.f32 %v1217, %v1245
  %v1288 = vadd.f32 %v1218, %v1245
  %v1289 = vadd.f32 %v1219, %v1245
  %v1290 = vadd.f32 %v1220, %v1245
  %v1291 = vadd.f32 %v1221, %v1245
  %v1292 = vadd.f32 %v1222, %v1245
  %v1293 = vadd.f32 %v1223, %v1245
  %v1294 = vadd.f32 %v1224, %v1245
  %v1295 = vadd.f32 %v1225, %v1245
  %v1296 = vadd.f32 %v1226, %v1245
  %v1297 = vadd.f32 %v1227, %v1245
  %v1298 = vadd.f32 %v1228, %v1245
  %v1299 = vadd.f32 %v1229, %v1245
  %v1300 = vadd.f32 %v1230, %v1245
  %v1301 = vadd.f32 %v1231, %v1245
  %v1302 = vadd.f32 %v1232, %v1245
  %v1303 = vadd.f32 %v1233, %v1245
  %v1304 = vadd.f32 %v1234, %v1245
  %v1305 = vadd.f32 %v1235, %v1245
  %v1306 = vadd.f32 %v1236, %v1245
  %v1307 = vadd.f32 %v1237, %v1245
  %v1308 = vadd.f32 %v1238, %v1245
  %v1309 = vadd.f32 %v1239, %v1245
  %v1310 = vadd.f32 %v1240, %v1245
  %v1311 = vmax.f32 %v1247, 0.0
  %v1312 = vmax.f32 %v1248, 0.0
  %v1313 = vmax.f32 %v1249, 0.0
  %v1314 = vmax.f32 %v1250, 0.0
  %v1315 = vmax.f32 %v1251, 0.0
  %v1316 = vmax.f32 %v1252, 0.0
  %v1317 = vmax.f32 %v1253, 0.0
  %v1318 = vmax.f32 %v1254, 0.0
  %v1319 = vmax.f32 %v1255, 0.0
  %v1320 = vmax.f32 %v1256, 0.0
  %v1321 = vmax.f32 %v1257, 0.0
  %v1322 = vmax.f32 %v1258, 0.0
  %v1323 = vmax.f32 %v1259, 0.0
  %v1324 = vmax.f32 %v1260, 0.0
  %v1325 = vmax.f32 %v1261, 0.0
  %v1326 = vmax.f32 %v1262, 0.0
  %v1327 = vmax.f32 %v1263, 0.0
  %v1328 = vmax.f32 %v1264, 0.0
  %v1329 = vmax.f32 %v1265, 0.0
  %v1330 = vmax.f32 %v1266, 0.0
  %v1331 = vmax.f32 %v1267, 0.0
  %v1332 = vmax.f32 %v1268, 0.0
  %v1333 = vmax.f32 %v1269, 0.0
  %v1334 = vmax.f32 %v1270, 0.0
  %v1335 = vmax.f32 %v1271, 0.0
  %v1336 = vmax.f32 %v1272, 0.0
  %v1337 = vmax.f32 %v1273, 0.0
  %v1338 = vmax.f32 %v1274, 0.0
  %v1339 = vmax.f32 %v1275, 0.0
  %v1340 = vmax.f32 %v1276, 0.0
  %v1341 = vmax.f32 %v1277, 0.0
  %v1342 = vmax.f32 %v1278, 0.0
  %v1343 = vmax.f32 %v1279, 0.0
  %v1344 = vmax.f32 %v1280, 0.0
  %v1345 = vmax.f32 %v1281, 0.0
  %v1346 = vmax.f32 %v1282, 0.0
  %v1347 = vmax.f32 %v1283, 0.0
  %v1348 = vmax.f32 %v1284, 0.0
  %v1349 = vmax.f32 %v1285, 0.0
  %v1350 = vmax.f32 %v1286, 0.0
  %v1351 = vmax.f32 %v1287, 0.0
  %v1352 = vmax.f32 %v1288, 0.0
  %v1353 = vmax.f32 %v1289, 0.0
  %v1354 = vmax.f32 %v1290, 0.0
  %v1355 = vmax.f32 %v1291, 0.0
  %v1356 = vmax.f32 %v1292, 0.0
  %v1357 = vmax.f32 %v1293, 0.0
  %v1358 = vmax.f32 %v1294, 0.0
  %v1359 = vmax.f32 %v1295, 0.0
  %v1360 = vmax.f32 %v1296, 0.0
  %v1361 = vmax.f32 %v1297, 0.0
  %v1362 = vmax.f32 %v1298, 0.0
  %v1363 = vmax.f32 %v1299, 0.0
  %v1364 = vmax.f32 %v1300, 0.0
  %v1365 = vmax.f32 %v1301, 0.0
  %v1366 = vmax.f32 %v1302, 0.0
  %v1367 = vmax.f32 %v1303, 0.0
  %v1368 = vmax.f32 %v1304, 0.0
  %v1369 = vmax.f32 %v1305, 0.0
  %v1370 = vmax.f32 %v1306, 0.0
  %v1371 = vmax.f32 %v1307, 0.0
  %v1372 = vmax.f32 %v1308, 0.0
  %v1373 = vmax.f32 %v1309, 0.0
  %v1374 = vmax.f32 %v1310, 0.0
  %1375 = vst.msk [vmem:[%s4] sm:$0xff] %vm828, %v1311
  %1376 = vst.msk [vmem:[%s4 + $0x8] sm:$0xff] %vm828, %v1312
  %1377 = vst.msk [vmem:[%s4 + $0x10] sm:$0xff] %vm828, %v1313
  %1378 = vst.msk [vmem:[%s4 + $0x18] sm:$0xff] %vm828, %v1314
  %1379 = vst.msk [vmem:[%s4 + $0x20] sm:$0xff] %vm828, %v1315
  %1380 = vst.msk [vmem:[%s4 + $0x28] sm:$0xff] %vm828, %v1316
  %1381 = vst.msk [vmem:[%s4 + $0x30] sm:$0xff] %vm828, %v1317
  %1382 = vst.msk [vmem:[%s4 + $0x38] sm:$0xff] %vm828, %v1318
  %1383 = vst.msk [vmem:[%s4 + $0x40] sm:$0xff] %vm828, %v1319
  %1384 = vst.msk [vmem:[%s4 + $0x48] sm:$0xff] %vm828, %v1320
  %1385 = vst.msk [vmem:[%s4 + $0x50] sm:$0xff] %vm828, %v1321
  %1386 = vst.msk [vmem:[%s4 + $0x58] sm:$0xff] %vm828, %v1322
  %1387 = vst.msk [vmem:[%s4 + $0x60] sm:$0xff] %vm828, %v1323
  %1388 = vst.msk [vmem:[%s4 + $0x68] sm:$0xff] %vm828, %v1324
  %1389 = vst.msk [vmem:[%s4 + $0x70] sm:$0xff] %vm828, %v1325
  %1390 = vst.msk [vmem:[%s4 + $0x78] sm:$0xff] %vm828, %v1326
  %1391 = vst.msk [vmem:[%s4 + $0x80] sm:$0xff] %vm828, %v1327
  %1392 = vst.msk [vmem:[%s4 + $0x88] sm:$0xff] %vm828, %v1328
  %1393 = vst.msk [vmem:[%s4 + $0x90] sm:$0xff] %vm828, %v1329
  %1394 = vst.msk [vmem:[%s4 + $0x98] sm:$0xff] %vm828, %v1330
  %1395 = vst.msk [vmem:[%s4 + $0xa0] sm:$0xff] %vm828, %v1331
  %1396 = vst.msk [vmem:[%s4 + $0xa8] sm:$0xff] %vm828, %v1332
  %1397 = vst.msk [vmem:[%s4 + $0xb0] sm:$0xff] %vm828, %v1333
  %1398 = vst.msk [vmem:[%s4 + $0xb8] sm:$0xff] %vm828, %v1334
  %1399 = vst.msk [vmem:[%s4 + $0xc0] sm:$0xff] %vm828, %v1335
  %1400 = vst.msk [vmem:[%s4 + $0xc8] sm:$0xff] %vm828, %v1336
  %1401 = vst.msk [vmem:[%s4 + $0xd0] sm:$0xff] %vm828, %v1337
  %1402 = vst.msk [vmem:[%s4 + $0xd8] sm:$0xff] %vm828, %v1338
  %1403 = vst.msk [vmem:[%s4 + $0xe0] sm:$0xff] %vm828, %v1339
  %1404 = vst.msk [vmem:[%s4 + $0xe8] sm:$0xff] %vm828, %v1340
  %1405 = vst.msk [vmem:[%s4 + $0xf0] sm:$0xff] %vm828, %v1341
  %1406 = vst.msk [vmem:[%s4 + $0xf8] sm:$0xff] %vm828, %v1342
  %1407 = vst.msk [vmem:[%s4 + $0x100] sm:$0xff] %vm828, %v1343
  %1408 = vst.msk [vmem:[%s4 + $0x108] sm:$0xff] %vm828, %v1344
  %1409 = vst.msk [vmem:[%s4 + $0x110] sm:$0xff] %vm828, %v1345
  %1410 = vst.msk [vmem:[%s4 + $0x118] sm:$0xff] %vm828, %v1346
  %1411 = vst.msk [vmem:[%s4 + $0x120] sm:$0xff] %vm828, %v1347
  %1412 = vst.msk [vmem:[%s4 + $0x128] sm:$0xff] %vm828, %v1348
  %1413 = vst.msk [vmem:[%s4 + $0x130] sm:$0xff] %vm828, %v1349
  %1414 = vst.msk [vmem:[%s4 + $0x138] sm:$0xff] %vm828, %v1350
  %1415 = vst.msk [vmem:[%s4 + $0x140] sm:$0xff] %vm828, %v1351
  %1416 = vst.msk [vmem:[%s4 + $0x148] sm:$0xff] %vm828, %v1352
  %1417 = vst.msk [vmem:[%s4 + $0x150] sm:$0xff] %vm828, %v1353
  %1418 = vst.msk [vmem:[%s4 + $0x158] sm:$0xff] %vm828, %v1354
  %1419 = vst.msk [vmem:[%s4 + $0x160] sm:$0xff] %vm828, %v1355
  %1420 = vst.msk [vmem:[%s4 + $0x168] sm:$0xff] %vm828, %v1356
  %1421 = vst.msk [vmem:[%s4 + $0x170] sm:$0xff] %vm828, %v1357
  %1422 = vst.msk [vmem:[%s4 + $0x178] sm:$0xff] %vm828, %v1358
  %1423 = vst.msk [vmem:[%s4 + $0x180] sm:$0xff] %vm828, %v1359
  %1424 = vst.msk [vmem:[%s4 + $0x188] sm:$0xff] %vm828, %v1360
  %1425 = vst.msk [vmem:[%s4 + $0x190] sm:$0xff] %vm828, %v1361
  %1426 = vst.msk [vmem:[%s4 + $0x198] sm:$0xff] %vm828, %v1362
  %1427 = vst.msk [vmem:[%s4 + $0x1a0] sm:$0xff] %vm828, %v1363
  %1428 = vst.msk [vmem:[%s4 + $0x1a8] sm:$0xff] %vm828, %v1364
  %1429 = vst.msk [vmem:[%s4 + $0x1b0] sm:$0xff] %vm828, %v1365
  %1430 = vst.msk [vmem:[%s4 + $0x1b8] sm:$0xff] %vm828, %v1366
  %1431 = vst.msk [vmem:[%s4 + $0x1c0] sm:$0xff] %vm828, %v1367
  %1432 = vst.msk [vmem:[%s4 + $0x1c8] sm:$0xff] %vm828, %v1368
  %1433 = vst.msk [vmem:[%s4 + $0x1d0] sm:$0xff] %vm828, %v1369
  %1434 = vst.msk [vmem:[%s4 + $0x1d8] sm:$0xff] %vm828, %v1370
  %1435 = vst.msk [vmem:[%s4 + $0x1e0] sm:$0xff] %vm828, %v1371
  %1436 = vst.msk [vmem:[%s4 + $0x1e8] sm:$0xff] %vm828, %v1372
  %1437 = vst.msk [vmem:[%s4 + $0x1f0] sm:$0xff] %vm828, %v1373
  %1438 = vst.msk [vmem:[%s4 + $0x1f8] sm:$0xff] %vm828, %v1374
  // Predicated region
  $region18: #{unet_forward.51} parent=0 // pred_check
    _
  $region19: #{unet_forward.51} parent=0 // pred_check_branch
    %1440 = sbr.rel (0) target = $region21
  $region20: #{unet_forward.51} parent=0 // pred_region
    _
  $region21: #{unet_forward.51} parent=0 // pred_fallthru
    _
  // Predicated region
  $region22: #{unet_forward.51} parent=0 // pred_check
    _
  $region23: #{unet_forward.51} parent=0 // pred_check_branch
    %1442 = sbr.rel (0) target = $region25
  $region24: #{unet_forward.51} parent=0 // pred_region
    _
  $region25: #{unet_forward.51} parent=0 // pred_fallthru
    _

// kernel: unet_forward.53
$region0: #{unet_forward.53}
  #allocation0 [shape = 'u32[]', space=smem, size = 0x4, offset = 0x4, fixed_abs, tag = 'smem constant byte address 0x4 - core index']
  #allocation1 [shape = 'u32[144,128]{1,0:T(1,128)}', space=vmem, size = 0x12000, scoped, tag = 'internal scratch']
  #allocation2 [shape = 'f32[1,1]{1,0:T(1,128)S(1)}', space=vmem, size = 0x200, scoped, tag = 'scoped memory for unet_forward.53']
  %s0 = inlined_call_operand.vmem [shape: bf16[512,8], index: 0, kind: input, shape index: {}]
  %s1 = inlined_call_operand.vmem [shape: bf16[8,1], index: 1, kind: input, shape index: {}]
  %s2 = inlined_call_operand.<no memory space> [shape: f32[1,1], index: 2, kind: input, shape index: {}]
  %s3 = inlined_call_operand.vmem [shape: f32[512,1], index: 3, kind: output, shape index: {}]
  %s4 = sld [smem:[#allocation0]]
  $region22: #{unet_forward.53} parent=0
    _
  %s6 = ssub.s32 1, %s4
  %s7 = scalar_select 0, %s6, %s4
  %v8 = vstv %s2
  %9 = vst [vmem:[#allocation2] sm:$0x1] %v8
  // Predicated region
  $region2: #{unet_forward.53} parent=0 // pred_check
    _
  $region3: #{unet_forward.53} parent=0 // pred_check_branch
    %11 = sbr.rel (0) target = $region5
  $region4: #{unet_forward.53} parent=0 // pred_region
    _
  $region5: #{unet_forward.53} parent=0 // pred_fallthru
    _
  // Predicated region
  $region6: #{unet_forward.53} parent=0 // pred_check
    _
  $region7: #{unet_forward.53} parent=0 // pred_check_branch
    %13 = sbr.rel (0) target = $region9
  $region8: #{unet_forward.53} parent=0 // pred_region
    _
  $region9: #{unet_forward.53} parent=0 // pred_fallthru
    _
  // Predicated region
  $region10: #{unet_forward.53} parent=0 // pred_check
    _
  $region11: #{unet_forward.53} parent=0 // pred_check_branch
    %15 = sbr.rel (0) target = $region13
  $region12: #{unet_forward.53} parent=0 // pred_region
    _
  $region13: #{unet_forward.53} parent=0 // pred_fallthru
    _
  %v17 = vld [vmem:[%s0] sm:$0xf]
  %v18 = vld [vmem:[%s0 + $0x4] sm:$0xf]
  %v19 = vld [vmem:[%s0 + $0x8] sm:$0xf]
  %v20 = vld [vmem:[%s0 + $0xc] sm:$0xf]
  %v21 = vld [vmem:[%s0 + $0x10] sm:$0xf]
  %v22 = vld [vmem:[%s0 + $0x14] sm:$0xf]
  %v23 = vld [vmem:[%s0 + $0x18] sm:$0xf]
  %v24 = vld [vmem:[%s0 + $0x1c] sm:$0xf]
  %v25 = vld [vmem:[%s0 + $0x20] sm:$0xf]
  %v26 = vld [vmem:[%s0 + $0x24] sm:$0xf]
  %v27 = vld [vmem:[%s0 + $0x28] sm:$0xf]
  %v28 = vld [vmem:[%s0 + $0x2c] sm:$0xf]
  %v29 = vld [vmem:[%s0 + $0x30] sm:$0xf]
  %v30 = vld [vmem:[%s0 + $0x34] sm:$0xf]
  %v31 = vld [vmem:[%s0 + $0x38] sm:$0xf]
  %v32 = vld [vmem:[%s0 + $0x3c] sm:$0xf]
  %v33 = vld [vmem:[%s0 + $0x40] sm:$0xf]
  %v34 = vld [vmem:[%s0 + $0x44] sm:$0xf]
  %v35 = vld [vmem:[%s0 + $0x48] sm:$0xf]
  %v36 = vld [vmem:[%s0 + $0x4c] sm:$0xf]
  %v37 = vld [vmem:[%s0 + $0x50] sm:$0xf]
  %v38 = vld [vmem:[%s0 + $0x54] sm:$0xf]
  %v39 = vld [vmem:[%s0 + $0x58] sm:$0xf]
  %v40 = vld [vmem:[%s0 + $0x5c] sm:$0xf]
  %v41 = vld [vmem:[%s0 + $0x60] sm:$0xf]
  %v42 = vld [vmem:[%s0 + $0x64] sm:$0xf]
  %v43 = vld [vmem:[%s0 + $0x68] sm:$0xf]
  %v44 = vld [vmem:[%s0 + $0x6c] sm:$0xf]
  %v45 = vld [vmem:[%s0 + $0x70] sm:$0xf]
  %v46 = vld [vmem:[%s0 + $0x74] sm:$0xf]
  %v47 = vld [vmem:[%s0 + $0x78] sm:$0xf]
  %v48 = vld [vmem:[%s0 + $0x7c] sm:$0xf]
  %v49 = vld [vmem:[%s0 + $0x80] sm:$0xf]
  %v50 = vld [vmem:[%s0 + $0x84] sm:$0xf]
  %v51 = vld [vmem:[%s0 + $0x88] sm:$0xf]
  %v52 = vld [vmem:[%s0 + $0x8c] sm:$0xf]
  %v53 = vld [vmem:[%s0 + $0x90] sm:$0xf]
  %v54 = vld [vmem:[%s0 + $0x94] sm:$0xf]
  %v55 = vld [vmem:[%s0 + $0x98] sm:$0xf]
  %v56 = vld [vmem:[%s0 + $0x9c] sm:$0xf]
  %v57 = vld [vmem:[%s0 + $0xa0] sm:$0xf]
  %v58 = vld [vmem:[%s0 + $0xa4] sm:$0xf]
  %v59 = vld [vmem:[%s0 + $0xa8] sm:$0xf]
  %v60 = vld [vmem:[%s0 + $0xac] sm:$0xf]
  %v61 = vld [vmem:[%s0 + $0xb0] sm:$0xf]
  %v62 = vld [vmem:[%s0 + $0xb4] sm:$0xf]
  %v63 = vld [vmem:[%s0 + $0xb8] sm:$0xf]
  %v64 = vld [vmem:[%s0 + $0xbc] sm:$0xf]
  %v65 = vld [vmem:[%s0 + $0xc0] sm:$0xf]
  %v66 = vld [vmem:[%s0 + $0xc4] sm:$0xf]
  %v67 = vld [vmem:[%s0 + $0xc8] sm:$0xf]
  %v68 = vld [vmem:[%s0 + $0xcc] sm:$0xf]
  %v69 = vld [vmem:[%s0 + $0xd0] sm:$0xf]
  %v70 = vld [vmem:[%s0 + $0xd4] sm:$0xf]
  %v71 = vld [vmem:[%s0 + $0xd8] sm:$0xf]
  %v72 = vld [vmem:[%s0 + $0xdc] sm:$0xf]
  %v73 = vld [vmem:[%s0 + $0xe0] sm:$0xf]
  %v74 = vld [vmem:[%s0 + $0xe4] sm:$0xf]
  %v75 = vld [vmem:[%s0 + $0xe8] sm:$0xf]
  %v76 = vld [vmem:[%s0 + $0xec] sm:$0xf]
  %v77 = vld [vmem:[%s0 + $0xf0] sm:$0xf]
  %v78 = vld [vmem:[%s0 + $0xf4] sm:$0xf]
  %v79 = vld [vmem:[%s0 + $0xf8] sm:$0xf]
  %v80 = vld [vmem:[%s0 + $0xfc] sm:$0xf]
  %v81 = vld [vmem:[%s1] sm:$0xf]
  %v82 = vld [vmem:[#allocation2] sm:$0x1]
  %v84 = vlaneseq
  %v85 = vshrl.u32 %v84, 7
  %v86 = vsub.s32 0, %v85
  %v87 = vrot.slane %v82, %v86
  %v153 = vunpack.c.l.b16 %v17
  %v154 = vunpack.c.l.b16 %v18
  %v155 = vunpack.c.l.b16 %v19
  %v156 = vunpack.c.l.b16 %v20
  %v157 = vunpack.c.l.b16 %v21
  %v158 = vunpack.c.l.b16 %v22
  %v159 = vunpack.c.l.b16 %v23
  %v160 = vunpack.c.l.b16 %v24
  %v161 = vunpack.c.l.b16 %v25
  %v162 = vunpack.c.l.b16 %v26
  %v163 = vunpack.c.l.b16 %v27
  %v164 = vunpack.c.l.b16 %v28
  %v165 = vunpack.c.l.b16 %v29
  %v166 = vunpack.c.l.b16 %v30
  %v167 = vunpack.c.l.b16 %v31
  %v168 = vunpack.c.l.b16 %v32
  %v169 = vunpack.c.l.b16 %v33
  %v170 = vunpack.c.l.b16 %v34
  %v171 = vunpack.c.l.b16 %v35
  %v172 = vunpack.c.l.b16 %v36
  %v173 = vunpack.c.l.b16 %v37
  %v174 = vunpack.c.l.b16 %v38
  %v175 = vunpack.c.l.b16 %v39
  %v176 = vunpack.c.l.b16 %v40
  %v177 = vunpack.c.l.b16 %v41
  %v178 = vunpack.c.l.b16 %v42
  %v179 = vunpack.c.l.b16 %v43
  %v180 = vunpack.c.l.b16 %v44
  %v181 = vunpack.c.l.b16 %v45
  %v182 = vunpack.c.l.b16 %v46
  %v183 = vunpack.c.l.b16 %v47
  %v184 = vunpack.c.l.b16 %v48
  %v185 = vunpack.c.l.b16 %v49
  %v186 = vunpack.c.l.b16 %v50
  %v187 = vunpack.c.l.b16 %v51
  %v188 = vunpack.c.l.b16 %v52
  %v189 = vunpack.c.l.b16 %v53
  %v190 = vunpack.c.l.b16 %v54
  %v191 = vunpack.c.l.b16 %v55
  %v192 = vunpack.c.l.b16 %v56
  %v193 = vunpack.c.l.b16 %v57
  %v194 = vunpack.c.l.b16 %v58
  %v195 = vunpack.c.l.b16 %v59
  %v196 = vunpack.c.l.b16 %v60
  %v197 = vunpack.c.l.b16 %v61
  %v198 = vunpack.c.l.b16 %v62
  %v199 = vunpack.c.l.b16 %v63
  %v200 = vunpack.c.l.b16 %v64
  %v201 = vunpack.c.l.b16 %v65
  %v202 = vunpack.c.l.b16 %v66
  %v203 = vunpack.c.l.b16 %v67
  %v204 = vunpack.c.l.b16 %v68
  %v205 = vunpack.c.l.b16 %v69
  %v206 = vunpack.c.l.b16 %v70
  %v207 = vunpack.c.l.b16 %v71
  %v208 = vunpack.c.l.b16 %v72
  %v209 = vunpack.c.l.b16 %v73
  %v210 = vunpack.c.l.b16 %v74
  %v211 = vunpack.c.l.b16 %v75
  %v212 = vunpack.c.l.b16 %v76
  %v213 = vunpack.c.l.b16 %v77
  %v214 = vunpack.c.l.b16 %v78
  %v215 = vunpack.c.l.b16 %v79
  %v216 = vunpack.c.l.b16 %v80
  %v217 = vpack.c.b16 %v154, %v153
  %v218 = vpack.c.b16 %v156, %v155
  %v219 = vpack.c.b16 %v158, %v157
  %v220 = vpack.c.b16 %v160, %v159
  %v221 = vpack.c.b16 %v162, %v161
  %v222 = vpack.c.b16 %v164, %v163
  %v223 = vpack.c.b16 %v166, %v165
  %v224 = vpack.c.b16 %v168, %v167
  %v225 = vpack.c.b16 %v170, %v169
  %v226 = vpack.c.b16 %v172, %v171
  %v227 = vpack.c.b16 %v174, %v173
  %v228 = vpack.c.b16 %v176, %v175
  %v229 = vpack.c.b16 %v178, %v177
  %v230 = vpack.c.b16 %v180, %v179
  %v231 = vpack.c.b16 %v182, %v181
  %v232 = vpack.c.b16 %v184, %v183
  %v233 = vpack.c.b16 %v186, %v185
  %v234 = vpack.c.b16 %v188, %v187
  %v235 = vpack.c.b16 %v190, %v189
  %v236 = vpack.c.b16 %v192, %v191
  %v237 = vpack.c.b16 %v194, %v193
  %v238 = vpack.c.b16 %v196, %v195
  %v239 = vpack.c.b16 %v198, %v197
  %v240 = vpack.c.b16 %v200, %v199
  %v241 = vpack.c.b16 %v202, %v201
  %v242 = vpack.c.b16 %v204, %v203
  %v243 = vpack.c.b16 %v206, %v205
  %v244 = vpack.c.b16 %v208, %v207
  %v245 = vpack.c.b16 %v210, %v209
  %v246 = vpack.c.b16 %v212, %v211
  %v247 = vpack.c.b16 %v214, %v213
  %v248 = vpack.c.b16 %v216, %v215
  %vm249 = vcmask 64512
  %v251 = vsel %vm249, %v217, 0
  %v254 = vsel %vm249, %v218, 0
  %v257 = vsel %vm249, %v219, 0
  %v260 = vsel %vm249, %v220, 0
  %v263 = vsel %vm249, %v221, 0
  %v266 = vsel %vm249, %v222, 0
  %v269 = vsel %vm249, %v223, 0
  %v272 = vsel %vm249, %v224, 0
  %v275 = vsel %vm249, %v225, 0
  %v278 = vsel %vm249, %v226, 0
  %v281 = vsel %vm249, %v227, 0
  %v284 = vsel %vm249, %v228, 0
  %v287 = vsel %vm249, %v229, 0
  %v290 = vsel %vm249, %v230, 0
  %v293 = vsel %vm249, %v231, 0
  %v296 = vsel %vm249, %v232, 0
  %v299 = vsel %vm249, %v233, 0
  %v302 = vsel %vm249, %v234, 0
  %v305 = vsel %vm249, %v235, 0
  %v308 = vsel %vm249, %v236, 0
  %v311 = vsel %vm249, %v237, 0
  %v314 = vsel %vm249, %v238, 0
  %v317 = vsel %vm249, %v239, 0
  %v320 = vsel %vm249, %v240, 0
  %v323 = vsel %vm249, %v241, 0
  %v326 = vsel %vm249, %v242, 0
  %v329 = vsel %vm249, %v243, 0
  %v332 = vsel %vm249, %v244, 0
  %v335 = vsel %vm249, %v245, 0
  %v338 = vsel %vm249, %v246, 0
  %v341 = vsel %vm249, %v247, 0
  %v344 = vsel %vm249, %v248, 0
  %vm346 = vcmask 1043456
  %v348 = vsel %vm346, %v81, 0
  %350 = vmatprep.subr.bf16.mxu0 0
  %351 = vmatpush1.bf16.msra.mxu0 %v348
  %352 = vmatprep.subr.bf16.mxu0 0
  %353 = vmatpush1.bf16.msra.mxu0 0
  %354 = vmatprep.subr.bf16.mxu0 0
  %355 = vmatpush1.bf16.msra.mxu0 0
  %356 = vmatprep.subr.bf16.mxu0 0
  %357 = vmatpush1.bf16.msra.mxu0 0
  %358 = vmatprep.subr.bf16.mxu0 0
  %359 = vmatpush1.bf16.msra.mxu0 0
  %360 = vmatprep.subr.bf16.mxu0 0
  %361 = vmatpush1.bf16.msra.mxu0 0
  %362 = vmatprep.subr.bf16.mxu0 0
  %363 = vmatpush1.bf16.msra.mxu0 0
  %364 = vmatprep.subr.bf16.mxu0 0
  %365 = vmatpush1.bf16.msra.mxu0 0
  %366 = vmatprep.subr.bf16.mxu0 0
  %367 = vmatpush1.bf16.msra.mxu0 0
  %368 = vmatprep.subr.bf16.mxu0 0
  %369 = vmatpush1.bf16.msra.mxu0 0
  %370 = vmatprep.subr.bf16.mxu0 0
  %371 = vmatpush1.bf16.msra.mxu0 0
  %372 = vmatprep.subr.bf16.mxu0 0
  %373 = vmatpush1.bf16.msra.mxu0 0
  %374 = vmatprep.subr.bf16.mxu0 0
  %375 = vmatpush1.bf16.msra.mxu0 0
  %376 = vmatprep.subr.bf16.mxu0 0
  %377 = vmatpush1.bf16.msra.mxu0 0
  %378 = vmatprep.subr.bf16.mxu0 0
  %379 = vmatpush1.bf16.msra.mxu0 0
  %380 = vmatprep.subr.bf16.mxu0 0
  %381 = vmatpush1.bf16.msra.mxu0 0
  %382 = vmatprep.mubr.bf16.mxu0 0
  %383 = vmatmul.mubr.bf16.gmra.mrb[0].mxu0 %v251
  %v384 = vpop.f32.mrb[0].mxu0
  %v385 = vadd.f32 %v87, %v384
  %v386 = vpop.f32.mrb[0].mxu0
  %v387 = vpop.f32.mrb[0].mxu0
  %v388 = vadd.f32 %v87, %v387
  %v389 = vpop.f32.mrb[0].mxu0
  %390 = vmatprep.mubr.bf16.mxu0 0
  %391 = vmatmul.mubr.bf16.gmra.mrb[0].mxu0 %v254
  %v392 = vpop.f32.mrb[0].mxu0
  %v393 = vadd.f32 %v87, %v392
  %v394 = vpop.f32.mrb[0].mxu0
  %v395 = vpop.f32.mrb[0].mxu0
  %v396 = vadd.f32 %v87, %v395
  %v397 = vpop.f32.mrb[0].mxu0
  %398 = vmatprep.mubr.bf16.mxu0 0
  %399 = vmatmul.mubr.bf16.gmra.mrb[0].mxu0 %v257
  %v400 = vpop.f32.mrb[0].mxu0
  %v401 = vadd.f32 %v87, %v400
  %v402 = vpop.f32.mrb[0].mxu0
  %v403 = vpop.f32.mrb[0].mxu0
  %v404 = vadd.f32 %v87, %v403
  %v405 = vpop.f32.mrb[0].mxu0
  %406 = vmatprep.mubr.bf16.mxu0 0
  %407 = vmatmul.mubr.bf16.gmra.mrb[0].mxu0 %v260
  %v408 = vpop.f32.mrb[0].mxu0
  %v409 = vadd.f32 %v87, %v408
  %v410 = vpop.f32.mrb[0].mxu0
  %v411 = vpop.f32.mrb[0].mxu0
  %v412 = vadd.f32 %v87, %v411
  %v413 = vpop.f32.mrb[0].mxu0
  %414 = vmatprep.mubr.bf16.mxu0 0
  %415 = vmatmul.mubr.bf16.gmra.mrb[0].mxu0 %v263
  %v416 = vpop.f32.mrb[0].mxu0
  %v417 = vadd.f32 %v87, %v416
  %v418 = vpop.f32.mrb[0].mxu0
  %v419 = vpop.f32.mrb[0].mxu0
  %v420 = vadd.f32 %v87, %v419
  %v421 = vpop.f32.mrb[0].mxu0
  %422 = vmatprep.mubr.bf16.mxu0 0
  %423 = vmatmul.mubr.bf16.gmra.mrb[0].mxu0 %v266
  %v424 = vpop.f32.mrb[0].mxu0
  %v425 = vadd.f32 %v87, %v424
  %v426 = vpop.f32.mrb[0].mxu0
  %v427 = vpop.f32.mrb[0].mxu0
  %v428 = vadd.f32 %v87, %v427
  %v429 = vpop.f32.mrb[0].mxu0
  %430 = vmatprep.mubr.bf16.mxu0 0
  %431 = vmatmul.mubr.bf16.gmra.mrb[0].mxu0 %v269
  %v432 = vpop.f32.mrb[0].mxu0
  %v433 = vadd.f32 %v87, %v432
  %v434 = vpop.f32.mrb[0].mxu0
  %v435 = vpop.f32.mrb[0].mxu0
  %v436 = vadd.f32 %v87, %v435
  %v437 = vpop.f32.mrb[0].mxu0
  %438 = vmatprep.mubr.bf16.mxu0 0
  %439 = vmatmul.mubr.bf16.gmra.mrb[0].mxu0 %v272
  %v440 = vpop.f32.mrb[0].mxu0
  %v441 = vadd.f32 %v87, %v440
  %v442 = vpop.f32.mrb[0].mxu0
  %v443 = vpop.f32.mrb[0].mxu0
  %v444 = vadd.f32 %v87, %v443
  %v445 = vpop.f32.mrb[0].mxu0
  %446 = vmatprep.mubr.bf16.mxu0 0
  %447 = vmatmul.mubr.bf16.gmra.mrb[0].mxu0 %v275
  %v448 = vpop.f32.mrb[0].mxu0
  %v449 = vadd.f32 %v87, %v448
  %v450 = vpop.f32.mrb[0].mxu0
  %v451 = vpop.f32.mrb[0].mxu0
  %v452 = vadd.f32 %v87, %v451
  %v453 = vpop.f32.mrb[0].mxu0
  %454 = vmatprep.mubr.bf16.mxu0 0
  %455 = vmatmul.mubr.bf16.gmra.mrb[0].mxu0 %v278
  %v456 = vpop.f32.mrb[0].mxu0
  %v457 = vadd.f32 %v87, %v456
  %v458 = vpop.f32.mrb[0].mxu0
  %v459 = vpop.f32.mrb[0].mxu0
  %v460 = vadd.f32 %v87, %v459
  %v461 = vpop.f32.mrb[0].mxu0
  %462 = vmatprep.mubr.bf16.mxu0 0
  %463 = vmatmul.mubr.bf16.gmra.mrb[0].mxu0 %v281
  %v464 = vpop.f32.mrb[0].mxu0
  %v465 = vadd.f32 %v87, %v464
  %v466 = vpop.f32.mrb[0].mxu0
  %v467 = vpop.f32.mrb[0].mxu0
  %v468 = vadd.f32 %v87, %v467
  %v469 = vpop.f32.mrb[0].mxu0
  %470 = vmatprep.mubr.bf16.mxu0 0
  %471 = vmatmul.mubr.bf16.gmra.mrb[0].mxu0 %v284
  %v472 = vpop.f32.mrb[0].mxu0
  %v473 = vadd.f32 %v87, %v472
  %v474 = vpop.f32.mrb[0].mxu0
  %v475 = vpop.f32.mrb[0].mxu0
  %v476 = vadd.f32 %v87, %v475
  %v477 = vpop.f32.mrb[0].mxu0
  %478 = vmatprep.mubr.bf16.mxu0 0
  %479 = vmatmul.mubr.bf16.gmra.mrb[0].mxu0 %v287
  %v480 = vpop.f32.mrb[0].mxu0
  %v481 = vadd.f32 %v87, %v480
  %v482 = vpop.f32.mrb[0].mxu0
  %v483 = vpop.f32.mrb[0].mxu0
  %v484 = vadd.f32 %v87, %v483
  %v485 = vpop.f32.mrb[0].mxu0
  %486 = vmatprep.mubr.bf16.mxu0 0
  %487 = vmatmul.mubr.bf16.gmra.mrb[0].mxu0 %v290
  %v488 = vpop.f32.mrb[0].mxu0
  %v489 = vadd.f32 %v87, %v488
  %v490 = vpop.f32.mrb[0].mxu0
  %v491 = vpop.f32.mrb[0].mxu0
  %v492 = vadd.f32 %v87, %v491
  %v493 = vpop.f32.mrb[0].mxu0
  %494 = vmatprep.mubr.bf16.mxu0 0
  %495 = vmatmul.mubr.bf16.gmra.mrb[0].mxu0 %v293
  %v496 = vpop.f32.mrb[0].mxu0
  %v497 = vadd.f32 %v87, %v496
  %v498 = vpop.f32.mrb[0].mxu0
  %v499 = vpop.f32.mrb[0].mxu0
  %v500 = vadd.f32 %v87, %v499
  %v501 = vpop.f32.mrb[0].mxu0
  %502 = vmatprep.mubr.bf16.mxu0 0
  %503 = vmatmul.mubr.bf16.gmra.mrb[0].mxu0 %v296
  %v504 = vpop.f32.mrb[0].mxu0
  %v505 = vadd.f32 %v87, %v504
  %v506 = vpop.f32.mrb[0].mxu0
  %v507 = vpop.f32.mrb[0].mxu0
  %v508 = vadd.f32 %v87, %v507
  %v509 = vpop.f32.mrb[0].mxu0
  %510 = vmatprep.mubr.bf16.mxu0 0
  %511 = vmatmul.mubr.bf16.gmra.mrb[0].mxu0 %v299
  %v512 = vpop.f32.mrb[0].mxu0
  %v513 = vadd.f32 %v87, %v512
  %v514 = vpop.f32.mrb[0].mxu0
  %v515 = vpop.f32.mrb[0].mxu0
  %v516 = vadd.f32 %v87, %v515
  %v517 = vpop.f32.mrb[0].mxu0
  %518 = vmatprep.mubr.bf16.mxu0 0
  %519 = vmatmul.mubr.bf16.gmra.mrb[0].mxu0 %v302
  %v520 = vpop.f32.mrb[0].mxu0
  %v521 = vadd.f32 %v87, %v520
  %v522 = vpop.f32.mrb[0].mxu0
  %v523 = vpop.f32.mrb[0].mxu0
  %v524 = vadd.f32 %v87, %v523
  %v525 = vpop.f32.mrb[0].mxu0
  %526 = vmatprep.mubr.bf16.mxu0 0
  %527 = vmatmul.mubr.bf16.gmra.mrb[0].mxu0 %v305
  %v528 = vpop.f32.mrb[0].mxu0
  %v529 = vadd.f32 %v87, %v528
  %v530 = vpop.f32.mrb[0].mxu0
  %v531 = vpop.f32.mrb[0].mxu0
  %v532 = vadd.f32 %v87, %v531
  %v533 = vpop.f32.mrb[0].mxu0
  %534 = vmatprep.mubr.bf16.mxu0 0
  %535 = vmatmul.mubr.bf16.gmra.mrb[0].mxu0 %v308
  %v536 = vpop.f32.mrb[0].mxu0
  %v537 = vadd.f32 %v87, %v536
  %v538 = vpop.f32.mrb[0].mxu0
  %v539 = vpop.f32.mrb[0].mxu0
  %v540 = vadd.f32 %v87, %v539
  %v541 = vpop.f32.mrb[0].mxu0
  %542 = vmatprep.mubr.bf16.mxu0 0
  %543 = vmatmul.mubr.bf16.gmra.mrb[0].mxu0 %v311
  %v544 = vpop.f32.mrb[0].mxu0
  %v545 = vadd.f32 %v87, %v544
  %v546 = vpop.f32.mrb[0].mxu0
  %v547 = vpop.f32.mrb[0].mxu0
  %v548 = vadd.f32 %v87, %v547
  %v549 = vpop.f32.mrb[0].mxu0
  %550 = vmatprep.mubr.bf16.mxu0 0
  %551 = vmatmul.mubr.bf16.gmra.mrb[0].mxu0 %v314
  %v552 = vpop.f32.mrb[0].mxu0
  %v553 = vadd.f32 %v87, %v552
  %v554 = vpop.f32.mrb[0].mxu0
  %v555 = vpop.f32.mrb[0].mxu0
  %v556 = vadd.f32 %v87, %v555
  %v557 = vpop.f32.mrb[0].mxu0
  %558 = vmatprep.mubr.bf16.mxu0 0
  %559 = vmatmul.mubr.bf16.gmra.mrb[0].mxu0 %v317
  %v560 = vpop.f32.mrb[0].mxu0
  %v561 = vadd.f32 %v87, %v560
  %v562 = vpop.f32.mrb[0].mxu0
  %v563 = vpop.f32.mrb[0].mxu0
  %v564 = vadd.f32 %v87, %v563
  %v565 = vpop.f32.mrb[0].mxu0
  %566 = vmatprep.mubr.bf16.mxu0 0
  %567 = vmatmul.mubr.bf16.gmra.mrb[0].mxu0 %v320
  %v568 = vpop.f32.mrb[0].mxu0
  %v569 = vadd.f32 %v87, %v568
  %v570 = vpop.f32.mrb[0].mxu0
  %v571 = vpop.f32.mrb[0].mxu0
  %v572 = vadd.f32 %v87, %v571
  %v573 = vpop.f32.mrb[0].mxu0
  %574 = vmatprep.mubr.bf16.mxu0 0
  %575 = vmatmul.mubr.bf16.gmra.mrb[0].mxu0 %v323
  %v576 = vpop.f32.mrb[0].mxu0
  %v577 = vadd.f32 %v87, %v576
  %v578 = vpop.f32.mrb[0].mxu0
  %v579 = vpop.f32.mrb[0].mxu0
  %v580 = vadd.f32 %v87, %v579
  %v581 = vpop.f32.mrb[0].mxu0
  %582 = vmatprep.mubr.bf16.mxu0 0
  %583 = vmatmul.mubr.bf16.gmra.mrb[0].mxu0 %v326
  %v584 = vpop.f32.mrb[0].mxu0
  %v585 = vadd.f32 %v87, %v584
  %v586 = vpop.f32.mrb[0].mxu0
  %v587 = vpop.f32.mrb[0].mxu0
  %v588 = vadd.f32 %v87, %v587
  %v589 = vpop.f32.mrb[0].mxu0
  %590 = vmatprep.mubr.bf16.mxu0 0
  %591 = vmatmul.mubr.bf16.gmra.mrb[0].mxu0 %v329
  %v592 = vpop.f32.mrb[0].mxu0
  %v593 = vadd.f32 %v87, %v592
  %v594 = vpop.f32.mrb[0].mxu0
  %v595 = vpop.f32.mrb[0].mxu0
  %v596 = vadd.f32 %v87, %v595
  %v597 = vpop.f32.mrb[0].mxu0
  %598 = vmatprep.mubr.bf16.mxu0 0
  %599 = vmatmul.mubr.bf16.gmra.mrb[0].mxu0 %v332
  %v600 = vpop.f32.mrb[0].mxu0
  %v601 = vadd.f32 %v87, %v600
  %v602 = vpop.f32.mrb[0].mxu0
  %v603 = vpop.f32.mrb[0].mxu0
  %v604 = vadd.f32 %v87, %v603
  %v605 = vpop.f32.mrb[0].mxu0
  %606 = vmatprep.mubr.bf16.mxu0 0
  %607 = vmatmul.mubr.bf16.gmra.mrb[0].mxu0 %v335
  %v608 = vpop.f32.mrb[0].mxu0
  %v609 = vadd.f32 %v87, %v608
  %v610 = vpop.f32.mrb[0].mxu0
  %v611 = vpop.f32.mrb[0].mxu0
  %v612 = vadd.f32 %v87, %v611
  %v613 = vpop.f32.mrb[0].mxu0
  %614 = vmatprep.mubr.bf16.mxu0 0
  %615 = vmatmul.mubr.bf16.gmra.mrb[0].mxu0 %v338
  %v616 = vpop.f32.mrb[0].mxu0
  %v617 = vadd.f32 %v87, %v616
  %v618 = vpop.f32.mrb[0].mxu0
  %v619 = vpop.f32.mrb[0].mxu0
  %v620 = vadd.f32 %v87, %v619
  %v621 = vpop.f32.mrb[0].mxu0
  %622 = vmatprep.mubr.bf16.mxu0 0
  %623 = vmatmul.mubr.bf16.gmra.mrb[0].mxu0 %v341
  %v624 = vpop.f32.mrb[0].mxu0
  %v625 = vadd.f32 %v87, %v624
  %v626 = vpop.f32.mrb[0].mxu0
  %v627 = vpop.f32.mrb[0].mxu0
  %v628 = vadd.f32 %v87, %v627
  %v629 = vpop.f32.mrb[0].mxu0
  %630 = vmatprep.mubr.bf16.mxu0 0
  %631 = vmatmul.mubr.bf16.gmra.mrb[0].mxu0 %v344
  %v632 = vpop.f32.mrb[0].mxu0
  %v633 = vadd.f32 %v87, %v632
  %v634 = vpop.f32.mrb[0].mxu0
  %v635 = vpop.f32.mrb[0].mxu0
  %v636 = vadd.f32 %v87, %v635
  %v637 = vpop.f32.mrb[0].mxu0
  %638 = vdwg.mxu0
  %vm639 = vcmask 7168
  %640 = vst.msk [vmem:[%s3] sm:$0xff] %vm639, %v385
  %641 = vst.msk [vmem:[%s3 + $0x8] sm:$0xff] %vm639, %v388
  %642 = vst.msk [vmem:[%s3 + $0x10] sm:$0xff] %vm639, %v393
  %643 = vst.msk [vmem:[%s3 + $0x18] sm:$0xff] %vm639, %v396
  %644 = vst.msk [vmem:[%s3 + $0x20] sm:$0xff] %vm639, %v401
  %645 = vst.msk [vmem:[%s3 + $0x28] sm:$0xff] %vm639, %v404
  %646 = vst.msk [vmem:[%s3 + $0x30] sm:$0xff] %vm639, %v409
  %647 = vst.msk [vmem:[%s3 + $0x38] sm:$0xff] %vm639, %v412
  %648 = vst.msk [vmem:[%s3 + $0x40] sm:$0xff] %vm639, %v417
  %649 = vst.msk [vmem:[%s3 + $0x48] sm:$0xff] %vm639, %v420
  %650 = vst.msk [vmem:[%s3 + $0x50] sm:$0xff] %vm639, %v425
  %651 = vst.msk [vmem:[%s3 + $0x58] sm:$0xff] %vm639, %v428
  %652 = vst.msk [vmem:[%s3 + $0x60] sm:$0xff] %vm639, %v433
  %653 = vst.msk [vmem:[%s3 + $0x68] sm:$0xff] %vm639, %v436
  %654 = vst.msk [vmem:[%s3 + $0x70] sm:$0xff] %vm639, %v441
  %655 = vst.msk [vmem:[%s3 + $0x78] sm:$0xff] %vm639, %v444
  %656 = vst.msk [vmem:[%s3 + $0x80] sm:$0xff] %vm639, %v449
  %657 = vst.msk [vmem:[%s3 + $0x88] sm:$0xff] %vm639, %v452
  %658 = vst.msk [vmem:[%s3 + $0x90] sm:$0xff] %vm639, %v457
  %659 = vst.msk [vmem:[%s3 + $0x98] sm:$0xff] %vm639, %v460
  %660 = vst.msk [vmem:[%s3 + $0xa0] sm:$0xff] %vm639, %v465
  %661 = vst.msk [vmem:[%s3 + $0xa8] sm:$0xff] %vm639, %v468
  %662 = vst.msk [vmem:[%s3 + $0xb0] sm:$0xff] %vm639, %v473
  %663 = vst.msk [vmem:[%s3 + $0xb8] sm:$0xff] %vm639, %v476
  %664 = vst.msk [vmem:[%s3 + $0xc0] sm:$0xff] %vm639, %v481
  %665 = vst.msk [vmem:[%s3 + $0xc8] sm:$0xff] %vm639, %v484
  %666 = vst.msk [vmem:[%s3 + $0xd0] sm:$0xff] %vm639, %v489
  %667 = vst.msk [vmem:[%s3 + $0xd8] sm:$0xff] %vm639, %v492
  %668 = vst.msk [vmem:[%s3 + $0xe0] sm:$0xff] %vm639, %v497
  %669 = vst.msk [vmem:[%s3 + $0xe8] sm:$0xff] %vm639, %v500
  %670 = vst.msk [vmem:[%s3 + $0xf0] sm:$0xff] %vm639, %v505
  %671 = vst.msk [vmem:[%s3 + $0xf8] sm:$0xff] %vm639, %v508
  %672 = vst.msk [vmem:[%s3 + $0x100] sm:$0xff] %vm639, %v513
  %673 = vst.msk [vmem:[%s3 + $0x108] sm:$0xff] %vm639, %v516
  %674 = vst.msk [vmem:[%s3 + $0x110] sm:$0xff] %vm639, %v521
  %675 = vst.msk [vmem:[%s3 + $0x118] sm:$0xff] %vm639, %v524
  %676 = vst.msk [vmem:[%s3 + $0x120] sm:$0xff] %vm639, %v529
  %677 = vst.msk [vmem:[%s3 + $0x128] sm:$0xff] %vm639, %v532
  %678 = vst.msk [vmem:[%s3 + $0x130] sm:$0xff] %vm639, %v537
  %679 = vst.msk [vmem:[%s3 + $0x138] sm:$0xff] %vm639, %v540
  %680 = vst.msk [vmem:[%s3 + $0x140] sm:$0xff] %vm639, %v545
  %681 = vst.msk [vmem:[%s3 + $0x148] sm:$0xff] %vm639, %v548
  %682 = vst.msk [vmem:[%s3 + $0x150] sm:$0xff] %vm639, %v553
  %683 = vst.msk [vmem:[%s3 + $0x158] sm:$0xff] %vm639, %v556
  %684 = vst.msk [vmem:[%s3 + $0x160] sm:$0xff] %vm639, %v561
  %685 = vst.msk [vmem:[%s3 + $0x168] sm:$0xff] %vm639, %v564
  %686 = vst.msk [vmem:[%s3 + $0x170] sm:$0xff] %vm639, %v569
  %687 = vst.msk [vmem:[%s3 + $0x178] sm:$0xff] %vm639, %v572
  %688 = vst.msk [vmem:[%s3 + $0x180] sm:$0xff] %vm639, %v577
  %689 = vst.msk [vmem:[%s3 + $0x188] sm:$0xff] %vm639, %v580
  %690 = vst.msk [vmem:[%s3 + $0x190] sm:$0xff] %vm639, %v585
  %691 = vst.msk [vmem:[%s3 + $0x198] sm:$0xff] %vm639, %v588
  %692 = vst.msk [vmem:[%s3 + $0x1a0] sm:$0xff] %vm639, %v593
  %693 = vst.msk [vmem:[%s3 + $0x1a8] sm:$0xff] %vm639, %v596
  %694 = vst.msk [vmem:[%s3 + $0x1b0] sm:$0xff] %vm639, %v601
  %695 = vst.msk [vmem:[%s3 + $0x1b8] sm:$0xff] %vm639, %v604
  %696 = vst.msk [vmem:[%s3 + $0x1c0] sm:$0xff] %vm639, %v609
  %697 = vst.msk [vmem:[%s3 + $0x1c8] sm:$0xff] %vm639, %v612
  %698 = vst.msk [vmem:[%s3 + $0x1d0] sm:$0xff] %vm639, %v617
  %699 = vst.msk [vmem:[%s3 + $0x1d8] sm:$0xff] %vm639, %v620
  %700 = vst.msk [vmem:[%s3 + $0x1e0] sm:$0xff] %vm639, %v625
  %701 = vst.msk [vmem:[%s3 + $0x1e8] sm:$0xff] %vm639, %v628
  %702 = vst.msk [vmem:[%s3 + $0x1f0] sm:$0xff] %vm639, %v633
  %703 = vst.msk [vmem:[%s3 + $0x1f8] sm:$0xff] %vm639, %v636
  // Predicated region
  $region14: #{unet_forward.53} parent=0 // pred_check
    _
  $region15: #{unet_forward.53} parent=0 // pred_check_branch
    %705 = sbr.rel (0) target = $region17
  $region16: #{unet_forward.53} parent=0 // pred_region
    _
  $region17: #{unet_forward.53} parent=0 // pred_fallthru
    _
  // Predicated region
  $region18: #{unet_forward.53} parent=0 // pred_check
    _
  $region19: #{unet_forward.53} parent=0 // pred_check_branch
    %707 = sbr.rel (0) target = $region21
  $region20: #{unet_forward.53} parent=0 // pred_region
    _
  $region21: #{unet_forward.53} parent=0 // pred_fallthru
    _

</llo_original>
